<compile_context>
chip_gen: v5e
topology: v5e:2x2
jax: 0.10.0
libtpu: 0.0.40
codegen_flags: <defaults>
</compile_context>

<pallas_src>
import itertools
import numpy as np

import jax
import jax.numpy as jnp
from jax.experimental import pallas as pl
from jax.experimental.pallas import tpu as pltpu  # noqa: F401  (kept for parity)

# ----------------------------- configuration -------------------------------
DIM = 32          # embedding dim
RES = 4           # spatial resolution (H == W == RES), N = RES*RES tokens
N_TOK = RES * RES
NUM_HEADS = 8     # fixed in Attention4D_knn
KEY_DIM = 32      # fixed in Attention4D_knn
ATTN_RATIO = 4    # fixed in Attention4D_knn
D_HEAD = ATTN_RATIO * KEY_DIM          # 128
DH = D_HEAD * NUM_HEADS                # 1024
NH_KD = KEY_DIM * NUM_HEADS            # 256
ALPHA = 0.75
TOPK = 6                               # must be <= N_TOK
N_TOPK_HEADS = int(ALPHA * NUM_HEADS)  # int(0.75 * num_heads) heads get top-k
MLP_RATIO = 4.0
HIDDEN = int(DIM * MLP_RATIO)          # 128
LAYER_SCALE_INIT = 1e-5
BN_EPS = 1e-5
BATCH = 2
BN_TOKENS = BATCH * N_TOK              # 32
SCALE = KEY_DIM ** -0.5


# ------------------------- fused Pallas kernel ------------------------------
def _fused_kernel(x_ref,
                  wqkv_ref, qkv_sc_ref, qkv_sh_ref,
                  g2_ref,
                  wvl_ref, vl_sc_ref, vl_sh_ref,
                  bias_ref,
                  wproj_ref, proj_sc_ref, proj_sh_ref, ls1_ref,
                  wfc1_ref, fc1_sc_ref, fc1_sh_ref,
                  wmid_ref, mid_sc_ref, mid_sh_ref,
                  wfc2_ref, fc2_sc_ref, fc2_sh_ref, ls2_ref,
                  o_ref):
    f32 = jnp.float32
    x = x_ref[...]                                    # (B*N, DIM)
    g2 = g2_ref[...]                                  # (9*B*N, B*N)

    def dw3x3_bn(tok, w9, scale, shift, relu):
        # depthwise 3x3 conv (stride 1, pad 1) + folded BN on token layout,
        # via a single gather matmul + 9 per-tap weighted adds.
        gath = jnp.dot(g2, tok, preferred_element_type=f32)   # (9*B*N, C)
        acc = None
        for tap in range(9):
            term = (gath[tap * BN_TOKENS:(tap + 1) * BN_TOKENS, :]
                    * w9[tap:tap + 1, :])
            acc = term if acc is None else acc + term
        y = acc * scale + shift
        if relu:
            y = jnp.maximum(y, 0.0)
        return y

    # -------- fused Q/K/V 1x1 conv + BN (single 32x1536 matmul) --------
    qkv = jnp.dot(x, wqkv_ref[...], preferred_element_type=f32)
    qkv = qkv * qkv_sc_ref[...] + qkv_sh_ref[...]     # (B*N, 2*nh_kd + dh)

    v_tok = qkv[:, 2 * NH_KD:]                        # (B*N, DH), lane-aligned
    v_local = dw3x3_bn(v_tok, wvl_ref[...], vl_sc_ref[...], vl_sh_ref[...],
                       relu=False)

    # -------- attention: all heads unrolled in-kernel, batched over B --------
    bias = bias_ref[...]                              # (heads, N, N)
    neg_inf = f32(-jnp.inf)
    ctx_parts = []
    for hd in range(NUM_HEADS):
        qh = qkv[:, hd * KEY_DIM:(hd + 1) * KEY_DIM].reshape(
            BATCH, N_TOK, KEY_DIM)
        kh = qkv[:, NH_KD + hd * KEY_DIM:NH_KD + (hd + 1) * KEY_DIM].reshape(
            BATCH, N_TOK, KEY_DIM)
        vh = qkv[:, 2 * NH_KD + hd * D_HEAD:
                 2 * NH_KD + (hd + 1) * D_HEAD].reshape(BATCH, N_TOK, D_HEAD)

        s = jnp.einsum('bnk,bmk->bnm', qh, kh, preferred_element_type=f32)
        s = s * SCALE + bias[hd]

        if hd < N_TOPK_HEADS:   # static head split: non-topk heads skip this
            # k-th largest logit per row via iterative max suppression.
            cur = s
            for _ in range(TOPK - 1):
                rmax = jnp.max(cur, axis=-1, keepdims=True)
                cur = jnp.where(cur >= rmax, neg_inf, cur)
            thresh = jnp.max(cur, axis=-1, keepdims=True)
            # TODO(synk): ties at the k-th value keep all tied entries here,
            # while torch.topk+scatter keeps exactly k; identical for
            # continuous inputs.
            s = jnp.where(s >= thresh, s, neg_inf)

        m = jnp.max(s, axis=-1, keepdims=True)
        e = jnp.exp(s - m)
        p_attn = e / jnp.sum(e, axis=-1, keepdims=True)
        ctx_parts.append(jnp.einsum('bnm,bmd->bnd', p_attn, vh,
                                    preferred_element_type=f32))
    ctx = jnp.concatenate(ctx_parts, axis=-1).reshape(BN_TOKENS, DH)

    # -------- proj: ReLU -> 1x1 conv -> BN, fused with scaled residual ------
    pre = jnp.maximum(ctx + v_local, 0.0)
    y1 = jnp.dot(pre, wproj_ref[...], preferred_element_type=f32)
    y1 = y1 * proj_sc_ref[...] + proj_sh_ref[...]
    x1 = x + ls1_ref[...] * y1                        # (B*N, DIM)

    # -------- MLP (mid_conv=True), ReLU activations, scaled residual --------
    h1 = jnp.dot(x1, wfc1_ref[...], preferred_element_type=f32)
    h1 = jnp.maximum(h1 * fc1_sc_ref[...] + fc1_sh_ref[...], 0.0)
    h2 = dw3x3_bn(h1, wmid_ref[...], mid_sc_ref[...], mid_sh_ref[...],
                  relu=True)
    y2 = jnp.dot(h2, wfc2_ref[...], preferred_element_type=f32)
    y2 = y2 * fc2_sc_ref[...] + fc2_sh_ref[...]
    o_ref[...] = x1 + ls2_ref[...] * y2


def fused_block(x_tok, p):
    bn, dim = x_tok.shape
    return pl.pallas_call(
        _fused_kernel,
        out_shape=jax.ShapeDtypeStruct((bn, dim), jnp.float32),
    )(x_tok,
      p['w_qkv'], p['qkv_scale'], p['qkv_shift'],
      p['dw_gather'],
      p['w_vlocal'], p['vlocal_scale'], p['vlocal_shift'],
      p['attn_bias'],
      p['w_proj'], p['proj_scale'], p['proj_shift'], p['layer_scale_1'],
      p['w_fc1'], p['fc1_scale'], p['fc1_shift'],
      p['w_mid'], p['mid_scale'], p['mid_shift'],
      p['w_fc2'], p['fc2_scale'], p['fc2_shift'], p['layer_scale_2'])


# ------------------------------- parameters --------------------------------
def _build_bias_idxs(resolution):
    points = list(itertools.product(range(resolution), range(resolution)))
    n = len(points)
    attention_offsets = {}
    idxs = []
    for p1 in points:
        for p2 in points:
            offset = (abs(p1[0] - p2[0]), abs(p1[1] - p2[1]))
            if offset not in attention_offsets:
                attention_offsets[offset] = len(attention_offsets)
            idxs.append(attention_offsets[offset])
    return (np.asarray(idxs, dtype=np.int32).reshape(n, n),
            len(attention_offsets))


def _build_dw_gather(batch, res):
    # (9*B*N, B*N) 0/1 matrix: row tap*B*N + b*N + t picks the (valid,
    # zero-padded) 3x3 neighbor of token t in image b for kernel tap
    # (kh, kw) = (tap // 3, tap % 3), offset (kh-1, kw-1).
    n = res * res
    g = np.zeros((9 * batch * n, batch * n), dtype=np.float32)
    for kh in range(3):
        for kw in range(3):
            tap = 3 * kh + kw
            for b in range(batch):
                for hh in range(res):
                    for ww in range(res):
                        sh, sw = hh + kh - 1, ww + kw - 1
                        if 0 <= sh < res and 0 <= sw < res:
                            row = tap * batch * n + b * n + hh * res + ww
                            col = b * n + sh * res + sw
                            g[row, col] = 1.0
    return jnp.asarray(g)


def init_params(key):
    keys = iter(jax.random.split(key, 64))
    nxt = lambda: next(keys)

    def folded_linear(cin, cout):
        w = 0.02 * jax.random.normal(nxt(), (cin, cout), jnp.float32)
        b = 0.01 * jax.random.normal(nxt(), (cout,), jnp.float32)
        gamma = 1.0 + 0.1 * jax.random.normal(nxt(), (cout,), jnp.float32)
        beta = 0.05 * jax.random.normal(nxt(), (cout,), jnp.float32)
        mean = 0.05 * jax.random.normal(nxt(), (cout,), jnp.float32)
        var = 0.9 + 0.2 * jax.random.uniform(nxt(), (cout,), jnp.float32)
        scale = gamma / jnp.sqrt(var + BN_EPS)
        shift = beta + scale * (b - mean)
        return w, scale, shift

    def folded_dw(c):
        w = 0.1 * jax.random.normal(nxt(), (9, c), jnp.float32)
        b = 0.01 * jax.random.normal(nxt(), (c,), jnp.float32)
        gamma = 1.0 + 0.1 * jax.random.normal(nxt(), (c,), jnp.float32)
        beta = 0.05 * jax.random.normal(nxt(), (c,), jnp.float32)
        mean = 0.05 * jax.random.normal(nxt(), (c,), jnp.float32)
        var = 0.9 + 0.2 * jax.random.uniform(nxt(), (c,), jnp.float32)
        scale = gamma / jnp.sqrt(var + BN_EPS)
        shift = beta + scale * (b - mean)
        return w, scale, shift

    p = {}

    # Q / K / V 1x1 convs fused into one (DIM, 2*nh_kd + dh) matmul.
    wq, q_sc, q_sh = folded_linear(DIM, NH_KD)
    wk, k_sc, k_sh = folded_linear(DIM, NH_KD)
    wv, v_sc, v_sh = folded_linear(DIM, DH)
    p['w_qkv'] = jnp.concatenate([wq, wk, wv], axis=1)
    p['qkv_scale'] = jnp.concatenate([q_sc, k_sc, v_sc]).reshape(1, -1)
    p['qkv_shift'] = jnp.concatenate([q_sh, k_sh, v_sh]).reshape(1, -1)

    w, sc, sh = folded_dw(DH)
    p['w_vlocal'], p['vlocal_scale'], p['vlocal_shift'] = \
        w, sc.reshape(1, -1), sh.reshape(1, -1)

    w, sc, sh = folded_linear(DH, DIM)
    p['w_proj'], p['proj_scale'], p['proj_shift'] = \
        w, sc.reshape(1, -1), sh.reshape(1, -1)

    w, sc, sh = folded_linear(DIM, HIDDEN)
    p['w_fc1'], p['fc1_scale'], p['fc1_shift'] = \
        w, sc.reshape(1, -1), sh.reshape(1, -1)

    w, sc, sh = folded_dw(HIDDEN)
    p['w_mid'], p['mid_scale'], p['mid_shift'] = \
        w, sc.reshape(1, -1), sh.reshape(1, -1)

    w, sc, sh = folded_linear(HIDDEN, DIM)
    p['w_fc2'], p['fc2_scale'], p['fc2_shift'] = \
        w, sc.reshape(1, -1), sh.reshape(1, -1)

    # Relative-position attention bias, gathered ONCE at init (hoisted).
    idxs, num_offsets = _build_bias_idxs(RES)
    biases = 0.02 * jax.random.normal(
        nxt(), (NUM_HEADS, num_offsets), jnp.float32)
    p['attn_bias'] = biases[:, idxs]                    # (heads, N, N)

    # Depthwise-conv gather matrix (shared by v_local and mid convs).
    p['dw_gather'] = _build_dw_gather(BATCH, RES)

    p['layer_scale_1'] = LAYER_SCALE_INIT * jnp.ones((1, DIM), jnp.float32)
    p['layer_scale_2'] = LAYER_SCALE_INIT * jnp.ones((1, DIM), jnp.float32)
    return p


# ------------------------------- forward pass ------------------------------
def attn_ffn_knn_forward(x_nchw, p):
    b, c, h, w = x_nchw.shape
    n = h * w
    x_tok = jnp.transpose(x_nchw, (0, 2, 3, 1)).reshape(b * n, c)
    out_tok = fused_block(x_tok, p)
    return out_tok.reshape(b, h, w, c).transpose(0, 3, 1, 2)      # back to NCHW


# ----------------------------------- main -----------------------------------
if __name__ == "__main__":
    key = jax.random.PRNGKey(0)
    pkey, xkey = jax.random.split(key)
    params = init_params(pkey)
    x = jax.random.normal(xkey, (BATCH, DIM, RES, RES), jnp.float32)

    fwd = jax.jit(lambda inp: attn_ffn_knn_forward(inp, params))
    out = fwd(x)
    jax.block_until_ready(out)

    assert out.shape == (BATCH, DIM, RES, RES)
    assert bool(jnp.all(jnp.isfinite(out)))
    print("KERNEL_OK")
</pallas_src>

<mosaic_0001>
module attributes {stable_mosaic.version = 11 : i64} {
  func.func @_fused_kernel(%arg0: memref<32x32xf32, #tpu.memory_space<vmem>>, %arg1: memref<32x1536xf32, #tpu.memory_space<vmem>>, %arg2: memref<1x1536xf32, #tpu.memory_space<vmem>>, %arg3: memref<1x1536xf32, #tpu.memory_space<vmem>>, %arg4: memref<288x32xf32, #tpu.memory_space<vmem>>, %arg5: memref<9x1024xf32, #tpu.memory_space<vmem>>, %arg6: memref<1x1024xf32, #tpu.memory_space<vmem>>, %arg7: memref<1x1024xf32, #tpu.memory_space<vmem>>, %arg8: memref<8x16x16xf32, #tpu.memory_space<vmem>>, %arg9: memref<1024x32xf32, #tpu.memory_space<vmem>>, %arg10: memref<1x32xf32, #tpu.memory_space<vmem>>, %arg11: memref<1x32xf32, #tpu.memory_space<vmem>>, %arg12: memref<1x32xf32, #tpu.memory_space<vmem>>, %arg13: memref<32x128xf32, #tpu.memory_space<vmem>>, %arg14: memref<1x128xf32, #tpu.memory_space<vmem>>, %arg15: memref<1x128xf32, #tpu.memory_space<vmem>>, %arg16: memref<9x128xf32, #tpu.memory_space<vmem>>, %arg17: memref<1x128xf32, #tpu.memory_space<vmem>>, %arg18: memref<1x128xf32, #tpu.memory_space<vmem>>, %arg19: memref<128x32xf32, #tpu.memory_space<vmem>>, %arg20: memref<1x32xf32, #tpu.memory_space<vmem>>, %arg21: memref<1x32xf32, #tpu.memory_space<vmem>>, %arg22: memref<1x32xf32, #tpu.memory_space<vmem>>, %arg23: memref<32x32xf32, #tpu.memory_space<vmem>>) attributes {dimension_semantics = [], scalar_prefetch = 0 : i64, scratch_operands = 0 : i64, tpu.core_type = #tpu.core_type<tc>} {
    %c0 = arith.constant 0 : index
    %c0_0 = arith.constant 0 : index
    %0 = vector.load %arg0[%c0, %c0_0] : memref<32x32xf32, #tpu.memory_space<vmem>>, vector<32x32xf32>
    %c0_1 = arith.constant 0 : index
    %c0_2 = arith.constant 0 : index
    %1 = vector.load %arg4[%c0_1, %c0_2] : memref<288x32xf32, #tpu.memory_space<vmem>>, vector<288x32xf32>
    %c0_3 = arith.constant 0 : index
    %c0_4 = arith.constant 0 : index
    %2 = vector.load %arg1[%c0_3, %c0_4] : memref<32x1536xf32, #tpu.memory_space<vmem>>, vector<32x1536xf32>
    %cst = arith.constant dense<0.000000e+00> : vector<32x1536xf32>
    %3 = tpu.matmul %0, %2, %cst {dimension_numbers = #tpu.dot_dimension_numbers<[1], [0], [0], [1], [0, 0, 1, 1], [], []>} : vector<32x32xf32>, vector<32x1536xf32>, vector<32x1536xf32> -> vector<32x1536xf32>
    %c0_5 = arith.constant 0 : index
    %c0_6 = arith.constant 0 : index
    %4 = vector.load %arg2[%c0_5, %c0_6] : memref<1x1536xf32, #tpu.memory_space<vmem>>, vector<1x1536xf32>
    %5 = vector.broadcast %4 : vector<1x1536xf32> to vector<32x1536xf32>
    %6 = arith.mulf %3, %5 : vector<32x1536xf32>
    %c0_7 = arith.constant 0 : index
    %c0_8 = arith.constant 0 : index
    %7 = vector.load %arg3[%c0_7, %c0_8] : memref<1x1536xf32, #tpu.memory_space<vmem>>, vector<1x1536xf32>
    %8 = vector.broadcast %7 : vector<1x1536xf32> to vector<32x1536xf32>
    %9 = arith.addf %6, %8 : vector<32x1536xf32>
    %10 = vector.extract_strided_slice %9 {offsets = [0, 512], sizes = [32, 1024], strides = [1, 1]} : vector<32x1536xf32> to vector<32x1024xf32>
    %c0_9 = arith.constant 0 : index
    %c0_10 = arith.constant 0 : index
    %11 = vector.load %arg5[%c0_9, %c0_10] : memref<9x1024xf32, #tpu.memory_space<vmem>>, vector<9x1024xf32>
    %c0_11 = arith.constant 0 : index
    %c0_12 = arith.constant 0 : index
    %12 = vector.load %arg6[%c0_11, %c0_12] : memref<1x1024xf32, #tpu.memory_space<vmem>>, vector<1x1024xf32>
    %c0_13 = arith.constant 0 : index
    %c0_14 = arith.constant 0 : index
    %13 = vector.load %arg7[%c0_13, %c0_14] : memref<1x1024xf32, #tpu.memory_space<vmem>>, vector<1x1024xf32>
    %cst_15 = arith.constant dense<0.000000e+00> : vector<288x1024xf32>
    %14 = tpu.matmul %1, %10, %cst_15 {dimension_numbers = #tpu.dot_dimension_numbers<[1], [0], [0], [1], [0, 0, 1, 1], [], []>} : vector<288x32xf32>, vector<32x1024xf32>, vector<288x1024xf32> -> vector<288x1024xf32>
    %15 = vector.extract_strided_slice %14 {offsets = [0, 0], sizes = [32, 1024], strides = [1, 1]} : vector<288x1024xf32> to vector<32x1024xf32>
    %16 = vector.extract_strided_slice %11 {offsets = [0, 0], sizes = [1, 1024], strides = [1, 1]} : vector<9x1024xf32> to vector<1x1024xf32>
    %17 = vector.broadcast %16 : vector<1x1024xf32> to vector<32x1024xf32>
    %18 = arith.mulf %15, %17 : vector<32x1024xf32>
    %19 = vector.extract_strided_slice %14 {offsets = [32, 0], sizes = [32, 1024], strides = [1, 1]} : vector<288x1024xf32> to vector<32x1024xf32>
    %20 = vector.extract_strided_slice %11 {offsets = [1, 0], sizes = [1, 1024], strides = [1, 1]} : vector<9x1024xf32> to vector<1x1024xf32>
    %21 = vector.broadcast %20 : vector<1x1024xf32> to vector<32x1024xf32>
    %22 = arith.mulf %19, %21 : vector<32x1024xf32>
    %23 = arith.addf %18, %22 : vector<32x1024xf32>
    %24 = vector.extract_strided_slice %14 {offsets = [64, 0], sizes = [32, 1024], strides = [1, 1]} : vector<288x1024xf32> to vector<32x1024xf32>
    %25 = vector.extract_strided_slice %11 {offsets = [2, 0], sizes = [1, 1024], strides = [1, 1]} : vector<9x1024xf32> to vector<1x1024xf32>
    %26 = vector.broadcast %25 : vector<1x1024xf32> to vector<32x1024xf32>
    %27 = arith.mulf %24, %26 : vector<32x1024xf32>
    %28 = arith.addf %23, %27 : vector<32x1024xf32>
    %29 = vector.extract_strided_slice %14 {offsets = [96, 0], sizes = [32, 1024], strides = [1, 1]} : vector<288x1024xf32> to vector<32x1024xf32>
    %30 = vector.extract_strided_slice %11 {offsets = [3, 0], sizes = [1, 1024], strides = [1, 1]} : vector<9x1024xf32> to vector<1x1024xf32>
    %31 = vector.broadcast %30 : vector<1x1024xf32> to vector<32x1024xf32>
    %32 = arith.mulf %29, %31 : vector<32x1024xf32>
    %33 = arith.addf %28, %32 : vector<32x1024xf32>
    %34 = vector.extract_strided_slice %14 {offsets = [128, 0], sizes = [32, 1024], strides = [1, 1]} : vector<288x1024xf32> to vector<32x1024xf32>
    %35 = vector.extract_strided_slice %11 {offsets = [4, 0], sizes = [1, 1024], strides = [1, 1]} : vector<9x1024xf32> to vector<1x1024xf32>
    %36 = vector.broadcast %35 : vector<1x1024xf32> to vector<32x1024xf32>
    %37 = arith.mulf %34, %36 : vector<32x1024xf32>
    %38 = arith.addf %33, %37 : vector<32x1024xf32>
    %39 = vector.extract_strided_slice %14 {offsets = [160, 0], sizes = [32, 1024], strides = [1, 1]} : vector<288x1024xf32> to vector<32x1024xf32>
    %40 = vector.extract_strided_slice %11 {offsets = [5, 0], sizes = [1, 1024], strides = [1, 1]} : vector<9x1024xf32> to vector<1x1024xf32>
    %41 = vector.broadcast %40 : vector<1x1024xf32> to vector<32x1024xf32>
    %42 = arith.mulf %39, %41 : vector<32x1024xf32>
    %43 = arith.addf %38, %42 : vector<32x1024xf32>
    %44 = vector.extract_strided_slice %14 {offsets = [192, 0], sizes = [32, 1024], strides = [1, 1]} : vector<288x1024xf32> to vector<32x1024xf32>
    %45 = vector.extract_strided_slice %11 {offsets = [6, 0], sizes = [1, 1024], strides = [1, 1]} : vector<9x1024xf32> to vector<1x1024xf32>
    %46 = vector.broadcast %45 : vector<1x1024xf32> to vector<32x1024xf32>
    %47 = arith.mulf %44, %46 : vector<32x1024xf32>
    %48 = arith.addf %43, %47 : vector<32x1024xf32>
    %49 = vector.extract_strided_slice %14 {offsets = [224, 0], sizes = [32, 1024], strides = [1, 1]} : vector<288x1024xf32> to vector<32x1024xf32>
    %50 = vector.extract_strided_slice %11 {offsets = [7, 0], sizes = [1, 1024], strides = [1, 1]} : vector<9x1024xf32> to vector<1x1024xf32>
    %51 = vector.broadcast %50 : vector<1x1024xf32> to vector<32x1024xf32>
    %52 = arith.mulf %49, %51 : vector<32x1024xf32>
    %53 = arith.addf %48, %52 : vector<32x1024xf32>
    %54 = vector.extract_strided_slice %14 {offsets = [256, 0], sizes = [32, 1024], strides = [1, 1]} : vector<288x1024xf32> to vector<32x1024xf32>
    %55 = vector.extract_strided_slice %11 {offsets = [8, 0], sizes = [1, 1024], strides = [1, 1]} : vector<9x1024xf32> to vector<1x1024xf32>
    %56 = vector.broadcast %55 : vector<1x1024xf32> to vector<32x1024xf32>
    %57 = arith.mulf %54, %56 : vector<32x1024xf32>
    %58 = arith.addf %53, %57 : vector<32x1024xf32>
    %59 = vector.broadcast %12 : vector<1x1024xf32> to vector<32x1024xf32>
    %60 = arith.mulf %58, %59 : vector<32x1024xf32>
    %61 = vector.broadcast %13 : vector<1x1024xf32> to vector<32x1024xf32>
    %62 = arith.addf %60, %61 : vector<32x1024xf32>
    %c0_16 = arith.constant 0 : index
    %c0_17 = arith.constant 0 : index
    %c0_18 = arith.constant 0 : index
    %63 = vector.load %arg8[%c0_16, %c0_17, %c0_18] : memref<8x16x16xf32, #tpu.memory_space<vmem>>, vector<8x16x16xf32>
    %64 = vector.extract_strided_slice %9 {offsets = [0, 0], sizes = [32, 32], strides = [1, 1]} : vector<32x1536xf32> to vector<32x32xf32>
    %65 = vector.shape_cast %64 : vector<32x32xf32> to vector<2x16x32xf32>
    %66 = vector.extract_strided_slice %9 {offsets = [0, 256], sizes = [32, 32], strides = [1, 1]} : vector<32x1536xf32> to vector<32x32xf32>
    %67 = vector.shape_cast %66 : vector<32x32xf32> to vector<2x16x32xf32>
    %68 = vector.extract_strided_slice %9 {offsets = [0, 512], sizes = [32, 128], strides = [1, 1]} : vector<32x1536xf32> to vector<32x128xf32>
    %69 = vector.shape_cast %68 : vector<32x128xf32> to vector<2x16x128xf32>
    "tpu.trace_start"() <{level = 10 : i32, message = "bnk,bmk->bnm"}> : () -> ()
    %cst_19 = arith.constant dense<0.000000e+00> : vector<2x16x16xf32>
    %70 = tpu.matmul %65, %67, %cst_19 {dimension_numbers = #tpu.dot_dimension_numbers<[2], [2], [1], [1], [0, 0, 0, 1, 1, 1], [0], [0]>} : vector<2x16x32xf32>, vector<2x16x32xf32>, vector<2x16x16xf32> -> vector<2x16x16xf32>
    "tpu.trace_stop"() : () -> ()
    %cst_20 = arith.constant 0.176776692 : f32
    %71 = vector.broadcast %cst_20 : f32 to vector<2x16x16xf32>
    %72 = arith.mulf %70, %71 : vector<2x16x16xf32>
    %73 = vector.extract_strided_slice %63 {offsets = [0, 0, 0], sizes = [1, 16, 16], strides = [1, 1, 1]} : vector<8x16x16xf32> to vector<1x16x16xf32>
    %74 = vector.shape_cast %73 : vector<1x16x16xf32> to vector<16x16xf32>
    %75 = vector.shape_cast %74 : vector<16x16xf32> to vector<1x16x16xf32>
    %76 = vector.broadcast %75 : vector<1x16x16xf32> to vector<2x16x16xf32>
    %77 = arith.addf %72, %76 : vector<2x16x16xf32>
    %cst_21 = arith.constant dense<0xFF800000> : vector<2x16xf32>
    %78 = vector.multi_reduction <maximumf>, %77, %cst_21 [2] : vector<2x16x16xf32> to vector<2x16xf32>
    %79 = vector.shape_cast %78 : vector<2x16xf32> to vector<2x16x1xf32>
    %80 = vector.broadcast %79 : vector<2x16x1xf32> to vector<2x16x16xf32>
    %81 = arith.cmpf oge, %77, %80 : vector<2x16x16xf32>
    %cst_22 = arith.constant 0xFF800000 : f32
    %82 = vector.broadcast %cst_22 : f32 to vector<2x16x16xf32>
    %83 = arith.select %81, %82, %77 : vector<2x16x16xi1>, vector<2x16x16xf32>
    %cst_23 = arith.constant dense<0xFF800000> : vector<2x16xf32>
    %84 = vector.multi_reduction <maximumf>, %83, %cst_23 [2] : vector<2x16x16xf32> to vector<2x16xf32>
    %85 = vector.shape_cast %84 : vector<2x16xf32> to vector<2x16x1xf32>
    %86 = vector.broadcast %85 : vector<2x16x1xf32> to vector<2x16x16xf32>
    %87 = arith.cmpf oge, %83, %86 : vector<2x16x16xf32>
    %cst_24 = arith.constant 0xFF800000 : f32
    %88 = vector.broadcast %cst_24 : f32 to vector<2x16x16xf32>
    %89 = arith.select %87, %88, %83 : vector<2x16x16xi1>, vector<2x16x16xf32>
    %cst_25 = arith.constant dense<0xFF800000> : vector<2x16xf32>
    %90 = vector.multi_reduction <maximumf>, %89, %cst_25 [2] : vector<2x16x16xf32> to vector<2x16xf32>
    %91 = vector.shape_cast %90 : vector<2x16xf32> to vector<2x16x1xf32>
    %92 = vector.broadcast %91 : vector<2x16x1xf32> to vector<2x16x16xf32>
    %93 = arith.cmpf oge, %89, %92 : vector<2x16x16xf32>
    %cst_26 = arith.constant 0xFF800000 : f32
    %94 = vector.broadcast %cst_26 : f32 to vector<2x16x16xf32>
    %95 = arith.select %93, %94, %89 : vector<2x16x16xi1>, vector<2x16x16xf32>
    %cst_27 = arith.constant dense<0xFF800000> : vector<2x16xf32>
    %96 = vector.multi_reduction <maximumf>, %95, %cst_27 [2] : vector<2x16x16xf32> to vector<2x16xf32>
    %97 = vector.shape_cast %96 : vector<2x16xf32> to vector<2x16x1xf32>
    %98 = vector.broadcast %97 : vector<2x16x1xf32> to vector<2x16x16xf32>
    %99 = arith.cmpf oge, %95, %98 : vector<2x16x16xf32>
    %cst_28 = arith.constant 0xFF800000 : f32
    %100 = vector.broadcast %cst_28 : f32 to vector<2x16x16xf32>
    %101 = arith.select %99, %100, %95 : vector<2x16x16xi1>, vector<2x16x16xf32>
    %cst_29 = arith.constant dense<0xFF800000> : vector<2x16xf32>
    %102 = vector.multi_reduction <maximumf>, %101, %cst_29 [2] : vector<2x16x16xf32> to vector<2x16xf32>
    %103 = vector.shape_cast %102 : vector<2x16xf32> to vector<2x16x1xf32>
    %104 = vector.broadcast %103 : vector<2x16x1xf32> to vector<2x16x16xf32>
    %105 = arith.cmpf oge, %101, %104 : vector<2x16x16xf32>
    %cst_30 = arith.constant 0xFF800000 : f32
    %106 = vector.broadcast %cst_30 : f32 to vector<2x16x16xf32>
    %107 = arith.select %105, %106, %101 : vector<2x16x16xi1>, vector<2x16x16xf32>
    %cst_31 = arith.constant dense<0xFF800000> : vector<2x16xf32>
    %108 = vector.multi_reduction <maximumf>, %107, %cst_31 [2] : vector<2x16x16xf32> to vector<2x16xf32>
    %109 = vector.shape_cast %108 : vector<2x16xf32> to vector<2x16x1xf32>
    %110 = vector.broadcast %109 : vector<2x16x1xf32> to vector<2x16x16xf32>
    %111 = arith.cmpf oge, %77, %110 : vector<2x16x16xf32>
    %cst_32 = arith.constant 0xFF800000 : f32
    %112 = vector.broadcast %cst_32 : f32 to vector<2x16x16xf32>
    %113 = arith.select %111, %77, %112 : vector<2x16x16xi1>, vector<2x16x16xf32>
    %cst_33 = arith.constant dense<0xFF800000> : vector<2x16xf32>
    %114 = vector.multi_reduction <maximumf>, %113, %cst_33 [2] : vector<2x16x16xf32> to vector<2x16xf32>
    %115 = vector.shape_cast %114 : vector<2x16xf32> to vector<2x16x1xf32>
    %116 = vector.broadcast %115 : vector<2x16x1xf32> to vector<2x16x16xf32>
    %117 = arith.subf %113, %116 : vector<2x16x16xf32>
    %118 = math.exp %117 : vector<2x16x16xf32>
    %cst_34 = arith.constant dense<0.000000e+00> : vector<2x16xf32>
    %119 = vector.multi_reduction <add>, %118, %cst_34 [2] : vector<2x16x16xf32> to vector<2x16xf32>
    %120 = vector.shape_cast %119 : vector<2x16xf32> to vector<2x16x1xf32>
    %121 = vector.broadcast %120 : vector<2x16x1xf32> to vector<2x16x16xf32>
    %122 = arith.divf %118, %121 : vector<2x16x16xf32>
    "tpu.trace_start"() <{level = 10 : i32, message = "bnm,bmd->bnd"}> : () -> ()
    %cst_35 = arith.constant dense<0.000000e+00> : vector<2x16x128xf32>
    %123 = tpu.matmul %122, %69, %cst_35 {dimension_numbers = #tpu.dot_dimension_numbers<[2], [1], [1], [2], [0, 0, 0, 1, 1, 2], [0], [0]>} : vector<2x16x16xf32>, vector<2x16x128xf32>, vector<2x16x128xf32> -> vector<2x16x128xf32>
    "tpu.trace_stop"() : () -> ()
    %124 = vector.extract_strided_slice %9 {offsets = [0, 32], sizes = [32, 32], strides = [1, 1]} : vector<32x1536xf32> to vector<32x32xf32>
    %125 = vector.shape_cast %124 : vector<32x32xf32> to vector<2x16x32xf32>
    %126 = vector.extract_strided_slice %9 {offsets = [0, 288], sizes = [32, 32], strides = [1, 1]} : vector<32x1536xf32> to vector<32x32xf32>
    %127 = vector.shape_cast %126 : vector<32x32xf32> to vector<2x16x32xf32>
    %128 = vector.extract_strided_slice %9 {offsets = [0, 640], sizes = [32, 128], strides = [1, 1]} : vector<32x1536xf32> to vector<32x128xf32>
    %129 = vector.shape_cast %128 : vector<32x128xf32> to vector<2x16x128xf32>
    "tpu.trace_start"() <{level = 10 : i32, message = "bnk,bmk->bnm"}> : () -> ()
    %cst_36 = arith.constant dense<0.000000e+00> : vector<2x16x16xf32>
    %130 = tpu.matmul %125, %127, %cst_36 {dimension_numbers = #tpu.dot_dimension_numbers<[2], [2], [1], [1], [0, 0, 0, 1, 1, 1], [0], [0]>} : vector<2x16x32xf32>, vector<2x16x32xf32>, vector<2x16x16xf32> -> vector<2x16x16xf32>
    "tpu.trace_stop"() : () -> ()
    %cst_37 = arith.constant 0.176776692 : f32
    %131 = vector.broadcast %cst_37 : f32 to vector<2x16x16xf32>
    %132 = arith.mulf %130, %131 : vector<2x16x16xf32>
    %133 = vector.extract_strided_slice %63 {offsets = [1, 0, 0], sizes = [1, 16, 16], strides = [1, 1, 1]} : vector<8x16x16xf32> to vector<1x16x16xf32>
    %134 = vector.shape_cast %133 : vector<1x16x16xf32> to vector<16x16xf32>
    %135 = vector.shape_cast %134 : vector<16x16xf32> to vector<1x16x16xf32>
    %136 = vector.broadcast %135 : vector<1x16x16xf32> to vector<2x16x16xf32>
    %137 = arith.addf %132, %136 : vector<2x16x16xf32>
    %cst_38 = arith.constant dense<0xFF800000> : vector<2x16xf32>
    %138 = vector.multi_reduction <maximumf>, %137, %cst_38 [2] : vector<2x16x16xf32> to vector<2x16xf32>
    %139 = vector.shape_cast %138 : vector<2x16xf32> to vector<2x16x1xf32>
    %140 = vector.broadcast %139 : vector<2x16x1xf32> to vector<2x16x16xf32>
    %141 = arith.cmpf oge, %137, %140 : vector<2x16x16xf32>
    %cst_39 = arith.constant 0xFF800000 : f32
    %142 = vector.broadcast %cst_39 : f32 to vector<2x16x16xf32>
    %143 = arith.select %141, %142, %137 : vector<2x16x16xi1>, vector<2x16x16xf32>
    %cst_40 = arith.constant dense<0xFF800000> : vector<2x16xf32>
    %144 = vector.multi_reduction <maximumf>, %143, %cst_40 [2] : vector<2x16x16xf32> to vector<2x16xf32>
    %145 = vector.shape_cast %144 : vector<2x16xf32> to vector<2x16x1xf32>
    %146 = vector.broadcast %145 : vector<2x16x1xf32> to vector<2x16x16xf32>
    %147 = arith.cmpf oge, %143, %146 : vector<2x16x16xf32>
    %cst_41 = arith.constant 0xFF800000 : f32
    %148 = vector.broadcast %cst_41 : f32 to vector<2x16x16xf32>
    %149 = arith.select %147, %148, %143 : vector<2x16x16xi1>, vector<2x16x16xf32>
    %cst_42 = arith.constant dense<0xFF800000> : vector<2x16xf32>
    %150 = vector.multi_reduction <maximumf>, %149, %cst_42 [2] : vector<2x16x16xf32> to vector<2x16xf32>
    %151 = vector.shape_cast %150 : vector<2x16xf32> to vector<2x16x1xf32>
    %152 = vector.broadcast %151 : vector<2x16x1xf32> to vector<2x16x16xf32>
    %153 = arith.cmpf oge, %149, %152 : vector<2x16x16xf32>
    %cst_43 = arith.constant 0xFF800000 : f32
    %154 = vector.broadcast %cst_43 : f32 to vector<2x16x16xf32>
    %155 = arith.select %153, %154, %149 : vector<2x16x16xi1>, vector<2x16x16xf32>
    %cst_44 = arith.constant dense<0xFF800000> : vector<2x16xf32>
    %156 = vector.multi_reduction <maximumf>, %155, %cst_44 [2] : vector<2x16x16xf32> to vector<2x16xf32>
    %157 = vector.shape_cast %156 : vector<2x16xf32> to vector<2x16x1xf32>
    %158 = vector.broadcast %157 : vector<2x16x1xf32> to vector<2x16x16xf32>
    %159 = arith.cmpf oge, %155, %158 : vector<2x16x16xf32>
    %cst_45 = arith.constant 0xFF800000 : f32
    %160 = vector.broadcast %cst_45 : f32 to vector<2x16x16xf32>
    %161 = arith.select %159, %160, %155 : vector<2x16x16xi1>, vector<2x16x16xf32>
    %cst_46 = arith.constant dense<0xFF800000> : vector<2x16xf32>
    %162 = vector.multi_reduction <maximumf>, %161, %cst_46 [2] : vector<2x16x16xf32> to vector<2x16xf32>
    %163 = vector.shape_cast %162 : vector<2x16xf32> to vector<2x16x1xf32>
    %164 = vector.broadcast %163 : vector<2x16x1xf32> to vector<2x16x16xf32>
    %165 = arith.cmpf oge, %161, %164 : vector<2x16x16xf32>
    %cst_47 = arith.constant 0xFF800000 : f32
    %166 = vector.broadcast %cst_47 : f32 to vector<2x16x16xf32>
    %167 = arith.select %165, %166, %161 : vector<2x16x16xi1>, vector<2x16x16xf32>
    %cst_48 = arith.constant dense<0xFF800000> : vector<2x16xf32>
    %168 = vector.multi_reduction <maximumf>, %167, %cst_48 [2] : vector<2x16x16xf32> to vector<2x16xf32>
    %169 = vector.shape_cast %168 : vector<2x16xf32> to vector<2x16x1xf32>
    %170 = vector.broadcast %169 : vector<2x16x1xf32> to vector<2x16x16xf32>
    %171 = arith.cmpf oge, %137, %170 : vector<2x16x16xf32>
    %cst_49 = arith.constant 0xFF800000 : f32
    %172 = vector.broadcast %cst_49 : f32 to vector<2x16x16xf32>
    %173 = arith.select %171, %137, %172 : vector<2x16x16xi1>, vector<2x16x16xf32>
    %cst_50 = arith.constant dense<0xFF800000> : vector<2x16xf32>
    %174 = vector.multi_reduction <maximumf>, %173, %cst_50 [2] : vector<2x16x16xf32> to vector<2x16xf32>
    %175 = vector.shape_cast %174 : vector<2x16xf32> to vector<2x16x1xf32>
    %176 = vector.broadcast %175 : vector<2x16x1xf32> to vector<2x16x16xf32>
    %177 = arith.subf %173, %176 : vector<2x16x16xf32>
    %178 = math.exp %177 : vector<2x16x16xf32>
    %cst_51 = arith.constant dense<0.000000e+00> : vector<2x16xf32>
    %179 = vector.multi_reduction <add>, %178, %cst_51 [2] : vector<2x16x16xf32> to vector<2x16xf32>
    %180 = vector.shape_cast %179 : vector<2x16xf32> to vector<2x16x1xf32>
    %181 = vector.broadcast %180 : vector<2x16x1xf32> to vector<2x16x16xf32>
    %182 = arith.divf %178, %181 : vector<2x16x16xf32>
    "tpu.trace_start"() <{level = 10 : i32, message = "bnm,bmd->bnd"}> : () -> ()
    %cst_52 = arith.constant dense<0.000000e+00> : vector<2x16x128xf32>
    %183 = tpu.matmul %182, %129, %cst_52 {dimension_numbers = #tpu.dot_dimension_numbers<[2], [1], [1], [2], [0, 0, 0, 1, 1, 2], [0], [0]>} : vector<2x16x16xf32>, vector<2x16x128xf32>, vector<2x16x128xf32> -> vector<2x16x128xf32>
    "tpu.trace_stop"() : () -> ()
    %184 = vector.extract_strided_slice %9 {offsets = [0, 64], sizes = [32, 32], strides = [1, 1]} : vector<32x1536xf32> to vector<32x32xf32>
    %185 = vector.shape_cast %184 : vector<32x32xf32> to vector<2x16x32xf32>
    %186 = vector.extract_strided_slice %9 {offsets = [0, 320], sizes = [32, 32], strides = [1, 1]} : vector<32x1536xf32> to vector<32x32xf32>
    %187 = vector.shape_cast %186 : vector<32x32xf32> to vector<2x16x32xf32>
    %188 = vector.extract_strided_slice %9 {offsets = [0, 768], sizes = [32, 128], strides = [1, 1]} : vector<32x1536xf32> to vector<32x128xf32>
    %189 = vector.shape_cast %188 : vector<32x128xf32> to vector<2x16x128xf32>
    "tpu.trace_start"() <{level = 10 : i32, message = "bnk,bmk->bnm"}> : () -> ()
    %cst_53 = arith.constant dense<0.000000e+00> : vector<2x16x16xf32>
    %190 = tpu.matmul %185, %187, %cst_53 {dimension_numbers = #tpu.dot_dimension_numbers<[2], [2], [1], [1], [0, 0, 0, 1, 1, 1], [0], [0]>} : vector<2x16x32xf32>, vector<2x16x32xf32>, vector<2x16x16xf32> -> vector<2x16x16xf32>
    "tpu.trace_stop"() : () -> ()
    %cst_54 = arith.constant 0.176776692 : f32
    %191 = vector.broadcast %cst_54 : f32 to vector<2x16x16xf32>
    %192 = arith.mulf %190, %191 : vector<2x16x16xf32>
    %193 = vector.extract_strided_slice %63 {offsets = [2, 0, 0], sizes = [1, 16, 16], strides = [1, 1, 1]} : vector<8x16x16xf32> to vector<1x16x16xf32>
    %194 = vector.shape_cast %193 : vector<1x16x16xf32> to vector<16x16xf32>
    %195 = vector.shape_cast %194 : vector<16x16xf32> to vector<1x16x16xf32>
    %196 = vector.broadcast %195 : vector<1x16x16xf32> to vector<2x16x16xf32>
    %197 = arith.addf %192, %196 : vector<2x16x16xf32>
    %cst_55 = arith.constant dense<0xFF800000> : vector<2x16xf32>
    %198 = vector.multi_reduction <maximumf>, %197, %cst_55 [2] : vector<2x16x16xf32> to vector<2x16xf32>
    %199 = vector.shape_cast %198 : vector<2x16xf32> to vector<2x16x1xf32>
    %200 = vector.broadcast %199 : vector<2x16x1xf32> to vector<2x16x16xf32>
    %201 = arith.cmpf oge, %197, %200 : vector<2x16x16xf32>
    %cst_56 = arith.constant 0xFF800000 : f32
    %202 = vector.broadcast %cst_56 : f32 to vector<2x16x16xf32>
    %203 = arith.select %201, %202, %197 : vector<2x16x16xi1>, vector<2x16x16xf32>
    %cst_57 = arith.constant dense<0xFF800000> : vector<2x16xf32>
    %204 = vector.multi_reduction <maximumf>, %203, %cst_57 [2] : vector<2x16x16xf32> to vector<2x16xf32>
    %205 = vector.shape_cast %204 : vector<2x16xf32> to vector<2x16x1xf32>
    %206 = vector.broadcast %205 : vector<2x16x1xf32> to vector<2x16x16xf32>
    %207 = arith.cmpf oge, %203, %206 : vector<2x16x16xf32>
    %cst_58 = arith.constant 0xFF800000 : f32
    %208 = vector.broadcast %cst_58 : f32 to vector<2x16x16xf32>
    %209 = arith.select %207, %208, %203 : vector<2x16x16xi1>, vector<2x16x16xf32>
    %cst_59 = arith.constant dense<0xFF800000> : vector<2x16xf32>
    %210 = vector.multi_reduction <maximumf>, %209, %cst_59 [2] : vector<2x16x16xf32> to vector<2x16xf32>
    %211 = vector.shape_cast %210 : vector<2x16xf32> to vector<2x16x1xf32>
    %212 = vector.broadcast %211 : vector<2x16x1xf32> to vector<2x16x16xf32>
    %213 = arith.cmpf oge, %209, %212 : vector<2x16x16xf32>
    %cst_60 = arith.constant 0xFF800000 : f32
    %214 = vector.broadcast %cst_60 : f32 to vector<2x16x16xf32>
    %215 = arith.select %213, %214, %209 : vector<2x16x16xi1>, vector<2x16x16xf32>
    %cst_61 = arith.constant dense<0xFF800000> : vector<2x16xf32>
    %216 = vector.multi_reduction <maximumf>, %215, %cst_61 [2] : vector<2x16x16xf32> to vector<2x16xf32>
    %217 = vector.shape_cast %216 : vector<2x16xf32> to vector<2x16x1xf32>
    %218 = vector.broadcast %217 : vector<2x16x1xf32> to vector<2x16x16xf32>
    %219 = arith.cmpf oge, %215, %218 : vector<2x16x16xf32>
    %cst_62 = arith.constant 0xFF800000 : f32
    %220 = vector.broadcast %cst_62 : f32 to vector<2x16x16xf32>
    %221 = arith.select %219, %220, %215 : vector<2x16x16xi1>, vector<2x16x16xf32>
    %cst_63 = arith.constant dense<0xFF800000> : vector<2x16xf32>
    %222 = vector.multi_reduction <maximumf>, %221, %cst_63 [2] : vector<2x16x16xf32> to vector<2x16xf32>
    %223 = vector.shape_cast %222 : vector<2x16xf32> to vector<2x16x1xf32>
    %224 = vector.broadcast %223 : vector<2x16x1xf32> to vector<2x16x16xf32>
    %225 = arith.cmpf oge, %221, %224 : vector<2x16x16xf32>
    %cst_64 = arith.constant 0xFF800000 : f32
    %226 = vector.broadcast %cst_64 : f32 to vector<2x16x16xf32>
    %227 = arith.select %225, %226, %221 : vector<2x16x16xi1>, vector<2x16x16xf32>
    %cst_65 = arith.constant dense<0xFF800000> : vector<2x16xf32>
    %228 = vector.multi_reduction <maximumf>, %227, %cst_65 [2] : vector<2x16x16xf32> to vector<2x16xf32>
    %229 = vector.shape_cast %228 : vector<2x16xf32> to vector<2x16x1xf32>
    %230 = vector.broadcast %229 : vector<2x16x1xf32> to vector<2x16x16xf32>
    %231 = arith.cmpf oge, %197, %230 : vector<2x16x16xf32>
    %cst_66 = arith.constant 0xFF800000 : f32
    %232 = vector.broadcast %cst_66 : f32 to vector<2x16x16xf32>
    %233 = arith.select %231, %197, %232 : vector<2x16x16xi1>, vector<2x16x16xf32>
    %cst_67 = arith.constant dense<0xFF800000> : vector<2x16xf32>
    %234 = vector.multi_reduction <maximumf>, %233, %cst_67 [2] : vector<2x16x16xf32> to vector<2x16xf32>
    %235 = vector.shape_cast %234 : vector<2x16xf32> to vector<2x16x1xf32>
    %236 = vector.broadcast %235 : vector<2x16x1xf32> to vector<2x16x16xf32>
    %237 = arith.subf %233, %236 : vector<2x16x16xf32>
    %238 = math.exp %237 : vector<2x16x16xf32>
    %cst_68 = arith.constant dense<0.000000e+00> : vector<2x16xf32>
    %239 = vector.multi_reduction <add>, %238, %cst_68 [2] : vector<2x16x16xf32> to vector<2x16xf32>
    %240 = vector.shape_cast %239 : vector<2x16xf32> to vector<2x16x1xf32>
    %241 = vector.broadcast %240 : vector<2x16x1xf32> to vector<2x16x16xf32>
    %242 = arith.divf %238, %241 : vector<2x16x16xf32>
    "tpu.trace_start"() <{level = 10 : i32, message = "bnm,bmd->bnd"}> : () -> ()
    %cst_69 = arith.constant dense<0.000000e+00> : vector<2x16x128xf32>
    %243 = tpu.matmul %242, %189, %cst_69 {dimension_numbers = #tpu.dot_dimension_numbers<[2], [1], [1], [2], [0, 0, 0, 1, 1, 2], [0], [0]>} : vector<2x16x16xf32>, vector<2x16x128xf32>, vector<2x16x128xf32> -> vector<2x16x128xf32>
    "tpu.trace_stop"() : () -> ()
    %244 = vector.extract_strided_slice %9 {offsets = [0, 96], sizes = [32, 32], strides = [1, 1]} : vector<32x1536xf32> to vector<32x32xf32>
    %245 = vector.shape_cast %244 : vector<32x32xf32> to vector<2x16x32xf32>
    %246 = vector.extract_strided_slice %9 {offsets = [0, 352], sizes = [32, 32], strides = [1, 1]} : vector<32x1536xf32> to vector<32x32xf32>
    %247 = vector.shape_cast %246 : vector<32x32xf32> to vector<2x16x32xf32>
    %248 = vector.extract_strided_slice %9 {offsets = [0, 896], sizes = [32, 128], strides = [1, 1]} : vector<32x1536xf32> to vector<32x128xf32>
    %249 = vector.shape_cast %248 : vector<32x128xf32> to vector<2x16x128xf32>
    "tpu.trace_start"() <{level = 10 : i32, message = "bnk,bmk->bnm"}> : () -> ()
    %cst_70 = arith.constant dense<0.000000e+00> : vector<2x16x16xf32>
    %250 = tpu.matmul %245, %247, %cst_70 {dimension_numbers = #tpu.dot_dimension_numbers<[2], [2], [1], [1], [0, 0, 0, 1, 1, 1], [0], [0]>} : vector<2x16x32xf32>, vector<2x16x32xf32>, vector<2x16x16xf32> -> vector<2x16x16xf32>
    "tpu.trace_stop"() : () -> ()
    %cst_71 = arith.constant 0.176776692 : f32
    %251 = vector.broadcast %cst_71 : f32 to vector<2x16x16xf32>
    %252 = arith.mulf %250, %251 : vector<2x16x16xf32>
    %253 = vector.extract_strided_slice %63 {offsets = [3, 0, 0], sizes = [1, 16, 16], strides = [1, 1, 1]} : vector<8x16x16xf32> to vector<1x16x16xf32>
    %254 = vector.shape_cast %253 : vector<1x16x16xf32> to vector<16x16xf32>
    %255 = vector.shape_cast %254 : vector<16x16xf32> to vector<1x16x16xf32>
    %256 = vector.broadcast %255 : vector<1x16x16xf32> to vector<2x16x16xf32>
    %257 = arith.addf %252, %256 : vector<2x16x16xf32>
    %cst_72 = arith.constant dense<0xFF800000> : vector<2x16xf32>
    %258 = vector.multi_reduction <maximumf>, %257, %cst_72 [2] : vector<2x16x16xf32> to vector<2x16xf32>
    %259 = vector.shape_cast %258 : vector<2x16xf32> to vector<2x16x1xf32>
    %260 = vector.broadcast %259 : vector<2x16x1xf32> to vector<2x16x16xf32>
    %261 = arith.cmpf oge, %257, %260 : vector<2x16x16xf32>
    %cst_73 = arith.constant 0xFF800000 : f32
    %262 = vector.broadcast %cst_73 : f32 to vector<2x16x16xf32>
    %263 = arith.select %261, %262, %257 : vector<2x16x16xi1>, vector<2x16x16xf32>
    %cst_74 = arith.constant dense<0xFF800000> : vector<2x16xf32>
    %264 = vector.multi_reduction <maximumf>, %263, %cst_74 [2] : vector<2x16x16xf32> to vector<2x16xf32>
    %265 = vector.shape_cast %264 : vector<2x16xf32> to vector<2x16x1xf32>
    %266 = vector.broadcast %265 : vector<2x16x1xf32> to vector<2x16x16xf32>
    %267 = arith.cmpf oge, %263, %266 : vector<2x16x16xf32>
    %cst_75 = arith.constant 0xFF800000 : f32
    %268 = vector.broadcast %cst_75 : f32 to vector<2x16x16xf32>
    %269 = arith.select %267, %268, %263 : vector<2x16x16xi1>, vector<2x16x16xf32>
    %cst_76 = arith.constant dense<0xFF800000> : vector<2x16xf32>
    %270 = vector.multi_reduction <maximumf>, %269, %cst_76 [2] : vector<2x16x16xf32> to vector<2x16xf32>
    %271 = vector.shape_cast %270 : vector<2x16xf32> to vector<2x16x1xf32>
    %272 = vector.broadcast %271 : vector<2x16x1xf32> to vector<2x16x16xf32>
    %273 = arith.cmpf oge, %269, %272 : vector<2x16x16xf32>
    %cst_77 = arith.constant 0xFF800000 : f32
    %274 = vector.broadcast %cst_77 : f32 to vector<2x16x16xf32>
    %275 = arith.select %273, %274, %269 : vector<2x16x16xi1>, vector<2x16x16xf32>
    %cst_78 = arith.constant dense<0xFF800000> : vector<2x16xf32>
    %276 = vector.multi_reduction <maximumf>, %275, %cst_78 [2] : vector<2x16x16xf32> to vector<2x16xf32>
    %277 = vector.shape_cast %276 : vector<2x16xf32> to vector<2x16x1xf32>
    %278 = vector.broadcast %277 : vector<2x16x1xf32> to vector<2x16x16xf32>
    %279 = arith.cmpf oge, %275, %278 : vector<2x16x16xf32>
    %cst_79 = arith.constant 0xFF800000 : f32
    %280 = vector.broadcast %cst_79 : f32 to vector<2x16x16xf32>
    %281 = arith.select %279, %280, %275 : vector<2x16x16xi1>, vector<2x16x16xf32>
    %cst_80 = arith.constant dense<0xFF800000> : vector<2x16xf32>
    %282 = vector.multi_reduction <maximumf>, %281, %cst_80 [2] : vector<2x16x16xf32> to vector<2x16xf32>
    %283 = vector.shape_cast %282 : vector<2x16xf32> to vector<2x16x1xf32>
    %284 = vector.broadcast %283 : vector<2x16x1xf32> to vector<2x16x16xf32>
    %285 = arith.cmpf oge, %281, %284 : vector<2x16x16xf32>
    %cst_81 = arith.constant 0xFF800000 : f32
    %286 = vector.broadcast %cst_81 : f32 to vector<2x16x16xf32>
    %287 = arith.select %285, %286, %281 : vector<2x16x16xi1>, vector<2x16x16xf32>
    %cst_82 = arith.constant dense<0xFF800000> : vector<2x16xf32>
    %288 = vector.multi_reduction <maximumf>, %287, %cst_82 [2] : vector<2x16x16xf32> to vector<2x16xf32>
    %289 = vector.shape_cast %288 : vector<2x16xf32> to vector<2x16x1xf32>
    %290 = vector.broadcast %289 : vector<2x16x1xf32> to vector<2x16x16xf32>
    %291 = arith.cmpf oge, %257, %290 : vector<2x16x16xf32>
    %cst_83 = arith.constant 0xFF800000 : f32
    %292 = vector.broadcast %cst_83 : f32 to vector<2x16x16xf32>
    %293 = arith.select %291, %257, %292 : vector<2x16x16xi1>, vector<2x16x16xf32>
    %cst_84 = arith.constant dense<0xFF800000> : vector<2x16xf32>
    %294 = vector.multi_reduction <maximumf>, %293, %cst_84 [2] : vector<2x16x16xf32> to vector<2x16xf32>
    %295 = vector.shape_cast %294 : vector<2x16xf32> to vector<2x16x1xf32>
    %296 = vector.broadcast %295 : vector<2x16x1xf32> to vector<2x16x16xf32>
    %297 = arith.subf %293, %296 : vector<2x16x16xf32>
    %298 = math.exp %297 : vector<2x16x16xf32>
    %cst_85 = arith.constant dense<0.000000e+00> : vector<2x16xf32>
    %299 = vector.multi_reduction <add>, %298, %cst_85 [2] : vector<2x16x16xf32> to vector<2x16xf32>
    %300 = vector.shape_cast %299 : vector<2x16xf32> to vector<2x16x1xf32>
    %301 = vector.broadcast %300 : vector<2x16x1xf32> to vector<2x16x16xf32>
    %302 = arith.divf %298, %301 : vector<2x16x16xf32>
    "tpu.trace_start"() <{level = 10 : i32, message = "bnm,bmd->bnd"}> : () -> ()
    %cst_86 = arith.constant dense<0.000000e+00> : vector<2x16x128xf32>
    %303 = tpu.matmul %302, %249, %cst_86 {dimension_numbers = #tpu.dot_dimension_numbers<[2], [1], [1], [2], [0, 0, 0, 1, 1, 2], [0], [0]>} : vector<2x16x16xf32>, vector<2x16x128xf32>, vector<2x16x128xf32> -> vector<2x16x128xf32>
    "tpu.trace_stop"() : () -> ()
    %304 = vector.extract_strided_slice %9 {offsets = [0, 128], sizes = [32, 32], strides = [1, 1]} : vector<32x1536xf32> to vector<32x32xf32>
    %305 = vector.shape_cast %304 : vector<32x32xf32> to vector<2x16x32xf32>
    %306 = vector.extract_strided_slice %9 {offsets = [0, 384], sizes = [32, 32], strides = [1, 1]} : vector<32x1536xf32> to vector<32x32xf32>
    %307 = vector.shape_cast %306 : vector<32x32xf32> to vector<2x16x32xf32>
    %308 = vector.extract_strided_slice %9 {offsets = [0, 1024], sizes = [32, 128], strides = [1, 1]} : vector<32x1536xf32> to vector<32x128xf32>
    %309 = vector.shape_cast %308 : vector<32x128xf32> to vector<2x16x128xf32>
    "tpu.trace_start"() <{level = 10 : i32, message = "bnk,bmk->bnm"}> : () -> ()
    %cst_87 = arith.constant dense<0.000000e+00> : vector<2x16x16xf32>
    %310 = tpu.matmul %305, %307, %cst_87 {dimension_numbers = #tpu.dot_dimension_numbers<[2], [2], [1], [1], [0, 0, 0, 1, 1, 1], [0], [0]>} : vector<2x16x32xf32>, vector<2x16x32xf32>, vector<2x16x16xf32> -> vector<2x16x16xf32>
    "tpu.trace_stop"() : () -> ()
    %cst_88 = arith.constant 0.176776692 : f32
    %311 = vector.broadcast %cst_88 : f32 to vector<2x16x16xf32>
    %312 = arith.mulf %310, %311 : vector<2x16x16xf32>
    %313 = vector.extract_strided_slice %63 {offsets = [4, 0, 0], sizes = [1, 16, 16], strides = [1, 1, 1]} : vector<8x16x16xf32> to vector<1x16x16xf32>
    %314 = vector.shape_cast %313 : vector<1x16x16xf32> to vector<16x16xf32>
    %315 = vector.shape_cast %314 : vector<16x16xf32> to vector<1x16x16xf32>
    %316 = vector.broadcast %315 : vector<1x16x16xf32> to vector<2x16x16xf32>
    %317 = arith.addf %312, %316 : vector<2x16x16xf32>
    %cst_89 = arith.constant dense<0xFF800000> : vector<2x16xf32>
    %318 = vector.multi_reduction <maximumf>, %317, %cst_89 [2] : vector<2x16x16xf32> to vector<2x16xf32>
    %319 = vector.shape_cast %318 : vector<2x16xf32> to vector<2x16x1xf32>
    %320 = vector.broadcast %319 : vector<2x16x1xf32> to vector<2x16x16xf32>
    %321 = arith.cmpf oge, %317, %320 : vector<2x16x16xf32>
    %cst_90 = arith.constant 0xFF800000 : f32
    %322 = vector.broadcast %cst_90 : f32 to vector<2x16x16xf32>
    %323 = arith.select %321, %322, %317 : vector<2x16x16xi1>, vector<2x16x16xf32>
    %cst_91 = arith.constant dense<0xFF800000> : vector<2x16xf32>
    %324 = vector.multi_reduction <maximumf>, %323, %cst_91 [2] : vector<2x16x16xf32> to vector<2x16xf32>
    %325 = vector.shape_cast %324 : vector<2x16xf32> to vector<2x16x1xf32>
    %326 = vector.broadcast %325 : vector<2x16x1xf32> to vector<2x16x16xf32>
    %327 = arith.cmpf oge, %323, %326 : vector<2x16x16xf32>
    %cst_92 = arith.constant 0xFF800000 : f32
    %328 = vector.broadcast %cst_92 : f32 to vector<2x16x16xf32>
    %329 = arith.select %327, %328, %323 : vector<2x16x16xi1>, vector<2x16x16xf32>
    %cst_93 = arith.constant dense<0xFF800000> : vector<2x16xf32>
    %330 = vector.multi_reduction <maximumf>, %329, %cst_93 [2] : vector<2x16x16xf32> to vector<2x16xf32>
    %331 = vector.shape_cast %330 : vector<2x16xf32> to vector<2x16x1xf32>
    %332 = vector.broadcast %331 : vector<2x16x1xf32> to vector<2x16x16xf32>
    %333 = arith.cmpf oge, %329, %332 : vector<2x16x16xf32>
    %cst_94 = arith.constant 0xFF800000 : f32
    %334 = vector.broadcast %cst_94 : f32 to vector<2x16x16xf32>
    %335 = arith.select %333, %334, %329 : vector<2x16x16xi1>, vector<2x16x16xf32>
    %cst_95 = arith.constant dense<0xFF800000> : vector<2x16xf32>
    %336 = vector.multi_reduction <maximumf>, %335, %cst_95 [2] : vector<2x16x16xf32> to vector<2x16xf32>
    %337 = vector.shape_cast %336 : vector<2x16xf32> to vector<2x16x1xf32>
    %338 = vector.broadcast %337 : vector<2x16x1xf32> to vector<2x16x16xf32>
    %339 = arith.cmpf oge, %335, %338 : vector<2x16x16xf32>
    %cst_96 = arith.constant 0xFF800000 : f32
    %340 = vector.broadcast %cst_96 : f32 to vector<2x16x16xf32>
    %341 = arith.select %339, %340, %335 : vector<2x16x16xi1>, vector<2x16x16xf32>
    %cst_97 = arith.constant dense<0xFF800000> : vector<2x16xf32>
    %342 = vector.multi_reduction <maximumf>, %341, %cst_97 [2] : vector<2x16x16xf32> to vector<2x16xf32>
    %343 = vector.shape_cast %342 : vector<2x16xf32> to vector<2x16x1xf32>
    %344 = vector.broadcast %343 : vector<2x16x1xf32> to vector<2x16x16xf32>
    %345 = arith.cmpf oge, %341, %344 : vector<2x16x16xf32>
    %cst_98 = arith.constant 0xFF800000 : f32
    %346 = vector.broadcast %cst_98 : f32 to vector<2x16x16xf32>
    %347 = arith.select %345, %346, %341 : vector<2x16x16xi1>, vector<2x16x16xf32>
    %cst_99 = arith.constant dense<0xFF800000> : vector<2x16xf32>
    %348 = vector.multi_reduction <maximumf>, %347, %cst_99 [2] : vector<2x16x16xf32> to vector<2x16xf32>
    %349 = vector.shape_cast %348 : vector<2x16xf32> to vector<2x16x1xf32>
    %350 = vector.broadcast %349 : vector<2x16x1xf32> to vector<2x16x16xf32>
    %351 = arith.cmpf oge, %317, %350 : vector<2x16x16xf32>
    %cst_100 = arith.constant 0xFF800000 : f32
    %352 = vector.broadcast %cst_100 : f32 to vector<2x16x16xf32>
    %353 = arith.select %351, %317, %352 : vector<2x16x16xi1>, vector<2x16x16xf32>
    %cst_101 = arith.constant dense<0xFF800000> : vector<2x16xf32>
    %354 = vector.multi_reduction <maximumf>, %353, %cst_101 [2] : vector<2x16x16xf32> to vector<2x16xf32>
    %355 = vector.shape_cast %354 : vector<2x16xf32> to vector<2x16x1xf32>
    %356 = vector.broadcast %355 : vector<2x16x1xf32> to vector<2x16x16xf32>
    %357 = arith.subf %353, %356 : vector<2x16x16xf32>
    %358 = math.exp %357 : vector<2x16x16xf32>
    %cst_102 = arith.constant dense<0.000000e+00> : vector<2x16xf32>
    %359 = vector.multi_reduction <add>, %358, %cst_102 [2] : vector<2x16x16xf32> to vector<2x16xf32>
    %360 = vector.shape_cast %359 : vector<2x16xf32> to vector<2x16x1xf32>
    %361 = vector.broadcast %360 : vector<2x16x1xf32> to vector<2x16x16xf32>
    %362 = arith.divf %358, %361 : vector<2x16x16xf32>
    "tpu.trace_start"() <{level = 10 : i32, message = "bnm,bmd->bnd"}> : () -> ()
    %cst_103 = arith.constant dense<0.000000e+00> : vector<2x16x128xf32>
    %363 = tpu.matmul %362, %309, %cst_103 {dimension_numbers = #tpu.dot_dimension_numbers<[2], [1], [1], [2], [0, 0, 0, 1, 1, 2], [0], [0]>} : vector<2x16x16xf32>, vector<2x16x128xf32>, vector<2x16x128xf32> -> vector<2x16x128xf32>
    "tpu.trace_stop"() : () -> ()
    %364 = vector.extract_strided_slice %9 {offsets = [0, 160], sizes = [32, 32], strides = [1, 1]} : vector<32x1536xf32> to vector<32x32xf32>
    %365 = vector.shape_cast %364 : vector<32x32xf32> to vector<2x16x32xf32>
    %366 = vector.extract_strided_slice %9 {offsets = [0, 416], sizes = [32, 32], strides = [1, 1]} : vector<32x1536xf32> to vector<32x32xf32>
    %367 = vector.shape_cast %366 : vector<32x32xf32> to vector<2x16x32xf32>
    %368 = vector.extract_strided_slice %9 {offsets = [0, 1152], sizes = [32, 128], strides = [1, 1]} : vector<32x1536xf32> to vector<32x128xf32>
    %369 = vector.shape_cast %368 : vector<32x128xf32> to vector<2x16x128xf32>
    "tpu.trace_start"() <{level = 10 : i32, message = "bnk,bmk->bnm"}> : () -> ()
    %cst_104 = arith.constant dense<0.000000e+00> : vector<2x16x16xf32>
    %370 = tpu.matmul %365, %367, %cst_104 {dimension_numbers = #tpu.dot_dimension_numbers<[2], [2], [1], [1], [0, 0, 0, 1, 1, 1], [0], [0]>} : vector<2x16x32xf32>, vector<2x16x32xf32>, vector<2x16x16xf32> -> vector<2x16x16xf32>
    "tpu.trace_stop"() : () -> ()
    %cst_105 = arith.constant 0.176776692 : f32
    %371 = vector.broadcast %cst_105 : f32 to vector<2x16x16xf32>
    %372 = arith.mulf %370, %371 : vector<2x16x16xf32>
    %373 = vector.extract_strided_slice %63 {offsets = [5, 0, 0], sizes = [1, 16, 16], strides = [1, 1, 1]} : vector<8x16x16xf32> to vector<1x16x16xf32>
    %374 = vector.shape_cast %373 : vector<1x16x16xf32> to vector<16x16xf32>
    %375 = vector.shape_cast %374 : vector<16x16xf32> to vector<1x16x16xf32>
    %376 = vector.broadcast %375 : vector<1x16x16xf32> to vector<2x16x16xf32>
    %377 = arith.addf %372, %376 : vector<2x16x16xf32>
    %cst_106 = arith.constant dense<0xFF800000> : vector<2x16xf32>
    %378 = vector.multi_reduction <maximumf>, %377, %cst_106 [2] : vector<2x16x16xf32> to vector<2x16xf32>
    %379 = vector.shape_cast %378 : vector<2x16xf32> to vector<2x16x1xf32>
    %380 = vector.broadcast %379 : vector<2x16x1xf32> to vector<2x16x16xf32>
    %381 = arith.cmpf oge, %377, %380 : vector<2x16x16xf32>
    %cst_107 = arith.constant 0xFF800000 : f32
    %382 = vector.broadcast %cst_107 : f32 to vector<2x16x16xf32>
    %383 = arith.select %381, %382, %377 : vector<2x16x16xi1>, vector<2x16x16xf32>
    %cst_108 = arith.constant dense<0xFF800000> : vector<2x16xf32>
    %384 = vector.multi_reduction <maximumf>, %383, %cst_108 [2] : vector<2x16x16xf32> to vector<2x16xf32>
    %385 = vector.shape_cast %384 : vector<2x16xf32> to vector<2x16x1xf32>
    %386 = vector.broadcast %385 : vector<2x16x1xf32> to vector<2x16x16xf32>
    %387 = arith.cmpf oge, %383, %386 : vector<2x16x16xf32>
    %cst_109 = arith.constant 0xFF800000 : f32
    %388 = vector.broadcast %cst_109 : f32 to vector<2x16x16xf32>
    %389 = arith.select %387, %388, %383 : vector<2x16x16xi1>, vector<2x16x16xf32>
    %cst_110 = arith.constant dense<0xFF800000> : vector<2x16xf32>
    %390 = vector.multi_reduction <maximumf>, %389, %cst_110 [2] : vector<2x16x16xf32> to vector<2x16xf32>
    %391 = vector.shape_cast %390 : vector<2x16xf32> to vector<2x16x1xf32>
    %392 = vector.broadcast %391 : vector<2x16x1xf32> to vector<2x16x16xf32>
    %393 = arith.cmpf oge, %389, %392 : vector<2x16x16xf32>
    %cst_111 = arith.constant 0xFF800000 : f32
    %394 = vector.broadcast %cst_111 : f32 to vector<2x16x16xf32>
    %395 = arith.select %393, %394, %389 : vector<2x16x16xi1>, vector<2x16x16xf32>
    %cst_112 = arith.constant dense<0xFF800000> : vector<2x16xf32>
    %396 = vector.multi_reduction <maximumf>, %395, %cst_112 [2] : vector<2x16x16xf32> to vector<2x16xf32>
    %397 = vector.shape_cast %396 : vector<2x16xf32> to vector<2x16x1xf32>
    %398 = vector.broadcast %397 : vector<2x16x1xf32> to vector<2x16x16xf32>
    %399 = arith.cmpf oge, %395, %398 : vector<2x16x16xf32>
    %cst_113 = arith.constant 0xFF800000 : f32
    %400 = vector.broadcast %cst_113 : f32 to vector<2x16x16xf32>
    %401 = arith.select %399, %400, %395 : vector<2x16x16xi1>, vector<2x16x16xf32>
    %cst_114 = arith.constant dense<0xFF800000> : vector<2x16xf32>
    %402 = vector.multi_reduction <maximumf>, %401, %cst_114 [2] : vector<2x16x16xf32> to vector<2x16xf32>
    %403 = vector.shape_cast %402 : vector<2x16xf32> to vector<2x16x1xf32>
    %404 = vector.broadcast %403 : vector<2x16x1xf32> to vector<2x16x16xf32>
    %405 = arith.cmpf oge, %401, %404 : vector<2x16x16xf32>
    %cst_115 = arith.constant 0xFF800000 : f32
    %406 = vector.broadcast %cst_115 : f32 to vector<2x16x16xf32>
    %407 = arith.select %405, %406, %401 : vector<2x16x16xi1>, vector<2x16x16xf32>
    %cst_116 = arith.constant dense<0xFF800000> : vector<2x16xf32>
    %408 = vector.multi_reduction <maximumf>, %407, %cst_116 [2] : vector<2x16x16xf32> to vector<2x16xf32>
    %409 = vector.shape_cast %408 : vector<2x16xf32> to vector<2x16x1xf32>
    %410 = vector.broadcast %409 : vector<2x16x1xf32> to vector<2x16x16xf32>
    %411 = arith.cmpf oge, %377, %410 : vector<2x16x16xf32>
    %cst_117 = arith.constant 0xFF800000 : f32
    %412 = vector.broadcast %cst_117 : f32 to vector<2x16x16xf32>
    %413 = arith.select %411, %377, %412 : vector<2x16x16xi1>, vector<2x16x16xf32>
    %cst_118 = arith.constant dense<0xFF800000> : vector<2x16xf32>
    %414 = vector.multi_reduction <maximumf>, %413, %cst_118 [2] : vector<2x16x16xf32> to vector<2x16xf32>
    %415 = vector.shape_cast %414 : vector<2x16xf32> to vector<2x16x1xf32>
    %416 = vector.broadcast %415 : vector<2x16x1xf32> to vector<2x16x16xf32>
    %417 = arith.subf %413, %416 : vector<2x16x16xf32>
    %418 = math.exp %417 : vector<2x16x16xf32>
    %cst_119 = arith.constant dense<0.000000e+00> : vector<2x16xf32>
    %419 = vector.multi_reduction <add>, %418, %cst_119 [2] : vector<2x16x16xf32> to vector<2x16xf32>
    %420 = vector.shape_cast %419 : vector<2x16xf32> to vector<2x16x1xf32>
    %421 = vector.broadcast %420 : vector<2x16x1xf32> to vector<2x16x16xf32>
    %422 = arith.divf %418, %421 : vector<2x16x16xf32>
    "tpu.trace_start"() <{level = 10 : i32, message = "bnm,bmd->bnd"}> : () -> ()
    %cst_120 = arith.constant dense<0.000000e+00> : vector<2x16x128xf32>
    %423 = tpu.matmul %422, %369, %cst_120 {dimension_numbers = #tpu.dot_dimension_numbers<[2], [1], [1], [2], [0, 0, 0, 1, 1, 2], [0], [0]>} : vector<2x16x16xf32>, vector<2x16x128xf32>, vector<2x16x128xf32> -> vector<2x16x128xf32>
    "tpu.trace_stop"() : () -> ()
    %424 = vector.extract_strided_slice %9 {offsets = [0, 192], sizes = [32, 32], strides = [1, 1]} : vector<32x1536xf32> to vector<32x32xf32>
    %425 = vector.shape_cast %424 : vector<32x32xf32> to vector<2x16x32xf32>
    %426 = vector.extract_strided_slice %9 {offsets = [0, 448], sizes = [32, 32], strides = [1, 1]} : vector<32x1536xf32> to vector<32x32xf32>
    %427 = vector.shape_cast %426 : vector<32x32xf32> to vector<2x16x32xf32>
    %428 = vector.extract_strided_slice %9 {offsets = [0, 1280], sizes = [32, 128], strides = [1, 1]} : vector<32x1536xf32> to vector<32x128xf32>
    %429 = vector.shape_cast %428 : vector<32x128xf32> to vector<2x16x128xf32>
    "tpu.trace_start"() <{level = 10 : i32, message = "bnk,bmk->bnm"}> : () -> ()
    %cst_121 = arith.constant dense<0.000000e+00> : vector<2x16x16xf32>
    %430 = tpu.matmul %425, %427, %cst_121 {dimension_numbers = #tpu.dot_dimension_numbers<[2], [2], [1], [1], [0, 0, 0, 1, 1, 1], [0], [0]>} : vector<2x16x32xf32>, vector<2x16x32xf32>, vector<2x16x16xf32> -> vector<2x16x16xf32>
    "tpu.trace_stop"() : () -> ()
    %cst_122 = arith.constant 0.176776692 : f32
    %431 = vector.broadcast %cst_122 : f32 to vector<2x16x16xf32>
    %432 = arith.mulf %430, %431 : vector<2x16x16xf32>
    %433 = vector.extract_strided_slice %63 {offsets = [6, 0, 0], sizes = [1, 16, 16], strides = [1, 1, 1]} : vector<8x16x16xf32> to vector<1x16x16xf32>
    %434 = vector.shape_cast %433 : vector<1x16x16xf32> to vector<16x16xf32>
    %435 = vector.shape_cast %434 : vector<16x16xf32> to vector<1x16x16xf32>
    %436 = vector.broadcast %435 : vector<1x16x16xf32> to vector<2x16x16xf32>
    %437 = arith.addf %432, %436 : vector<2x16x16xf32>
    %cst_123 = arith.constant dense<0xFF800000> : vector<2x16xf32>
    %438 = vector.multi_reduction <maximumf>, %437, %cst_123 [2] : vector<2x16x16xf32> to vector<2x16xf32>
    %439 = vector.shape_cast %438 : vector<2x16xf32> to vector<2x16x1xf32>
    %440 = vector.broadcast %439 : vector<2x16x1xf32> to vector<2x16x16xf32>
    %441 = arith.subf %437, %440 : vector<2x16x16xf32>
    %442 = math.exp %441 : vector<2x16x16xf32>
    %cst_124 = arith.constant dense<0.000000e+00> : vector<2x16xf32>
    %443 = vector.multi_reduction <add>, %442, %cst_124 [2] : vector<2x16x16xf32> to vector<2x16xf32>
    %444 = vector.shape_cast %443 : vector<2x16xf32> to vector<2x16x1xf32>
    %445 = vector.broadcast %444 : vector<2x16x1xf32> to vector<2x16x16xf32>
    %446 = arith.divf %442, %445 : vector<2x16x16xf32>
    "tpu.trace_start"() <{level = 10 : i32, message = "bnm,bmd->bnd"}> : () -> ()
    %cst_125 = arith.constant dense<0.000000e+00> : vector<2x16x128xf32>
    %447 = tpu.matmul %446, %429, %cst_125 {dimension_numbers = #tpu.dot_dimension_numbers<[2], [1], [1], [2], [0, 0, 0, 1, 1, 2], [0], [0]>} : vector<2x16x16xf32>, vector<2x16x128xf32>, vector<2x16x128xf32> -> vector<2x16x128xf32>
    "tpu.trace_stop"() : () -> ()
    %448 = vector.extract_strided_slice %9 {offsets = [0, 224], sizes = [32, 32], strides = [1, 1]} : vector<32x1536xf32> to vector<32x32xf32>
    %449 = vector.shape_cast %448 : vector<32x32xf32> to vector<2x16x32xf32>
    %450 = vector.extract_strided_slice %9 {offsets = [0, 480], sizes = [32, 32], strides = [1, 1]} : vector<32x1536xf32> to vector<32x32xf32>
    %451 = vector.shape_cast %450 : vector<32x32xf32> to vector<2x16x32xf32>
    %452 = vector.extract_strided_slice %9 {offsets = [0, 1408], sizes = [32, 128], strides = [1, 1]} : vector<32x1536xf32> to vector<32x128xf32>
    %453 = vector.shape_cast %452 : vector<32x128xf32> to vector<2x16x128xf32>
    "tpu.trace_start"() <{level = 10 : i32, message = "bnk,bmk->bnm"}> : () -> ()
    %cst_126 = arith.constant dense<0.000000e+00> : vector<2x16x16xf32>
    %454 = tpu.matmul %449, %451, %cst_126 {dimension_numbers = #tpu.dot_dimension_numbers<[2], [2], [1], [1], [0, 0, 0, 1, 1, 1], [0], [0]>} : vector<2x16x32xf32>, vector<2x16x32xf32>, vector<2x16x16xf32> -> vector<2x16x16xf32>
    "tpu.trace_stop"() : () -> ()
    %cst_127 = arith.constant 0.176776692 : f32
    %455 = vector.broadcast %cst_127 : f32 to vector<2x16x16xf32>
    %456 = arith.mulf %454, %455 : vector<2x16x16xf32>
    %457 = vector.extract_strided_slice %63 {offsets = [7, 0, 0], sizes = [1, 16, 16], strides = [1, 1, 1]} : vector<8x16x16xf32> to vector<1x16x16xf32>
    %458 = vector.shape_cast %457 : vector<1x16x16xf32> to vector<16x16xf32>
    %459 = vector.shape_cast %458 : vector<16x16xf32> to vector<1x16x16xf32>
    %460 = vector.broadcast %459 : vector<1x16x16xf32> to vector<2x16x16xf32>
    %461 = arith.addf %456, %460 : vector<2x16x16xf32>
    %cst_128 = arith.constant dense<0xFF800000> : vector<2x16xf32>
    %462 = vector.multi_reduction <maximumf>, %461, %cst_128 [2] : vector<2x16x16xf32> to vector<2x16xf32>
    %463 = vector.shape_cast %462 : vector<2x16xf32> to vector<2x16x1xf32>
    %464 = vector.broadcast %463 : vector<2x16x1xf32> to vector<2x16x16xf32>
    %465 = arith.subf %461, %464 : vector<2x16x16xf32>
    %466 = math.exp %465 : vector<2x16x16xf32>
    %cst_129 = arith.constant dense<0.000000e+00> : vector<2x16xf32>
    %467 = vector.multi_reduction <add>, %466, %cst_129 [2] : vector<2x16x16xf32> to vector<2x16xf32>
    %468 = vector.shape_cast %467 : vector<2x16xf32> to vector<2x16x1xf32>
    %469 = vector.broadcast %468 : vector<2x16x1xf32> to vector<2x16x16xf32>
    %470 = arith.divf %466, %469 : vector<2x16x16xf32>
    "tpu.trace_start"() <{level = 10 : i32, message = "bnm,bmd->bnd"}> : () -> ()
    %cst_130 = arith.constant dense<0.000000e+00> : vector<2x16x128xf32>
    %471 = tpu.matmul %470, %453, %cst_130 {dimension_numbers = #tpu.dot_dimension_numbers<[2], [1], [1], [2], [0, 0, 0, 1, 1, 2], [0], [0]>} : vector<2x16x16xf32>, vector<2x16x128xf32>, vector<2x16x128xf32> -> vector<2x16x128xf32>
    "tpu.trace_stop"() : () -> ()
    %472 = tpu.concatenate %123, %183, %243, %303, %363, %423, %447, %471 in 2 : vector<2x16x128xf32>, vector<2x16x128xf32>, vector<2x16x128xf32>, vector<2x16x128xf32>, vector<2x16x128xf32>, vector<2x16x128xf32>, vector<2x16x128xf32>, vector<2x16x128xf32> -> vector<2x16x1024xf32>
    %473 = vector.shape_cast %472 : vector<2x16x1024xf32> to vector<32x1024xf32>
    %474 = arith.addf %473, %62 : vector<32x1024xf32>
    %cst_131 = arith.constant 0.000000e+00 : f32
    %475 = vector.broadcast %cst_131 : f32 to vector<32x1024xf32>
    %476 = arith.maximumf %474, %475 : vector<32x1024xf32>
    %c0_132 = arith.constant 0 : index
    %c0_133 = arith.constant 0 : index
    %477 = vector.load %arg9[%c0_132, %c0_133] : memref<1024x32xf32, #tpu.memory_space<vmem>>, vector<1024x32xf32>
    %cst_134 = arith.constant dense<0.000000e+00> : vector<32x32xf32>
    %478 = tpu.matmul %476, %477, %cst_134 {dimension_numbers = #tpu.dot_dimension_numbers<[1], [0], [0], [1], [0, 0, 1, 1], [], []>} : vector<32x1024xf32>, vector<1024x32xf32>, vector<32x32xf32> -> vector<32x32xf32>
    %c0_135 = arith.constant 0 : index
    %c0_136 = arith.constant 0 : index
    %479 = vector.load %arg10[%c0_135, %c0_136] : memref<1x32xf32, #tpu.memory_space<vmem>>, vector<1x32xf32>
    %480 = vector.broadcast %479 : vector<1x32xf32> to vector<32x32xf32>
    %481 = arith.mulf %478, %480 : vector<32x32xf32>
    %c0_137 = arith.constant 0 : index
    %c0_138 = arith.constant 0 : index
    %482 = vector.load %arg11[%c0_137, %c0_138] : memref<1x32xf32, #tpu.memory_space<vmem>>, vector<1x32xf32>
    %483 = vector.broadcast %482 : vector<1x32xf32> to vector<32x32xf32>
    %484 = arith.addf %481, %483 : vector<32x32xf32>
    %c0_139 = arith.constant 0 : index
    %c0_140 = arith.constant 0 : index
    %485 = vector.load %arg12[%c0_139, %c0_140] : memref<1x32xf32, #tpu.memory_space<vmem>>, vector<1x32xf32>
    %486 = vector.broadcast %485 : vector<1x32xf32> to vector<32x32xf32>
    %487 = arith.mulf %486, %484 : vector<32x32xf32>
    %488 = arith.addf %0, %487 : vector<32x32xf32>
    %c0_141 = arith.constant 0 : index
    %c0_142 = arith.constant 0 : index
    %489 = vector.load %arg13[%c0_141, %c0_142] : memref<32x128xf32, #tpu.memory_space<vmem>>, vector<32x128xf32>
    %cst_143 = arith.constant dense<0.000000e+00> : vector<32x128xf32>
    %490 = tpu.matmul %488, %489, %cst_143 {dimension_numbers = #tpu.dot_dimension_numbers<[1], [0], [0], [1], [0, 0, 1, 1], [], []>} : vector<32x32xf32>, vector<32x128xf32>, vector<32x128xf32> -> vector<32x128xf32>
    %c0_144 = arith.constant 0 : index
    %c0_145 = arith.constant 0 : index
    %491 = vector.load %arg14[%c0_144, %c0_145] : memref<1x128xf32, #tpu.memory_space<vmem>>, vector<1x128xf32>
    %492 = vector.broadcast %491 : vector<1x128xf32> to vector<32x128xf32>
    %493 = arith.mulf %490, %492 : vector<32x128xf32>
    %c0_146 = arith.constant 0 : index
    %c0_147 = arith.constant 0 : index
    %494 = vector.load %arg15[%c0_146, %c0_147] : memref<1x128xf32, #tpu.memory_space<vmem>>, vector<1x128xf32>
    %495 = vector.broadcast %494 : vector<1x128xf32> to vector<32x128xf32>
    %496 = arith.addf %493, %495 : vector<32x128xf32>
    %cst_148 = arith.constant 0.000000e+00 : f32
    %497 = vector.broadcast %cst_148 : f32 to vector<32x128xf32>
    %498 = arith.maximumf %496, %497 : vector<32x128xf32>
    %c0_149 = arith.constant 0 : index
    %c0_150 = arith.constant 0 : index
    %499 = vector.load %arg16[%c0_149, %c0_150] : memref<9x128xf32, #tpu.memory_space<vmem>>, vector<9x128xf32>
    %c0_151 = arith.constant 0 : index
    %c0_152 = arith.constant 0 : index
    %500 = vector.load %arg17[%c0_151, %c0_152] : memref<1x128xf32, #tpu.memory_space<vmem>>, vector<1x128xf32>
    %c0_153 = arith.constant 0 : index
    %c0_154 = arith.constant 0 : index
    %501 = vector.load %arg18[%c0_153, %c0_154] : memref<1x128xf32, #tpu.memory_space<vmem>>, vector<1x128xf32>
    %cst_155 = arith.constant dense<0.000000e+00> : vector<288x128xf32>
    %502 = tpu.matmul %1, %498, %cst_155 {dimension_numbers = #tpu.dot_dimension_numbers<[1], [0], [0], [1], [0, 0, 1, 1], [], []>} : vector<288x32xf32>, vector<32x128xf32>, vector<288x128xf32> -> vector<288x128xf32>
    %503 = vector.extract_strided_slice %502 {offsets = [0, 0], sizes = [32, 128], strides = [1, 1]} : vector<288x128xf32> to vector<32x128xf32>
    %504 = vector.extract_strided_slice %499 {offsets = [0, 0], sizes = [1, 128], strides = [1, 1]} : vector<9x128xf32> to vector<1x128xf32>
    %505 = vector.broadcast %504 : vector<1x128xf32> to vector<32x128xf32>
    %506 = arith.mulf %503, %505 : vector<32x128xf32>
    %507 = vector.extract_strided_slice %502 {offsets = [32, 0], sizes = [32, 128], strides = [1, 1]} : vector<288x128xf32> to vector<32x128xf32>
    %508 = vector.extract_strided_slice %499 {offsets = [1, 0], sizes = [1, 128], strides = [1, 1]} : vector<9x128xf32> to vector<1x128xf32>
    %509 = vector.broadcast %508 : vector<1x128xf32> to vector<32x128xf32>
    %510 = arith.mulf %507, %509 : vector<32x128xf32>
    %511 = arith.addf %506, %510 : vector<32x128xf32>
    %512 = vector.extract_strided_slice %502 {offsets = [64, 0], sizes = [32, 128], strides = [1, 1]} : vector<288x128xf32> to vector<32x128xf32>
    %513 = vector.extract_strided_slice %499 {offsets = [2, 0], sizes = [1, 128], strides = [1, 1]} : vector<9x128xf32> to vector<1x128xf32>
    %514 = vector.broadcast %513 : vector<1x128xf32> to vector<32x128xf32>
    %515 = arith.mulf %512, %514 : vector<32x128xf32>
    %516 = arith.addf %511, %515 : vector<32x128xf32>
    %517 = vector.extract_strided_slice %502 {offsets = [96, 0], sizes = [32, 128], strides = [1, 1]} : vector<288x128xf32> to vector<32x128xf32>
    %518 = vector.extract_strided_slice %499 {offsets = [3, 0], sizes = [1, 128], strides = [1, 1]} : vector<9x128xf32> to vector<1x128xf32>
    %519 = vector.broadcast %518 : vector<1x128xf32> to vector<32x128xf32>
    %520 = arith.mulf %517, %519 : vector<32x128xf32>
    %521 = arith.addf %516, %520 : vector<32x128xf32>
    %522 = vector.extract_strided_slice %502 {offsets = [128, 0], sizes = [32, 128], strides = [1, 1]} : vector<288x128xf32> to vector<32x128xf32>
    %523 = vector.extract_strided_slice %499 {offsets = [4, 0], sizes = [1, 128], strides = [1, 1]} : vector<9x128xf32> to vector<1x128xf32>
    %524 = vector.broadcast %523 : vector<1x128xf32> to vector<32x128xf32>
    %525 = arith.mulf %522, %524 : vector<32x128xf32>
    %526 = arith.addf %521, %525 : vector<32x128xf32>
    %527 = vector.extract_strided_slice %502 {offsets = [160, 0], sizes = [32, 128], strides = [1, 1]} : vector<288x128xf32> to vector<32x128xf32>
    %528 = vector.extract_strided_slice %499 {offsets = [5, 0], sizes = [1, 128], strides = [1, 1]} : vector<9x128xf32> to vector<1x128xf32>
    %529 = vector.broadcast %528 : vector<1x128xf32> to vector<32x128xf32>
    %530 = arith.mulf %527, %529 : vector<32x128xf32>
    %531 = arith.addf %526, %530 : vector<32x128xf32>
    %532 = vector.extract_strided_slice %502 {offsets = [192, 0], sizes = [32, 128], strides = [1, 1]} : vector<288x128xf32> to vector<32x128xf32>
    %533 = vector.extract_strided_slice %499 {offsets = [6, 0], sizes = [1, 128], strides = [1, 1]} : vector<9x128xf32> to vector<1x128xf32>
    %534 = vector.broadcast %533 : vector<1x128xf32> to vector<32x128xf32>
    %535 = arith.mulf %532, %534 : vector<32x128xf32>
    %536 = arith.addf %531, %535 : vector<32x128xf32>
    %537 = vector.extract_strided_slice %502 {offsets = [224, 0], sizes = [32, 128], strides = [1, 1]} : vector<288x128xf32> to vector<32x128xf32>
    %538 = vector.extract_strided_slice %499 {offsets = [7, 0], sizes = [1, 128], strides = [1, 1]} : vector<9x128xf32> to vector<1x128xf32>
    %539 = vector.broadcast %538 : vector<1x128xf32> to vector<32x128xf32>
    %540 = arith.mulf %537, %539 : vector<32x128xf32>
    %541 = arith.addf %536, %540 : vector<32x128xf32>
    %542 = vector.extract_strided_slice %502 {offsets = [256, 0], sizes = [32, 128], strides = [1, 1]} : vector<288x128xf32> to vector<32x128xf32>
    %543 = vector.extract_strided_slice %499 {offsets = [8, 0], sizes = [1, 128], strides = [1, 1]} : vector<9x128xf32> to vector<1x128xf32>
    %544 = vector.broadcast %543 : vector<1x128xf32> to vector<32x128xf32>
    %545 = arith.mulf %542, %544 : vector<32x128xf32>
    %546 = arith.addf %541, %545 : vector<32x128xf32>
    %547 = vector.broadcast %500 : vector<1x128xf32> to vector<32x128xf32>
    %548 = arith.mulf %546, %547 : vector<32x128xf32>
    %549 = vector.broadcast %501 : vector<1x128xf32> to vector<32x128xf32>
    %550 = arith.addf %548, %549 : vector<32x128xf32>
    %cst_156 = arith.constant 0.000000e+00 : f32
    %551 = vector.broadcast %cst_156 : f32 to vector<32x128xf32>
    %552 = arith.maximumf %550, %551 : vector<32x128xf32>
    %c0_157 = arith.constant 0 : index
    %c0_158 = arith.constant 0 : index
    %553 = vector.load %arg19[%c0_157, %c0_158] : memref<128x32xf32, #tpu.memory_space<vmem>>, vector<128x32xf32>
    %cst_159 = arith.constant dense<0.000000e+00> : vector<32x32xf32>
    %554 = tpu.matmul %552, %553, %cst_159 {dimension_numbers = #tpu.dot_dimension_numbers<[1], [0], [0], [1], [0, 0, 1, 1], [], []>} : vector<32x128xf32>, vector<128x32xf32>, vector<32x32xf32> -> vector<32x32xf32>
    %c0_160 = arith.constant 0 : index
    %c0_161 = arith.constant 0 : index
    %555 = vector.load %arg20[%c0_160, %c0_161] : memref<1x32xf32, #tpu.memory_space<vmem>>, vector<1x32xf32>
    %556 = vector.broadcast %555 : vector<1x32xf32> to vector<32x32xf32>
    %557 = arith.mulf %554, %556 : vector<32x32xf32>
    %c0_162 = arith.constant 0 : index
    %c0_163 = arith.constant 0 : index
    %558 = vector.load %arg21[%c0_162, %c0_163] : memref<1x32xf32, #tpu.memory_space<vmem>>, vector<1x32xf32>
    %559 = vector.broadcast %558 : vector<1x32xf32> to vector<32x32xf32>
    %560 = arith.addf %557, %559 : vector<32x32xf32>
    %c0_164 = arith.constant 0 : index
    %c0_165 = arith.constant 0 : index
    %561 = vector.load %arg22[%c0_164, %c0_165] : memref<1x32xf32, #tpu.memory_space<vmem>>, vector<1x32xf32>
    %562 = vector.broadcast %561 : vector<1x32xf32> to vector<32x32xf32>
    %563 = arith.mulf %562, %560 : vector<32x32xf32>
    %564 = arith.addf %488, %563 : vector<32x32xf32>
    %c0_166 = arith.constant 0 : index
    %c0_167 = arith.constant 0 : index
    %565 = vector.load %arg23[%c0_166, %c0_167] : memref<32x32xf32, #tpu.memory_space<vmem>>, vector<32x32xf32>
    tpu.vector_store %arg23[%c0_166, %c0_167], %564 {strides = array<i32>} : memref<32x32xf32, #tpu.memory_space<vmem>>, vector<32x32xf32>,
    return
  }
}

</mosaic_0001>

<llo_original>
// kernel: _lambda_.1
$region0: #{_lambda_.1}
  #allocation0 [shape = 'u32[]', space=smem, size = 0x4, offset = 0x4, fixed_abs, tag = 'smem constant byte address 0x4 - core index']
  #allocation1 [shape = 'u32[72,128]{1,0:T(1,128)}', space=vmem, size = 0x9000, scoped, tag = 'internal scratch']
  %s0 = inlined_call_operand.hbm [shape: f32[32,32], index: 0, kind: input, shape index: {}]
  %s1 = inlined_call_operand.hbm [shape: f32[32,1536], index: 1, kind: input, shape index: {}]
  %s2 = inlined_call_operand.hbm [shape: f32[1,1536], index: 2, kind: input, shape index: {}]
  %s3 = inlined_call_operand.hbm [shape: f32[1,1536], index: 3, kind: input, shape index: {}]
  %s4 = inlined_call_operand.hbm [shape: f32[288,32], index: 4, kind: input, shape index: {}]
  %s5 = inlined_call_operand.hbm [shape: f32[9,1024], index: 5, kind: input, shape index: {}]
  %s6 = inlined_call_operand.hbm [shape: f32[1,1024], index: 6, kind: input, shape index: {}]
  %s7 = inlined_call_operand.hbm [shape: f32[1,1024], index: 7, kind: input, shape index: {}]
  %s8 = inlined_call_operand.hbm [shape: f32[8,16,16], index: 8, kind: input, shape index: {}]
  %s9 = inlined_call_operand.hbm [shape: f32[1024,32], index: 9, kind: input, shape index: {}]
  %s10 = inlined_call_operand.hbm [shape: f32[1,32], index: 10, kind: input, shape index: {}]
  %s11 = inlined_call_operand.hbm [shape: f32[1,32], index: 11, kind: input, shape index: {}]
  %s12 = inlined_call_operand.vmem [shape: f32[1,32], index: 12, kind: input, shape index: {}, may-alias: {12,22}]
  %s13 = inlined_call_operand.hbm [shape: f32[32,128], index: 13, kind: input, shape index: {}]
  %s14 = inlined_call_operand.hbm [shape: f32[1,128], index: 14, kind: input, shape index: {}]
  %s15 = inlined_call_operand.hbm [shape: f32[1,128], index: 15, kind: input, shape index: {}]
  %s16 = inlined_call_operand.vmem [shape: f32[9,128], index: 16, kind: input, shape index: {}]
  %s17 = inlined_call_operand.hbm [shape: f32[1,128], index: 17, kind: input, shape index: {}]
  %s18 = inlined_call_operand.vmem [shape: f32[1,128], index: 18, kind: input, shape index: {}]
  %s19 = inlined_call_operand.hbm [shape: f32[128,32], index: 19, kind: input, shape index: {}]
  %s20 = inlined_call_operand.vmem [shape: f32[1,32], index: 20, kind: input, shape index: {}]
  %s21 = inlined_call_operand.vmem [shape: f32[1,32], index: 21, kind: input, shape index: {}]
  %s22 = inlined_call_operand.vmem [shape: f32[1,32], index: 22, kind: input, shape index: {}, may-alias: {12,22}]
  %s23 = inlined_call_operand.hbm [shape: f32[32,32], index: 23, kind: output, shape index: {}]
  %s24 = sld [smem:[#allocation0]]
  $region170: #{_lambda_.1} parent=0
    _
  %s26 = ssub.s32 1, %s24
  %s27 = scalar_select 0, %s26, %s24
  $region1: #{_lambda_.1} parent=0
    #allocation2 [shape = 'u8[16384]{0}', space=vmem, size = 0x4000, scoped, tag = 'input window, operand 0, single buffered']
    #allocation3 [shape = 's32[1]{0}', space=sflag, size = 0x4, scoped, tag = 'scoped memory for _lambda_.1']
    #allocation4 [shape = 's32[1]{0}', space=sflag, size = 0x4, scoped, tag = 'scoped memory for _lambda_.1']
    #allocation5 [shape = 'u8[196608]{0}', space=vmem, size = 0x30000, scoped, tag = 'input window, operand 1, single buffered']
    #allocation6 [shape = 's32[1]{0}', space=sflag, size = 0x4, scoped, tag = 'scoped memory for _lambda_.1']
    #allocation7 [shape = 'u8[6144]{0}', space=vmem, size = 0x1800, scoped, tag = 'input window, operand 2, single buffered']
    #allocation8 [shape = 'u8[6144]{0}', space=vmem, size = 0x1800, scoped, tag = 'input window, operand 3, single buffered']
    #allocation9 [shape = 's32[1]{0}', space=sflag, size = 0x4, scoped, tag = 'scoped memory for _lambda_.1']
    #allocation10 [shape = 'u8[147456]{0}', space=vmem, size = 0x24000, scoped, tag = 'input window, operand 4, single buffered']
    #allocation11 [shape = 'u8[65536]{0}', space=vmem, size = 0x10000, scoped, tag = 'input window, operand 5, single buffered']
    #allocation12 [shape = 's32[1]{0}', space=sflag, size = 0x4, scoped, tag = 'scoped memory for _lambda_.1']
    #allocation13 [shape = 'u8[4096]{0}', space=vmem, size = 0x1000, scoped, tag = 'input window, operand 6, single buffered']
    #allocation14 [shape = 'u8[4096]{0}', space=vmem, size = 0x1000, scoped, tag = 'input window, operand 7, single buffered']
    #allocation15 [shape = 's32[1]{0}', space=sflag, size = 0x4, scoped, tag = 'scoped memory for _lambda_.1']
    #allocation16 [shape = 'u8[65536]{0}', space=vmem, size = 0x10000, scoped, tag = 'input window, operand 8, single buffered']
    #allocation17 [shape = 'u8[524288]{0}', space=vmem, size = 0x80000, scoped, tag = 'input window, operand 9, single buffered']
    #allocation18 [shape = 's32[1]{0}', space=sflag, size = 0x4, scoped, tag = 'scoped memory for _lambda_.1']
    #allocation19 [shape = 'u8[512]{0}', space=vmem, size = 0x400, scoped, tag = 'input window, operand 10, single buffered']
    #allocation20 [shape = 'u8[512]{0}', space=vmem, size = 0x400, scoped, tag = 'input window, operand 11, single buffered']
    #allocation21 [shape = 's32[1]{0}', space=sflag, size = 0x4, scoped, tag = 'scoped memory for _lambda_.1']
    #allocation22 [shape = 'u8[16384]{0}', space=vmem, size = 0x4000, scoped, tag = 'input window, operand 13, single buffered']
    #allocation23 [shape = 'u8[512]{0}', space=vmem, size = 0x400, scoped, tag = 'input window, operand 14, single buffered']
    #allocation24 [shape = 's32[1]{0}', space=sflag, size = 0x4, scoped, tag = 'scoped memory for _lambda_.1']
    #allocation25 [shape = 'u8[512]{0}', space=vmem, size = 0x400, scoped, tag = 'input window, operand 15, single buffered']
    #allocation26 [shape = 'u8[512]{0}', space=vmem, size = 0x400, scoped, tag = 'input window, operand 17, single buffered']
    #allocation27 [shape = 's32[1]{0}', space=sflag, size = 0x4, scoped, tag = 'scoped memory for _lambda_.1']
    #allocation28 [shape = 'u8[65536]{0}', space=vmem, size = 0x10000, scoped, tag = 'input window, operand 19, single buffered']
    #allocation29 [shape = 'u8[16384]{0}', space=vmem, size = 0x4000, scoped, tag = 'output window, operand 0, single buffered']
    %28 = vsyncpa [#allocation3], 0
    %29 = vsyncpa [#allocation6], 0
    %30 = vsyncpa [#allocation9], 0
    %31 = vsyncpa [#allocation12], 0
    %32 = vsyncpa [#allocation15], 0
    %33 = vsyncpa [#allocation18], 0
    %34 = vsyncpa [#allocation21], 0
    %35 = vsyncpa [#allocation24], 0
    %36 = vsyncpa [#allocation27], 0
    %37 = vsyncpa [#allocation4], 0
    // Predicated region
    $region2: #{_lambda_.1} parent=1 // pred_check
      _
    $region3: #{_lambda_.1} parent=1 // pred_check_branch
      %39 = sbr.rel (0) target = $region5
    $region4: #{_lambda_.1} parent=1 // pred_region
      %41 = vsyncadd [#allocation3], 0
      %s42 = sshll.u32 %s0, 4
      %s43 = int_to_ptr.hbm [resolvable:$true] %s42
      %s44 = sshll.u32 [#allocation2], 4
      %s45 = int_to_ptr.vmem [resolvable:$true] %s44
      %50 = dma.hbm_to_vmem [thread:$0]  %s43, 512, %s45, [#allocation3], 128, 128, 8
    $region5: #{_lambda_.1} parent=1 // pred_fallthru
      _
    // Predicated region
    $region6: #{_lambda_.1} parent=1 // pred_check
      _
    $region7: #{_lambda_.1} parent=1 // pred_check_branch
      %52 = sbr.rel (0) target = $region9
    $region8: #{_lambda_.1} parent=1 // pred_region
      %54 = vsyncadd [#allocation6], 0
      %s55 = sshll.u32 %s1, 4
      %s56 = int_to_ptr.hbm [resolvable:$true] %s55
      %s57 = sshll.u32 [#allocation5], 4
      %s58 = int_to_ptr.vmem [resolvable:$true] %s57
      %63 = dma.hbm_to_vmem [thread:$0]  %s56, 6144, %s58, [#allocation6], 1536, 1536, 96
    $region9: #{_lambda_.1} parent=1 // pred_fallthru
      _
    // Predicated region
    $region10: #{_lambda_.1} parent=1 // pred_check
      _
    $region11: #{_lambda_.1} parent=1 // pred_check_branch
      %65 = sbr.rel (0) target = $region13
    $region12: #{_lambda_.1} parent=1 // pred_region
      %67 = vsyncadd [#allocation6], 0
      %s69 = sshll.u32 %s2, 4
      %s70 = int_to_ptr.hbm [resolvable:$true] %s69
      %s71 = sshll.u32 [#allocation7], 4
      %s72 = int_to_ptr.vmem [resolvable:$true] %s71
      %74 = dma.hbm_to_vmem [thread:$0]  %s70, 192, %s72, [#allocation6]
    $region13: #{_lambda_.1} parent=1 // pred_fallthru
      _
    // Predicated region
    $region14: #{_lambda_.1} parent=1 // pred_check
      _
    $region15: #{_lambda_.1} parent=1 // pred_check_branch
      %76 = sbr.rel (0) target = $region17
    $region16: #{_lambda_.1} parent=1 // pred_region
      %78 = vsyncadd [#allocation9], 0
      %s80 = sshll.u32 %s3, 4
      %s81 = int_to_ptr.hbm [resolvable:$true] %s80
      %s82 = sshll.u32 [#allocation8], 4
      %s83 = int_to_ptr.vmem [resolvable:$true] %s82
      %85 = dma.hbm_to_vmem [thread:$0]  %s81, 192, %s83, [#allocation9]
    $region17: #{_lambda_.1} parent=1 // pred_fallthru
      _
    // Predicated region
    $region18: #{_lambda_.1} parent=1 // pred_check
      _
    $region19: #{_lambda_.1} parent=1 // pred_check_branch
      %87 = sbr.rel (0) target = $region21
    $region20: #{_lambda_.1} parent=1 // pred_region
      %89 = vsyncadd [#allocation9], 0
      %s90 = sshll.u32 %s4, 4
      %s91 = int_to_ptr.hbm [resolvable:$true] %s90
      %s92 = sshll.u32 [#allocation10], 4
      %s93 = int_to_ptr.vmem [resolvable:$true] %s92
      %98 = dma.hbm_to_vmem [thread:$0]  %s91, 4608, %s93, [#allocation9], 128, 128, 8
    $region21: #{_lambda_.1} parent=1 // pred_fallthru
      _
    // Predicated region
    $region22: #{_lambda_.1} parent=1 // pred_check
      _
    $region23: #{_lambda_.1} parent=1 // pred_check_branch
      %100 = sbr.rel (0) target = $region25
    $region24: #{_lambda_.1} parent=1 // pred_region
      %102 = vsyncadd [#allocation12], 0
      %s103 = sshll.u32 %s5, 4
      %s104 = int_to_ptr.hbm [resolvable:$true] %s103
      %s105 = sshll.u32 [#allocation11], 4
      %s106 = int_to_ptr.vmem [resolvable:$true] %s105
      %111 = dma.hbm_to_vmem [thread:$0]  %s104, 2048, %s106, [#allocation12], 1024, 1024, 64
    $region25: #{_lambda_.1} parent=1 // pred_fallthru
      _
    // Predicated region
    $region26: #{_lambda_.1} parent=1 // pred_check
      _
    $region27: #{_lambda_.1} parent=1 // pred_check_branch
      %113 = sbr.rel (0) target = $region29
    $region28: #{_lambda_.1} parent=1 // pred_region
      %115 = vsyncadd [#allocation12], 0
      %s117 = sshll.u32 %s6, 4
      %s118 = int_to_ptr.hbm [resolvable:$true] %s117
      %s119 = sshll.u32 [#allocation13], 4
      %s120 = int_to_ptr.vmem [resolvable:$true] %s119
      %122 = dma.hbm_to_vmem [thread:$0]  %s118, 128, %s120, [#allocation12]
    $region29: #{_lambda_.1} parent=1 // pred_fallthru
      _
    // Predicated region
    $region30: #{_lambda_.1} parent=1 // pred_check
      _
    $region31: #{_lambda_.1} parent=1 // pred_check_branch
      %124 = sbr.rel (0) target = $region33
    $region32: #{_lambda_.1} parent=1 // pred_region
      %126 = vsyncadd [#allocation15], 0
      %s128 = sshll.u32 %s7, 4
      %s129 = int_to_ptr.hbm [resolvable:$true] %s128
      %s130 = sshll.u32 [#allocation14], 4
      %s131 = int_to_ptr.vmem [resolvable:$true] %s130
      %133 = dma.hbm_to_vmem [thread:$0]  %s129, 128, %s131, [#allocation15]
    $region33: #{_lambda_.1} parent=1 // pred_fallthru
      _
    // Predicated region
    $region34: #{_lambda_.1} parent=1 // pred_check
      _
    $region35: #{_lambda_.1} parent=1 // pred_check_branch
      %135 = sbr.rel (0) target = $region37
    $region36: #{_lambda_.1} parent=1 // pred_region
      %137 = vsyncadd [#allocation15], 0
      %s138 = sshll.u32 %s8, 4
      %s139 = int_to_ptr.hbm [resolvable:$true] %s138
      %s140 = sshll.u32 [#allocation16], 4
      %s141 = int_to_ptr.vmem [resolvable:$true] %s140
      %146 = dma.hbm_to_vmem [thread:$0]  %s139, 2048, %s141, [#allocation15], 128, 128, 8
    $region37: #{_lambda_.1} parent=1 // pred_fallthru
      _
    // Predicated region
    $region38: #{_lambda_.1} parent=1 // pred_check
      _
    $region39: #{_lambda_.1} parent=1 // pred_check_branch
      %148 = sbr.rel (0) target = $region41
    $region40: #{_lambda_.1} parent=1 // pred_region
      %150 = vsyncadd [#allocation18], 0
      %s151 = sshll.u32 %s9, 4
      %s152 = int_to_ptr.hbm [resolvable:$true] %s151
      %s153 = sshll.u32 [#allocation17], 4
      %s154 = int_to_ptr.vmem [resolvable:$true] %s153
      %159 = dma.hbm_to_vmem [thread:$0]  %s152, 16384, %s154, [#allocation18], 128, 128, 8
    $region41: #{_lambda_.1} parent=1 // pred_fallthru
      _
    // Predicated region
    $region42: #{_lambda_.1} parent=1 // pred_check
      _
    $region43: #{_lambda_.1} parent=1 // pred_check_branch
      %161 = sbr.rel (0) target = $region45
    $region44: #{_lambda_.1} parent=1 // pred_region
      %163 = vsyncadd [#allocation18], 0
      %s165 = sshll.u32 %s10, 4
      %s166 = int_to_ptr.hbm [resolvable:$true] %s165
      %s167 = sshll.u32 [#allocation19], 4
      %s168 = int_to_ptr.vmem [resolvable:$true] %s167
      %170 = dma.hbm_to_vmem [thread:$0]  %s166, 16, %s168, [#allocation18]
    $region45: #{_lambda_.1} parent=1 // pred_fallthru
      _
    // Predicated region
    $region46: #{_lambda_.1} parent=1 // pred_check
      _
    $region47: #{_lambda_.1} parent=1 // pred_check_branch
      %172 = sbr.rel (0) target = $region49
    $region48: #{_lambda_.1} parent=1 // pred_region
      %174 = vsyncadd [#allocation21], 0
      %s176 = sshll.u32 %s11, 4
      %s177 = int_to_ptr.hbm [resolvable:$true] %s176
      %s178 = sshll.u32 [#allocation20], 4
      %s179 = int_to_ptr.vmem [resolvable:$true] %s178
      %181 = dma.hbm_to_vmem [thread:$0]  %s177, 16, %s179, [#allocation21]
    $region49: #{_lambda_.1} parent=1 // pred_fallthru
      _
    // Predicated region
    $region50: #{_lambda_.1} parent=1 // pred_check
      _
    $region51: #{_lambda_.1} parent=1 // pred_check_branch
      %183 = sbr.rel (0) target = $region53
    $region52: #{_lambda_.1} parent=1 // pred_region
      _
    $region53: #{_lambda_.1} parent=1 // pred_fallthru
      _
    // Predicated region
    $region54: #{_lambda_.1} parent=1 // pred_check
      _
    $region55: #{_lambda_.1} parent=1 // pred_check_branch
      %185 = sbr.rel (0) target = $region57
    $region56: #{_lambda_.1} parent=1 // pred_region
      %187 = vsyncadd [#allocation21], 0
      %s188 = sshll.u32 %s13, 4
      %s189 = int_to_ptr.hbm [resolvable:$true] %s188
      %s190 = sshll.u32 [#allocation22], 4
      %s191 = int_to_ptr.vmem [resolvable:$true] %s190
      %196 = dma.hbm_to_vmem [thread:$0]  %s189, 512, %s191, [#allocation21], 128, 128, 8
    $region57: #{_lambda_.1} parent=1 // pred_fallthru
      _
    // Predicated region
    $region58: #{_lambda_.1} parent=1 // pred_check
      _
    $region59: #{_lambda_.1} parent=1 // pred_check_branch
      %198 = sbr.rel (0) target = $region61
    $region60: #{_lambda_.1} parent=1 // pred_region
      %200 = vsyncadd [#allocation24], 0
      %s202 = sshll.u32 %s14, 4
      %s203 = int_to_ptr.hbm [resolvable:$true] %s202
      %s204 = sshll.u32 [#allocation23], 4
      %s205 = int_to_ptr.vmem [resolvable:$true] %s204
      %207 = dma.hbm_to_vmem [thread:$0]  %s203, 16, %s205, [#allocation24]
    $region61: #{_lambda_.1} parent=1 // pred_fallthru
      _
    // Predicated region
    $region62: #{_lambda_.1} parent=1 // pred_check
      _
    $region63: #{_lambda_.1} parent=1 // pred_check_branch
      %209 = sbr.rel (0) target = $region65
    $region64: #{_lambda_.1} parent=1 // pred_region
      %211 = vsyncadd [#allocation24], 0
      %s213 = sshll.u32 %s15, 4
      %s214 = int_to_ptr.hbm [resolvable:$true] %s213
      %s215 = sshll.u32 [#allocation25], 4
      %s216 = int_to_ptr.vmem [resolvable:$true] %s215
      %218 = dma.hbm_to_vmem [thread:$0]  %s214, 16, %s216, [#allocation24]
    $region65: #{_lambda_.1} parent=1 // pred_fallthru
      _
    // Predicated region
    $region66: #{_lambda_.1} parent=1 // pred_check
      _
    $region67: #{_lambda_.1} parent=1 // pred_check_branch
      %220 = sbr.rel (0) target = $region69
    $region68: #{_lambda_.1} parent=1 // pred_region
      _
    $region69: #{_lambda_.1} parent=1 // pred_fallthru
      _
    // Predicated region
    $region70: #{_lambda_.1} parent=1 // pred_check
      _
    $region71: #{_lambda_.1} parent=1 // pred_check_branch
      %222 = sbr.rel (0) target = $region73
    $region72: #{_lambda_.1} parent=1 // pred_region
      %224 = vsyncadd [#allocation27], 0
      %s226 = sshll.u32 %s17, 4
      %s227 = int_to_ptr.hbm [resolvable:$true] %s226
      %s228 = sshll.u32 [#allocation26], 4
      %s229 = int_to_ptr.vmem [resolvable:$true] %s228
      %231 = dma.hbm_to_vmem [thread:$0]  %s227, 16, %s229, [#allocation27]
    $region73: #{_lambda_.1} parent=1 // pred_fallthru
      _
    // Predicated region
    $region74: #{_lambda_.1} parent=1 // pred_check
      _
    $region75: #{_lambda_.1} parent=1 // pred_check_branch
      %233 = sbr.rel (0) target = $region77
    $region76: #{_lambda_.1} parent=1 // pred_region
      _
    $region77: #{_lambda_.1} parent=1 // pred_fallthru
      _
    // Predicated region
    $region78: #{_lambda_.1} parent=1 // pred_check
      _
    $region79: #{_lambda_.1} parent=1 // pred_check_branch
      %235 = sbr.rel (0) target = $region81
    $region80: #{_lambda_.1} parent=1 // pred_region
      %237 = vsyncadd [#allocation27], 0
      %s238 = sshll.u32 %s19, 4
      %s239 = int_to_ptr.hbm [resolvable:$true] %s238
      %s240 = sshll.u32 [#allocation28], 4
      %s241 = int_to_ptr.vmem [resolvable:$true] %s240
      %246 = dma.hbm_to_vmem [thread:$0]  %s239, 2048, %s241, [#allocation27], 128, 128, 8
    $region81: #{_lambda_.1} parent=1 // pred_fallthru
      _
    // Predicated region
    $region82: #{_lambda_.1} parent=1 // pred_check
      _
    $region83: #{_lambda_.1} parent=1 // pred_check_branch
      %248 = sbr.rel (0) target = $region85
    $region84: #{_lambda_.1} parent=1 // pred_region
      _
    $region85: #{_lambda_.1} parent=1 // pred_fallthru
      _
    // Predicated region
    $region86: #{_lambda_.1} parent=1 // pred_check
      _
    $region87: #{_lambda_.1} parent=1 // pred_check_branch
      %250 = sbr.rel (0) target = $region89
    $region88: #{_lambda_.1} parent=1 // pred_region
      _
    $region89: #{_lambda_.1} parent=1 // pred_fallthru
      _
    // Predicated region
    $region90: #{_lambda_.1} parent=1 // pred_check
      _
    $region91: #{_lambda_.1} parent=1 // pred_check_branch
      %252 = sbr.rel (0) target = $region93
    $region92: #{_lambda_.1} parent=1 // pred_region
      _
    $region93: #{_lambda_.1} parent=1 // pred_fallthru
      _
    // Predicated region
    $region94: #{_lambda_.1} parent=1 // pred_check
      _
    $region95: #{_lambda_.1} parent=1 // pred_check_branch
      %254 = sbr.rel (0) target = $region97
    $region96: #{_lambda_.1} parent=1 // pred_region
      %256 = dma.done [#allocation3], 512
    $region97: #{_lambda_.1} parent=1 // pred_fallthru
      _
    // Predicated region
    $region98: #{_lambda_.1} parent=1 // pred_check
      _
    $region99: #{_lambda_.1} parent=1 // pred_check_branch
      %258 = sbr.rel (0) target = $region101
    $region100: #{_lambda_.1} parent=1 // pred_region
      %260 = dma.done [#allocation6], 6144
    $region101: #{_lambda_.1} parent=1 // pred_fallthru
      _
    // Predicated region
    $region102: #{_lambda_.1} parent=1 // pred_check
      _
    $region103: #{_lambda_.1} parent=1 // pred_check_branch
      %262 = sbr.rel (0) target = $region105
    $region104: #{_lambda_.1} parent=1 // pred_region
      %264 = dma.done [#allocation6], 192
    $region105: #{_lambda_.1} parent=1 // pred_fallthru
      _
    // Predicated region
    $region106: #{_lambda_.1} parent=1 // pred_check
      _
    $region107: #{_lambda_.1} parent=1 // pred_check_branch
      %266 = sbr.rel (0) target = $region109
    $region108: #{_lambda_.1} parent=1 // pred_region
      %268 = dma.done [#allocation9], 192
    $region109: #{_lambda_.1} parent=1 // pred_fallthru
      _
    // Predicated region
    $region110: #{_lambda_.1} parent=1 // pred_check
      _
    $region111: #{_lambda_.1} parent=1 // pred_check_branch
      %270 = sbr.rel (0) target = $region113
    $region112: #{_lambda_.1} parent=1 // pred_region
      %272 = dma.done [#allocation9], 4608
    $region113: #{_lambda_.1} parent=1 // pred_fallthru
      _
    // Predicated region
    $region114: #{_lambda_.1} parent=1 // pred_check
      _
    $region115: #{_lambda_.1} parent=1 // pred_check_branch
      %274 = sbr.rel (0) target = $region117
    $region116: #{_lambda_.1} parent=1 // pred_region
      %276 = dma.done [#allocation12], 2048
    $region117: #{_lambda_.1} parent=1 // pred_fallthru
      _
    // Predicated region
    $region118: #{_lambda_.1} parent=1 // pred_check
      _
    $region119: #{_lambda_.1} parent=1 // pred_check_branch
      %278 = sbr.rel (0) target = $region121
    $region120: #{_lambda_.1} parent=1 // pred_region
      %280 = dma.done [#allocation12], 128
    $region121: #{_lambda_.1} parent=1 // pred_fallthru
      _
    // Predicated region
    $region122: #{_lambda_.1} parent=1 // pred_check
      _
    $region123: #{_lambda_.1} parent=1 // pred_check_branch
      %282 = sbr.rel (0) target = $region125
    $region124: #{_lambda_.1} parent=1 // pred_region
      %284 = dma.done [#allocation15], 128
    $region125: #{_lambda_.1} parent=1 // pred_fallthru
      _
    // Predicated region
    $region126: #{_lambda_.1} parent=1 // pred_check
      _
    $region127: #{_lambda_.1} parent=1 // pred_check_branch
      %286 = sbr.rel (0) target = $region129
    $region128: #{_lambda_.1} parent=1 // pred_region
      %288 = dma.done [#allocation15], 2048
    $region129: #{_lambda_.1} parent=1 // pred_fallthru
      _
    // Predicated region
    $region130: #{_lambda_.1} parent=1 // pred_check
      _
    $region131: #{_lambda_.1} parent=1 // pred_check_branch
      %290 = sbr.rel (0) target = $region133
    $region132: #{_lambda_.1} parent=1 // pred_region
      %292 = dma.done [#allocation18], 16384
    $region133: #{_lambda_.1} parent=1 // pred_fallthru
      _
    // Predicated region
    $region134: #{_lambda_.1} parent=1 // pred_check
      _
    $region135: #{_lambda_.1} parent=1 // pred_check_branch
      %294 = sbr.rel (0) target = $region137
    $region136: #{_lambda_.1} parent=1 // pred_region
      %296 = dma.done [#allocation18], 16
    $region137: #{_lambda_.1} parent=1 // pred_fallthru
      _
    // Predicated region
    $region138: #{_lambda_.1} parent=1 // pred_check
      _
    $region139: #{_lambda_.1} parent=1 // pred_check_branch
      %298 = sbr.rel (0) target = $region141
    $region140: #{_lambda_.1} parent=1 // pred_region
      %300 = dma.done [#allocation21], 16
    $region141: #{_lambda_.1} parent=1 // pred_fallthru
      _
    // Predicated region
    $region142: #{_lambda_.1} parent=1 // pred_check
      _
    $region143: #{_lambda_.1} parent=1 // pred_check_branch
      %302 = sbr.rel (0) target = $region145
    $region144: #{_lambda_.1} parent=1 // pred_region
      %304 = dma.done [#allocation21], 512
    $region145: #{_lambda_.1} parent=1 // pred_fallthru
      _
    // Predicated region
    $region146: #{_lambda_.1} parent=1 // pred_check
      _
    $region147: #{_lambda_.1} parent=1 // pred_check_branch
      %306 = sbr.rel (0) target = $region149
    $region148: #{_lambda_.1} parent=1 // pred_region
      %308 = dma.done [#allocation24], 16
    $region149: #{_lambda_.1} parent=1 // pred_fallthru
      _
    // Predicated region
    $region150: #{_lambda_.1} parent=1 // pred_check
      _
    $region151: #{_lambda_.1} parent=1 // pred_check_branch
      %310 = sbr.rel (0) target = $region153
    $region152: #{_lambda_.1} parent=1 // pred_region
      %312 = dma.done [#allocation24], 16
    $region153: #{_lambda_.1} parent=1 // pred_fallthru
      _
    // Predicated region
    $region154: #{_lambda_.1} parent=1 // pred_check
      _
    $region155: #{_lambda_.1} parent=1 // pred_check_branch
      %314 = sbr.rel (0) target = $region157
    $region156: #{_lambda_.1} parent=1 // pred_region
      %316 = dma.done [#allocation27], 16
    $region157: #{_lambda_.1} parent=1 // pred_fallthru
      _
    // Predicated region
    $region158: #{_lambda_.1} parent=1 // pred_check
      _
    $region159: #{_lambda_.1} parent=1 // pred_check_branch
      %318 = sbr.rel (0) target = $region161
    $region160: #{_lambda_.1} parent=1 // pred_region
      %320 = dma.done [#allocation27], 2048
    $region161: #{_lambda_.1} parent=1 // pred_fallthru
      _
    %v321 = vld [vmem:[#allocation2] sm:$0xff]
    %v322 = vld [vmem:[#allocation2 + $0x8] sm:$0xff]
    %v323 = vld [vmem:[#allocation2 + $0x10] sm:$0xff]
    %v324 = vld [vmem:[#allocation2 + $0x18] sm:$0xff]
    %v325 = vld [vmem:[#allocation10] sm:$0xff]
    %v326 = vld [vmem:[#allocation10 + $0x8] sm:$0xff]
    %v327 = vld [vmem:[#allocation10 + $0x10] sm:$0xff]
    %v328 = vld [vmem:[#allocation10 + $0x18] sm:$0xff]
    %v329 = vld [vmem:[#allocation10 + $0x20] sm:$0xff]
    %v330 = vld [vmem:[#allocation10 + $0x28] sm:$0xff]
    %v331 = vld [vmem:[#allocation10 + $0x30] sm:$0xff]
    %v332 = vld [vmem:[#allocation10 + $0x38] sm:$0xff]
    %v333 = vld [vmem:[#allocation10 + $0x40] sm:$0xff]
    %v334 = vld [vmem:[#allocation10 + $0x48] sm:$0xff]
    %v335 = vld [vmem:[#allocation10 + $0x50] sm:$0xff]
    %v336 = vld [vmem:[#allocation10 + $0x58] sm:$0xff]
    %v337 = vld [vmem:[#allocation10 + $0x60] sm:$0xff]
    %v338 = vld [vmem:[#allocation10 + $0x68] sm:$0xff]
    %v339 = vld [vmem:[#allocation10 + $0x70] sm:$0xff]
    %v340 = vld [vmem:[#allocation10 + $0x78] sm:$0xff]
    %v341 = vld [vmem:[#allocation10 + $0x80] sm:$0xff]
    %v342 = vld [vmem:[#allocation10 + $0x88] sm:$0xff]
    %v343 = vld [vmem:[#allocation10 + $0x90] sm:$0xff]
    %v344 = vld [vmem:[#allocation10 + $0x98] sm:$0xff]
    %v345 = vld [vmem:[#allocation10 + $0xa0] sm:$0xff]
    %v346 = vld [vmem:[#allocation10 + $0xa8] sm:$0xff]
    %v347 = vld [vmem:[#allocation10 + $0xb0] sm:$0xff]
    %v348 = vld [vmem:[#allocation10 + $0xb8] sm:$0xff]
    %v349 = vld [vmem:[#allocation10 + $0xc0] sm:$0xff]
    %v350 = vld [vmem:[#allocation10 + $0xc8] sm:$0xff]
    %v351 = vld [vmem:[#allocation10 + $0xd0] sm:$0xff]
    %v352 = vld [vmem:[#allocation10 + $0xd8] sm:$0xff]
    %v353 = vld [vmem:[#allocation10 + $0xe0] sm:$0xff]
    %v354 = vld [vmem:[#allocation10 + $0xe8] sm:$0xff]
    %v355 = vld [vmem:[#allocation10 + $0xf0] sm:$0xff]
    %v356 = vld [vmem:[#allocation10 + $0xf8] sm:$0xff]
    %v357 = vld [vmem:[#allocation10 + $0x100] sm:$0xff]
    %v358 = vld [vmem:[#allocation10 + $0x108] sm:$0xff]
    %v359 = vld [vmem:[#allocation10 + $0x110] sm:$0xff]
    %v360 = vld [vmem:[#allocation10 + $0x118] sm:$0xff]
    %v361 = vld [vmem:[#allocation5] sm:$0xff]
    %v362 = vld [vmem:[#allocation5 + $0x8] sm:$0xff]
    %v363 = vld [vmem:[#allocation5 + $0x10] sm:$0xff]
    %v364 = vld [vmem:[#allocation5 + $0x18] sm:$0xff]
    %v365 = vld [vmem:[#allocation5 + $0x20] sm:$0xff]
    %v366 = vld [vmem:[#allocation5 + $0x28] sm:$0xff]
    %v367 = vld [vmem:[#allocation5 + $0x30] sm:$0xff]
    %v368 = vld [vmem:[#allocation5 + $0x38] sm:$0xff]
    %v369 = vld [vmem:[#allocation5 + $0x40] sm:$0xff]
    %v370 = vld [vmem:[#allocation5 + $0x48] sm:$0xff]
    %v371 = vld [vmem:[#allocation5 + $0x50] sm:$0xff]
    %v372 = vld [vmem:[#allocation5 + $0x58] sm:$0xff]
    %v373 = vld [vmem:[#allocation5 + $0x60] sm:$0xff]
    %v374 = vld [vmem:[#allocation5 + $0x68] sm:$0xff]
    %v375 = vld [vmem:[#allocation5 + $0x70] sm:$0xff]
    %v376 = vld [vmem:[#allocation5 + $0x78] sm:$0xff]
    %v377 = vld [vmem:[#allocation5 + $0x80] sm:$0xff]
    %v378 = vld [vmem:[#allocation5 + $0x88] sm:$0xff]
    %v379 = vld [vmem:[#allocation5 + $0x90] sm:$0xff]
    %v380 = vld [vmem:[#allocation5 + $0x98] sm:$0xff]
    %v381 = vld [vmem:[#allocation5 + $0xa0] sm:$0xff]
    %v382 = vld [vmem:[#allocation5 + $0xa8] sm:$0xff]
    %v383 = vld [vmem:[#allocation5 + $0xb0] sm:$0xff]
    %v384 = vld [vmem:[#allocation5 + $0xb8] sm:$0xff]
    %v385 = vld [vmem:[#allocation5 + $0xc0] sm:$0xff]
    %v386 = vld [vmem:[#allocation5 + $0xc8] sm:$0xff]
    %v387 = vld [vmem:[#allocation5 + $0xd0] sm:$0xff]
    %v388 = vld [vmem:[#allocation5 + $0xd8] sm:$0xff]
    %v389 = vld [vmem:[#allocation5 + $0xe0] sm:$0xff]
    %v390 = vld [vmem:[#allocation5 + $0xe8] sm:$0xff]
    %v391 = vld [vmem:[#allocation5 + $0xf0] sm:$0xff]
    %v392 = vld [vmem:[#allocation5 + $0xf8] sm:$0xff]
    %v393 = vld [vmem:[#allocation5 + $0x100] sm:$0xff]
    %v394 = vld [vmem:[#allocation5 + $0x108] sm:$0xff]
    %v395 = vld [vmem:[#allocation5 + $0x110] sm:$0xff]
    %v396 = vld [vmem:[#allocation5 + $0x118] sm:$0xff]
    %v397 = vld [vmem:[#allocation5 + $0x120] sm:$0xff]
    %v398 = vld [vmem:[#allocation5 + $0x128] sm:$0xff]
    %v399 = vld [vmem:[#allocation5 + $0x130] sm:$0xff]
    %v400 = vld [vmem:[#allocation5 + $0x138] sm:$0xff]
    %v401 = vld [vmem:[#allocation5 + $0x140] sm:$0xff]
    %v402 = vld [vmem:[#allocation5 + $0x148] sm:$0xff]
    %v403 = vld [vmem:[#allocation5 + $0x150] sm:$0xff]
    %v404 = vld [vmem:[#allocation5 + $0x158] sm:$0xff]
    %v405 = vld [vmem:[#allocation5 + $0x160] sm:$0xff]
    %v406 = vld [vmem:[#allocation5 + $0x168] sm:$0xff]
    %v407 = vld [vmem:[#allocation5 + $0x170] sm:$0xff]
    %v408 = vld [vmem:[#allocation5 + $0x178] sm:$0xff]
    %vm409 = vcmask 261120
    %v411 = vsel %vm409, %v321, 0
    %v414 = vsel %vm409, %v322, 0
    %v417 = vsel %vm409, %v323, 0
    %v420 = vsel %vm409, %v324, 0
    %422 = vmatpush.msra.mxu0 0.0
    %423 = vmatpush.msra.mxu0 0.0
    %424 = vmatpush.msra.mxu0 0.0
    %425 = vmatpush.msra.mxu0 0.0
    %426 = vmatpush.msra.mxu0 0.0
    %427 = vmatpush.msra.mxu0 0.0
    %428 = vmatpush.msra.mxu0 0.0
    %429 = vmatpush.msra.mxu0 0.0
    %430 = vmatpush.msra.mxu0 0.0
    %431 = vmatpush.msra.mxu0 0.0
    %432 = vmatpush.msra.mxu0 0.0
    %433 = vmatpush.msra.mxu0 0.0
    %434 = vmatpush.msra.mxu0 %v397
    %435 = vmatpush.msra.mxu0 %v385
    %436 = vmatpush.msra.mxu0 %v373
    %437 = vmatpush.msra.mxu0 %v361
    %438 = vmatmul.f32.gmra.mxu0 %v411
    %v439 = vpop.f32.mrf.mxu0
    %v440 = vadd.f32 0.0, %v439
    %441 = vmatmul.f32.gmra.mxu0 %v414
    %v442 = vpop.f32.mrf.mxu0
    %v443 = vadd.f32 0.0, %v442
    %444 = vmatmul.f32.gmra.mxu0 %v417
    %v445 = vpop.f32.mrf.mxu0
    %v446 = vadd.f32 0.0, %v445
    %447 = vmatmul.f32.gmra.mxu0 %v420
    %v448 = vpop.f32.mrf.mxu0
    %v449 = vadd.f32 0.0, %v448
    %450 = vdwg.mxu0
    %451 = vmatpush.msra.mxu0 0.0
    %452 = vmatpush.msra.mxu0 0.0
    %453 = vmatpush.msra.mxu0 0.0
    %454 = vmatpush.msra.mxu0 0.0
    %455 = vmatpush.msra.mxu0 0.0
    %456 = vmatpush.msra.mxu0 0.0
    %457 = vmatpush.msra.mxu0 0.0
    %458 = vmatpush.msra.mxu0 0.0
    %459 = vmatpush.msra.mxu0 0.0
    %460 = vmatpush.msra.mxu0 0.0
    %461 = vmatpush.msra.mxu0 0.0
    %462 = vmatpush.msra.mxu0 0.0
    %463 = vmatpush.msra.mxu0 %v398
    %464 = vmatpush.msra.mxu0 %v386
    %465 = vmatpush.msra.mxu0 %v374
    %466 = vmatpush.msra.mxu0 %v362
    %467 = vmatmul.f32.gmra.mxu0 %v411
    %v468 = vpop.f32.mrf.mxu0
    %v469 = vadd.f32 0.0, %v468
    %470 = vmatmul.f32.gmra.mxu0 %v414
    %v471 = vpop.f32.mrf.mxu0
    %v472 = vadd.f32 0.0, %v471
    %473 = vmatmul.f32.gmra.mxu0 %v417
    %v474 = vpop.f32.mrf.mxu0
    %v475 = vadd.f32 0.0, %v474
    %476 = vmatmul.f32.gmra.mxu0 %v420
    %v477 = vpop.f32.mrf.mxu0
    %v478 = vadd.f32 0.0, %v477
    %479 = vdwg.mxu0
    %480 = vmatpush.msra.mxu0 0.0
    %481 = vmatpush.msra.mxu0 0.0
    %482 = vmatpush.msra.mxu0 0.0
    %483 = vmatpush.msra.mxu0 0.0
    %484 = vmatpush.msra.mxu0 0.0
    %485 = vmatpush.msra.mxu0 0.0
    %486 = vmatpush.msra.mxu0 0.0
    %487 = vmatpush.msra.mxu0 0.0
    %488 = vmatpush.msra.mxu0 0.0
    %489 = vmatpush.msra.mxu0 0.0
    %490 = vmatpush.msra.mxu0 0.0
    %491 = vmatpush.msra.mxu0 0.0
    %492 = vmatpush.msra.mxu0 %v399
    %493 = vmatpush.msra.mxu0 %v387
    %494 = vmatpush.msra.mxu0 %v375
    %495 = vmatpush.msra.mxu0 %v363
    %496 = vmatmul.f32.gmra.mxu0 %v411
    %v497 = vpop.f32.mrf.mxu0
    %v498 = vadd.f32 0.0, %v497
    %499 = vmatmul.f32.gmra.mxu0 %v414
    %v500 = vpop.f32.mrf.mxu0
    %v501 = vadd.f32 0.0, %v500
    %502 = vmatmul.f32.gmra.mxu0 %v417
    %v503 = vpop.f32.mrf.mxu0
    %v504 = vadd.f32 0.0, %v503
    %505 = vmatmul.f32.gmra.mxu0 %v420
    %v506 = vpop.f32.mrf.mxu0
    %v507 = vadd.f32 0.0, %v506
    %508 = vdwg.mxu0
    %509 = vmatpush.msra.mxu0 0.0
    %510 = vmatpush.msra.mxu0 0.0
    %511 = vmatpush.msra.mxu0 0.0
    %512 = vmatpush.msra.mxu0 0.0
    %513 = vmatpush.msra.mxu0 0.0
    %514 = vmatpush.msra.mxu0 0.0
    %515 = vmatpush.msra.mxu0 0.0
    %516 = vmatpush.msra.mxu0 0.0
    %517 = vmatpush.msra.mxu0 0.0
    %518 = vmatpush.msra.mxu0 0.0
    %519 = vmatpush.msra.mxu0 0.0
    %520 = vmatpush.msra.mxu0 0.0
    %521 = vmatpush.msra.mxu0 %v400
    %522 = vmatpush.msra.mxu0 %v388
    %523 = vmatpush.msra.mxu0 %v376
    %524 = vmatpush.msra.mxu0 %v364
    %525 = vmatmul.f32.gmra.mxu0 %v411
    %v526 = vpop.f32.mrf.mxu0
    %v527 = vadd.f32 0.0, %v526
    %528 = vmatmul.f32.gmra.mxu0 %v414
    %v529 = vpop.f32.mrf.mxu0
    %v530 = vadd.f32 0.0, %v529
    %531 = vmatmul.f32.gmra.mxu0 %v417
    %v532 = vpop.f32.mrf.mxu0
    %v533 = vadd.f32 0.0, %v532
    %534 = vmatmul.f32.gmra.mxu0 %v420
    %v535 = vpop.f32.mrf.mxu0
    %v536 = vadd.f32 0.0, %v535
    %537 = vdwg.mxu0
    %538 = vmatpush.msra.mxu0 0.0
    %539 = vmatpush.msra.mxu0 0.0
    %540 = vmatpush.msra.mxu0 0.0
    %541 = vmatpush.msra.mxu0 0.0
    %542 = vmatpush.msra.mxu0 0.0
    %543 = vmatpush.msra.mxu0 0.0
    %544 = vmatpush.msra.mxu0 0.0
    %545 = vmatpush.msra.mxu0 0.0
    %546 = vmatpush.msra.mxu0 0.0
    %547 = vmatpush.msra.mxu0 0.0
    %548 = vmatpush.msra.mxu0 0.0
    %549 = vmatpush.msra.mxu0 0.0
    %550 = vmatpush.msra.mxu0 %v401
    %551 = vmatpush.msra.mxu0 %v389
    %552 = vmatpush.msra.mxu0 %v377
    %553 = vmatpush.msra.mxu0 %v365
    %554 = vmatmul.f32.gmra.mxu0 %v411
    %v555 = vpop.f32.mrf.mxu0
    %v556 = vadd.f32 0.0, %v555
    %557 = vmatmul.f32.gmra.mxu0 %v414
    %v558 = vpop.f32.mrf.mxu0
    %v559 = vadd.f32 0.0, %v558
    %560 = vmatmul.f32.gmra.mxu0 %v417
    %v561 = vpop.f32.mrf.mxu0
    %v562 = vadd.f32 0.0, %v561
    %563 = vmatmul.f32.gmra.mxu0 %v420
    %v564 = vpop.f32.mrf.mxu0
    %v565 = vadd.f32 0.0, %v564
    %566 = vdwg.mxu0
    %567 = vmatpush.msra.mxu0 0.0
    %568 = vmatpush.msra.mxu0 0.0
    %569 = vmatpush.msra.mxu0 0.0
    %570 = vmatpush.msra.mxu0 0.0
    %571 = vmatpush.msra.mxu0 0.0
    %572 = vmatpush.msra.mxu0 0.0
    %573 = vmatpush.msra.mxu0 0.0
    %574 = vmatpush.msra.mxu0 0.0
    %575 = vmatpush.msra.mxu0 0.0
    %576 = vmatpush.msra.mxu0 0.0
    %577 = vmatpush.msra.mxu0 0.0
    %578 = vmatpush.msra.mxu0 0.0
    %579 = vmatpush.msra.mxu0 %v402
    %580 = vmatpush.msra.mxu0 %v390
    %581 = vmatpush.msra.mxu0 %v378
    %582 = vmatpush.msra.mxu0 %v366
    %583 = vmatmul.f32.gmra.mxu0 %v411
    %v584 = vpop.f32.mrf.mxu0
    %v585 = vadd.f32 0.0, %v584
    %586 = vmatmul.f32.gmra.mxu0 %v414
    %v587 = vpop.f32.mrf.mxu0
    %v588 = vadd.f32 0.0, %v587
    %589 = vmatmul.f32.gmra.mxu0 %v417
    %v590 = vpop.f32.mrf.mxu0
    %v591 = vadd.f32 0.0, %v590
    %592 = vmatmul.f32.gmra.mxu0 %v420
    %v593 = vpop.f32.mrf.mxu0
    %v594 = vadd.f32 0.0, %v593
    %595 = vdwg.mxu0
    %596 = vmatpush.msra.mxu0 0.0
    %597 = vmatpush.msra.mxu0 0.0
    %598 = vmatpush.msra.mxu0 0.0
    %599 = vmatpush.msra.mxu0 0.0
    %600 = vmatpush.msra.mxu0 0.0
    %601 = vmatpush.msra.mxu0 0.0
    %602 = vmatpush.msra.mxu0 0.0
    %603 = vmatpush.msra.mxu0 0.0
    %604 = vmatpush.msra.mxu0 0.0
    %605 = vmatpush.msra.mxu0 0.0
    %606 = vmatpush.msra.mxu0 0.0
    %607 = vmatpush.msra.mxu0 0.0
    %608 = vmatpush.msra.mxu0 %v403
    %609 = vmatpush.msra.mxu0 %v391
    %610 = vmatpush.msra.mxu0 %v379
    %611 = vmatpush.msra.mxu0 %v367
    %612 = vmatmul.f32.gmra.mxu0 %v411
    %v613 = vpop.f32.mrf.mxu0
    %v614 = vadd.f32 0.0, %v613
    %615 = vmatmul.f32.gmra.mxu0 %v414
    %v616 = vpop.f32.mrf.mxu0
    %v617 = vadd.f32 0.0, %v616
    %618 = vmatmul.f32.gmra.mxu0 %v417
    %v619 = vpop.f32.mrf.mxu0
    %v620 = vadd.f32 0.0, %v619
    %621 = vmatmul.f32.gmra.mxu0 %v420
    %v622 = vpop.f32.mrf.mxu0
    %v623 = vadd.f32 0.0, %v622
    %624 = vdwg.mxu0
    %625 = vmatpush.msra.mxu0 0.0
    %626 = vmatpush.msra.mxu0 0.0
    %627 = vmatpush.msra.mxu0 0.0
    %628 = vmatpush.msra.mxu0 0.0
    %629 = vmatpush.msra.mxu0 0.0
    %630 = vmatpush.msra.mxu0 0.0
    %631 = vmatpush.msra.mxu0 0.0
    %632 = vmatpush.msra.mxu0 0.0
    %633 = vmatpush.msra.mxu0 0.0
    %634 = vmatpush.msra.mxu0 0.0
    %635 = vmatpush.msra.mxu0 0.0
    %636 = vmatpush.msra.mxu0 0.0
    %637 = vmatpush.msra.mxu0 %v404
    %638 = vmatpush.msra.mxu0 %v392
    %639 = vmatpush.msra.mxu0 %v380
    %640 = vmatpush.msra.mxu0 %v368
    %641 = vmatmul.f32.gmra.mxu0 %v411
    %v642 = vpop.f32.mrf.mxu0
    %v643 = vadd.f32 0.0, %v642
    %644 = vmatmul.f32.gmra.mxu0 %v414
    %v645 = vpop.f32.mrf.mxu0
    %v646 = vadd.f32 0.0, %v645
    %647 = vmatmul.f32.gmra.mxu0 %v417
    %v648 = vpop.f32.mrf.mxu0
    %v649 = vadd.f32 0.0, %v648
    %650 = vmatmul.f32.gmra.mxu0 %v420
    %v651 = vpop.f32.mrf.mxu0
    %v652 = vadd.f32 0.0, %v651
    %653 = vdwg.mxu0
    %654 = vmatpush.msra.mxu0 0.0
    %655 = vmatpush.msra.mxu0 0.0
    %656 = vmatpush.msra.mxu0 0.0
    %657 = vmatpush.msra.mxu0 0.0
    %658 = vmatpush.msra.mxu0 0.0
    %659 = vmatpush.msra.mxu0 0.0
    %660 = vmatpush.msra.mxu0 0.0
    %661 = vmatpush.msra.mxu0 0.0
    %662 = vmatpush.msra.mxu0 0.0
    %663 = vmatpush.msra.mxu0 0.0
    %664 = vmatpush.msra.mxu0 0.0
    %665 = vmatpush.msra.mxu0 0.0
    %666 = vmatpush.msra.mxu0 %v405
    %667 = vmatpush.msra.mxu0 %v393
    %668 = vmatpush.msra.mxu0 %v381
    %669 = vmatpush.msra.mxu0 %v369
    %670 = vmatmul.f32.gmra.mxu0 %v411
    %v671 = vpop.f32.mrf.mxu0
    %v672 = vadd.f32 0.0, %v671
    %673 = vmatmul.f32.gmra.mxu0 %v414
    %v674 = vpop.f32.mrf.mxu0
    %v675 = vadd.f32 0.0, %v674
    %676 = vmatmul.f32.gmra.mxu0 %v417
    %v677 = vpop.f32.mrf.mxu0
    %v678 = vadd.f32 0.0, %v677
    %679 = vmatmul.f32.gmra.mxu0 %v420
    %v680 = vpop.f32.mrf.mxu0
    %v681 = vadd.f32 0.0, %v680
    %682 = vdwg.mxu0
    %683 = vmatpush.msra.mxu0 0.0
    %684 = vmatpush.msra.mxu0 0.0
    %685 = vmatpush.msra.mxu0 0.0
    %686 = vmatpush.msra.mxu0 0.0
    %687 = vmatpush.msra.mxu0 0.0
    %688 = vmatpush.msra.mxu0 0.0
    %689 = vmatpush.msra.mxu0 0.0
    %690 = vmatpush.msra.mxu0 0.0
    %691 = vmatpush.msra.mxu0 0.0
    %692 = vmatpush.msra.mxu0 0.0
    %693 = vmatpush.msra.mxu0 0.0
    %694 = vmatpush.msra.mxu0 0.0
    %695 = vmatpush.msra.mxu0 %v406
    %696 = vmatpush.msra.mxu0 %v394
    %697 = vmatpush.msra.mxu0 %v382
    %698 = vmatpush.msra.mxu0 %v370
    %699 = vmatmul.f32.gmra.mxu0 %v411
    %v700 = vpop.f32.mrf.mxu0
    %v701 = vadd.f32 0.0, %v700
    %702 = vmatmul.f32.gmra.mxu0 %v414
    %v703 = vpop.f32.mrf.mxu0
    %v704 = vadd.f32 0.0, %v703
    %705 = vmatmul.f32.gmra.mxu0 %v417
    %v706 = vpop.f32.mrf.mxu0
    %v707 = vadd.f32 0.0, %v706
    %708 = vmatmul.f32.gmra.mxu0 %v420
    %v709 = vpop.f32.mrf.mxu0
    %v710 = vadd.f32 0.0, %v709
    %711 = vdwg.mxu0
    %712 = vmatpush.msra.mxu0 0.0
    %713 = vmatpush.msra.mxu0 0.0
    %714 = vmatpush.msra.mxu0 0.0
    %715 = vmatpush.msra.mxu0 0.0
    %716 = vmatpush.msra.mxu0 0.0
    %717 = vmatpush.msra.mxu0 0.0
    %718 = vmatpush.msra.mxu0 0.0
    %719 = vmatpush.msra.mxu0 0.0
    %720 = vmatpush.msra.mxu0 0.0
    %721 = vmatpush.msra.mxu0 0.0
    %722 = vmatpush.msra.mxu0 0.0
    %723 = vmatpush.msra.mxu0 0.0
    %724 = vmatpush.msra.mxu0 %v407
    %725 = vmatpush.msra.mxu0 %v395
    %726 = vmatpush.msra.mxu0 %v383
    %727 = vmatpush.msra.mxu0 %v371
    %728 = vmatmul.f32.gmra.mxu0 %v411
    %v729 = vpop.f32.mrf.mxu0
    %v730 = vadd.f32 0.0, %v729
    %731 = vmatmul.f32.gmra.mxu0 %v414
    %v732 = vpop.f32.mrf.mxu0
    %v733 = vadd.f32 0.0, %v732
    %734 = vmatmul.f32.gmra.mxu0 %v417
    %v735 = vpop.f32.mrf.mxu0
    %v736 = vadd.f32 0.0, %v735
    %737 = vmatmul.f32.gmra.mxu0 %v420
    %v738 = vpop.f32.mrf.mxu0
    %v739 = vadd.f32 0.0, %v738
    %740 = vdwg.mxu0
    %741 = vmatpush.msra.mxu0 0.0
    %742 = vmatpush.msra.mxu0 0.0
    %743 = vmatpush.msra.mxu0 0.0
    %744 = vmatpush.msra.mxu0 0.0
    %745 = vmatpush.msra.mxu0 0.0
    %746 = vmatpush.msra.mxu0 0.0
    %747 = vmatpush.msra.mxu0 0.0
    %748 = vmatpush.msra.mxu0 0.0
    %749 = vmatpush.msra.mxu0 0.0
    %750 = vmatpush.msra.mxu0 0.0
    %751 = vmatpush.msra.mxu0 0.0
    %752 = vmatpush.msra.mxu0 0.0
    %753 = vmatpush.msra.mxu0 %v408
    %754 = vmatpush.msra.mxu0 %v396
    %755 = vmatpush.msra.mxu0 %v384
    %756 = vmatpush.msra.mxu0 %v372
    %757 = vmatmul.f32.gmra.mxu0 %v411
    %v758 = vpop.f32.mrf.mxu0
    %v759 = vadd.f32 0.0, %v758
    %760 = vmatmul.f32.gmra.mxu0 %v414
    %v761 = vpop.f32.mrf.mxu0
    %v762 = vadd.f32 0.0, %v761
    %763 = vmatmul.f32.gmra.mxu0 %v417
    %v764 = vpop.f32.mrf.mxu0
    %v765 = vadd.f32 0.0, %v764
    %766 = vmatmul.f32.gmra.mxu0 %v420
    %v767 = vpop.f32.mrf.mxu0
    %v768 = vadd.f32 0.0, %v767
    %769 = vdwg.mxu0
    %v770 = vld [vmem:[#allocation7] sm:$0xff]
    %v771 = vld [vmem:[#allocation7 + $0x8] sm:$0xf]
    %v774 = vperm.slane %v770, 0
    %v775 = vperm.slane %v770, 1
    %v776 = vperm.slane %v770, 2
    %v777 = vperm.slane %v770, 3
    %v778 = vperm.slane %v770, 4
    %v779 = vperm.slane %v770, 5
    %v780 = vperm.slane %v770, 6
    %v781 = vperm.slane %v770, 7
    %v782 = vperm.slane %v771, 0
    %v783 = vperm.slane %v771, 1
    %v784 = vperm.slane %v771, 2
    %v785 = vperm.slane %v771, 3
    %v798 = vmul.f32 %v440, %v774
    %v799 = vmul.f32 %v469, %v775
    %v800 = vmul.f32 %v498, %v776
    %v801 = vmul.f32 %v527, %v777
    %v802 = vmul.f32 %v556, %v778
    %v803 = vmul.f32 %v585, %v779
    %v804 = vmul.f32 %v614, %v780
    %v805 = vmul.f32 %v643, %v781
    %v806 = vmul.f32 %v672, %v782
    %v807 = vmul.f32 %v701, %v783
    %v808 = vmul.f32 %v730, %v784
    %v809 = vmul.f32 %v759, %v785
    %v810 = vmul.f32 %v443, %v774
    %v811 = vmul.f32 %v472, %v775
    %v812 = vmul.f32 %v501, %v776
    %v813 = vmul.f32 %v530, %v777
    %v814 = vmul.f32 %v559, %v778
    %v815 = vmul.f32 %v588, %v779
    %v816 = vmul.f32 %v617, %v780
    %v817 = vmul.f32 %v646, %v781
    %v818 = vmul.f32 %v675, %v782
    %v819 = vmul.f32 %v704, %v783
    %v820 = vmul.f32 %v733, %v784
    %v821 = vmul.f32 %v762, %v785
    %v822 = vmul.f32 %v446, %v774
    %v823 = vmul.f32 %v475, %v775
    %v824 = vmul.f32 %v504, %v776
    %v825 = vmul.f32 %v533, %v777
    %v826 = vmul.f32 %v562, %v778
    %v827 = vmul.f32 %v591, %v779
    %v828 = vmul.f32 %v620, %v780
    %v829 = vmul.f32 %v649, %v781
    %v830 = vmul.f32 %v678, %v782
    %v831 = vmul.f32 %v707, %v783
    %v832 = vmul.f32 %v736, %v784
    %v833 = vmul.f32 %v765, %v785
    %v834 = vmul.f32 %v449, %v774
    %v835 = vmul.f32 %v478, %v775
    %v836 = vmul.f32 %v507, %v776
    %v837 = vmul.f32 %v536, %v777
    %v838 = vmul.f32 %v565, %v778
    %v839 = vmul.f32 %v594, %v779
    %v840 = vmul.f32 %v623, %v780
    %v841 = vmul.f32 %v652, %v781
    %v842 = vmul.f32 %v681, %v782
    %v843 = vmul.f32 %v710, %v783
    %v844 = vmul.f32 %v739, %v784
    %v845 = vmul.f32 %v768, %v785
    %v846 = vld [vmem:[#allocation8] sm:$0xff]
    %v847 = vld [vmem:[#allocation8 + $0x8] sm:$0xf]
    %v850 = vperm.slane %v846, 0
    %v851 = vperm.slane %v846, 1
    %v852 = vperm.slane %v846, 2
    %v853 = vperm.slane %v846, 3
    %v854 = vperm.slane %v846, 4
    %v855 = vperm.slane %v846, 5
    %v856 = vperm.slane %v846, 6
    %v857 = vperm.slane %v846, 7
    %v858 = vperm.slane %v847, 0
    %v859 = vperm.slane %v847, 1
    %v860 = vperm.slane %v847, 2
    %v861 = vperm.slane %v847, 3
    %v874 = vadd.f32 %v798, %v850
    %v875 = vadd.f32 %v799, %v851
    %v876 = vadd.f32 %v800, %v852
    %v877 = vadd.f32 %v801, %v853
    %v878 = vadd.f32 %v802, %v854
    %v879 = vadd.f32 %v803, %v855
    %v880 = vadd.f32 %v804, %v856
    %v881 = vadd.f32 %v805, %v857
    %v882 = vadd.f32 %v806, %v858
    %v883 = vadd.f32 %v807, %v859
    %v884 = vadd.f32 %v808, %v860
    %v885 = vadd.f32 %v809, %v861
    %v886 = vadd.f32 %v810, %v850
    %v887 = vadd.f32 %v811, %v851
    %v888 = vadd.f32 %v812, %v852
    %v889 = vadd.f32 %v813, %v853
    %v890 = vadd.f32 %v814, %v854
    %v891 = vadd.f32 %v815, %v855
    %v892 = vadd.f32 %v816, %v856
    %v893 = vadd.f32 %v817, %v857
    %v894 = vadd.f32 %v818, %v858
    %v895 = vadd.f32 %v819, %v859
    %v896 = vadd.f32 %v820, %v860
    %v897 = vadd.f32 %v821, %v861
    %v898 = vadd.f32 %v822, %v850
    %v899 = vadd.f32 %v823, %v851
    %v900 = vadd.f32 %v824, %v852
    %v901 = vadd.f32 %v825, %v853
    %v902 = vadd.f32 %v826, %v854
    %v903 = vadd.f32 %v827, %v855
    %v904 = vadd.f32 %v828, %v856
    %v905 = vadd.f32 %v829, %v857
    %v906 = vadd.f32 %v830, %v858
    %v907 = vadd.f32 %v831, %v859
    %v908 = vadd.f32 %v832, %v860
    %v909 = vadd.f32 %v833, %v861
    %v910 = vadd.f32 %v834, %v850
    %v911 = vadd.f32 %v835, %v851
    %v912 = vadd.f32 %v836, %v852
    %v913 = vadd.f32 %v837, %v853
    %v914 = vadd.f32 %v838, %v854
    %v915 = vadd.f32 %v839, %v855
    %v916 = vadd.f32 %v840, %v856
    %v917 = vadd.f32 %v841, %v857
    %v918 = vadd.f32 %v842, %v858
    %v919 = vadd.f32 %v843, %v859
    %v920 = vadd.f32 %v844, %v860
    %v921 = vadd.f32 %v845, %v861
    %v922 = vld [vmem:[#allocation11] sm:$0xff]
    %v923 = vld [vmem:[#allocation11 + $0x8] sm:$0xff]
    %v924 = vld [vmem:[#allocation11 + $0x10] sm:$0xff]
    %v925 = vld [vmem:[#allocation11 + $0x18] sm:$0xff]
    %v926 = vld [vmem:[#allocation11 + $0x20] sm:$0xff]
    %v927 = vld [vmem:[#allocation11 + $0x28] sm:$0xff]
    %v928 = vld [vmem:[#allocation11 + $0x30] sm:$0xff]
    %v929 = vld [vmem:[#allocation11 + $0x38] sm:$0xff]
    %v930 = vld [vmem:[#allocation11 + $0x40] sm:$0x1]
    %v931 = vld [vmem:[#allocation11 + $0x48] sm:$0x1]
    %v932 = vld [vmem:[#allocation11 + $0x50] sm:$0x1]
    %v933 = vld [vmem:[#allocation11 + $0x58] sm:$0x1]
    %v934 = vld [vmem:[#allocation11 + $0x60] sm:$0x1]
    %v935 = vld [vmem:[#allocation11 + $0x68] sm:$0x1]
    %v936 = vld [vmem:[#allocation11 + $0x70] sm:$0x1]
    %v937 = vld [vmem:[#allocation11 + $0x78] sm:$0x1]
    %v938 = vld [vmem:[#allocation13] sm:$0xff]
    %v939 = vld [vmem:[#allocation14] sm:$0xff]
    %v941 = vsel %vm409, %v325, 0
    %v944 = vsel %vm409, %v326, 0
    %v947 = vsel %vm409, %v327, 0
    %v950 = vsel %vm409, %v328, 0
    %v953 = vsel %vm409, %v329, 0
    %v956 = vsel %vm409, %v330, 0
    %v959 = vsel %vm409, %v331, 0
    %v962 = vsel %vm409, %v332, 0
    %v965 = vsel %vm409, %v333, 0
    %v968 = vsel %vm409, %v334, 0
    %v971 = vsel %vm409, %v335, 0
    %v974 = vsel %vm409, %v336, 0
    %v977 = vsel %vm409, %v337, 0
    %v980 = vsel %vm409, %v338, 0
    %v983 = vsel %vm409, %v339, 0
    %v986 = vsel %vm409, %v340, 0
    %v989 = vsel %vm409, %v341, 0
    %v992 = vsel %vm409, %v342, 0
    %v995 = vsel %vm409, %v343, 0
    %v998 = vsel %vm409, %v344, 0
    %v1001 = vsel %vm409, %v345, 0
    %v1004 = vsel %vm409, %v346, 0
    %v1007 = vsel %vm409, %v347, 0
    %v1010 = vsel %vm409, %v348, 0
    %v1013 = vsel %vm409, %v349, 0
    %v1016 = vsel %vm409, %v350, 0
    %v1019 = vsel %vm409, %v351, 0
    %v1022 = vsel %vm409, %v352, 0
    %v1025 = vsel %vm409, %v353, 0
    %v1028 = vsel %vm409, %v354, 0
    %v1031 = vsel %vm409, %v355, 0
    %v1034 = vsel %vm409, %v356, 0
    %v1037 = vsel %vm409, %v357, 0
    %v1040 = vsel %vm409, %v358, 0
    %v1043 = vsel %vm409, %v359, 0
    %v1046 = vsel %vm409, %v360, 0
    %1048 = vmatpush.msra.mxu0 0.0
    %1049 = vmatpush.msra.mxu0 0.0
    %1050 = vmatpush.msra.mxu0 0.0
    %1051 = vmatpush.msra.mxu0 0.0
    %1052 = vmatpush.msra.mxu0 0.0
    %1053 = vmatpush.msra.mxu0 0.0
    %1054 = vmatpush.msra.mxu0 0.0
    %1055 = vmatpush.msra.mxu0 0.0
    %1056 = vmatpush.msra.mxu0 0.0
    %1057 = vmatpush.msra.mxu0 0.0
    %1058 = vmatpush.msra.mxu0 0.0
    %1059 = vmatpush.msra.mxu0 0.0
    %1060 = vmatpush.msra.mxu0 %v914
    %1061 = vmatpush.msra.mxu0 %v902
    %1062 = vmatpush.msra.mxu0 %v890
    %1063 = vmatpush.msra.mxu0 %v878
    %1064 = vmatmul.f32.gmra.mxu0 %v941
    %v1065 = vpop.f32.mrf.mxu0
    %v1066 = vadd.f32 0.0, %v1065
    %1067 = vmatmul.f32.gmra.mxu0 %v944
    %v1068 = vpop.f32.mrf.mxu0
    %v1069 = vadd.f32 0.0, %v1068
    %1070 = vmatmul.f32.gmra.mxu0 %v947
    %v1071 = vpop.f32.mrf.mxu0
    %v1072 = vadd.f32 0.0, %v1071
    %1073 = vmatmul.f32.gmra.mxu0 %v950
    %v1074 = vpop.f32.mrf.mxu0
    %v1075 = vadd.f32 0.0, %v1074
    %1076 = vmatmul.f32.gmra.mxu0 %v953
    %v1077 = vpop.f32.mrf.mxu0
    %v1078 = vadd.f32 0.0, %v1077
    %1079 = vmatmul.f32.gmra.mxu0 %v956
    %v1080 = vpop.f32.mrf.mxu0
    %v1081 = vadd.f32 0.0, %v1080
    %1082 = vmatmul.f32.gmra.mxu0 %v959
    %v1083 = vpop.f32.mrf.mxu0
    %v1084 = vadd.f32 0.0, %v1083
    %1085 = vmatmul.f32.gmra.mxu0 %v962
    %v1086 = vpop.f32.mrf.mxu0
    %v1087 = vadd.f32 0.0, %v1086
    %1088 = vmatmul.f32.gmra.mxu0 %v965
    %v1089 = vpop.f32.mrf.mxu0
    %v1090 = vadd.f32 0.0, %v1089
    %1091 = vmatmul.f32.gmra.mxu0 %v968
    %v1092 = vpop.f32.mrf.mxu0
    %v1093 = vadd.f32 0.0, %v1092
    %1094 = vmatmul.f32.gmra.mxu0 %v971
    %v1095 = vpop.f32.mrf.mxu0
    %v1096 = vadd.f32 0.0, %v1095
    %1097 = vmatmul.f32.gmra.mxu0 %v974
    %v1098 = vpop.f32.mrf.mxu0
    %v1099 = vadd.f32 0.0, %v1098
    %1100 = vmatmul.f32.gmra.mxu0 %v977
    %v1101 = vpop.f32.mrf.mxu0
    %v1102 = vadd.f32 0.0, %v1101
    %1103 = vmatmul.f32.gmra.mxu0 %v980
    %v1104 = vpop.f32.mrf.mxu0
    %v1105 = vadd.f32 0.0, %v1104
    %1106 = vmatmul.f32.gmra.mxu0 %v983
    %v1107 = vpop.f32.mrf.mxu0
    %v1108 = vadd.f32 0.0, %v1107
    %1109 = vmatmul.f32.gmra.mxu0 %v986
    %v1110 = vpop.f32.mrf.mxu0
    %v1111 = vadd.f32 0.0, %v1110
    %1112 = vmatmul.f32.gmra.mxu0 %v989
    %v1113 = vpop.f32.mrf.mxu0
    %v1114 = vadd.f32 0.0, %v1113
    %1115 = vmatmul.f32.gmra.mxu0 %v992
    %v1116 = vpop.f32.mrf.mxu0
    %v1117 = vadd.f32 0.0, %v1116
    %1118 = vmatmul.f32.gmra.mxu0 %v995
    %v1119 = vpop.f32.mrf.mxu0
    %v1120 = vadd.f32 0.0, %v1119
    %1121 = vmatmul.f32.gmra.mxu0 %v998
    %v1122 = vpop.f32.mrf.mxu0
    %v1123 = vadd.f32 0.0, %v1122
    %1124 = vmatmul.f32.gmra.mxu0 %v1001
    %v1125 = vpop.f32.mrf.mxu0
    %v1126 = vadd.f32 0.0, %v1125
    %1127 = vmatmul.f32.gmra.mxu0 %v1004
    %v1128 = vpop.f32.mrf.mxu0
    %v1129 = vadd.f32 0.0, %v1128
    %1130 = vmatmul.f32.gmra.mxu0 %v1007
    %v1131 = vpop.f32.mrf.mxu0
    %v1132 = vadd.f32 0.0, %v1131
    %1133 = vmatmul.f32.gmra.mxu0 %v1010
    %v1134 = vpop.f32.mrf.mxu0
    %v1135 = vadd.f32 0.0, %v1134
    %1136 = vmatmul.f32.gmra.mxu0 %v1013
    %v1137 = vpop.f32.mrf.mxu0
    %v1138 = vadd.f32 0.0, %v1137
    %1139 = vmatmul.f32.gmra.mxu0 %v1016
    %v1140 = vpop.f32.mrf.mxu0
    %v1141 = vadd.f32 0.0, %v1140
    %1142 = vmatmul.f32.gmra.mxu0 %v1019
    %v1143 = vpop.f32.mrf.mxu0
    %v1144 = vadd.f32 0.0, %v1143
    %1145 = vmatmul.f32.gmra.mxu0 %v1022
    %v1146 = vpop.f32.mrf.mxu0
    %v1147 = vadd.f32 0.0, %v1146
    %1148 = vmatmul.f32.gmra.mxu0 %v1025
    %v1149 = vpop.f32.mrf.mxu0
    %v1150 = vadd.f32 0.0, %v1149
    %1151 = vmatmul.f32.gmra.mxu0 %v1028
    %v1152 = vpop.f32.mrf.mxu0
    %v1153 = vadd.f32 0.0, %v1152
    %1154 = vmatmul.f32.gmra.mxu0 %v1031
    %v1155 = vpop.f32.mrf.mxu0
    %v1156 = vadd.f32 0.0, %v1155
    %1157 = vmatmul.f32.gmra.mxu0 %v1034
    %v1158 = vpop.f32.mrf.mxu0
    %v1159 = vadd.f32 0.0, %v1158
    %1160 = vmatmul.f32.gmra.mxu0 %v1037
    %v1161 = vpop.f32.mrf.mxu0
    %v1162 = vadd.f32 0.0, %v1161
    %1163 = vmatmul.f32.gmra.mxu0 %v1040
    %v1164 = vpop.f32.mrf.mxu0
    %v1165 = vadd.f32 0.0, %v1164
    %1166 = vmatmul.f32.gmra.mxu0 %v1043
    %v1167 = vpop.f32.mrf.mxu0
    %v1168 = vadd.f32 0.0, %v1167
    %1169 = vmatmul.f32.gmra.mxu0 %v1046
    %v1170 = vpop.f32.mrf.mxu0
    %v1171 = vadd.f32 0.0, %v1170
    %1172 = vdwg.mxu0
    %1173 = vmatpush.msra.mxu0 0.0
    %1174 = vmatpush.msra.mxu0 0.0
    %1175 = vmatpush.msra.mxu0 0.0
    %1176 = vmatpush.msra.mxu0 0.0
    %1177 = vmatpush.msra.mxu0 0.0
    %1178 = vmatpush.msra.mxu0 0.0
    %1179 = vmatpush.msra.mxu0 0.0
    %1180 = vmatpush.msra.mxu0 0.0
    %1181 = vmatpush.msra.mxu0 0.0
    %1182 = vmatpush.msra.mxu0 0.0
    %1183 = vmatpush.msra.mxu0 0.0
    %1184 = vmatpush.msra.mxu0 0.0
    %1185 = vmatpush.msra.mxu0 %v915
    %1186 = vmatpush.msra.mxu0 %v903
    %1187 = vmatpush.msra.mxu0 %v891
    %1188 = vmatpush.msra.mxu0 %v879
    %1189 = vmatmul.f32.gmra.mxu0 %v941
    %v1190 = vpop.f32.mrf.mxu0
    %v1191 = vadd.f32 0.0, %v1190
    %1192 = vmatmul.f32.gmra.mxu0 %v944
    %v1193 = vpop.f32.mrf.mxu0
    %v1194 = vadd.f32 0.0, %v1193
    %1195 = vmatmul.f32.gmra.mxu0 %v947
    %v1196 = vpop.f32.mrf.mxu0
    %v1197 = vadd.f32 0.0, %v1196
    %1198 = vmatmul.f32.gmra.mxu0 %v950
    %v1199 = vpop.f32.mrf.mxu0
    %v1200 = vadd.f32 0.0, %v1199
    %1201 = vmatmul.f32.gmra.mxu0 %v953
    %v1202 = vpop.f32.mrf.mxu0
    %v1203 = vadd.f32 0.0, %v1202
    %1204 = vmatmul.f32.gmra.mxu0 %v956
    %v1205 = vpop.f32.mrf.mxu0
    %v1206 = vadd.f32 0.0, %v1205
    %1207 = vmatmul.f32.gmra.mxu0 %v959
    %v1208 = vpop.f32.mrf.mxu0
    %v1209 = vadd.f32 0.0, %v1208
    %1210 = vmatmul.f32.gmra.mxu0 %v962
    %v1211 = vpop.f32.mrf.mxu0
    %v1212 = vadd.f32 0.0, %v1211
    %1213 = vmatmul.f32.gmra.mxu0 %v965
    %v1214 = vpop.f32.mrf.mxu0
    %v1215 = vadd.f32 0.0, %v1214
    %1216 = vmatmul.f32.gmra.mxu0 %v968
    %v1217 = vpop.f32.mrf.mxu0
    %v1218 = vadd.f32 0.0, %v1217
    %1219 = vmatmul.f32.gmra.mxu0 %v971
    %v1220 = vpop.f32.mrf.mxu0
    %v1221 = vadd.f32 0.0, %v1220
    %1222 = vmatmul.f32.gmra.mxu0 %v974
    %v1223 = vpop.f32.mrf.mxu0
    %v1224 = vadd.f32 0.0, %v1223
    %1225 = vmatmul.f32.gmra.mxu0 %v977
    %v1226 = vpop.f32.mrf.mxu0
    %v1227 = vadd.f32 0.0, %v1226
    %1228 = vmatmul.f32.gmra.mxu0 %v980
    %v1229 = vpop.f32.mrf.mxu0
    %v1230 = vadd.f32 0.0, %v1229
    %1231 = vmatmul.f32.gmra.mxu0 %v983
    %v1232 = vpop.f32.mrf.mxu0
    %v1233 = vadd.f32 0.0, %v1232
    %1234 = vmatmul.f32.gmra.mxu0 %v986
    %v1235 = vpop.f32.mrf.mxu0
    %v1236 = vadd.f32 0.0, %v1235
    %1237 = vmatmul.f32.gmra.mxu0 %v989
    %v1238 = vpop.f32.mrf.mxu0
    %v1239 = vadd.f32 0.0, %v1238
    %1240 = vmatmul.f32.gmra.mxu0 %v992
    %v1241 = vpop.f32.mrf.mxu0
    %v1242 = vadd.f32 0.0, %v1241
    %1243 = vmatmul.f32.gmra.mxu0 %v995
    %v1244 = vpop.f32.mrf.mxu0
    %v1245 = vadd.f32 0.0, %v1244
    %1246 = vmatmul.f32.gmra.mxu0 %v998
    %v1247 = vpop.f32.mrf.mxu0
    %v1248 = vadd.f32 0.0, %v1247
    %1249 = vmatmul.f32.gmra.mxu0 %v1001
    %v1250 = vpop.f32.mrf.mxu0
    %v1251 = vadd.f32 0.0, %v1250
    %1252 = vmatmul.f32.gmra.mxu0 %v1004
    %v1253 = vpop.f32.mrf.mxu0
    %v1254 = vadd.f32 0.0, %v1253
    %1255 = vmatmul.f32.gmra.mxu0 %v1007
    %v1256 = vpop.f32.mrf.mxu0
    %v1257 = vadd.f32 0.0, %v1256
    %1258 = vmatmul.f32.gmra.mxu0 %v1010
    %v1259 = vpop.f32.mrf.mxu0
    %v1260 = vadd.f32 0.0, %v1259
    %1261 = vmatmul.f32.gmra.mxu0 %v1013
    %v1262 = vpop.f32.mrf.mxu0
    %v1263 = vadd.f32 0.0, %v1262
    %1264 = vmatmul.f32.gmra.mxu0 %v1016
    %v1265 = vpop.f32.mrf.mxu0
    %v1266 = vadd.f32 0.0, %v1265
    %1267 = vmatmul.f32.gmra.mxu0 %v1019
    %v1268 = vpop.f32.mrf.mxu0
    %v1269 = vadd.f32 0.0, %v1268
    %1270 = vmatmul.f32.gmra.mxu0 %v1022
    %v1271 = vpop.f32.mrf.mxu0
    %v1272 = vadd.f32 0.0, %v1271
    %1273 = vmatmul.f32.gmra.mxu0 %v1025
    %v1274 = vpop.f32.mrf.mxu0
    %v1275 = vadd.f32 0.0, %v1274
    %1276 = vmatmul.f32.gmra.mxu0 %v1028
    %v1277 = vpop.f32.mrf.mxu0
    %v1278 = vadd.f32 0.0, %v1277
    %1279 = vmatmul.f32.gmra.mxu0 %v1031
    %v1280 = vpop.f32.mrf.mxu0
    %v1281 = vadd.f32 0.0, %v1280
    %1282 = vmatmul.f32.gmra.mxu0 %v1034
    %v1283 = vpop.f32.mrf.mxu0
    %v1284 = vadd.f32 0.0, %v1283
    %1285 = vmatmul.f32.gmra.mxu0 %v1037
    %v1286 = vpop.f32.mrf.mxu0
    %v1287 = vadd.f32 0.0, %v1286
    %1288 = vmatmul.f32.gmra.mxu0 %v1040
    %v1289 = vpop.f32.mrf.mxu0
    %v1290 = vadd.f32 0.0, %v1289
    %1291 = vmatmul.f32.gmra.mxu0 %v1043
    %v1292 = vpop.f32.mrf.mxu0
    %v1293 = vadd.f32 0.0, %v1292
    %1294 = vmatmul.f32.gmra.mxu0 %v1046
    %v1295 = vpop.f32.mrf.mxu0
    %v1296 = vadd.f32 0.0, %v1295
    %1297 = vdwg.mxu0
    %1298 = vmatpush.msra.mxu0 0.0
    %1299 = vmatpush.msra.mxu0 0.0
    %1300 = vmatpush.msra.mxu0 0.0
    %1301 = vmatpush.msra.mxu0 0.0
    %1302 = vmatpush.msra.mxu0 0.0
    %1303 = vmatpush.msra.mxu0 0.0
    %1304 = vmatpush.msra.mxu0 0.0
    %1305 = vmatpush.msra.mxu0 0.0
    %1306 = vmatpush.msra.mxu0 0.0
    %1307 = vmatpush.msra.mxu0 0.0
    %1308 = vmatpush.msra.mxu0 0.0
    %1309 = vmatpush.msra.mxu0 0.0
    %1310 = vmatpush.msra.mxu0 %v916
    %1311 = vmatpush.msra.mxu0 %v904
    %1312 = vmatpush.msra.mxu0 %v892
    %1313 = vmatpush.msra.mxu0 %v880
    %1314 = vmatmul.f32.gmra.mxu0 %v941
    %v1315 = vpop.f32.mrf.mxu0
    %v1316 = vadd.f32 0.0, %v1315
    %1317 = vmatmul.f32.gmra.mxu0 %v944
    %v1318 = vpop.f32.mrf.mxu0
    %v1319 = vadd.f32 0.0, %v1318
    %1320 = vmatmul.f32.gmra.mxu0 %v947
    %v1321 = vpop.f32.mrf.mxu0
    %v1322 = vadd.f32 0.0, %v1321
    %1323 = vmatmul.f32.gmra.mxu0 %v950
    %v1324 = vpop.f32.mrf.mxu0
    %v1325 = vadd.f32 0.0, %v1324
    %1326 = vmatmul.f32.gmra.mxu0 %v953
    %v1327 = vpop.f32.mrf.mxu0
    %v1328 = vadd.f32 0.0, %v1327
    %1329 = vmatmul.f32.gmra.mxu0 %v956
    %v1330 = vpop.f32.mrf.mxu0
    %v1331 = vadd.f32 0.0, %v1330
    %1332 = vmatmul.f32.gmra.mxu0 %v959
    %v1333 = vpop.f32.mrf.mxu0
    %v1334 = vadd.f32 0.0, %v1333
    %1335 = vmatmul.f32.gmra.mxu0 %v962
    %v1336 = vpop.f32.mrf.mxu0
    %v1337 = vadd.f32 0.0, %v1336
    %1338 = vmatmul.f32.gmra.mxu0 %v965
    %v1339 = vpop.f32.mrf.mxu0
    %v1340 = vadd.f32 0.0, %v1339
    %1341 = vmatmul.f32.gmra.mxu0 %v968
    %v1342 = vpop.f32.mrf.mxu0
    %v1343 = vadd.f32 0.0, %v1342
    %1344 = vmatmul.f32.gmra.mxu0 %v971
    %v1345 = vpop.f32.mrf.mxu0
    %v1346 = vadd.f32 0.0, %v1345
    %1347 = vmatmul.f32.gmra.mxu0 %v974
    %v1348 = vpop.f32.mrf.mxu0
    %v1349 = vadd.f32 0.0, %v1348
    %1350 = vmatmul.f32.gmra.mxu0 %v977
    %v1351 = vpop.f32.mrf.mxu0
    %v1352 = vadd.f32 0.0, %v1351
    %1353 = vmatmul.f32.gmra.mxu0 %v980
    %v1354 = vpop.f32.mrf.mxu0
    %v1355 = vadd.f32 0.0, %v1354
    %1356 = vmatmul.f32.gmra.mxu0 %v983
    %v1357 = vpop.f32.mrf.mxu0
    %v1358 = vadd.f32 0.0, %v1357
    %1359 = vmatmul.f32.gmra.mxu0 %v986
    %v1360 = vpop.f32.mrf.mxu0
    %v1361 = vadd.f32 0.0, %v1360
    %1362 = vmatmul.f32.gmra.mxu0 %v989
    %v1363 = vpop.f32.mrf.mxu0
    %v1364 = vadd.f32 0.0, %v1363
    %1365 = vmatmul.f32.gmra.mxu0 %v992
    %v1366 = vpop.f32.mrf.mxu0
    %v1367 = vadd.f32 0.0, %v1366
    %1368 = vmatmul.f32.gmra.mxu0 %v995
    %v1369 = vpop.f32.mrf.mxu0
    %v1370 = vadd.f32 0.0, %v1369
    %1371 = vmatmul.f32.gmra.mxu0 %v998
    %v1372 = vpop.f32.mrf.mxu0
    %v1373 = vadd.f32 0.0, %v1372
    %1374 = vmatmul.f32.gmra.mxu0 %v1001
    %v1375 = vpop.f32.mrf.mxu0
    %v1376 = vadd.f32 0.0, %v1375
    %1377 = vmatmul.f32.gmra.mxu0 %v1004
    %v1378 = vpop.f32.mrf.mxu0
    %v1379 = vadd.f32 0.0, %v1378
    %1380 = vmatmul.f32.gmra.mxu0 %v1007
    %v1381 = vpop.f32.mrf.mxu0
    %v1382 = vadd.f32 0.0, %v1381
    %1383 = vmatmul.f32.gmra.mxu0 %v1010
    %v1384 = vpop.f32.mrf.mxu0
    %v1385 = vadd.f32 0.0, %v1384
    %1386 = vmatmul.f32.gmra.mxu0 %v1013
    %v1387 = vpop.f32.mrf.mxu0
    %v1388 = vadd.f32 0.0, %v1387
    %1389 = vmatmul.f32.gmra.mxu0 %v1016
    %v1390 = vpop.f32.mrf.mxu0
    %v1391 = vadd.f32 0.0, %v1390
    %1392 = vmatmul.f32.gmra.mxu0 %v1019
    %v1393 = vpop.f32.mrf.mxu0
    %v1394 = vadd.f32 0.0, %v1393
    %1395 = vmatmul.f32.gmra.mxu0 %v1022
    %v1396 = vpop.f32.mrf.mxu0
    %v1397 = vadd.f32 0.0, %v1396
    %1398 = vmatmul.f32.gmra.mxu0 %v1025
    %v1399 = vpop.f32.mrf.mxu0
    %v1400 = vadd.f32 0.0, %v1399
    %1401 = vmatmul.f32.gmra.mxu0 %v1028
    %v1402 = vpop.f32.mrf.mxu0
    %v1403 = vadd.f32 0.0, %v1402
    %1404 = vmatmul.f32.gmra.mxu0 %v1031
    %v1405 = vpop.f32.mrf.mxu0
    %v1406 = vadd.f32 0.0, %v1405
    %1407 = vmatmul.f32.gmra.mxu0 %v1034
    %v1408 = vpop.f32.mrf.mxu0
    %v1409 = vadd.f32 0.0, %v1408
    %1410 = vmatmul.f32.gmra.mxu0 %v1037
    %v1411 = vpop.f32.mrf.mxu0
    %v1412 = vadd.f32 0.0, %v1411
    %1413 = vmatmul.f32.gmra.mxu0 %v1040
    %v1414 = vpop.f32.mrf.mxu0
    %v1415 = vadd.f32 0.0, %v1414
    %1416 = vmatmul.f32.gmra.mxu0 %v1043
    %v1417 = vpop.f32.mrf.mxu0
    %v1418 = vadd.f32 0.0, %v1417
    %1419 = vmatmul.f32.gmra.mxu0 %v1046
    %v1420 = vpop.f32.mrf.mxu0
    %v1421 = vadd.f32 0.0, %v1420
    %1422 = vdwg.mxu0
    %1423 = vmatpush.msra.mxu0 0.0
    %1424 = vmatpush.msra.mxu0 0.0
    %1425 = vmatpush.msra.mxu0 0.0
    %1426 = vmatpush.msra.mxu0 0.0
    %1427 = vmatpush.msra.mxu0 0.0
    %1428 = vmatpush.msra.mxu0 0.0
    %1429 = vmatpush.msra.mxu0 0.0
    %1430 = vmatpush.msra.mxu0 0.0
    %1431 = vmatpush.msra.mxu0 0.0
    %1432 = vmatpush.msra.mxu0 0.0
    %1433 = vmatpush.msra.mxu0 0.0
    %1434 = vmatpush.msra.mxu0 0.0
    %1435 = vmatpush.msra.mxu0 %v917
    %1436 = vmatpush.msra.mxu0 %v905
    %1437 = vmatpush.msra.mxu0 %v893
    %1438 = vmatpush.msra.mxu0 %v881
    %1439 = vmatmul.f32.gmra.mxu0 %v941
    %v1440 = vpop.f32.mrf.mxu0
    %v1441 = vadd.f32 0.0, %v1440
    %1442 = vmatmul.f32.gmra.mxu0 %v944
    %v1443 = vpop.f32.mrf.mxu0
    %v1444 = vadd.f32 0.0, %v1443
    %1445 = vmatmul.f32.gmra.mxu0 %v947
    %v1446 = vpop.f32.mrf.mxu0
    %v1447 = vadd.f32 0.0, %v1446
    %1448 = vmatmul.f32.gmra.mxu0 %v950
    %v1449 = vpop.f32.mrf.mxu0
    %v1450 = vadd.f32 0.0, %v1449
    %1451 = vmatmul.f32.gmra.mxu0 %v953
    %v1452 = vpop.f32.mrf.mxu0
    %v1453 = vadd.f32 0.0, %v1452
    %1454 = vmatmul.f32.gmra.mxu0 %v956
    %v1455 = vpop.f32.mrf.mxu0
    %v1456 = vadd.f32 0.0, %v1455
    %1457 = vmatmul.f32.gmra.mxu0 %v959
    %v1458 = vpop.f32.mrf.mxu0
    %v1459 = vadd.f32 0.0, %v1458
    %1460 = vmatmul.f32.gmra.mxu0 %v962
    %v1461 = vpop.f32.mrf.mxu0
    %v1462 = vadd.f32 0.0, %v1461
    %1463 = vmatmul.f32.gmra.mxu0 %v965
    %v1464 = vpop.f32.mrf.mxu0
    %v1465 = vadd.f32 0.0, %v1464
    %1466 = vmatmul.f32.gmra.mxu0 %v968
    %v1467 = vpop.f32.mrf.mxu0
    %v1468 = vadd.f32 0.0, %v1467
    %1469 = vmatmul.f32.gmra.mxu0 %v971
    %v1470 = vpop.f32.mrf.mxu0
    %v1471 = vadd.f32 0.0, %v1470
    %1472 = vmatmul.f32.gmra.mxu0 %v974
    %v1473 = vpop.f32.mrf.mxu0
    %v1474 = vadd.f32 0.0, %v1473
    %1475 = vmatmul.f32.gmra.mxu0 %v977
    %v1476 = vpop.f32.mrf.mxu0
    %v1477 = vadd.f32 0.0, %v1476
    %1478 = vmatmul.f32.gmra.mxu0 %v980
    %v1479 = vpop.f32.mrf.mxu0
    %v1480 = vadd.f32 0.0, %v1479
    %1481 = vmatmul.f32.gmra.mxu0 %v983
    %v1482 = vpop.f32.mrf.mxu0
    %v1483 = vadd.f32 0.0, %v1482
    %1484 = vmatmul.f32.gmra.mxu0 %v986
    %v1485 = vpop.f32.mrf.mxu0
    %v1486 = vadd.f32 0.0, %v1485
    %1487 = vmatmul.f32.gmra.mxu0 %v989
    %v1488 = vpop.f32.mrf.mxu0
    %v1489 = vadd.f32 0.0, %v1488
    %1490 = vmatmul.f32.gmra.mxu0 %v992
    %v1491 = vpop.f32.mrf.mxu0
    %v1492 = vadd.f32 0.0, %v1491
    %1493 = vmatmul.f32.gmra.mxu0 %v995
    %v1494 = vpop.f32.mrf.mxu0
    %v1495 = vadd.f32 0.0, %v1494
    %1496 = vmatmul.f32.gmra.mxu0 %v998
    %v1497 = vpop.f32.mrf.mxu0
    %v1498 = vadd.f32 0.0, %v1497
    %1499 = vmatmul.f32.gmra.mxu0 %v1001
    %v1500 = vpop.f32.mrf.mxu0
    %v1501 = vadd.f32 0.0, %v1500
    %1502 = vmatmul.f32.gmra.mxu0 %v1004
    %v1503 = vpop.f32.mrf.mxu0
    %v1504 = vadd.f32 0.0, %v1503
    %1505 = vmatmul.f32.gmra.mxu0 %v1007
    %v1506 = vpop.f32.mrf.mxu0
    %v1507 = vadd.f32 0.0, %v1506
    %1508 = vmatmul.f32.gmra.mxu0 %v1010
    %v1509 = vpop.f32.mrf.mxu0
    %v1510 = vadd.f32 0.0, %v1509
    %1511 = vmatmul.f32.gmra.mxu0 %v1013
    %v1512 = vpop.f32.mrf.mxu0
    %v1513 = vadd.f32 0.0, %v1512
    %1514 = vmatmul.f32.gmra.mxu0 %v1016
    %v1515 = vpop.f32.mrf.mxu0
    %v1516 = vadd.f32 0.0, %v1515
    %1517 = vmatmul.f32.gmra.mxu0 %v1019
    %v1518 = vpop.f32.mrf.mxu0
    %v1519 = vadd.f32 0.0, %v1518
    %1520 = vmatmul.f32.gmra.mxu0 %v1022
    %v1521 = vpop.f32.mrf.mxu0
    %v1522 = vadd.f32 0.0, %v1521
    %1523 = vmatmul.f32.gmra.mxu0 %v1025
    %v1524 = vpop.f32.mrf.mxu0
    %v1525 = vadd.f32 0.0, %v1524
    %1526 = vmatmul.f32.gmra.mxu0 %v1028
    %v1527 = vpop.f32.mrf.mxu0
    %v1528 = vadd.f32 0.0, %v1527
    %1529 = vmatmul.f32.gmra.mxu0 %v1031
    %v1530 = vpop.f32.mrf.mxu0
    %v1531 = vadd.f32 0.0, %v1530
    %1532 = vmatmul.f32.gmra.mxu0 %v1034
    %v1533 = vpop.f32.mrf.mxu0
    %v1534 = vadd.f32 0.0, %v1533
    %1535 = vmatmul.f32.gmra.mxu0 %v1037
    %v1536 = vpop.f32.mrf.mxu0
    %v1537 = vadd.f32 0.0, %v1536
    %1538 = vmatmul.f32.gmra.mxu0 %v1040
    %v1539 = vpop.f32.mrf.mxu0
    %v1540 = vadd.f32 0.0, %v1539
    %1541 = vmatmul.f32.gmra.mxu0 %v1043
    %v1542 = vpop.f32.mrf.mxu0
    %v1543 = vadd.f32 0.0, %v1542
    %1544 = vmatmul.f32.gmra.mxu0 %v1046
    %v1545 = vpop.f32.mrf.mxu0
    %v1546 = vadd.f32 0.0, %v1545
    %1547 = vdwg.mxu0
    %1548 = vmatpush.msra.mxu0 0.0
    %1549 = vmatpush.msra.mxu0 0.0
    %1550 = vmatpush.msra.mxu0 0.0
    %1551 = vmatpush.msra.mxu0 0.0
    %1552 = vmatpush.msra.mxu0 0.0
    %1553 = vmatpush.msra.mxu0 0.0
    %1554 = vmatpush.msra.mxu0 0.0
    %1555 = vmatpush.msra.mxu0 0.0
    %1556 = vmatpush.msra.mxu0 0.0
    %1557 = vmatpush.msra.mxu0 0.0
    %1558 = vmatpush.msra.mxu0 0.0
    %1559 = vmatpush.msra.mxu0 0.0
    %1560 = vmatpush.msra.mxu0 %v918
    %1561 = vmatpush.msra.mxu0 %v906
    %1562 = vmatpush.msra.mxu0 %v894
    %1563 = vmatpush.msra.mxu0 %v882
    %1564 = vmatmul.f32.gmra.mxu0 %v941
    %v1565 = vpop.f32.mrf.mxu0
    %v1566 = vadd.f32 0.0, %v1565
    %1567 = vmatmul.f32.gmra.mxu0 %v944
    %v1568 = vpop.f32.mrf.mxu0
    %v1569 = vadd.f32 0.0, %v1568
    %1570 = vmatmul.f32.gmra.mxu0 %v947
    %v1571 = vpop.f32.mrf.mxu0
    %v1572 = vadd.f32 0.0, %v1571
    %1573 = vmatmul.f32.gmra.mxu0 %v950
    %v1574 = vpop.f32.mrf.mxu0
    %v1575 = vadd.f32 0.0, %v1574
    %1576 = vmatmul.f32.gmra.mxu0 %v953
    %v1577 = vpop.f32.mrf.mxu0
    %v1578 = vadd.f32 0.0, %v1577
    %1579 = vmatmul.f32.gmra.mxu0 %v956
    %v1580 = vpop.f32.mrf.mxu0
    %v1581 = vadd.f32 0.0, %v1580
    %1582 = vmatmul.f32.gmra.mxu0 %v959
    %v1583 = vpop.f32.mrf.mxu0
    %v1584 = vadd.f32 0.0, %v1583
    %1585 = vmatmul.f32.gmra.mxu0 %v962
    %v1586 = vpop.f32.mrf.mxu0
    %v1587 = vadd.f32 0.0, %v1586
    %1588 = vmatmul.f32.gmra.mxu0 %v965
    %v1589 = vpop.f32.mrf.mxu0
    %v1590 = vadd.f32 0.0, %v1589
    %1591 = vmatmul.f32.gmra.mxu0 %v968
    %v1592 = vpop.f32.mrf.mxu0
    %v1593 = vadd.f32 0.0, %v1592
    %1594 = vmatmul.f32.gmra.mxu0 %v971
    %v1595 = vpop.f32.mrf.mxu0
    %v1596 = vadd.f32 0.0, %v1595
    %1597 = vmatmul.f32.gmra.mxu0 %v974
    %v1598 = vpop.f32.mrf.mxu0
    %v1599 = vadd.f32 0.0, %v1598
    %1600 = vmatmul.f32.gmra.mxu0 %v977
    %v1601 = vpop.f32.mrf.mxu0
    %v1602 = vadd.f32 0.0, %v1601
    %1603 = vmatmul.f32.gmra.mxu0 %v980
    %v1604 = vpop.f32.mrf.mxu0
    %v1605 = vadd.f32 0.0, %v1604
    %1606 = vmatmul.f32.gmra.mxu0 %v983
    %v1607 = vpop.f32.mrf.mxu0
    %v1608 = vadd.f32 0.0, %v1607
    %1609 = vmatmul.f32.gmra.mxu0 %v986
    %v1610 = vpop.f32.mrf.mxu0
    %v1611 = vadd.f32 0.0, %v1610
    %1612 = vmatmul.f32.gmra.mxu0 %v989
    %v1613 = vpop.f32.mrf.mxu0
    %v1614 = vadd.f32 0.0, %v1613
    %1615 = vmatmul.f32.gmra.mxu0 %v992
    %v1616 = vpop.f32.mrf.mxu0
    %v1617 = vadd.f32 0.0, %v1616
    %1618 = vmatmul.f32.gmra.mxu0 %v995
    %v1619 = vpop.f32.mrf.mxu0
    %v1620 = vadd.f32 0.0, %v1619
    %1621 = vmatmul.f32.gmra.mxu0 %v998
    %v1622 = vpop.f32.mrf.mxu0
    %v1623 = vadd.f32 0.0, %v1622
    %1624 = vmatmul.f32.gmra.mxu0 %v1001
    %v1625 = vpop.f32.mrf.mxu0
    %v1626 = vadd.f32 0.0, %v1625
    %1627 = vmatmul.f32.gmra.mxu0 %v1004
    %v1628 = vpop.f32.mrf.mxu0
    %v1629 = vadd.f32 0.0, %v1628
    %1630 = vmatmul.f32.gmra.mxu0 %v1007
    %v1631 = vpop.f32.mrf.mxu0
    %v1632 = vadd.f32 0.0, %v1631
    %1633 = vmatmul.f32.gmra.mxu0 %v1010
    %v1634 = vpop.f32.mrf.mxu0
    %v1635 = vadd.f32 0.0, %v1634
    %1636 = vmatmul.f32.gmra.mxu0 %v1013
    %v1637 = vpop.f32.mrf.mxu0
    %v1638 = vadd.f32 0.0, %v1637
    %1639 = vmatmul.f32.gmra.mxu0 %v1016
    %v1640 = vpop.f32.mrf.mxu0
    %v1641 = vadd.f32 0.0, %v1640
    %1642 = vmatmul.f32.gmra.mxu0 %v1019
    %v1643 = vpop.f32.mrf.mxu0
    %v1644 = vadd.f32 0.0, %v1643
    %1645 = vmatmul.f32.gmra.mxu0 %v1022
    %v1646 = vpop.f32.mrf.mxu0
    %v1647 = vadd.f32 0.0, %v1646
    %1648 = vmatmul.f32.gmra.mxu0 %v1025
    %v1649 = vpop.f32.mrf.mxu0
    %v1650 = vadd.f32 0.0, %v1649
    %1651 = vmatmul.f32.gmra.mxu0 %v1028
    %v1652 = vpop.f32.mrf.mxu0
    %v1653 = vadd.f32 0.0, %v1652
    %1654 = vmatmul.f32.gmra.mxu0 %v1031
    %v1655 = vpop.f32.mrf.mxu0
    %v1656 = vadd.f32 0.0, %v1655
    %1657 = vmatmul.f32.gmra.mxu0 %v1034
    %v1658 = vpop.f32.mrf.mxu0
    %v1659 = vadd.f32 0.0, %v1658
    %1660 = vmatmul.f32.gmra.mxu0 %v1037
    %v1661 = vpop.f32.mrf.mxu0
    %v1662 = vadd.f32 0.0, %v1661
    %1663 = vmatmul.f32.gmra.mxu0 %v1040
    %v1664 = vpop.f32.mrf.mxu0
    %v1665 = vadd.f32 0.0, %v1664
    %1666 = vmatmul.f32.gmra.mxu0 %v1043
    %v1667 = vpop.f32.mrf.mxu0
    %v1668 = vadd.f32 0.0, %v1667
    %1669 = vmatmul.f32.gmra.mxu0 %v1046
    %v1670 = vpop.f32.mrf.mxu0
    %v1671 = vadd.f32 0.0, %v1670
    %1672 = vdwg.mxu0
    %1673 = vmatpush.msra.mxu0 0.0
    %1674 = vmatpush.msra.mxu0 0.0
    %1675 = vmatpush.msra.mxu0 0.0
    %1676 = vmatpush.msra.mxu0 0.0
    %1677 = vmatpush.msra.mxu0 0.0
    %1678 = vmatpush.msra.mxu0 0.0
    %1679 = vmatpush.msra.mxu0 0.0
    %1680 = vmatpush.msra.mxu0 0.0
    %1681 = vmatpush.msra.mxu0 0.0
    %1682 = vmatpush.msra.mxu0 0.0
    %1683 = vmatpush.msra.mxu0 0.0
    %1684 = vmatpush.msra.mxu0 0.0
    %1685 = vmatpush.msra.mxu0 %v919
    %1686 = vmatpush.msra.mxu0 %v907
    %1687 = vmatpush.msra.mxu0 %v895
    %1688 = vmatpush.msra.mxu0 %v883
    %1689 = vmatmul.f32.gmra.mxu0 %v941
    %v1690 = vpop.f32.mrf.mxu0
    %v1691 = vadd.f32 0.0, %v1690
    %1692 = vmatmul.f32.gmra.mxu0 %v944
    %v1693 = vpop.f32.mrf.mxu0
    %v1694 = vadd.f32 0.0, %v1693
    %1695 = vmatmul.f32.gmra.mxu0 %v947
    %v1696 = vpop.f32.mrf.mxu0
    %v1697 = vadd.f32 0.0, %v1696
    %1698 = vmatmul.f32.gmra.mxu0 %v950
    %v1699 = vpop.f32.mrf.mxu0
    %v1700 = vadd.f32 0.0, %v1699
    %1701 = vmatmul.f32.gmra.mxu0 %v953
    %v1702 = vpop.f32.mrf.mxu0
    %v1703 = vadd.f32 0.0, %v1702
    %1704 = vmatmul.f32.gmra.mxu0 %v956
    %v1705 = vpop.f32.mrf.mxu0
    %v1706 = vadd.f32 0.0, %v1705
    %1707 = vmatmul.f32.gmra.mxu0 %v959
    %v1708 = vpop.f32.mrf.mxu0
    %v1709 = vadd.f32 0.0, %v1708
    %1710 = vmatmul.f32.gmra.mxu0 %v962
    %v1711 = vpop.f32.mrf.mxu0
    %v1712 = vadd.f32 0.0, %v1711
    %1713 = vmatmul.f32.gmra.mxu0 %v965
    %v1714 = vpop.f32.mrf.mxu0
    %v1715 = vadd.f32 0.0, %v1714
    %1716 = vmatmul.f32.gmra.mxu0 %v968
    %v1717 = vpop.f32.mrf.mxu0
    %v1718 = vadd.f32 0.0, %v1717
    %1719 = vmatmul.f32.gmra.mxu0 %v971
    %v1720 = vpop.f32.mrf.mxu0
    %v1721 = vadd.f32 0.0, %v1720
    %1722 = vmatmul.f32.gmra.mxu0 %v974
    %v1723 = vpop.f32.mrf.mxu0
    %v1724 = vadd.f32 0.0, %v1723
    %1725 = vmatmul.f32.gmra.mxu0 %v977
    %v1726 = vpop.f32.mrf.mxu0
    %v1727 = vadd.f32 0.0, %v1726
    %1728 = vmatmul.f32.gmra.mxu0 %v980
    %v1729 = vpop.f32.mrf.mxu0
    %v1730 = vadd.f32 0.0, %v1729
    %1731 = vmatmul.f32.gmra.mxu0 %v983
    %v1732 = vpop.f32.mrf.mxu0
    %v1733 = vadd.f32 0.0, %v1732
    %1734 = vmatmul.f32.gmra.mxu0 %v986
    %v1735 = vpop.f32.mrf.mxu0
    %v1736 = vadd.f32 0.0, %v1735
    %1737 = vmatmul.f32.gmra.mxu0 %v989
    %v1738 = vpop.f32.mrf.mxu0
    %v1739 = vadd.f32 0.0, %v1738
    %1740 = vmatmul.f32.gmra.mxu0 %v992
    %v1741 = vpop.f32.mrf.mxu0
    %v1742 = vadd.f32 0.0, %v1741
    %1743 = vmatmul.f32.gmra.mxu0 %v995
    %v1744 = vpop.f32.mrf.mxu0
    %v1745 = vadd.f32 0.0, %v1744
    %1746 = vmatmul.f32.gmra.mxu0 %v998
    %v1747 = vpop.f32.mrf.mxu0
    %v1748 = vadd.f32 0.0, %v1747
    %1749 = vmatmul.f32.gmra.mxu0 %v1001
    %v1750 = vpop.f32.mrf.mxu0
    %v1751 = vadd.f32 0.0, %v1750
    %1752 = vmatmul.f32.gmra.mxu0 %v1004
    %v1753 = vpop.f32.mrf.mxu0
    %v1754 = vadd.f32 0.0, %v1753
    %1755 = vmatmul.f32.gmra.mxu0 %v1007
    %v1756 = vpop.f32.mrf.mxu0
    %v1757 = vadd.f32 0.0, %v1756
    %1758 = vmatmul.f32.gmra.mxu0 %v1010
    %v1759 = vpop.f32.mrf.mxu0
    %v1760 = vadd.f32 0.0, %v1759
    %1761 = vmatmul.f32.gmra.mxu0 %v1013
    %v1762 = vpop.f32.mrf.mxu0
    %v1763 = vadd.f32 0.0, %v1762
    %1764 = vmatmul.f32.gmra.mxu0 %v1016
    %v1765 = vpop.f32.mrf.mxu0
    %v1766 = vadd.f32 0.0, %v1765
    %1767 = vmatmul.f32.gmra.mxu0 %v1019
    %v1768 = vpop.f32.mrf.mxu0
    %v1769 = vadd.f32 0.0, %v1768
    %1770 = vmatmul.f32.gmra.mxu0 %v1022
    %v1771 = vpop.f32.mrf.mxu0
    %v1772 = vadd.f32 0.0, %v1771
    %1773 = vmatmul.f32.gmra.mxu0 %v1025
    %v1774 = vpop.f32.mrf.mxu0
    %v1775 = vadd.f32 0.0, %v1774
    %1776 = vmatmul.f32.gmra.mxu0 %v1028
    %v1777 = vpop.f32.mrf.mxu0
    %v1778 = vadd.f32 0.0, %v1777
    %1779 = vmatmul.f32.gmra.mxu0 %v1031
    %v1780 = vpop.f32.mrf.mxu0
    %v1781 = vadd.f32 0.0, %v1780
    %1782 = vmatmul.f32.gmra.mxu0 %v1034
    %v1783 = vpop.f32.mrf.mxu0
    %v1784 = vadd.f32 0.0, %v1783
    %1785 = vmatmul.f32.gmra.mxu0 %v1037
    %v1786 = vpop.f32.mrf.mxu0
    %v1787 = vadd.f32 0.0, %v1786
    %1788 = vmatmul.f32.gmra.mxu0 %v1040
    %v1789 = vpop.f32.mrf.mxu0
    %v1790 = vadd.f32 0.0, %v1789
    %1791 = vmatmul.f32.gmra.mxu0 %v1043
    %v1792 = vpop.f32.mrf.mxu0
    %v1793 = vadd.f32 0.0, %v1792
    %1794 = vmatmul.f32.gmra.mxu0 %v1046
    %v1795 = vpop.f32.mrf.mxu0
    %v1796 = vadd.f32 0.0, %v1795
    %1797 = vdwg.mxu0
    %1798 = vmatpush.msra.mxu0 0.0
    %1799 = vmatpush.msra.mxu0 0.0
    %1800 = vmatpush.msra.mxu0 0.0
    %1801 = vmatpush.msra.mxu0 0.0
    %1802 = vmatpush.msra.mxu0 0.0
    %1803 = vmatpush.msra.mxu0 0.0
    %1804 = vmatpush.msra.mxu0 0.0
    %1805 = vmatpush.msra.mxu0 0.0
    %1806 = vmatpush.msra.mxu0 0.0
    %1807 = vmatpush.msra.mxu0 0.0
    %1808 = vmatpush.msra.mxu0 0.0
    %1809 = vmatpush.msra.mxu0 0.0
    %1810 = vmatpush.msra.mxu0 %v920
    %1811 = vmatpush.msra.mxu0 %v908
    %1812 = vmatpush.msra.mxu0 %v896
    %1813 = vmatpush.msra.mxu0 %v884
    %1814 = vmatmul.f32.gmra.mxu0 %v941
    %v1815 = vpop.f32.mrf.mxu0
    %v1816 = vadd.f32 0.0, %v1815
    %1817 = vmatmul.f32.gmra.mxu0 %v944
    %v1818 = vpop.f32.mrf.mxu0
    %v1819 = vadd.f32 0.0, %v1818
    %1820 = vmatmul.f32.gmra.mxu0 %v947
    %v1821 = vpop.f32.mrf.mxu0
    %v1822 = vadd.f32 0.0, %v1821
    %1823 = vmatmul.f32.gmra.mxu0 %v950
    %v1824 = vpop.f32.mrf.mxu0
    %v1825 = vadd.f32 0.0, %v1824
    %1826 = vmatmul.f32.gmra.mxu0 %v953
    %v1827 = vpop.f32.mrf.mxu0
    %v1828 = vadd.f32 0.0, %v1827
    %1829 = vmatmul.f32.gmra.mxu0 %v956
    %v1830 = vpop.f32.mrf.mxu0
    %v1831 = vadd.f32 0.0, %v1830
    %1832 = vmatmul.f32.gmra.mxu0 %v959
    %v1833 = vpop.f32.mrf.mxu0
    %v1834 = vadd.f32 0.0, %v1833
    %1835 = vmatmul.f32.gmra.mxu0 %v962
    %v1836 = vpop.f32.mrf.mxu0
    %v1837 = vadd.f32 0.0, %v1836
    %1838 = vmatmul.f32.gmra.mxu0 %v965
    %v1839 = vpop.f32.mrf.mxu0
    %v1840 = vadd.f32 0.0, %v1839
    %1841 = vmatmul.f32.gmra.mxu0 %v968
    %v1842 = vpop.f32.mrf.mxu0
    %v1843 = vadd.f32 0.0, %v1842
    %1844 = vmatmul.f32.gmra.mxu0 %v971
    %v1845 = vpop.f32.mrf.mxu0
    %v1846 = vadd.f32 0.0, %v1845
    %1847 = vmatmul.f32.gmra.mxu0 %v974
    %v1848 = vpop.f32.mrf.mxu0
    %v1849 = vadd.f32 0.0, %v1848
    %1850 = vmatmul.f32.gmra.mxu0 %v977
    %v1851 = vpop.f32.mrf.mxu0
    %v1852 = vadd.f32 0.0, %v1851
    %1853 = vmatmul.f32.gmra.mxu0 %v980
    %v1854 = vpop.f32.mrf.mxu0
    %v1855 = vadd.f32 0.0, %v1854
    %1856 = vmatmul.f32.gmra.mxu0 %v983
    %v1857 = vpop.f32.mrf.mxu0
    %v1858 = vadd.f32 0.0, %v1857
    %1859 = vmatmul.f32.gmra.mxu0 %v986
    %v1860 = vpop.f32.mrf.mxu0
    %v1861 = vadd.f32 0.0, %v1860
    %1862 = vmatmul.f32.gmra.mxu0 %v989
    %v1863 = vpop.f32.mrf.mxu0
    %v1864 = vadd.f32 0.0, %v1863
    %1865 = vmatmul.f32.gmra.mxu0 %v992
    %v1866 = vpop.f32.mrf.mxu0
    %v1867 = vadd.f32 0.0, %v1866
    %1868 = vmatmul.f32.gmra.mxu0 %v995
    %v1869 = vpop.f32.mrf.mxu0
    %v1870 = vadd.f32 0.0, %v1869
    %1871 = vmatmul.f32.gmra.mxu0 %v998
    %v1872 = vpop.f32.mrf.mxu0
    %v1873 = vadd.f32 0.0, %v1872
    %1874 = vmatmul.f32.gmra.mxu0 %v1001
    %v1875 = vpop.f32.mrf.mxu0
    %v1876 = vadd.f32 0.0, %v1875
    %1877 = vmatmul.f32.gmra.mxu0 %v1004
    %v1878 = vpop.f32.mrf.mxu0
    %v1879 = vadd.f32 0.0, %v1878
    %1880 = vmatmul.f32.gmra.mxu0 %v1007
    %v1881 = vpop.f32.mrf.mxu0
    %v1882 = vadd.f32 0.0, %v1881
    %1883 = vmatmul.f32.gmra.mxu0 %v1010
    %v1884 = vpop.f32.mrf.mxu0
    %v1885 = vadd.f32 0.0, %v1884
    %1886 = vmatmul.f32.gmra.mxu0 %v1013
    %v1887 = vpop.f32.mrf.mxu0
    %v1888 = vadd.f32 0.0, %v1887
    %1889 = vmatmul.f32.gmra.mxu0 %v1016
    %v1890 = vpop.f32.mrf.mxu0
    %v1891 = vadd.f32 0.0, %v1890
    %1892 = vmatmul.f32.gmra.mxu0 %v1019
    %v1893 = vpop.f32.mrf.mxu0
    %v1894 = vadd.f32 0.0, %v1893
    %1895 = vmatmul.f32.gmra.mxu0 %v1022
    %v1896 = vpop.f32.mrf.mxu0
    %v1897 = vadd.f32 0.0, %v1896
    %1898 = vmatmul.f32.gmra.mxu0 %v1025
    %v1899 = vpop.f32.mrf.mxu0
    %v1900 = vadd.f32 0.0, %v1899
    %1901 = vmatmul.f32.gmra.mxu0 %v1028
    %v1902 = vpop.f32.mrf.mxu0
    %v1903 = vadd.f32 0.0, %v1902
    %1904 = vmatmul.f32.gmra.mxu0 %v1031
    %v1905 = vpop.f32.mrf.mxu0
    %v1906 = vadd.f32 0.0, %v1905
    %1907 = vmatmul.f32.gmra.mxu0 %v1034
    %v1908 = vpop.f32.mrf.mxu0
    %v1909 = vadd.f32 0.0, %v1908
    %1910 = vmatmul.f32.gmra.mxu0 %v1037
    %v1911 = vpop.f32.mrf.mxu0
    %v1912 = vadd.f32 0.0, %v1911
    %1913 = vmatmul.f32.gmra.mxu0 %v1040
    %v1914 = vpop.f32.mrf.mxu0
    %v1915 = vadd.f32 0.0, %v1914
    %1916 = vmatmul.f32.gmra.mxu0 %v1043
    %v1917 = vpop.f32.mrf.mxu0
    %v1918 = vadd.f32 0.0, %v1917
    %1919 = vmatmul.f32.gmra.mxu0 %v1046
    %v1920 = vpop.f32.mrf.mxu0
    %v1921 = vadd.f32 0.0, %v1920
    %1922 = vdwg.mxu0
    %1923 = vmatpush.msra.mxu0 0.0
    %1924 = vmatpush.msra.mxu0 0.0
    %1925 = vmatpush.msra.mxu0 0.0
    %1926 = vmatpush.msra.mxu0 0.0
    %1927 = vmatpush.msra.mxu0 0.0
    %1928 = vmatpush.msra.mxu0 0.0
    %1929 = vmatpush.msra.mxu0 0.0
    %1930 = vmatpush.msra.mxu0 0.0
    %1931 = vmatpush.msra.mxu0 0.0
    %1932 = vmatpush.msra.mxu0 0.0
    %1933 = vmatpush.msra.mxu0 0.0
    %1934 = vmatpush.msra.mxu0 0.0
    %1935 = vmatpush.msra.mxu0 %v921
    %1936 = vmatpush.msra.mxu0 %v909
    %1937 = vmatpush.msra.mxu0 %v897
    %1938 = vmatpush.msra.mxu0 %v885
    %1939 = vmatmul.f32.gmra.mxu0 %v941
    %v1940 = vpop.f32.mrf.mxu0
    %v1941 = vadd.f32 0.0, %v1940
    %1942 = vmatmul.f32.gmra.mxu0 %v944
    %v1943 = vpop.f32.mrf.mxu0
    %v1944 = vadd.f32 0.0, %v1943
    %1945 = vmatmul.f32.gmra.mxu0 %v947
    %v1946 = vpop.f32.mrf.mxu0
    %v1947 = vadd.f32 0.0, %v1946
    %1948 = vmatmul.f32.gmra.mxu0 %v950
    %v1949 = vpop.f32.mrf.mxu0
    %v1950 = vadd.f32 0.0, %v1949
    %1951 = vmatmul.f32.gmra.mxu0 %v953
    %v1952 = vpop.f32.mrf.mxu0
    %v1953 = vadd.f32 0.0, %v1952
    %1954 = vmatmul.f32.gmra.mxu0 %v956
    %v1955 = vpop.f32.mrf.mxu0
    %v1956 = vadd.f32 0.0, %v1955
    %1957 = vmatmul.f32.gmra.mxu0 %v959
    %v1958 = vpop.f32.mrf.mxu0
    %v1959 = vadd.f32 0.0, %v1958
    %1960 = vmatmul.f32.gmra.mxu0 %v962
    %v1961 = vpop.f32.mrf.mxu0
    %v1962 = vadd.f32 0.0, %v1961
    %1963 = vmatmul.f32.gmra.mxu0 %v965
    %v1964 = vpop.f32.mrf.mxu0
    %v1965 = vadd.f32 0.0, %v1964
    %1966 = vmatmul.f32.gmra.mxu0 %v968
    %v1967 = vpop.f32.mrf.mxu0
    %v1968 = vadd.f32 0.0, %v1967
    %1969 = vmatmul.f32.gmra.mxu0 %v971
    %v1970 = vpop.f32.mrf.mxu0
    %v1971 = vadd.f32 0.0, %v1970
    %1972 = vmatmul.f32.gmra.mxu0 %v974
    %v1973 = vpop.f32.mrf.mxu0
    %v1974 = vadd.f32 0.0, %v1973
    %1975 = vmatmul.f32.gmra.mxu0 %v977
    %v1976 = vpop.f32.mrf.mxu0
    %v1977 = vadd.f32 0.0, %v1976
    %1978 = vmatmul.f32.gmra.mxu0 %v980
    %v1979 = vpop.f32.mrf.mxu0
    %v1980 = vadd.f32 0.0, %v1979
    %1981 = vmatmul.f32.gmra.mxu0 %v983
    %v1982 = vpop.f32.mrf.mxu0
    %v1983 = vadd.f32 0.0, %v1982
    %1984 = vmatmul.f32.gmra.mxu0 %v986
    %v1985 = vpop.f32.mrf.mxu0
    %v1986 = vadd.f32 0.0, %v1985
    %1987 = vmatmul.f32.gmra.mxu0 %v989
    %v1988 = vpop.f32.mrf.mxu0
    %v1989 = vadd.f32 0.0, %v1988
    %1990 = vmatmul.f32.gmra.mxu0 %v992
    %v1991 = vpop.f32.mrf.mxu0
    %v1992 = vadd.f32 0.0, %v1991
    %1993 = vmatmul.f32.gmra.mxu0 %v995
    %v1994 = vpop.f32.mrf.mxu0
    %v1995 = vadd.f32 0.0, %v1994
    %1996 = vmatmul.f32.gmra.mxu0 %v998
    %v1997 = vpop.f32.mrf.mxu0
    %v1998 = vadd.f32 0.0, %v1997
    %1999 = vmatmul.f32.gmra.mxu0 %v1001
    %v2000 = vpop.f32.mrf.mxu0
    %v2001 = vadd.f32 0.0, %v2000
    %2002 = vmatmul.f32.gmra.mxu0 %v1004
    %v2003 = vpop.f32.mrf.mxu0
    %v2004 = vadd.f32 0.0, %v2003
    %2005 = vmatmul.f32.gmra.mxu0 %v1007
    %v2006 = vpop.f32.mrf.mxu0
    %v2007 = vadd.f32 0.0, %v2006
    %2008 = vmatmul.f32.gmra.mxu0 %v1010
    %v2009 = vpop.f32.mrf.mxu0
    %v2010 = vadd.f32 0.0, %v2009
    %2011 = vmatmul.f32.gmra.mxu0 %v1013
    %v2012 = vpop.f32.mrf.mxu0
    %v2013 = vadd.f32 0.0, %v2012
    %2014 = vmatmul.f32.gmra.mxu0 %v1016
    %v2015 = vpop.f32.mrf.mxu0
    %v2016 = vadd.f32 0.0, %v2015
    %2017 = vmatmul.f32.gmra.mxu0 %v1019
    %v2018 = vpop.f32.mrf.mxu0
    %v2019 = vadd.f32 0.0, %v2018
    %2020 = vmatmul.f32.gmra.mxu0 %v1022
    %v2021 = vpop.f32.mrf.mxu0
    %v2022 = vadd.f32 0.0, %v2021
    %2023 = vmatmul.f32.gmra.mxu0 %v1025
    %v2024 = vpop.f32.mrf.mxu0
    %v2025 = vadd.f32 0.0, %v2024
    %2026 = vmatmul.f32.gmra.mxu0 %v1028
    %v2027 = vpop.f32.mrf.mxu0
    %v2028 = vadd.f32 0.0, %v2027
    %2029 = vmatmul.f32.gmra.mxu0 %v1031
    %v2030 = vpop.f32.mrf.mxu0
    %v2031 = vadd.f32 0.0, %v2030
    %2032 = vmatmul.f32.gmra.mxu0 %v1034
    %v2033 = vpop.f32.mrf.mxu0
    %v2034 = vadd.f32 0.0, %v2033
    %2035 = vmatmul.f32.gmra.mxu0 %v1037
    %v2036 = vpop.f32.mrf.mxu0
    %v2037 = vadd.f32 0.0, %v2036
    %2038 = vmatmul.f32.gmra.mxu0 %v1040
    %v2039 = vpop.f32.mrf.mxu0
    %v2040 = vadd.f32 0.0, %v2039
    %2041 = vmatmul.f32.gmra.mxu0 %v1043
    %v2042 = vpop.f32.mrf.mxu0
    %v2043 = vadd.f32 0.0, %v2042
    %2044 = vmatmul.f32.gmra.mxu0 %v1046
    %v2045 = vpop.f32.mrf.mxu0
    %v2046 = vadd.f32 0.0, %v2045
    %2047 = vdwg.mxu0
    %v2048 = vperm.slane %v922, 0
    %v2049 = vperm.slane %v923, 0
    %v2050 = vperm.slane %v924, 0
    %v2051 = vperm.slane %v925, 0
    %v2052 = vperm.slane %v926, 0
    %v2053 = vperm.slane %v927, 0
    %v2054 = vperm.slane %v928, 0
    %v2055 = vperm.slane %v929, 0
    %v2056 = vmul.f32 %v1066, %v2048
    %v2057 = vmul.f32 %v1191, %v2049
    %v2058 = vmul.f32 %v1316, %v2050
    %v2059 = vmul.f32 %v1441, %v2051
    %v2060 = vmul.f32 %v1566, %v2052
    %v2061 = vmul.f32 %v1691, %v2053
    %v2062 = vmul.f32 %v1816, %v2054
    %v2063 = vmul.f32 %v1941, %v2055
    %v2064 = vmul.f32 %v1069, %v2048
    %v2065 = vmul.f32 %v1194, %v2049
    %v2066 = vmul.f32 %v1319, %v2050
    %v2067 = vmul.f32 %v1444, %v2051
    %v2068 = vmul.f32 %v1569, %v2052
    %v2069 = vmul.f32 %v1694, %v2053
    %v2070 = vmul.f32 %v1819, %v2054
    %v2071 = vmul.f32 %v1944, %v2055
    %v2072 = vmul.f32 %v1072, %v2048
    %v2073 = vmul.f32 %v1197, %v2049
    %v2074 = vmul.f32 %v1322, %v2050
    %v2075 = vmul.f32 %v1447, %v2051
    %v2076 = vmul.f32 %v1572, %v2052
    %v2077 = vmul.f32 %v1697, %v2053
    %v2078 = vmul.f32 %v1822, %v2054
    %v2079 = vmul.f32 %v1947, %v2055
    %v2080 = vmul.f32 %v1075, %v2048
    %v2081 = vmul.f32 %v1200, %v2049
    %v2082 = vmul.f32 %v1325, %v2050
    %v2083 = vmul.f32 %v1450, %v2051
    %v2084 = vmul.f32 %v1575, %v2052
    %v2085 = vmul.f32 %v1700, %v2053
    %v2086 = vmul.f32 %v1825, %v2054
    %v2087 = vmul.f32 %v1950, %v2055
    %v2088 = vperm.slane %v922, 1
    %v2089 = vperm.slane %v923, 1
    %v2090 = vperm.slane %v924, 1
    %v2091 = vperm.slane %v925, 1
    %v2092 = vperm.slane %v926, 1
    %v2093 = vperm.slane %v927, 1
    %v2094 = vperm.slane %v928, 1
    %v2095 = vperm.slane %v929, 1
    %v2096 = vmul.f32 %v1078, %v2088
    %v2097 = vmul.f32 %v1203, %v2089
    %v2098 = vmul.f32 %v1328, %v2090
    %v2099 = vmul.f32 %v1453, %v2091
    %v2100 = vmul.f32 %v1578, %v2092
    %v2101 = vmul.f32 %v1703, %v2093
    %v2102 = vmul.f32 %v1828, %v2094
    %v2103 = vmul.f32 %v1953, %v2095
    %v2104 = vmul.f32 %v1081, %v2088
    %v2105 = vmul.f32 %v1206, %v2089
    %v2106 = vmul.f32 %v1331, %v2090
    %v2107 = vmul.f32 %v1456, %v2091
    %v2108 = vmul.f32 %v1581, %v2092
    %v2109 = vmul.f32 %v1706, %v2093
    %v2110 = vmul.f32 %v1831, %v2094
    %v2111 = vmul.f32 %v1956, %v2095
    %v2112 = vmul.f32 %v1084, %v2088
    %v2113 = vmul.f32 %v1209, %v2089
    %v2114 = vmul.f32 %v1334, %v2090
    %v2115 = vmul.f32 %v1459, %v2091
    %v2116 = vmul.f32 %v1584, %v2092
    %v2117 = vmul.f32 %v1709, %v2093
    %v2118 = vmul.f32 %v1834, %v2094
    %v2119 = vmul.f32 %v1959, %v2095
    %v2120 = vmul.f32 %v1087, %v2088
    %v2121 = vmul.f32 %v1212, %v2089
    %v2122 = vmul.f32 %v1337, %v2090
    %v2123 = vmul.f32 %v1462, %v2091
    %v2124 = vmul.f32 %v1587, %v2092
    %v2125 = vmul.f32 %v1712, %v2093
    %v2126 = vmul.f32 %v1837, %v2094
    %v2127 = vmul.f32 %v1962, %v2095
    %v2128 = vadd.f32 %v2056, %v2096
    %v2129 = vadd.f32 %v2057, %v2097
    %v2130 = vadd.f32 %v2058, %v2098
    %v2131 = vadd.f32 %v2059, %v2099
    %v2132 = vadd.f32 %v2060, %v2100
    %v2133 = vadd.f32 %v2061, %v2101
    %v2134 = vadd.f32 %v2062, %v2102
    %v2135 = vadd.f32 %v2063, %v2103
    %v2136 = vadd.f32 %v2064, %v2104
    %v2137 = vadd.f32 %v2065, %v2105
    %v2138 = vadd.f32 %v2066, %v2106
    %v2139 = vadd.f32 %v2067, %v2107
    %v2140 = vadd.f32 %v2068, %v2108
    %v2141 = vadd.f32 %v2069, %v2109
    %v2142 = vadd.f32 %v2070, %v2110
    %v2143 = vadd.f32 %v2071, %v2111
    %v2144 = vadd.f32 %v2072, %v2112
    %v2145 = vadd.f32 %v2073, %v2113
    %v2146 = vadd.f32 %v2074, %v2114
    %v2147 = vadd.f32 %v2075, %v2115
    %v2148 = vadd.f32 %v2076, %v2116
    %v2149 = vadd.f32 %v2077, %v2117
    %v2150 = vadd.f32 %v2078, %v2118
    %v2151 = vadd.f32 %v2079, %v2119
    %v2152 = vadd.f32 %v2080, %v2120
    %v2153 = vadd.f32 %v2081, %v2121
    %v2154 = vadd.f32 %v2082, %v2122
    %v2155 = vadd.f32 %v2083, %v2123
    %v2156 = vadd.f32 %v2084, %v2124
    %v2157 = vadd.f32 %v2085, %v2125
    %v2158 = vadd.f32 %v2086, %v2126
    %v2159 = vadd.f32 %v2087, %v2127
    %v2160 = vperm.slane %v922, 2
    %v2161 = vperm.slane %v923, 2
    %v2162 = vperm.slane %v924, 2
    %v2163 = vperm.slane %v925, 2
    %v2164 = vperm.slane %v926, 2
    %v2165 = vperm.slane %v927, 2
    %v2166 = vperm.slane %v928, 2
    %v2167 = vperm.slane %v929, 2
    %v2168 = vmul.f32 %v1090, %v2160
    %v2169 = vmul.f32 %v1215, %v2161
    %v2170 = vmul.f32 %v1340, %v2162
    %v2171 = vmul.f32 %v1465, %v2163
    %v2172 = vmul.f32 %v1590, %v2164
    %v2173 = vmul.f32 %v1715, %v2165
    %v2174 = vmul.f32 %v1840, %v2166
    %v2175 = vmul.f32 %v1965, %v2167
    %v2176 = vmul.f32 %v1093, %v2160
    %v2177 = vmul.f32 %v1218, %v2161
    %v2178 = vmul.f32 %v1343, %v2162
    %v2179 = vmul.f32 %v1468, %v2163
    %v2180 = vmul.f32 %v1593, %v2164
    %v2181 = vmul.f32 %v1718, %v2165
    %v2182 = vmul.f32 %v1843, %v2166
    %v2183 = vmul.f32 %v1968, %v2167
    %v2184 = vmul.f32 %v1096, %v2160
    %v2185 = vmul.f32 %v1221, %v2161
    %v2186 = vmul.f32 %v1346, %v2162
    %v2187 = vmul.f32 %v1471, %v2163
    %v2188 = vmul.f32 %v1596, %v2164
    %v2189 = vmul.f32 %v1721, %v2165
    %v2190 = vmul.f32 %v1846, %v2166
    %v2191 = vmul.f32 %v1971, %v2167
    %v2192 = vmul.f32 %v1099, %v2160
    %v2193 = vmul.f32 %v1224, %v2161
    %v2194 = vmul.f32 %v1349, %v2162
    %v2195 = vmul.f32 %v1474, %v2163
    %v2196 = vmul.f32 %v1599, %v2164
    %v2197 = vmul.f32 %v1724, %v2165
    %v2198 = vmul.f32 %v1849, %v2166
    %v2199 = vmul.f32 %v1974, %v2167
    %v2200 = vadd.f32 %v2128, %v2168
    %v2201 = vadd.f32 %v2129, %v2169
    %v2202 = vadd.f32 %v2130, %v2170
    %v2203 = vadd.f32 %v2131, %v2171
    %v2204 = vadd.f32 %v2132, %v2172
    %v2205 = vadd.f32 %v2133, %v2173
    %v2206 = vadd.f32 %v2134, %v2174
    %v2207 = vadd.f32 %v2135, %v2175
    %v2208 = vadd.f32 %v2136, %v2176
    %v2209 = vadd.f32 %v2137, %v2177
    %v2210 = vadd.f32 %v2138, %v2178
    %v2211 = vadd.f32 %v2139, %v2179
    %v2212 = vadd.f32 %v2140, %v2180
    %v2213 = vadd.f32 %v2141, %v2181
    %v2214 = vadd.f32 %v2142, %v2182
    %v2215 = vadd.f32 %v2143, %v2183
    %v2216 = vadd.f32 %v2144, %v2184
    %v2217 = vadd.f32 %v2145, %v2185
    %v2218 = vadd.f32 %v2146, %v2186
    %v2219 = vadd.f32 %v2147, %v2187
    %v2220 = vadd.f32 %v2148, %v2188
    %v2221 = vadd.f32 %v2149, %v2189
    %v2222 = vadd.f32 %v2150, %v2190
    %v2223 = vadd.f32 %v2151, %v2191
    %v2224 = vadd.f32 %v2152, %v2192
    %v2225 = vadd.f32 %v2153, %v2193
    %v2226 = vadd.f32 %v2154, %v2194
    %v2227 = vadd.f32 %v2155, %v2195
    %v2228 = vadd.f32 %v2156, %v2196
    %v2229 = vadd.f32 %v2157, %v2197
    %v2230 = vadd.f32 %v2158, %v2198
    %v2231 = vadd.f32 %v2159, %v2199
    %v2232 = vperm.slane %v922, 3
    %v2233 = vperm.slane %v923, 3
    %v2234 = vperm.slane %v924, 3
    %v2235 = vperm.slane %v925, 3
    %v2236 = vperm.slane %v926, 3
    %v2237 = vperm.slane %v927, 3
    %v2238 = vperm.slane %v928, 3
    %v2239 = vperm.slane %v929, 3
    %v2240 = vmul.f32 %v1102, %v2232
    %v2241 = vmul.f32 %v1227, %v2233
    %v2242 = vmul.f32 %v1352, %v2234
    %v2243 = vmul.f32 %v1477, %v2235
    %v2244 = vmul.f32 %v1602, %v2236
    %v2245 = vmul.f32 %v1727, %v2237
    %v2246 = vmul.f32 %v1852, %v2238
    %v2247 = vmul.f32 %v1977, %v2239
    %v2248 = vmul.f32 %v1105, %v2232
    %v2249 = vmul.f32 %v1230, %v2233
    %v2250 = vmul.f32 %v1355, %v2234
    %v2251 = vmul.f32 %v1480, %v2235
    %v2252 = vmul.f32 %v1605, %v2236
    %v2253 = vmul.f32 %v1730, %v2237
    %v2254 = vmul.f32 %v1855, %v2238
    %v2255 = vmul.f32 %v1980, %v2239
    %v2256 = vmul.f32 %v1108, %v2232
    %v2257 = vmul.f32 %v1233, %v2233
    %v2258 = vmul.f32 %v1358, %v2234
    %v2259 = vmul.f32 %v1483, %v2235
    %v2260 = vmul.f32 %v1608, %v2236
    %v2261 = vmul.f32 %v1733, %v2237
    %v2262 = vmul.f32 %v1858, %v2238
    %v2263 = vmul.f32 %v1983, %v2239
    %v2264 = vmul.f32 %v1111, %v2232
    %v2265 = vmul.f32 %v1236, %v2233
    %v2266 = vmul.f32 %v1361, %v2234
    %v2267 = vmul.f32 %v1486, %v2235
    %v2268 = vmul.f32 %v1611, %v2236
    %v2269 = vmul.f32 %v1736, %v2237
    %v2270 = vmul.f32 %v1861, %v2238
    %v2271 = vmul.f32 %v1986, %v2239
    %v2272 = vadd.f32 %v2200, %v2240
    %v2273 = vadd.f32 %v2201, %v2241
    %v2274 = vadd.f32 %v2202, %v2242
    %v2275 = vadd.f32 %v2203, %v2243
    %v2276 = vadd.f32 %v2204, %v2244
    %v2277 = vadd.f32 %v2205, %v2245
    %v2278 = vadd.f32 %v2206, %v2246
    %v2279 = vadd.f32 %v2207, %v2247
    %v2280 = vadd.f32 %v2208, %v2248
    %v2281 = vadd.f32 %v2209, %v2249
    %v2282 = vadd.f32 %v2210, %v2250
    %v2283 = vadd.f32 %v2211, %v2251
    %v2284 = vadd.f32 %v2212, %v2252
    %v2285 = vadd.f32 %v2213, %v2253
    %v2286 = vadd.f32 %v2214, %v2254
    %v2287 = vadd.f32 %v2215, %v2255
    %v2288 = vadd.f32 %v2216, %v2256
    %v2289 = vadd.f32 %v2217, %v2257
    %v2290 = vadd.f32 %v2218, %v2258
    %v2291 = vadd.f32 %v2219, %v2259
    %v2292 = vadd.f32 %v2220, %v2260
    %v2293 = vadd.f32 %v2221, %v2261
    %v2294 = vadd.f32 %v2222, %v2262
    %v2295 = vadd.f32 %v2223, %v2263
    %v2296 = vadd.f32 %v2224, %v2264
    %v2297 = vadd.f32 %v2225, %v2265
    %v2298 = vadd.f32 %v2226, %v2266
    %v2299 = vadd.f32 %v2227, %v2267
    %v2300 = vadd.f32 %v2228, %v2268
    %v2301 = vadd.f32 %v2229, %v2269
    %v2302 = vadd.f32 %v2230, %v2270
    %v2303 = vadd.f32 %v2231, %v2271
    %v2304 = vperm.slane %v922, 4
    %v2305 = vperm.slane %v923, 4
    %v2306 = vperm.slane %v924, 4
    %v2307 = vperm.slane %v925, 4
    %v2308 = vperm.slane %v926, 4
    %v2309 = vperm.slane %v927, 4
    %v2310 = vperm.slane %v928, 4
    %v2311 = vperm.slane %v929, 4
    %v2312 = vmul.f32 %v1114, %v2304
    %v2313 = vmul.f32 %v1239, %v2305
    %v2314 = vmul.f32 %v1364, %v2306
    %v2315 = vmul.f32 %v1489, %v2307
    %v2316 = vmul.f32 %v1614, %v2308
    %v2317 = vmul.f32 %v1739, %v2309
    %v2318 = vmul.f32 %v1864, %v2310
    %v2319 = vmul.f32 %v1989, %v2311
    %v2320 = vmul.f32 %v1117, %v2304
    %v2321 = vmul.f32 %v1242, %v2305
    %v2322 = vmul.f32 %v1367, %v2306
    %v2323 = vmul.f32 %v1492, %v2307
    %v2324 = vmul.f32 %v1617, %v2308
    %v2325 = vmul.f32 %v1742, %v2309
    %v2326 = vmul.f32 %v1867, %v2310
    %v2327 = vmul.f32 %v1992, %v2311
    %v2328 = vmul.f32 %v1120, %v2304
    %v2329 = vmul.f32 %v1245, %v2305
    %v2330 = vmul.f32 %v1370, %v2306
    %v2331 = vmul.f32 %v1495, %v2307
    %v2332 = vmul.f32 %v1620, %v2308
    %v2333 = vmul.f32 %v1745, %v2309
    %v2334 = vmul.f32 %v1870, %v2310
    %v2335 = vmul.f32 %v1995, %v2311
    %v2336 = vmul.f32 %v1123, %v2304
    %v2337 = vmul.f32 %v1248, %v2305
    %v2338 = vmul.f32 %v1373, %v2306
    %v2339 = vmul.f32 %v1498, %v2307
    %v2340 = vmul.f32 %v1623, %v2308
    %v2341 = vmul.f32 %v1748, %v2309
    %v2342 = vmul.f32 %v1873, %v2310
    %v2343 = vmul.f32 %v1998, %v2311
    %v2344 = vadd.f32 %v2272, %v2312
    %v2345 = vadd.f32 %v2273, %v2313
    %v2346 = vadd.f32 %v2274, %v2314
    %v2347 = vadd.f32 %v2275, %v2315
    %v2348 = vadd.f32 %v2276, %v2316
    %v2349 = vadd.f32 %v2277, %v2317
    %v2350 = vadd.f32 %v2278, %v2318
    %v2351 = vadd.f32 %v2279, %v2319
    %v2352 = vadd.f32 %v2280, %v2320
    %v2353 = vadd.f32 %v2281, %v2321
    %v2354 = vadd.f32 %v2282, %v2322
    %v2355 = vadd.f32 %v2283, %v2323
    %v2356 = vadd.f32 %v2284, %v2324
    %v2357 = vadd.f32 %v2285, %v2325
    %v2358 = vadd.f32 %v2286, %v2326
    %v2359 = vadd.f32 %v2287, %v2327
    %v2360 = vadd.f32 %v2288, %v2328
    %v2361 = vadd.f32 %v2289, %v2329
    %v2362 = vadd.f32 %v2290, %v2330
    %v2363 = vadd.f32 %v2291, %v2331
    %v2364 = vadd.f32 %v2292, %v2332
    %v2365 = vadd.f32 %v2293, %v2333
    %v2366 = vadd.f32 %v2294, %v2334
    %v2367 = vadd.f32 %v2295, %v2335
    %v2368 = vadd.f32 %v2296, %v2336
    %v2369 = vadd.f32 %v2297, %v2337
    %v2370 = vadd.f32 %v2298, %v2338
    %v2371 = vadd.f32 %v2299, %v2339
    %v2372 = vadd.f32 %v2300, %v2340
    %v2373 = vadd.f32 %v2301, %v2341
    %v2374 = vadd.f32 %v2302, %v2342
    %v2375 = vadd.f32 %v2303, %v2343
    %v2376 = vperm.slane %v922, 5
    %v2377 = vperm.slane %v923, 5
    %v2378 = vperm.slane %v924, 5
    %v2379 = vperm.slane %v925, 5
    %v2380 = vperm.slane %v926, 5
    %v2381 = vperm.slane %v927, 5
    %v2382 = vperm.slane %v928, 5
    %v2383 = vperm.slane %v929, 5
    %v2384 = vmul.f32 %v1126, %v2376
    %v2385 = vmul.f32 %v1251, %v2377
    %v2386 = vmul.f32 %v1376, %v2378
    %v2387 = vmul.f32 %v1501, %v2379
    %v2388 = vmul.f32 %v1626, %v2380
    %v2389 = vmul.f32 %v1751, %v2381
    %v2390 = vmul.f32 %v1876, %v2382
    %v2391 = vmul.f32 %v2001, %v2383
    %v2392 = vmul.f32 %v1129, %v2376
    %v2393 = vmul.f32 %v1254, %v2377
    %v2394 = vmul.f32 %v1379, %v2378
    %v2395 = vmul.f32 %v1504, %v2379
    %v2396 = vmul.f32 %v1629, %v2380
    %v2397 = vmul.f32 %v1754, %v2381
    %v2398 = vmul.f32 %v1879, %v2382
    %v2399 = vmul.f32 %v2004, %v2383
    %v2400 = vmul.f32 %v1132, %v2376
    %v2401 = vmul.f32 %v1257, %v2377
    %v2402 = vmul.f32 %v1382, %v2378
    %v2403 = vmul.f32 %v1507, %v2379
    %v2404 = vmul.f32 %v1632, %v2380
    %v2405 = vmul.f32 %v1757, %v2381
    %v2406 = vmul.f32 %v1882, %v2382
    %v2407 = vmul.f32 %v2007, %v2383
    %v2408 = vmul.f32 %v1135, %v2376
    %v2409 = vmul.f32 %v1260, %v2377
    %v2410 = vmul.f32 %v1385, %v2378
    %v2411 = vmul.f32 %v1510, %v2379
    %v2412 = vmul.f32 %v1635, %v2380
    %v2413 = vmul.f32 %v1760, %v2381
    %v2414 = vmul.f32 %v1885, %v2382
    %v2415 = vmul.f32 %v2010, %v2383
    %v2416 = vadd.f32 %v2344, %v2384
    %v2417 = vadd.f32 %v2345, %v2385
    %v2418 = vadd.f32 %v2346, %v2386
    %v2419 = vadd.f32 %v2347, %v2387
    %v2420 = vadd.f32 %v2348, %v2388
    %v2421 = vadd.f32 %v2349, %v2389
    %v2422 = vadd.f32 %v2350, %v2390
    %v2423 = vadd.f32 %v2351, %v2391
    %v2424 = vadd.f32 %v2352, %v2392
    %v2425 = vadd.f32 %v2353, %v2393
    %v2426 = vadd.f32 %v2354, %v2394
    %v2427 = vadd.f32 %v2355, %v2395
    %v2428 = vadd.f32 %v2356, %v2396
    %v2429 = vadd.f32 %v2357, %v2397
    %v2430 = vadd.f32 %v2358, %v2398
    %v2431 = vadd.f32 %v2359, %v2399
    %v2432 = vadd.f32 %v2360, %v2400
    %v2433 = vadd.f32 %v2361, %v2401
    %v2434 = vadd.f32 %v2362, %v2402
    %v2435 = vadd.f32 %v2363, %v2403
    %v2436 = vadd.f32 %v2364, %v2404
    %v2437 = vadd.f32 %v2365, %v2405
    %v2438 = vadd.f32 %v2366, %v2406
    %v2439 = vadd.f32 %v2367, %v2407
    %v2440 = vadd.f32 %v2368, %v2408
    %v2441 = vadd.f32 %v2369, %v2409
    %v2442 = vadd.f32 %v2370, %v2410
    %v2443 = vadd.f32 %v2371, %v2411
    %v2444 = vadd.f32 %v2372, %v2412
    %v2445 = vadd.f32 %v2373, %v2413
    %v2446 = vadd.f32 %v2374, %v2414
    %v2447 = vadd.f32 %v2375, %v2415
    %v2448 = vperm.slane %v922, 6
    %v2449 = vperm.slane %v923, 6
    %v2450 = vperm.slane %v924, 6
    %v2451 = vperm.slane %v925, 6
    %v2452 = vperm.slane %v926, 6
    %v2453 = vperm.slane %v927, 6
    %v2454 = vperm.slane %v928, 6
    %v2455 = vperm.slane %v929, 6
    %v2456 = vmul.f32 %v1138, %v2448
    %v2457 = vmul.f32 %v1263, %v2449
    %v2458 = vmul.f32 %v1388, %v2450
    %v2459 = vmul.f32 %v1513, %v2451
    %v2460 = vmul.f32 %v1638, %v2452
    %v2461 = vmul.f32 %v1763, %v2453
    %v2462 = vmul.f32 %v1888, %v2454
    %v2463 = vmul.f32 %v2013, %v2455
    %v2464 = vmul.f32 %v1141, %v2448
    %v2465 = vmul.f32 %v1266, %v2449
    %v2466 = vmul.f32 %v1391, %v2450
    %v2467 = vmul.f32 %v1516, %v2451
    %v2468 = vmul.f32 %v1641, %v2452
    %v2469 = vmul.f32 %v1766, %v2453
    %v2470 = vmul.f32 %v1891, %v2454
    %v2471 = vmul.f32 %v2016, %v2455
    %v2472 = vmul.f32 %v1144, %v2448
    %v2473 = vmul.f32 %v1269, %v2449
    %v2474 = vmul.f32 %v1394, %v2450
    %v2475 = vmul.f32 %v1519, %v2451
    %v2476 = vmul.f32 %v1644, %v2452
    %v2477 = vmul.f32 %v1769, %v2453
    %v2478 = vmul.f32 %v1894, %v2454
    %v2479 = vmul.f32 %v2019, %v2455
    %v2480 = vmul.f32 %v1147, %v2448
    %v2481 = vmul.f32 %v1272, %v2449
    %v2482 = vmul.f32 %v1397, %v2450
    %v2483 = vmul.f32 %v1522, %v2451
    %v2484 = vmul.f32 %v1647, %v2452
    %v2485 = vmul.f32 %v1772, %v2453
    %v2486 = vmul.f32 %v1897, %v2454
    %v2487 = vmul.f32 %v2022, %v2455
    %v2488 = vadd.f32 %v2416, %v2456
    %v2489 = vadd.f32 %v2417, %v2457
    %v2490 = vadd.f32 %v2418, %v2458
    %v2491 = vadd.f32 %v2419, %v2459
    %v2492 = vadd.f32 %v2420, %v2460
    %v2493 = vadd.f32 %v2421, %v2461
    %v2494 = vadd.f32 %v2422, %v2462
    %v2495 = vadd.f32 %v2423, %v2463
    %v2496 = vadd.f32 %v2424, %v2464
    %v2497 = vadd.f32 %v2425, %v2465
    %v2498 = vadd.f32 %v2426, %v2466
    %v2499 = vadd.f32 %v2427, %v2467
    %v2500 = vadd.f32 %v2428, %v2468
    %v2501 = vadd.f32 %v2429, %v2469
    %v2502 = vadd.f32 %v2430, %v2470
    %v2503 = vadd.f32 %v2431, %v2471
    %v2504 = vadd.f32 %v2432, %v2472
    %v2505 = vadd.f32 %v2433, %v2473
    %v2506 = vadd.f32 %v2434, %v2474
    %v2507 = vadd.f32 %v2435, %v2475
    %v2508 = vadd.f32 %v2436, %v2476
    %v2509 = vadd.f32 %v2437, %v2477
    %v2510 = vadd.f32 %v2438, %v2478
    %v2511 = vadd.f32 %v2439, %v2479
    %v2512 = vadd.f32 %v2440, %v2480
    %v2513 = vadd.f32 %v2441, %v2481
    %v2514 = vadd.f32 %v2442, %v2482
    %v2515 = vadd.f32 %v2443, %v2483
    %v2516 = vadd.f32 %v2444, %v2484
    %v2517 = vadd.f32 %v2445, %v2485
    %v2518 = vadd.f32 %v2446, %v2486
    %v2519 = vadd.f32 %v2447, %v2487
    %v2520 = vperm.slane %v922, 7
    %v2521 = vperm.slane %v923, 7
    %v2522 = vperm.slane %v924, 7
    %v2523 = vperm.slane %v925, 7
    %v2524 = vperm.slane %v926, 7
    %v2525 = vperm.slane %v927, 7
    %v2526 = vperm.slane %v928, 7
    %v2527 = vperm.slane %v929, 7
    %v2528 = vmul.f32 %v1150, %v2520
    %v2529 = vmul.f32 %v1275, %v2521
    %v2530 = vmul.f32 %v1400, %v2522
    %v2531 = vmul.f32 %v1525, %v2523
    %v2532 = vmul.f32 %v1650, %v2524
    %v2533 = vmul.f32 %v1775, %v2525
    %v2534 = vmul.f32 %v1900, %v2526
    %v2535 = vmul.f32 %v2025, %v2527
    %v2536 = vmul.f32 %v1153, %v2520
    %v2537 = vmul.f32 %v1278, %v2521
    %v2538 = vmul.f32 %v1403, %v2522
    %v2539 = vmul.f32 %v1528, %v2523
    %v2540 = vmul.f32 %v1653, %v2524
    %v2541 = vmul.f32 %v1778, %v2525
    %v2542 = vmul.f32 %v1903, %v2526
    %v2543 = vmul.f32 %v2028, %v2527
    %v2544 = vmul.f32 %v1156, %v2520
    %v2545 = vmul.f32 %v1281, %v2521
    %v2546 = vmul.f32 %v1406, %v2522
    %v2547 = vmul.f32 %v1531, %v2523
    %v2548 = vmul.f32 %v1656, %v2524
    %v2549 = vmul.f32 %v1781, %v2525
    %v2550 = vmul.f32 %v1906, %v2526
    %v2551 = vmul.f32 %v2031, %v2527
    %v2552 = vmul.f32 %v1159, %v2520
    %v2553 = vmul.f32 %v1284, %v2521
    %v2554 = vmul.f32 %v1409, %v2522
    %v2555 = vmul.f32 %v1534, %v2523
    %v2556 = vmul.f32 %v1659, %v2524
    %v2557 = vmul.f32 %v1784, %v2525
    %v2558 = vmul.f32 %v1909, %v2526
    %v2559 = vmul.f32 %v2034, %v2527
    %v2560 = vadd.f32 %v2488, %v2528
    %v2561 = vadd.f32 %v2489, %v2529
    %v2562 = vadd.f32 %v2490, %v2530
    %v2563 = vadd.f32 %v2491, %v2531
    %v2564 = vadd.f32 %v2492, %v2532
    %v2565 = vadd.f32 %v2493, %v2533
    %v2566 = vadd.f32 %v2494, %v2534
    %v2567 = vadd.f32 %v2495, %v2535
    %v2568 = vadd.f32 %v2496, %v2536
    %v2569 = vadd.f32 %v2497, %v2537
    %v2570 = vadd.f32 %v2498, %v2538
    %v2571 = vadd.f32 %v2499, %v2539
    %v2572 = vadd.f32 %v2500, %v2540
    %v2573 = vadd.f32 %v2501, %v2541
    %v2574 = vadd.f32 %v2502, %v2542
    %v2575 = vadd.f32 %v2503, %v2543
    %v2576 = vadd.f32 %v2504, %v2544
    %v2577 = vadd.f32 %v2505, %v2545
    %v2578 = vadd.f32 %v2506, %v2546
    %v2579 = vadd.f32 %v2507, %v2547
    %v2580 = vadd.f32 %v2508, %v2548
    %v2581 = vadd.f32 %v2509, %v2549
    %v2582 = vadd.f32 %v2510, %v2550
    %v2583 = vadd.f32 %v2511, %v2551
    %v2584 = vadd.f32 %v2512, %v2552
    %v2585 = vadd.f32 %v2513, %v2553
    %v2586 = vadd.f32 %v2514, %v2554
    %v2587 = vadd.f32 %v2515, %v2555
    %v2588 = vadd.f32 %v2516, %v2556
    %v2589 = vadd.f32 %v2517, %v2557
    %v2590 = vadd.f32 %v2518, %v2558
    %v2591 = vadd.f32 %v2519, %v2559
    %v2592 = vperm.slane %v930, 0
    %v2593 = vperm.slane %v931, 0
    %v2594 = vperm.slane %v932, 0
    %v2595 = vperm.slane %v933, 0
    %v2596 = vperm.slane %v934, 0
    %v2597 = vperm.slane %v935, 0
    %v2598 = vperm.slane %v936, 0
    %v2599 = vperm.slane %v937, 0
    %v2600 = vmul.f32 %v1162, %v2592
    %v2601 = vmul.f32 %v1287, %v2593
    %v2602 = vmul.f32 %v1412, %v2594
    %v2603 = vmul.f32 %v1537, %v2595
    %v2604 = vmul.f32 %v1662, %v2596
    %v2605 = vmul.f32 %v1787, %v2597
    %v2606 = vmul.f32 %v1912, %v2598
    %v2607 = vmul.f32 %v2037, %v2599
    %v2608 = vmul.f32 %v1165, %v2592
    %v2609 = vmul.f32 %v1290, %v2593
    %v2610 = vmul.f32 %v1415, %v2594
    %v2611 = vmul.f32 %v1540, %v2595
    %v2612 = vmul.f32 %v1665, %v2596
    %v2613 = vmul.f32 %v1790, %v2597
    %v2614 = vmul.f32 %v1915, %v2598
    %v2615 = vmul.f32 %v2040, %v2599
    %v2616 = vmul.f32 %v1168, %v2592
    %v2617 = vmul.f32 %v1293, %v2593
    %v2618 = vmul.f32 %v1418, %v2594
    %v2619 = vmul.f32 %v1543, %v2595
    %v2620 = vmul.f32 %v1668, %v2596
    %v2621 = vmul.f32 %v1793, %v2597
    %v2622 = vmul.f32 %v1918, %v2598
    %v2623 = vmul.f32 %v2043, %v2599
    %v2624 = vmul.f32 %v1171, %v2592
    %v2625 = vmul.f32 %v1296, %v2593
    %v2626 = vmul.f32 %v1421, %v2594
    %v2627 = vmul.f32 %v1546, %v2595
    %v2628 = vmul.f32 %v1671, %v2596
    %v2629 = vmul.f32 %v1796, %v2597
    %v2630 = vmul.f32 %v1921, %v2598
    %v2631 = vmul.f32 %v2046, %v2599
    %v2632 = vadd.f32 %v2560, %v2600
    %v2633 = vadd.f32 %v2561, %v2601
    %v2634 = vadd.f32 %v2562, %v2602
    %v2635 = vadd.f32 %v2563, %v2603
    %v2636 = vadd.f32 %v2564, %v2604
    %v2637 = vadd.f32 %v2565, %v2605
    %v2638 = vadd.f32 %v2566, %v2606
    %v2639 = vadd.f32 %v2567, %v2607
    %v2640 = vadd.f32 %v2568, %v2608
    %v2641 = vadd.f32 %v2569, %v2609
    %v2642 = vadd.f32 %v2570, %v2610
    %v2643 = vadd.f32 %v2571, %v2611
    %v2644 = vadd.f32 %v2572, %v2612
    %v2645 = vadd.f32 %v2573, %v2613
    %v2646 = vadd.f32 %v2574, %v2614
    %v2647 = vadd.f32 %v2575, %v2615
    %v2648 = vadd.f32 %v2576, %v2616
    %v2649 = vadd.f32 %v2577, %v2617
    %v2650 = vadd.f32 %v2578, %v2618
    %v2651 = vadd.f32 %v2579, %v2619
    %v2652 = vadd.f32 %v2580, %v2620
    %v2653 = vadd.f32 %v2581, %v2621
    %v2654 = vadd.f32 %v2582, %v2622
    %v2655 = vadd.f32 %v2583, %v2623
    %v2656 = vadd.f32 %v2584, %v2624
    %v2657 = vadd.f32 %v2585, %v2625
    %v2658 = vadd.f32 %v2586, %v2626
    %v2659 = vadd.f32 %v2587, %v2627
    %v2660 = vadd.f32 %v2588, %v2628
    %v2661 = vadd.f32 %v2589, %v2629
    %v2662 = vadd.f32 %v2590, %v2630
    %v2663 = vadd.f32 %v2591, %v2631
    %v2665 = vperm.slane %v938, 0
    %v2666 = vperm.slane %v938, 1
    %v2667 = vperm.slane %v938, 2
    %v2668 = vperm.slane %v938, 3
    %v2669 = vperm.slane %v938, 4
    %v2670 = vperm.slane %v938, 5
    %v2671 = vperm.slane %v938, 6
    %v2672 = vperm.slane %v938, 7
    %v2681 = vmul.f32 %v2632, %v2665
    %v2682 = vmul.f32 %v2633, %v2666
    %v2683 = vmul.f32 %v2634, %v2667
    %v2684 = vmul.f32 %v2635, %v2668
    %v2685 = vmul.f32 %v2636, %v2669
    %v2686 = vmul.f32 %v2637, %v2670
    %v2687 = vmul.f32 %v2638, %v2671
    %v2688 = vmul.f32 %v2639, %v2672
    %v2689 = vmul.f32 %v2640, %v2665
    %v2690 = vmul.f32 %v2641, %v2666
    %v2691 = vmul.f32 %v2642, %v2667
    %v2692 = vmul.f32 %v2643, %v2668
    %v2693 = vmul.f32 %v2644, %v2669
    %v2694 = vmul.f32 %v2645, %v2670
    %v2695 = vmul.f32 %v2646, %v2671
    %v2696 = vmul.f32 %v2647, %v2672
    %v2697 = vmul.f32 %v2648, %v2665
    %v2698 = vmul.f32 %v2649, %v2666
    %v2699 = vmul.f32 %v2650, %v2667
    %v2700 = vmul.f32 %v2651, %v2668
    %v2701 = vmul.f32 %v2652, %v2669
    %v2702 = vmul.f32 %v2653, %v2670
    %v2703 = vmul.f32 %v2654, %v2671
    %v2704 = vmul.f32 %v2655, %v2672
    %v2705 = vmul.f32 %v2656, %v2665
    %v2706 = vmul.f32 %v2657, %v2666
    %v2707 = vmul.f32 %v2658, %v2667
    %v2708 = vmul.f32 %v2659, %v2668
    %v2709 = vmul.f32 %v2660, %v2669
    %v2710 = vmul.f32 %v2661, %v2670
    %v2711 = vmul.f32 %v2662, %v2671
    %v2712 = vmul.f32 %v2663, %v2672
    %v2714 = vperm.slane %v939, 0
    %v2715 = vperm.slane %v939, 1
    %v2716 = vperm.slane %v939, 2
    %v2717 = vperm.slane %v939, 3
    %v2718 = vperm.slane %v939, 4
    %v2719 = vperm.slane %v939, 5
    %v2720 = vperm.slane %v939, 6
    %v2721 = vperm.slane %v939, 7
    %v2730 = vadd.f32 %v2681, %v2714
    %v2731 = vadd.f32 %v2682, %v2715
    %v2732 = vadd.f32 %v2683, %v2716
    %v2733 = vadd.f32 %v2684, %v2717
    %v2734 = vadd.f32 %v2685, %v2718
    %v2735 = vadd.f32 %v2686, %v2719
    %v2736 = vadd.f32 %v2687, %v2720
    %v2737 = vadd.f32 %v2688, %v2721
    %v2738 = vadd.f32 %v2689, %v2714
    %v2739 = vadd.f32 %v2690, %v2715
    %v2740 = vadd.f32 %v2691, %v2716
    %v2741 = vadd.f32 %v2692, %v2717
    %v2742 = vadd.f32 %v2693, %v2718
    %v2743 = vadd.f32 %v2694, %v2719
    %v2744 = vadd.f32 %v2695, %v2720
    %v2745 = vadd.f32 %v2696, %v2721
    %v2746 = vadd.f32 %v2697, %v2714
    %v2747 = vadd.f32 %v2698, %v2715
    %v2748 = vadd.f32 %v2699, %v2716
    %v2749 = vadd.f32 %v2700, %v2717
    %v2750 = vadd.f32 %v2701, %v2718
    %v2751 = vadd.f32 %v2702, %v2719
    %v2752 = vadd.f32 %v2703, %v2720
    %v2753 = vadd.f32 %v2704, %v2721
    %v2754 = vadd.f32 %v2705, %v2714
    %v2755 = vadd.f32 %v2706, %v2715
    %v2756 = vadd.f32 %v2707, %v2716
    %v2757 = vadd.f32 %v2708, %v2717
    %v2758 = vadd.f32 %v2709, %v2718
    %v2759 = vadd.f32 %v2710, %v2719
    %v2760 = vadd.f32 %v2711, %v2720
    %v2761 = vadd.f32 %v2712, %v2721
    %v2762 = vld [vmem:[#allocation16] sm:$0xff]
    %v2763 = vld [vmem:[#allocation16 + $0x8] sm:$0xff]
    %v2764 = vld [vmem:[#allocation16 + $0x10] sm:$0xff]
    %v2765 = vld [vmem:[#allocation16 + $0x18] sm:$0xff]
    %v2766 = vld [vmem:[#allocation16 + $0x20] sm:$0xff]
    %v2767 = vld [vmem:[#allocation16 + $0x28] sm:$0xff]
    %v2768 = vld [vmem:[#allocation16 + $0x30] sm:$0xff]
    %v2769 = vld [vmem:[#allocation16 + $0x38] sm:$0xff]
    %v2770 = vld [vmem:[#allocation16 + $0x40] sm:$0xff]
    %v2771 = vld [vmem:[#allocation16 + $0x48] sm:$0xff]
    %v2772 = vld [vmem:[#allocation16 + $0x50] sm:$0xff]
    %v2773 = vld [vmem:[#allocation16 + $0x58] sm:$0xff]
    %v2774 = vld [vmem:[#allocation16 + $0x60] sm:$0xff]
    %v2775 = vld [vmem:[#allocation16 + $0x68] sm:$0xff]
    %v2776 = vld [vmem:[#allocation16 + $0x70] sm:$0xff]
    %v2777 = vld [vmem:[#allocation16 + $0x78] sm:$0xff]
    %v2779 = vsel %vm409, %v874, 0
    %v2782 = vsel %vm409, %v886, 0
    %v2785 = vsel %vm409, %v876, 0
    %v2788 = vsel %vm409, %v888, 0
    %2790 = vmatpush.xpose.msra.mxu0 0.0
    %2791 = vmatpush.xpose.msra.mxu0 0.0
    %2792 = vmatpush.xpose.msra.mxu0 0.0
    %2793 = vmatpush.xpose.msra.mxu0 0.0
    %2794 = vmatpush.xpose.msra.mxu0 0.0
    %2795 = vmatpush.xpose.msra.mxu0 0.0
    %2796 = vmatpush.xpose.msra.mxu0 0.0
    %2797 = vmatpush.xpose.msra.mxu0 0.0
    %2798 = vmatpush.xpose.msra.mxu0 0.0
    %2799 = vmatpush.xpose.msra.mxu0 0.0
    %2800 = vmatpush.xpose.msra.mxu0 0.0
    %2801 = vmatpush.xpose.msra.mxu0 0.0
    %2802 = vmatpush.xpose.msra.mxu0 0.0
    %2803 = vmatpush.xpose.msra.mxu0 0.0
    %2804 = vmatpush.xpose.msra.mxu0 %v2788
    %2805 = vmatpush.xpose.msra.mxu0 %v2785
    %2806 = vmatmul.f32.gmra.mxu0 %v2779
    %v2807 = vpop.f32.mrf.mxu0
    %v2808 = vadd.f32 0.0, %v2807
    %2809 = vmatmul.f32.gmra.mxu0 %v2782
    %v2810 = vpop.f32.mrf.mxu0
    %v2811 = vadd.f32 0.0, %v2810
    %2812 = vdwg.mxu0
    %v2814 = vsel %vm409, %v898, 0
    %v2817 = vsel %vm409, %v910, 0
    %v2820 = vsel %vm409, %v900, 0
    %v2823 = vsel %vm409, %v912, 0
    %2825 = vmatpush.xpose.msra.mxu0 0.0
    %2826 = vmatpush.xpose.msra.mxu0 0.0
    %2827 = vmatpush.xpose.msra.mxu0 0.0
    %2828 = vmatpush.xpose.msra.mxu0 0.0
    %2829 = vmatpush.xpose.msra.mxu0 0.0
    %2830 = vmatpush.xpose.msra.mxu0 0.0
    %2831 = vmatpush.xpose.msra.mxu0 0.0
    %2832 = vmatpush.xpose.msra.mxu0 0.0
    %2833 = vmatpush.xpose.msra.mxu0 0.0
    %2834 = vmatpush.xpose.msra.mxu0 0.0
    %2835 = vmatpush.xpose.msra.mxu0 0.0
    %2836 = vmatpush.xpose.msra.mxu0 0.0
    %2837 = vmatpush.xpose.msra.mxu0 0.0
    %2838 = vmatpush.xpose.msra.mxu0 0.0
    %2839 = vmatpush.xpose.msra.mxu0 %v2823
    %2840 = vmatpush.xpose.msra.mxu0 %v2820
    %2841 = vmatmul.f32.gmra.mxu0 %v2814
    %v2842 = vpop.f32.mrf.mxu0
    %v2843 = vadd.f32 0.0, %v2842
    %2844 = vmatmul.f32.gmra.mxu0 %v2817
    %v2845 = vpop.f32.mrf.mxu0
    %v2846 = vadd.f32 0.0, %v2845
    %2847 = vdwg.mxu0
    %v2848 = vmul.f32 %v2808, 0.17677669
    %v2849 = vmul.f32 %v2811, 0.17677669
    %v2850 = vmul.f32 %v2843, 0.17677669
    %v2851 = vmul.f32 %v2846, 0.17677669
    %v2852 = vadd.f32 %v2848, %v2762
    %v2853 = vadd.f32 %v2849, %v2763
    %v2854 = vadd.f32 %v2850, %v2762
    %v2855 = vadd.f32 %v2851, %v2763
    %vm2856 = vcmask 130048
    %v2857 = vsel %vm2856, %v2852, -inf
    %2858 = vmax.xlane.f32.xlu0 %v2857
    %v2859 = vpop.xlane.xlu0 %2858
    %v2860 = vsel %vm2856, %v2853, -inf
    %2861 = vmax.xlane.f32.xlu0 %v2860
    %v2862 = vpop.xlane.xlu0 %2861
    %v2863 = vsel %vm2856, %v2854, -inf
    %2864 = vmax.xlane.f32.xlu0 %v2863
    %v2865 = vpop.xlane.xlu0 %2864
    %v2866 = vsel %vm2856, %v2855, -inf
    %2867 = vmax.xlane.f32.xlu0 %v2866
    %v2868 = vpop.xlane.xlu0 %2867
    %vm2869 = vcmp.ge.f32.partialorder %v2852, %v2859
    %vm2870 = vcmp.ge.f32.partialorder %v2853, %v2862
    %vm2871 = vcmp.ge.f32.partialorder %v2854, %v2865
    %vm2872 = vcmp.ge.f32.partialorder %v2855, %v2868
    %v2873 = vsel %vm2869, -inf, %v2852
    %v2874 = vsel %vm2870, -inf, %v2853
    %v2875 = vsel %vm2871, -inf, %v2854
    %v2876 = vsel %vm2872, -inf, %v2855
    %v2877 = vsel %vm2856, %v2873, -inf
    %2878 = vmax.xlane.f32.xlu0 %v2877
    %v2879 = vpop.xlane.xlu0 %2878
    %v2880 = vsel %vm2856, %v2874, -inf
    %2881 = vmax.xlane.f32.xlu0 %v2880
    %v2882 = vpop.xlane.xlu0 %2881
    %v2883 = vsel %vm2856, %v2875, -inf
    %2884 = vmax.xlane.f32.xlu0 %v2883
    %v2885 = vpop.xlane.xlu0 %2884
    %v2886 = vsel %vm2856, %v2876, -inf
    %2887 = vmax.xlane.f32.xlu0 %v2886
    %v2888 = vpop.xlane.xlu0 %2887
    %vm2889 = vcmp.ge.f32.partialorder %v2873, %v2879
    %vm2890 = vcmp.ge.f32.partialorder %v2874, %v2882
    %vm2891 = vcmp.ge.f32.partialorder %v2875, %v2885
    %vm2892 = vcmp.ge.f32.partialorder %v2876, %v2888
    %v2893 = vsel %vm2889, -inf, %v2873
    %v2894 = vsel %vm2890, -inf, %v2874
    %v2895 = vsel %vm2891, -inf, %v2875
    %v2896 = vsel %vm2892, -inf, %v2876
    %v2897 = vsel %vm2856, %v2893, -inf
    %2898 = vmax.xlane.f32.xlu0 %v2897
    %v2899 = vpop.xlane.xlu0 %2898
    %v2900 = vsel %vm2856, %v2894, -inf
    %2901 = vmax.xlane.f32.xlu0 %v2900
    %v2902 = vpop.xlane.xlu0 %2901
    %v2903 = vsel %vm2856, %v2895, -inf
    %2904 = vmax.xlane.f32.xlu0 %v2903
    %v2905 = vpop.xlane.xlu0 %2904
    %v2906 = vsel %vm2856, %v2896, -inf
    %2907 = vmax.xlane.f32.xlu0 %v2906
    %v2908 = vpop.xlane.xlu0 %2907
    %vm2909 = vcmp.ge.f32.partialorder %v2893, %v2899
    %vm2910 = vcmp.ge.f32.partialorder %v2894, %v2902
    %vm2911 = vcmp.ge.f32.partialorder %v2895, %v2905
    %vm2912 = vcmp.ge.f32.partialorder %v2896, %v2908
    %v2913 = vsel %vm2909, -inf, %v2893
    %v2914 = vsel %vm2910, -inf, %v2894
    %v2915 = vsel %vm2911, -inf, %v2895
    %v2916 = vsel %vm2912, -inf, %v2896
    %v2917 = vsel %vm2856, %v2913, -inf
    %2918 = vmax.xlane.f32.xlu0 %v2917
    %v2919 = vpop.xlane.xlu0 %2918
    %v2920 = vsel %vm2856, %v2914, -inf
    %2921 = vmax.xlane.f32.xlu0 %v2920
    %v2922 = vpop.xlane.xlu0 %2921
    %v2923 = vsel %vm2856, %v2915, -inf
    %2924 = vmax.xlane.f32.xlu0 %v2923
    %v2925 = vpop.xlane.xlu0 %2924
    %v2926 = vsel %vm2856, %v2916, -inf
    %2927 = vmax.xlane.f32.xlu0 %v2926
    %v2928 = vpop.xlane.xlu0 %2927
    %vm2929 = vcmp.ge.f32.partialorder %v2913, %v2919
    %vm2930 = vcmp.ge.f32.partialorder %v2914, %v2922
    %vm2931 = vcmp.ge.f32.partialorder %v2915, %v2925
    %vm2932 = vcmp.ge.f32.partialorder %v2916, %v2928
    %v2933 = vsel %vm2929, -inf, %v2913
    %v2934 = vsel %vm2930, -inf, %v2914
    %v2935 = vsel %vm2931, -inf, %v2915
    %v2936 = vsel %vm2932, -inf, %v2916
    %v2937 = vsel %vm2856, %v2933, -inf
    %2938 = vmax.xlane.f32.xlu0 %v2937
    %v2939 = vpop.xlane.xlu0 %2938
    %v2940 = vsel %vm2856, %v2934, -inf
    %2941 = vmax.xlane.f32.xlu0 %v2940
    %v2942 = vpop.xlane.xlu0 %2941
    %v2943 = vsel %vm2856, %v2935, -inf
    %2944 = vmax.xlane.f32.xlu0 %v2943
    %v2945 = vpop.xlane.xlu0 %2944
    %v2946 = vsel %vm2856, %v2936, -inf
    %2947 = vmax.xlane.f32.xlu0 %v2946
    %v2948 = vpop.xlane.xlu0 %2947
    %vm2949 = vcmp.ge.f32.partialorder %v2933, %v2939
    %vm2950 = vcmp.ge.f32.partialorder %v2934, %v2942
    %vm2951 = vcmp.ge.f32.partialorder %v2935, %v2945
    %vm2952 = vcmp.ge.f32.partialorder %v2936, %v2948
    %v2953 = vsel %vm2949, -inf, %v2933
    %v2954 = vsel %vm2950, -inf, %v2934
    %v2955 = vsel %vm2951, -inf, %v2935
    %v2956 = vsel %vm2952, -inf, %v2936
    %v2957 = vsel %vm2856, %v2953, -inf
    %2958 = vmax.xlane.f32.xlu0 %v2957
    %v2959 = vpop.xlane.xlu0 %2958
    %v2960 = vsel %vm2856, %v2954, -inf
    %2961 = vmax.xlane.f32.xlu0 %v2960
    %v2962 = vpop.xlane.xlu0 %2961
    %v2963 = vsel %vm2856, %v2955, -inf
    %2964 = vmax.xlane.f32.xlu0 %v2963
    %v2965 = vpop.xlane.xlu0 %2964
    %v2966 = vsel %vm2856, %v2956, -inf
    %2967 = vmax.xlane.f32.xlu0 %v2966
    %v2968 = vpop.xlane.xlu0 %2967
    %vm2969 = vcmp.ge.f32.partialorder %v2852, %v2959
    %vm2970 = vcmp.ge.f32.partialorder %v2853, %v2962
    %vm2971 = vcmp.ge.f32.partialorder %v2854, %v2965
    %vm2972 = vcmp.ge.f32.partialorder %v2855, %v2968
    %v2973 = vsel %vm2969, %v2852, -inf
    %v2974 = vsel %vm2970, %v2853, -inf
    %v2975 = vsel %vm2971, %v2854, -inf
    %v2976 = vsel %vm2972, %v2855, -inf
    %v2977 = vsel %vm2856, %v2973, -inf
    %2978 = vmax.xlane.f32.xlu0 %v2977
    %v2979 = vpop.xlane.xlu0 %2978
    %v2980 = vsel %vm2856, %v2974, -inf
    %2981 = vmax.xlane.f32.xlu0 %v2980
    %v2982 = vpop.xlane.xlu0 %2981
    %v2983 = vsel %vm2856, %v2975, -inf
    %2984 = vmax.xlane.f32.xlu0 %v2983
    %v2985 = vpop.xlane.xlu0 %2984
    %v2986 = vsel %vm2856, %v2976, -inf
    %2987 = vmax.xlane.f32.xlu0 %v2986
    %v2988 = vpop.xlane.xlu0 %2987
    %v2989 = vsub.f32 %v2973, %v2979
    %v2990 = vsub.f32 %v2974, %v2982
    %v2991 = vsub.f32 %v2975, %v2985
    %v2992 = vsub.f32 %v2976, %v2988
    %v2993 = vmul.f32 %v2989, 1.442695
    %v2994 = vpow.pop %v2993
    %v2995 = vmul.f32 %v2990, 1.442695
    %v2996 = vpow.pop %v2995
    %v2997 = vmul.f32 %v2991, 1.442695
    %v2998 = vpow.pop %v2997
    %v2999 = vmul.f32 %v2992, 1.442695
    %v3000 = vpow.pop %v2999
    %v3001 = vsel %vm2856, %v2994, 0.0
    %3002 = vadd.xlane.f32.xlu0 %v3001
    %v3003 = vpop.xlane.xlu0 %3002
    %v3004 = vsel %vm2856, %v2996, 0.0
    %3005 = vadd.xlane.f32.xlu0 %v3004
    %v3006 = vpop.xlane.xlu0 %3005
    %v3007 = vsel %vm2856, %v2998, 0.0
    %3008 = vadd.xlane.f32.xlu0 %v3007
    %v3009 = vpop.xlane.xlu0 %3008
    %v3010 = vsel %vm2856, %v3000, 0.0
    %3011 = vadd.xlane.f32.xlu0 %v3010
    %v3012 = vpop.xlane.xlu0 %3011
    %v3013 = vrcp.pop %v3003
    %v3014 = vmul.f32 %v3003, %v3013
    %v3015 = vsub.f32 1.0, %v3014
    %v3016 = vmul.f32 %v3013, %v3015
    %v3017 = vadd.f32 %v3013, %v3016
    %vm3018 = vweird.f32 %v3003
    %vm3019 = vweird.f32 %v3013
    %vm3020 = vmor %vm3018, %vm3019
    %v3021 = vsel %vm3020, %v3013, %v3017
    %v3022 = vand.u32 2147483647, %v3003
    %vm3023 = vcmp.eq.f32.partialorder %v3022, 8.507059e+37
    %v3024 = vand.u32 %v3003, 2147483648
    %v3025 = vor.u32 1.1754944e-38, %v3024
    %v3026 = vsel %vm3023, %v3025, %v3021
    %v3027 = vmul.f32 %v2994, %v3026
    %v3028 = vrcp.pop %v3006
    %v3029 = vmul.f32 %v3006, %v3028
    %v3030 = vsub.f32 1.0, %v3029
    %v3031 = vmul.f32 %v3028, %v3030
    %v3032 = vadd.f32 %v3028, %v3031
    %vm3033 = vweird.f32 %v3006
    %vm3034 = vweird.f32 %v3028
    %vm3035 = vmor %vm3033, %vm3034
    %v3036 = vsel %vm3035, %v3028, %v3032
    %v3037 = vand.u32 2147483647, %v3006
    %vm3038 = vcmp.eq.f32.partialorder %v3037, 8.507059e+37
    %v3039 = vand.u32 %v3006, 2147483648
    %v3040 = vor.u32 1.1754944e-38, %v3039
    %v3041 = vsel %vm3038, %v3040, %v3036
    %v3042 = vmul.f32 %v2996, %v3041
    %v3043 = vrcp.pop %v3009
    %v3044 = vmul.f32 %v3009, %v3043
    %v3045 = vsub.f32 1.0, %v3044
    %v3046 = vmul.f32 %v3043, %v3045
    %v3047 = vadd.f32 %v3043, %v3046
    %vm3048 = vweird.f32 %v3009
    %vm3049 = vweird.f32 %v3043
    %vm3050 = vmor %vm3048, %vm3049
    %v3051 = vsel %vm3050, %v3043, %v3047
    %v3052 = vand.u32 2147483647, %v3009
    %vm3053 = vcmp.eq.f32.partialorder %v3052, 8.507059e+37
    %v3054 = vand.u32 %v3009, 2147483648
    %v3055 = vor.u32 1.1754944e-38, %v3054
    %v3056 = vsel %vm3053, %v3055, %v3051
    %v3057 = vmul.f32 %v2998, %v3056
    %v3058 = vrcp.pop %v3012
    %v3059 = vmul.f32 %v3012, %v3058
    %v3060 = vsub.f32 1.0, %v3059
    %v3061 = vmul.f32 %v3058, %v3060
    %v3062 = vadd.f32 %v3058, %v3061
    %vm3063 = vweird.f32 %v3012
    %vm3064 = vweird.f32 %v3058
    %vm3065 = vmor %vm3063, %vm3064
    %v3066 = vsel %vm3065, %v3058, %v3062
    %v3067 = vand.u32 2147483647, %v3012
    %vm3068 = vcmp.eq.f32.partialorder %v3067, 8.507059e+37
    %v3069 = vand.u32 %v3012, 2147483648
    %v3070 = vor.u32 1.1754944e-38, %v3069
    %v3071 = vsel %vm3068, %v3070, %v3066
    %v3072 = vmul.f32 %v3000, %v3071
    %v3074 = vsel %vm2856, %v3027, 0
    %v3077 = vsel %vm2856, %v3042, 0
    %3079 = vmatpush.msra.mxu0 0.0
    %3080 = vmatpush.msra.mxu0 0.0
    %3081 = vmatpush.msra.mxu0 0.0
    %3082 = vmatpush.msra.mxu0 0.0
    %3083 = vmatpush.msra.mxu0 0.0
    %3084 = vmatpush.msra.mxu0 0.0
    %3085 = vmatpush.msra.mxu0 0.0
    %3086 = vmatpush.msra.mxu0 0.0
    %3087 = vmatpush.msra.mxu0 0.0
    %3088 = vmatpush.msra.mxu0 0.0
    %3089 = vmatpush.msra.mxu0 0.0
    %3090 = vmatpush.msra.mxu0 0.0
    %3091 = vmatpush.msra.mxu0 0.0
    %3092 = vmatpush.msra.mxu0 0.0
    %3093 = vmatpush.msra.mxu0 %v890
    %3094 = vmatpush.msra.mxu0 %v878
    %3095 = vmatmul.f32.gmra.mxu0 %v3074
    %v3096 = vpop.f32.mrf.mxu0
    %v3097 = vadd.f32 0.0, %v3096
    %3098 = vmatmul.f32.gmra.mxu0 %v3077
    %v3099 = vpop.f32.mrf.mxu0
    %v3100 = vadd.f32 0.0, %v3099
    %3101 = vdwg.mxu0
    %v3103 = vsel %vm2856, %v3057, 0
    %v3106 = vsel %vm2856, %v3072, 0
    %3108 = vmatpush.msra.mxu0 0.0
    %3109 = vmatpush.msra.mxu0 0.0
    %3110 = vmatpush.msra.mxu0 0.0
    %3111 = vmatpush.msra.mxu0 0.0
    %3112 = vmatpush.msra.mxu0 0.0
    %3113 = vmatpush.msra.mxu0 0.0
    %3114 = vmatpush.msra.mxu0 0.0
    %3115 = vmatpush.msra.mxu0 0.0
    %3116 = vmatpush.msra.mxu0 0.0
    %3117 = vmatpush.msra.mxu0 0.0
    %3118 = vmatpush.msra.mxu0 0.0
    %3119 = vmatpush.msra.mxu0 0.0
    %3120 = vmatpush.msra.mxu0 0.0
    %3121 = vmatpush.msra.mxu0 0.0
    %3122 = vmatpush.msra.mxu0 %v914
    %3123 = vmatpush.msra.mxu0 %v902
    %3124 = vmatmul.f32.gmra.mxu0 %v3103
    %v3125 = vpop.f32.mrf.mxu0
    %v3126 = vadd.f32 0.0, %v3125
    %3127 = vmatmul.f32.gmra.mxu0 %v3106
    %v3128 = vpop.f32.mrf.mxu0
    %v3129 = vadd.f32 0.0, %v3128
    %3130 = vdwg.mxu0
    %3131 = vrot.lane.b32.xlu0 %v874, 96
    %v3132 = vpop.permute.xlu0 %3131
    %3133 = vrot.lane.b32.xlu0 %v886, 96
    %v3134 = vpop.permute.xlu0 %3133
    %3135 = vrot.lane.b32.xlu0 %v876, 96
    %v3136 = vpop.permute.xlu0 %3135
    %3137 = vrot.lane.b32.xlu0 %v888, 96
    %v3138 = vpop.permute.xlu0 %3137
    %v3139 = vsel %vm409, %v3132, 0
    %v3141 = vsel %vm409, %v3134, 0
    %v3143 = vsel %vm409, %v3136, 0
    %v3145 = vsel %vm409, %v3138, 0
    %3147 = vmatpush.xpose.msra.mxu0 0.0
    %3148 = vmatpush.xpose.msra.mxu0 0.0
    %3149 = vmatpush.xpose.msra.mxu0 0.0
    %3150 = vmatpush.xpose.msra.mxu0 0.0
    %3151 = vmatpush.xpose.msra.mxu0 0.0
    %3152 = vmatpush.xpose.msra.mxu0 0.0
    %3153 = vmatpush.xpose.msra.mxu0 0.0
    %3154 = vmatpush.xpose.msra.mxu0 0.0
    %3155 = vmatpush.xpose.msra.mxu0 0.0
    %3156 = vmatpush.xpose.msra.mxu0 0.0
    %3157 = vmatpush.xpose.msra.mxu0 0.0
    %3158 = vmatpush.xpose.msra.mxu0 0.0
    %3159 = vmatpush.xpose.msra.mxu0 0.0
    %3160 = vmatpush.xpose.msra.mxu0 0.0
    %3161 = vmatpush.xpose.msra.mxu0 %v3145
    %3162 = vmatpush.xpose.msra.mxu0 %v3143
    %3163 = vmatmul.f32.gmra.mxu0 %v3139
    %v3164 = vpop.f32.mrf.mxu0
    %v3165 = vadd.f32 0.0, %v3164
    %3166 = vmatmul.f32.gmra.mxu0 %v3141
    %v3167 = vpop.f32.mrf.mxu0
    %v3168 = vadd.f32 0.0, %v3167
    %3169 = vdwg.mxu0
    %3170 = vrot.lane.b32.xlu0 %v898, 96
    %v3171 = vpop.permute.xlu0 %3170
    %3172 = vrot.lane.b32.xlu0 %v910, 96
    %v3173 = vpop.permute.xlu0 %3172
    %3174 = vrot.lane.b32.xlu0 %v900, 96
    %v3175 = vpop.permute.xlu0 %3174
    %3176 = vrot.lane.b32.xlu0 %v912, 96
    %v3177 = vpop.permute.xlu0 %3176
    %v3178 = vsel %vm409, %v3171, 0
    %v3180 = vsel %vm409, %v3173, 0
    %v3182 = vsel %vm409, %v3175, 0
    %v3184 = vsel %vm409, %v3177, 0
    %3186 = vmatpush.xpose.msra.mxu0 0.0
    %3187 = vmatpush.xpose.msra.mxu0 0.0
    %3188 = vmatpush.xpose.msra.mxu0 0.0
    %3189 = vmatpush.xpose.msra.mxu0 0.0
    %3190 = vmatpush.xpose.msra.mxu0 0.0
    %3191 = vmatpush.xpose.msra.mxu0 0.0
    %3192 = vmatpush.xpose.msra.mxu0 0.0
    %3193 = vmatpush.xpose.msra.mxu0 0.0
    %3194 = vmatpush.xpose.msra.mxu0 0.0
    %3195 = vmatpush.xpose.msra.mxu0 0.0
    %3196 = vmatpush.xpose.msra.mxu0 0.0
    %3197 = vmatpush.xpose.msra.mxu0 0.0
    %3198 = vmatpush.xpose.msra.mxu0 0.0
    %3199 = vmatpush.xpose.msra.mxu0 0.0
    %3200 = vmatpush.xpose.msra.mxu0 %v3184
    %3201 = vmatpush.xpose.msra.mxu0 %v3182
    %3202 = vmatmul.f32.gmra.mxu0 %v3178
    %v3203 = vpop.f32.mrf.mxu0
    %v3204 = vadd.f32 0.0, %v3203
    %3205 = vmatmul.f32.gmra.mxu0 %v3180
    %v3206 = vpop.f32.mrf.mxu0
    %v3207 = vadd.f32 0.0, %v3206
    %3208 = vdwg.mxu0
    %v3209 = vmul.f32 %v3165, 0.17677669
    %v3210 = vmul.f32 %v3168, 0.17677669
    %v3211 = vmul.f32 %v3204, 0.17677669
    %v3212 = vmul.f32 %v3207, 0.17677669
    %v3213 = vadd.f32 %v3209, %v2764
    %v3214 = vadd.f32 %v3210, %v2765
    %v3215 = vadd.f32 %v3211, %v2764
    %v3216 = vadd.f32 %v3212, %v2765
    %v3217 = vsel %vm2856, %v3213, -inf
    %3218 = vmax.xlane.f32.xlu0 %v3217
    %v3219 = vpop.xlane.xlu0 %3218
    %v3220 = vsel %vm2856, %v3214, -inf
    %3221 = vmax.xlane.f32.xlu0 %v3220
    %v3222 = vpop.xlane.xlu0 %3221
    %v3223 = vsel %vm2856, %v3215, -inf
    %3224 = vmax.xlane.f32.xlu0 %v3223
    %v3225 = vpop.xlane.xlu0 %3224
    %v3226 = vsel %vm2856, %v3216, -inf
    %3227 = vmax.xlane.f32.xlu0 %v3226
    %v3228 = vpop.xlane.xlu0 %3227
    %vm3229 = vcmp.ge.f32.partialorder %v3213, %v3219
    %vm3230 = vcmp.ge.f32.partialorder %v3214, %v3222
    %vm3231 = vcmp.ge.f32.partialorder %v3215, %v3225
    %vm3232 = vcmp.ge.f32.partialorder %v3216, %v3228
    %v3233 = vsel %vm3229, -inf, %v3213
    %v3234 = vsel %vm3230, -inf, %v3214
    %v3235 = vsel %vm3231, -inf, %v3215
    %v3236 = vsel %vm3232, -inf, %v3216
    %v3237 = vsel %vm2856, %v3233, -inf
    %3238 = vmax.xlane.f32.xlu0 %v3237
    %v3239 = vpop.xlane.xlu0 %3238
    %v3240 = vsel %vm2856, %v3234, -inf
    %3241 = vmax.xlane.f32.xlu0 %v3240
    %v3242 = vpop.xlane.xlu0 %3241
    %v3243 = vsel %vm2856, %v3235, -inf
    %3244 = vmax.xlane.f32.xlu0 %v3243
    %v3245 = vpop.xlane.xlu0 %3244
    %v3246 = vsel %vm2856, %v3236, -inf
    %3247 = vmax.xlane.f32.xlu0 %v3246
    %v3248 = vpop.xlane.xlu0 %3247
    %vm3249 = vcmp.ge.f32.partialorder %v3233, %v3239
    %vm3250 = vcmp.ge.f32.partialorder %v3234, %v3242
    %vm3251 = vcmp.ge.f32.partialorder %v3235, %v3245
    %vm3252 = vcmp.ge.f32.partialorder %v3236, %v3248
    %v3253 = vsel %vm3249, -inf, %v3233
    %v3254 = vsel %vm3250, -inf, %v3234
    %v3255 = vsel %vm3251, -inf, %v3235
    %v3256 = vsel %vm3252, -inf, %v3236
    %v3257 = vsel %vm2856, %v3253, -inf
    %3258 = vmax.xlane.f32.xlu0 %v3257
    %v3259 = vpop.xlane.xlu0 %3258
    %v3260 = vsel %vm2856, %v3254, -inf
    %3261 = vmax.xlane.f32.xlu0 %v3260
    %v3262 = vpop.xlane.xlu0 %3261
    %v3263 = vsel %vm2856, %v3255, -inf
    %3264 = vmax.xlane.f32.xlu0 %v3263
    %v3265 = vpop.xlane.xlu0 %3264
    %v3266 = vsel %vm2856, %v3256, -inf
    %3267 = vmax.xlane.f32.xlu0 %v3266
    %v3268 = vpop.xlane.xlu0 %3267
    %vm3269 = vcmp.ge.f32.partialorder %v3253, %v3259
    %vm3270 = vcmp.ge.f32.partialorder %v3254, %v3262
    %vm3271 = vcmp.ge.f32.partialorder %v3255, %v3265
    %vm3272 = vcmp.ge.f32.partialorder %v3256, %v3268
    %v3273 = vsel %vm3269, -inf, %v3253
    %v3274 = vsel %vm3270, -inf, %v3254
    %v3275 = vsel %vm3271, -inf, %v3255
    %v3276 = vsel %vm3272, -inf, %v3256
    %v3277 = vsel %vm2856, %v3273, -inf
    %3278 = vmax.xlane.f32.xlu0 %v3277
    %v3279 = vpop.xlane.xlu0 %3278
    %v3280 = vsel %vm2856, %v3274, -inf
    %3281 = vmax.xlane.f32.xlu0 %v3280
    %v3282 = vpop.xlane.xlu0 %3281
    %v3283 = vsel %vm2856, %v3275, -inf
    %3284 = vmax.xlane.f32.xlu0 %v3283
    %v3285 = vpop.xlane.xlu0 %3284
    %v3286 = vsel %vm2856, %v3276, -inf
    %3287 = vmax.xlane.f32.xlu0 %v3286
    %v3288 = vpop.xlane.xlu0 %3287
    %vm3289 = vcmp.ge.f32.partialorder %v3273, %v3279
    %vm3290 = vcmp.ge.f32.partialorder %v3274, %v3282
    %vm3291 = vcmp.ge.f32.partialorder %v3275, %v3285
    %vm3292 = vcmp.ge.f32.partialorder %v3276, %v3288
    %v3293 = vsel %vm3289, -inf, %v3273
    %v3294 = vsel %vm3290, -inf, %v3274
    %v3295 = vsel %vm3291, -inf, %v3275
    %v3296 = vsel %vm3292, -inf, %v3276
    %v3297 = vsel %vm2856, %v3293, -inf
    %3298 = vmax.xlane.f32.xlu0 %v3297
    %v3299 = vpop.xlane.xlu0 %3298
    %v3300 = vsel %vm2856, %v3294, -inf
    %3301 = vmax.xlane.f32.xlu0 %v3300
    %v3302 = vpop.xlane.xlu0 %3301
    %v3303 = vsel %vm2856, %v3295, -inf
    %3304 = vmax.xlane.f32.xlu0 %v3303
    %v3305 = vpop.xlane.xlu0 %3304
    %v3306 = vsel %vm2856, %v3296, -inf
    %3307 = vmax.xlane.f32.xlu0 %v3306
    %v3308 = vpop.xlane.xlu0 %3307
    %vm3309 = vcmp.ge.f32.partialorder %v3293, %v3299
    %vm3310 = vcmp.ge.f32.partialorder %v3294, %v3302
    %vm3311 = vcmp.ge.f32.partialorder %v3295, %v3305
    %vm3312 = vcmp.ge.f32.partialorder %v3296, %v3308
    %v3313 = vsel %vm3309, -inf, %v3293
    %v3314 = vsel %vm3310, -inf, %v3294
    %v3315 = vsel %vm3311, -inf, %v3295
    %v3316 = vsel %vm3312, -inf, %v3296
    %v3317 = vsel %vm2856, %v3313, -inf
    %3318 = vmax.xlane.f32.xlu0 %v3317
    %v3319 = vpop.xlane.xlu0 %3318
    %v3320 = vsel %vm2856, %v3314, -inf
    %3321 = vmax.xlane.f32.xlu0 %v3320
    %v3322 = vpop.xlane.xlu0 %3321
    %v3323 = vsel %vm2856, %v3315, -inf
    %3324 = vmax.xlane.f32.xlu0 %v3323
    %v3325 = vpop.xlane.xlu0 %3324
    %v3326 = vsel %vm2856, %v3316, -inf
    %3327 = vmax.xlane.f32.xlu0 %v3326
    %v3328 = vpop.xlane.xlu0 %3327
    %vm3329 = vcmp.ge.f32.partialorder %v3213, %v3319
    %vm3330 = vcmp.ge.f32.partialorder %v3214, %v3322
    %vm3331 = vcmp.ge.f32.partialorder %v3215, %v3325
    %vm3332 = vcmp.ge.f32.partialorder %v3216, %v3328
    %v3333 = vsel %vm3329, %v3213, -inf
    %v3334 = vsel %vm3330, %v3214, -inf
    %v3335 = vsel %vm3331, %v3215, -inf
    %v3336 = vsel %vm3332, %v3216, -inf
    %v3337 = vsel %vm2856, %v3333, -inf
    %3338 = vmax.xlane.f32.xlu0 %v3337
    %v3339 = vpop.xlane.xlu0 %3338
    %v3340 = vsel %vm2856, %v3334, -inf
    %3341 = vmax.xlane.f32.xlu0 %v3340
    %v3342 = vpop.xlane.xlu0 %3341
    %v3343 = vsel %vm2856, %v3335, -inf
    %3344 = vmax.xlane.f32.xlu0 %v3343
    %v3345 = vpop.xlane.xlu0 %3344
    %v3346 = vsel %vm2856, %v3336, -inf
    %3347 = vmax.xlane.f32.xlu0 %v3346
    %v3348 = vpop.xlane.xlu0 %3347
    %v3349 = vsub.f32 %v3333, %v3339
    %v3350 = vsub.f32 %v3334, %v3342
    %v3351 = vsub.f32 %v3335, %v3345
    %v3352 = vsub.f32 %v3336, %v3348
    %v3353 = vmul.f32 %v3349, 1.442695
    %v3354 = vpow.pop %v3353
    %v3355 = vmul.f32 %v3350, 1.442695
    %v3356 = vpow.pop %v3355
    %v3357 = vmul.f32 %v3351, 1.442695
    %v3358 = vpow.pop %v3357
    %v3359 = vmul.f32 %v3352, 1.442695
    %v3360 = vpow.pop %v3359
    %v3361 = vsel %vm2856, %v3354, 0.0
    %3362 = vadd.xlane.f32.xlu0 %v3361
    %v3363 = vpop.xlane.xlu0 %3362
    %v3364 = vsel %vm2856, %v3356, 0.0
    %3365 = vadd.xlane.f32.xlu0 %v3364
    %v3366 = vpop.xlane.xlu0 %3365
    %v3367 = vsel %vm2856, %v3358, 0.0
    %3368 = vadd.xlane.f32.xlu0 %v3367
    %v3369 = vpop.xlane.xlu0 %3368
    %v3370 = vsel %vm2856, %v3360, 0.0
    %3371 = vadd.xlane.f32.xlu0 %v3370
    %v3372 = vpop.xlane.xlu0 %3371
    %v3373 = vrcp.pop %v3363
    %v3374 = vmul.f32 %v3363, %v3373
    %v3375 = vsub.f32 1.0, %v3374
    %v3376 = vmul.f32 %v3373, %v3375
    %v3377 = vadd.f32 %v3373, %v3376
    %vm3378 = vweird.f32 %v3363
    %vm3379 = vweird.f32 %v3373
    %vm3380 = vmor %vm3378, %vm3379
    %v3381 = vsel %vm3380, %v3373, %v3377
    %v3382 = vand.u32 2147483647, %v3363
    %vm3383 = vcmp.eq.f32.partialorder %v3382, 8.507059e+37
    %v3384 = vand.u32 %v3363, 2147483648
    %v3385 = vor.u32 1.1754944e-38, %v3384
    %v3386 = vsel %vm3383, %v3385, %v3381
    %v3387 = vmul.f32 %v3354, %v3386
    %v3388 = vrcp.pop %v3366
    %v3389 = vmul.f32 %v3366, %v3388
    %v3390 = vsub.f32 1.0, %v3389
    %v3391 = vmul.f32 %v3388, %v3390
    %v3392 = vadd.f32 %v3388, %v3391
    %vm3393 = vweird.f32 %v3366
    %vm3394 = vweird.f32 %v3388
    %vm3395 = vmor %vm3393, %vm3394
    %v3396 = vsel %vm3395, %v3388, %v3392
    %v3397 = vand.u32 2147483647, %v3366
    %vm3398 = vcmp.eq.f32.partialorder %v3397, 8.507059e+37
    %v3399 = vand.u32 %v3366, 2147483648
    %v3400 = vor.u32 1.1754944e-38, %v3399
    %v3401 = vsel %vm3398, %v3400, %v3396
    %v3402 = vmul.f32 %v3356, %v3401
    %v3403 = vrcp.pop %v3369
    %v3404 = vmul.f32 %v3369, %v3403
    %v3405 = vsub.f32 1.0, %v3404
    %v3406 = vmul.f32 %v3403, %v3405
    %v3407 = vadd.f32 %v3403, %v3406
    %vm3408 = vweird.f32 %v3369
    %vm3409 = vweird.f32 %v3403
    %vm3410 = vmor %vm3408, %vm3409
    %v3411 = vsel %vm3410, %v3403, %v3407
    %v3412 = vand.u32 2147483647, %v3369
    %vm3413 = vcmp.eq.f32.partialorder %v3412, 8.507059e+37
    %v3414 = vand.u32 %v3369, 2147483648
    %v3415 = vor.u32 1.1754944e-38, %v3414
    %v3416 = vsel %vm3413, %v3415, %v3411
    %v3417 = vmul.f32 %v3358, %v3416
    %v3418 = vrcp.pop %v3372
    %v3419 = vmul.f32 %v3372, %v3418
    %v3420 = vsub.f32 1.0, %v3419
    %v3421 = vmul.f32 %v3418, %v3420
    %v3422 = vadd.f32 %v3418, %v3421
    %vm3423 = vweird.f32 %v3372
    %vm3424 = vweird.f32 %v3418
    %vm3425 = vmor %vm3423, %vm3424
    %v3426 = vsel %vm3425, %v3418, %v3422
    %v3427 = vand.u32 2147483647, %v3372
    %vm3428 = vcmp.eq.f32.partialorder %v3427, 8.507059e+37
    %v3429 = vand.u32 %v3372, 2147483648
    %v3430 = vor.u32 1.1754944e-38, %v3429
    %v3431 = vsel %vm3428, %v3430, %v3426
    %v3432 = vmul.f32 %v3360, %v3431
    %v3434 = vsel %vm2856, %v3387, 0
    %v3437 = vsel %vm2856, %v3402, 0
    %3439 = vmatpush.msra.mxu0 0.0
    %3440 = vmatpush.msra.mxu0 0.0
    %3441 = vmatpush.msra.mxu0 0.0
    %3442 = vmatpush.msra.mxu0 0.0
    %3443 = vmatpush.msra.mxu0 0.0
    %3444 = vmatpush.msra.mxu0 0.0
    %3445 = vmatpush.msra.mxu0 0.0
    %3446 = vmatpush.msra.mxu0 0.0
    %3447 = vmatpush.msra.mxu0 0.0
    %3448 = vmatpush.msra.mxu0 0.0
    %3449 = vmatpush.msra.mxu0 0.0
    %3450 = vmatpush.msra.mxu0 0.0
    %3451 = vmatpush.msra.mxu0 0.0
    %3452 = vmatpush.msra.mxu0 0.0
    %3453 = vmatpush.msra.mxu0 %v891
    %3454 = vmatpush.msra.mxu0 %v879
    %3455 = vmatmul.f32.gmra.mxu0 %v3434
    %v3456 = vpop.f32.mrf.mxu0
    %v3457 = vadd.f32 0.0, %v3456
    %3458 = vmatmul.f32.gmra.mxu0 %v3437
    %v3459 = vpop.f32.mrf.mxu0
    %v3460 = vadd.f32 0.0, %v3459
    %3461 = vdwg.mxu0
    %v3463 = vsel %vm2856, %v3417, 0
    %v3466 = vsel %vm2856, %v3432, 0
    %3468 = vmatpush.msra.mxu0 0.0
    %3469 = vmatpush.msra.mxu0 0.0
    %3470 = vmatpush.msra.mxu0 0.0
    %3471 = vmatpush.msra.mxu0 0.0
    %3472 = vmatpush.msra.mxu0 0.0
    %3473 = vmatpush.msra.mxu0 0.0
    %3474 = vmatpush.msra.mxu0 0.0
    %3475 = vmatpush.msra.mxu0 0.0
    %3476 = vmatpush.msra.mxu0 0.0
    %3477 = vmatpush.msra.mxu0 0.0
    %3478 = vmatpush.msra.mxu0 0.0
    %3479 = vmatpush.msra.mxu0 0.0
    %3480 = vmatpush.msra.mxu0 0.0
    %3481 = vmatpush.msra.mxu0 0.0
    %3482 = vmatpush.msra.mxu0 %v915
    %3483 = vmatpush.msra.mxu0 %v903
    %3484 = vmatmul.f32.gmra.mxu0 %v3463
    %v3485 = vpop.f32.mrf.mxu0
    %v3486 = vadd.f32 0.0, %v3485
    %3487 = vmatmul.f32.gmra.mxu0 %v3466
    %v3488 = vpop.f32.mrf.mxu0
    %v3489 = vadd.f32 0.0, %v3488
    %3490 = vdwg.mxu0
    %3491 = vrot.lane.b32.xlu0 %v874, 64
    %v3492 = vpop.permute.xlu0 %3491
    %3493 = vrot.lane.b32.xlu0 %v886, 64
    %v3494 = vpop.permute.xlu0 %3493
    %3495 = vrot.lane.b32.xlu0 %v876, 64
    %v3496 = vpop.permute.xlu0 %3495
    %3497 = vrot.lane.b32.xlu0 %v888, 64
    %v3498 = vpop.permute.xlu0 %3497
    %v3499 = vsel %vm409, %v3492, 0
    %v3501 = vsel %vm409, %v3494, 0
    %v3503 = vsel %vm409, %v3496, 0
    %v3505 = vsel %vm409, %v3498, 0
    %3507 = vmatpush.xpose.msra.mxu0 0.0
    %3508 = vmatpush.xpose.msra.mxu0 0.0
    %3509 = vmatpush.xpose.msra.mxu0 0.0
    %3510 = vmatpush.xpose.msra.mxu0 0.0
    %3511 = vmatpush.xpose.msra.mxu0 0.0
    %3512 = vmatpush.xpose.msra.mxu0 0.0
    %3513 = vmatpush.xpose.msra.mxu0 0.0
    %3514 = vmatpush.xpose.msra.mxu0 0.0
    %3515 = vmatpush.xpose.msra.mxu0 0.0
    %3516 = vmatpush.xpose.msra.mxu0 0.0
    %3517 = vmatpush.xpose.msra.mxu0 0.0
    %3518 = vmatpush.xpose.msra.mxu0 0.0
    %3519 = vmatpush.xpose.msra.mxu0 0.0
    %3520 = vmatpush.xpose.msra.mxu0 0.0
    %3521 = vmatpush.xpose.msra.mxu0 %v3505
    %3522 = vmatpush.xpose.msra.mxu0 %v3503
    %3523 = vmatmul.f32.gmra.mxu0 %v3499
    %v3524 = vpop.f32.mrf.mxu0
    %v3525 = vadd.f32 0.0, %v3524
    %3526 = vmatmul.f32.gmra.mxu0 %v3501
    %v3527 = vpop.f32.mrf.mxu0
    %v3528 = vadd.f32 0.0, %v3527
    %3529 = vdwg.mxu0
    %3530 = vrot.lane.b32.xlu0 %v898, 64
    %v3531 = vpop.permute.xlu0 %3530
    %3532 = vrot.lane.b32.xlu0 %v910, 64
    %v3533 = vpop.permute.xlu0 %3532
    %3534 = vrot.lane.b32.xlu0 %v900, 64
    %v3535 = vpop.permute.xlu0 %3534
    %3536 = vrot.lane.b32.xlu0 %v912, 64
    %v3537 = vpop.permute.xlu0 %3536
    %v3538 = vsel %vm409, %v3531, 0
    %v3540 = vsel %vm409, %v3533, 0
    %v3542 = vsel %vm409, %v3535, 0
    %v3544 = vsel %vm409, %v3537, 0
    %3546 = vmatpush.xpose.msra.mxu0 0.0
    %3547 = vmatpush.xpose.msra.mxu0 0.0
    %3548 = vmatpush.xpose.msra.mxu0 0.0
    %3549 = vmatpush.xpose.msra.mxu0 0.0
    %3550 = vmatpush.xpose.msra.mxu0 0.0
    %3551 = vmatpush.xpose.msra.mxu0 0.0
    %3552 = vmatpush.xpose.msra.mxu0 0.0
    %3553 = vmatpush.xpose.msra.mxu0 0.0
    %3554 = vmatpush.xpose.msra.mxu0 0.0
    %3555 = vmatpush.xpose.msra.mxu0 0.0
    %3556 = vmatpush.xpose.msra.mxu0 0.0
    %3557 = vmatpush.xpose.msra.mxu0 0.0
    %3558 = vmatpush.xpose.msra.mxu0 0.0
    %3559 = vmatpush.xpose.msra.mxu0 0.0
    %3560 = vmatpush.xpose.msra.mxu0 %v3544
    %3561 = vmatpush.xpose.msra.mxu0 %v3542
    %3562 = vmatmul.f32.gmra.mxu0 %v3538
    %v3563 = vpop.f32.mrf.mxu0
    %v3564 = vadd.f32 0.0, %v3563
    %3565 = vmatmul.f32.gmra.mxu0 %v3540
    %v3566 = vpop.f32.mrf.mxu0
    %v3567 = vadd.f32 0.0, %v3566
    %3568 = vdwg.mxu0
    %v3569 = vmul.f32 %v3525, 0.17677669
    %v3570 = vmul.f32 %v3528, 0.17677669
    %v3571 = vmul.f32 %v3564, 0.17677669
    %v3572 = vmul.f32 %v3567, 0.17677669
    %v3573 = vadd.f32 %v3569, %v2766
    %v3574 = vadd.f32 %v3570, %v2767
    %v3575 = vadd.f32 %v3571, %v2766
    %v3576 = vadd.f32 %v3572, %v2767
    %v3577 = vsel %vm2856, %v3573, -inf
    %3578 = vmax.xlane.f32.xlu0 %v3577
    %v3579 = vpop.xlane.xlu0 %3578
    %v3580 = vsel %vm2856, %v3574, -inf
    %3581 = vmax.xlane.f32.xlu0 %v3580
    %v3582 = vpop.xlane.xlu0 %3581
    %v3583 = vsel %vm2856, %v3575, -inf
    %3584 = vmax.xlane.f32.xlu0 %v3583
    %v3585 = vpop.xlane.xlu0 %3584
    %v3586 = vsel %vm2856, %v3576, -inf
    %3587 = vmax.xlane.f32.xlu0 %v3586
    %v3588 = vpop.xlane.xlu0 %3587
    %vm3589 = vcmp.ge.f32.partialorder %v3573, %v3579
    %vm3590 = vcmp.ge.f32.partialorder %v3574, %v3582
    %vm3591 = vcmp.ge.f32.partialorder %v3575, %v3585
    %vm3592 = vcmp.ge.f32.partialorder %v3576, %v3588
    %v3593 = vsel %vm3589, -inf, %v3573
    %v3594 = vsel %vm3590, -inf, %v3574
    %v3595 = vsel %vm3591, -inf, %v3575
    %v3596 = vsel %vm3592, -inf, %v3576
    %v3597 = vsel %vm2856, %v3593, -inf
    %3598 = vmax.xlane.f32.xlu0 %v3597
    %v3599 = vpop.xlane.xlu0 %3598
    %v3600 = vsel %vm2856, %v3594, -inf
    %3601 = vmax.xlane.f32.xlu0 %v3600
    %v3602 = vpop.xlane.xlu0 %3601
    %v3603 = vsel %vm2856, %v3595, -inf
    %3604 = vmax.xlane.f32.xlu0 %v3603
    %v3605 = vpop.xlane.xlu0 %3604
    %v3606 = vsel %vm2856, %v3596, -inf
    %3607 = vmax.xlane.f32.xlu0 %v3606
    %v3608 = vpop.xlane.xlu0 %3607
    %vm3609 = vcmp.ge.f32.partialorder %v3593, %v3599
    %vm3610 = vcmp.ge.f32.partialorder %v3594, %v3602
    %vm3611 = vcmp.ge.f32.partialorder %v3595, %v3605
    %vm3612 = vcmp.ge.f32.partialorder %v3596, %v3608
    %v3613 = vsel %vm3609, -inf, %v3593
    %v3614 = vsel %vm3610, -inf, %v3594
    %v3615 = vsel %vm3611, -inf, %v3595
    %v3616 = vsel %vm3612, -inf, %v3596
    %v3617 = vsel %vm2856, %v3613, -inf
    %3618 = vmax.xlane.f32.xlu0 %v3617
    %v3619 = vpop.xlane.xlu0 %3618
    %v3620 = vsel %vm2856, %v3614, -inf
    %3621 = vmax.xlane.f32.xlu0 %v3620
    %v3622 = vpop.xlane.xlu0 %3621
    %v3623 = vsel %vm2856, %v3615, -inf
    %3624 = vmax.xlane.f32.xlu0 %v3623
    %v3625 = vpop.xlane.xlu0 %3624
    %v3626 = vsel %vm2856, %v3616, -inf
    %3627 = vmax.xlane.f32.xlu0 %v3626
    %v3628 = vpop.xlane.xlu0 %3627
    %vm3629 = vcmp.ge.f32.partialorder %v3613, %v3619
    %vm3630 = vcmp.ge.f32.partialorder %v3614, %v3622
    %vm3631 = vcmp.ge.f32.partialorder %v3615, %v3625
    %vm3632 = vcmp.ge.f32.partialorder %v3616, %v3628
    %v3633 = vsel %vm3629, -inf, %v3613
    %v3634 = vsel %vm3630, -inf, %v3614
    %v3635 = vsel %vm3631, -inf, %v3615
    %v3636 = vsel %vm3632, -inf, %v3616
    %v3637 = vsel %vm2856, %v3633, -inf
    %3638 = vmax.xlane.f32.xlu0 %v3637
    %v3639 = vpop.xlane.xlu0 %3638
    %v3640 = vsel %vm2856, %v3634, -inf
    %3641 = vmax.xlane.f32.xlu0 %v3640
    %v3642 = vpop.xlane.xlu0 %3641
    %v3643 = vsel %vm2856, %v3635, -inf
    %3644 = vmax.xlane.f32.xlu0 %v3643
    %v3645 = vpop.xlane.xlu0 %3644
    %v3646 = vsel %vm2856, %v3636, -inf
    %3647 = vmax.xlane.f32.xlu0 %v3646
    %v3648 = vpop.xlane.xlu0 %3647
    %vm3649 = vcmp.ge.f32.partialorder %v3633, %v3639
    %vm3650 = vcmp.ge.f32.partialorder %v3634, %v3642
    %vm3651 = vcmp.ge.f32.partialorder %v3635, %v3645
    %vm3652 = vcmp.ge.f32.partialorder %v3636, %v3648
    %v3653 = vsel %vm3649, -inf, %v3633
    %v3654 = vsel %vm3650, -inf, %v3634
    %v3655 = vsel %vm3651, -inf, %v3635
    %v3656 = vsel %vm3652, -inf, %v3636
    %v3657 = vsel %vm2856, %v3653, -inf
    %3658 = vmax.xlane.f32.xlu0 %v3657
    %v3659 = vpop.xlane.xlu0 %3658
    %v3660 = vsel %vm2856, %v3654, -inf
    %3661 = vmax.xlane.f32.xlu0 %v3660
    %v3662 = vpop.xlane.xlu0 %3661
    %v3663 = vsel %vm2856, %v3655, -inf
    %3664 = vmax.xlane.f32.xlu0 %v3663
    %v3665 = vpop.xlane.xlu0 %3664
    %v3666 = vsel %vm2856, %v3656, -inf
    %3667 = vmax.xlane.f32.xlu0 %v3666
    %v3668 = vpop.xlane.xlu0 %3667
    %vm3669 = vcmp.ge.f32.partialorder %v3653, %v3659
    %vm3670 = vcmp.ge.f32.partialorder %v3654, %v3662
    %vm3671 = vcmp.ge.f32.partialorder %v3655, %v3665
    %vm3672 = vcmp.ge.f32.partialorder %v3656, %v3668
    %v3673 = vsel %vm3669, -inf, %v3653
    %v3674 = vsel %vm3670, -inf, %v3654
    %v3675 = vsel %vm3671, -inf, %v3655
    %v3676 = vsel %vm3672, -inf, %v3656
    %v3677 = vsel %vm2856, %v3673, -inf
    %3678 = vmax.xlane.f32.xlu0 %v3677
    %v3679 = vpop.xlane.xlu0 %3678
    %v3680 = vsel %vm2856, %v3674, -inf
    %3681 = vmax.xlane.f32.xlu0 %v3680
    %v3682 = vpop.xlane.xlu0 %3681
    %v3683 = vsel %vm2856, %v3675, -inf
    %3684 = vmax.xlane.f32.xlu0 %v3683
    %v3685 = vpop.xlane.xlu0 %3684
    %v3686 = vsel %vm2856, %v3676, -inf
    %3687 = vmax.xlane.f32.xlu0 %v3686
    %v3688 = vpop.xlane.xlu0 %3687
    %vm3689 = vcmp.ge.f32.partialorder %v3573, %v3679
    %vm3690 = vcmp.ge.f32.partialorder %v3574, %v3682
    %vm3691 = vcmp.ge.f32.partialorder %v3575, %v3685
    %vm3692 = vcmp.ge.f32.partialorder %v3576, %v3688
    %v3693 = vsel %vm3689, %v3573, -inf
    %v3694 = vsel %vm3690, %v3574, -inf
    %v3695 = vsel %vm3691, %v3575, -inf
    %v3696 = vsel %vm3692, %v3576, -inf
    %v3697 = vsel %vm2856, %v3693, -inf
    %3698 = vmax.xlane.f32.xlu0 %v3697
    %v3699 = vpop.xlane.xlu0 %3698
    %v3700 = vsel %vm2856, %v3694, -inf
    %3701 = vmax.xlane.f32.xlu0 %v3700
    %v3702 = vpop.xlane.xlu0 %3701
    %v3703 = vsel %vm2856, %v3695, -inf
    %3704 = vmax.xlane.f32.xlu0 %v3703
    %v3705 = vpop.xlane.xlu0 %3704
    %v3706 = vsel %vm2856, %v3696, -inf
    %3707 = vmax.xlane.f32.xlu0 %v3706
    %v3708 = vpop.xlane.xlu0 %3707
    %v3709 = vsub.f32 %v3693, %v3699
    %v3710 = vsub.f32 %v3694, %v3702
    %v3711 = vsub.f32 %v3695, %v3705
    %v3712 = vsub.f32 %v3696, %v3708
    %v3713 = vmul.f32 %v3709, 1.442695
    %v3714 = vpow.pop %v3713
    %v3715 = vmul.f32 %v3710, 1.442695
    %v3716 = vpow.pop %v3715
    %v3717 = vmul.f32 %v3711, 1.442695
    %v3718 = vpow.pop %v3717
    %v3719 = vmul.f32 %v3712, 1.442695
    %v3720 = vpow.pop %v3719
    %v3721 = vsel %vm2856, %v3714, 0.0
    %3722 = vadd.xlane.f32.xlu0 %v3721
    %v3723 = vpop.xlane.xlu0 %3722
    %v3724 = vsel %vm2856, %v3716, 0.0
    %3725 = vadd.xlane.f32.xlu0 %v3724
    %v3726 = vpop.xlane.xlu0 %3725
    %v3727 = vsel %vm2856, %v3718, 0.0
    %3728 = vadd.xlane.f32.xlu0 %v3727
    %v3729 = vpop.xlane.xlu0 %3728
    %v3730 = vsel %vm2856, %v3720, 0.0
    %3731 = vadd.xlane.f32.xlu0 %v3730
    %v3732 = vpop.xlane.xlu0 %3731
    %v3733 = vrcp.pop %v3723
    %v3734 = vmul.f32 %v3723, %v3733
    %v3735 = vsub.f32 1.0, %v3734
    %v3736 = vmul.f32 %v3733, %v3735
    %v3737 = vadd.f32 %v3733, %v3736
    %vm3738 = vweird.f32 %v3723
    %vm3739 = vweird.f32 %v3733
    %vm3740 = vmor %vm3738, %vm3739
    %v3741 = vsel %vm3740, %v3733, %v3737
    %v3742 = vand.u32 2147483647, %v3723
    %vm3743 = vcmp.eq.f32.partialorder %v3742, 8.507059e+37
    %v3744 = vand.u32 %v3723, 2147483648
    %v3745 = vor.u32 1.1754944e-38, %v3744
    %v3746 = vsel %vm3743, %v3745, %v3741
    %v3747 = vmul.f32 %v3714, %v3746
    %v3748 = vrcp.pop %v3726
    %v3749 = vmul.f32 %v3726, %v3748
    %v3750 = vsub.f32 1.0, %v3749
    %v3751 = vmul.f32 %v3748, %v3750
    %v3752 = vadd.f32 %v3748, %v3751
    %vm3753 = vweird.f32 %v3726
    %vm3754 = vweird.f32 %v3748
    %vm3755 = vmor %vm3753, %vm3754
    %v3756 = vsel %vm3755, %v3748, %v3752
    %v3757 = vand.u32 2147483647, %v3726
    %vm3758 = vcmp.eq.f32.partialorder %v3757, 8.507059e+37
    %v3759 = vand.u32 %v3726, 2147483648
    %v3760 = vor.u32 1.1754944e-38, %v3759
    %v3761 = vsel %vm3758, %v3760, %v3756
    %v3762 = vmul.f32 %v3716, %v3761
    %v3763 = vrcp.pop %v3729
    %v3764 = vmul.f32 %v3729, %v3763
    %v3765 = vsub.f32 1.0, %v3764
    %v3766 = vmul.f32 %v3763, %v3765
    %v3767 = vadd.f32 %v3763, %v3766
    %vm3768 = vweird.f32 %v3729
    %vm3769 = vweird.f32 %v3763
    %vm3770 = vmor %vm3768, %vm3769
    %v3771 = vsel %vm3770, %v3763, %v3767
    %v3772 = vand.u32 2147483647, %v3729
    %vm3773 = vcmp.eq.f32.partialorder %v3772, 8.507059e+37
    %v3774 = vand.u32 %v3729, 2147483648
    %v3775 = vor.u32 1.1754944e-38, %v3774
    %v3776 = vsel %vm3773, %v3775, %v3771
    %v3777 = vmul.f32 %v3718, %v3776
    %v3778 = vrcp.pop %v3732
    %v3779 = vmul.f32 %v3732, %v3778
    %v3780 = vsub.f32 1.0, %v3779
    %v3781 = vmul.f32 %v3778, %v3780
    %v3782 = vadd.f32 %v3778, %v3781
    %vm3783 = vweird.f32 %v3732
    %vm3784 = vweird.f32 %v3778
    %vm3785 = vmor %vm3783, %vm3784
    %v3786 = vsel %vm3785, %v3778, %v3782
    %v3787 = vand.u32 2147483647, %v3732
    %vm3788 = vcmp.eq.f32.partialorder %v3787, 8.507059e+37
    %v3789 = vand.u32 %v3732, 2147483648
    %v3790 = vor.u32 1.1754944e-38, %v3789
    %v3791 = vsel %vm3788, %v3790, %v3786
    %v3792 = vmul.f32 %v3720, %v3791
    %v3794 = vsel %vm2856, %v3747, 0
    %v3797 = vsel %vm2856, %v3762, 0
    %3799 = vmatpush.msra.mxu0 0.0
    %3800 = vmatpush.msra.mxu0 0.0
    %3801 = vmatpush.msra.mxu0 0.0
    %3802 = vmatpush.msra.mxu0 0.0
    %3803 = vmatpush.msra.mxu0 0.0
    %3804 = vmatpush.msra.mxu0 0.0
    %3805 = vmatpush.msra.mxu0 0.0
    %3806 = vmatpush.msra.mxu0 0.0
    %3807 = vmatpush.msra.mxu0 0.0
    %3808 = vmatpush.msra.mxu0 0.0
    %3809 = vmatpush.msra.mxu0 0.0
    %3810 = vmatpush.msra.mxu0 0.0
    %3811 = vmatpush.msra.mxu0 0.0
    %3812 = vmatpush.msra.mxu0 0.0
    %3813 = vmatpush.msra.mxu0 %v892
    %3814 = vmatpush.msra.mxu0 %v880
    %3815 = vmatmul.f32.gmra.mxu0 %v3794
    %v3816 = vpop.f32.mrf.mxu0
    %v3817 = vadd.f32 0.0, %v3816
    %3818 = vmatmul.f32.gmra.mxu0 %v3797
    %v3819 = vpop.f32.mrf.mxu0
    %v3820 = vadd.f32 0.0, %v3819
    %3821 = vdwg.mxu0
    %v3823 = vsel %vm2856, %v3777, 0
    %v3826 = vsel %vm2856, %v3792, 0
    %3828 = vmatpush.msra.mxu0 0.0
    %3829 = vmatpush.msra.mxu0 0.0
    %3830 = vmatpush.msra.mxu0 0.0
    %3831 = vmatpush.msra.mxu0 0.0
    %3832 = vmatpush.msra.mxu0 0.0
    %3833 = vmatpush.msra.mxu0 0.0
    %3834 = vmatpush.msra.mxu0 0.0
    %3835 = vmatpush.msra.mxu0 0.0
    %3836 = vmatpush.msra.mxu0 0.0
    %3837 = vmatpush.msra.mxu0 0.0
    %3838 = vmatpush.msra.mxu0 0.0
    %3839 = vmatpush.msra.mxu0 0.0
    %3840 = vmatpush.msra.mxu0 0.0
    %3841 = vmatpush.msra.mxu0 0.0
    %3842 = vmatpush.msra.mxu0 %v916
    %3843 = vmatpush.msra.mxu0 %v904
    %3844 = vmatmul.f32.gmra.mxu0 %v3823
    %v3845 = vpop.f32.mrf.mxu0
    %v3846 = vadd.f32 0.0, %v3845
    %3847 = vmatmul.f32.gmra.mxu0 %v3826
    %v3848 = vpop.f32.mrf.mxu0
    %v3849 = vadd.f32 0.0, %v3848
    %3850 = vdwg.mxu0
    %3851 = vrot.lane.b32.xlu0 %v874, 32
    %v3852 = vpop.permute.xlu0 %3851
    %3853 = vrot.lane.b32.xlu0 %v886, 32
    %v3854 = vpop.permute.xlu0 %3853
    %3855 = vrot.lane.b32.xlu0 %v876, 32
    %v3856 = vpop.permute.xlu0 %3855
    %3857 = vrot.lane.b32.xlu0 %v888, 32
    %v3858 = vpop.permute.xlu0 %3857
    %v3859 = vsel %vm409, %v3852, 0
    %v3861 = vsel %vm409, %v3854, 0
    %v3863 = vsel %vm409, %v3856, 0
    %v3865 = vsel %vm409, %v3858, 0
    %3867 = vmatpush.xpose.msra.mxu0 0.0
    %3868 = vmatpush.xpose.msra.mxu0 0.0
    %3869 = vmatpush.xpose.msra.mxu0 0.0
    %3870 = vmatpush.xpose.msra.mxu0 0.0
    %3871 = vmatpush.xpose.msra.mxu0 0.0
    %3872 = vmatpush.xpose.msra.mxu0 0.0
    %3873 = vmatpush.xpose.msra.mxu0 0.0
    %3874 = vmatpush.xpose.msra.mxu0 0.0
    %3875 = vmatpush.xpose.msra.mxu0 0.0
    %3876 = vmatpush.xpose.msra.mxu0 0.0
    %3877 = vmatpush.xpose.msra.mxu0 0.0
    %3878 = vmatpush.xpose.msra.mxu0 0.0
    %3879 = vmatpush.xpose.msra.mxu0 0.0
    %3880 = vmatpush.xpose.msra.mxu0 0.0
    %3881 = vmatpush.xpose.msra.mxu0 %v3865
    %3882 = vmatpush.xpose.msra.mxu0 %v3863
    %3883 = vmatmul.f32.gmra.mxu0 %v3859
    %v3884 = vpop.f32.mrf.mxu0
    %v3885 = vadd.f32 0.0, %v3884
    %3886 = vmatmul.f32.gmra.mxu0 %v3861
    %v3887 = vpop.f32.mrf.mxu0
    %v3888 = vadd.f32 0.0, %v3887
    %3889 = vdwg.mxu0
    %3890 = vrot.lane.b32.xlu0 %v898, 32
    %v3891 = vpop.permute.xlu0 %3890
    %3892 = vrot.lane.b32.xlu0 %v910, 32
    %v3893 = vpop.permute.xlu0 %3892
    %3894 = vrot.lane.b32.xlu0 %v900, 32
    %v3895 = vpop.permute.xlu0 %3894
    %3896 = vrot.lane.b32.xlu0 %v912, 32
    %v3897 = vpop.permute.xlu0 %3896
    %v3898 = vsel %vm409, %v3891, 0
    %v3900 = vsel %vm409, %v3893, 0
    %v3902 = vsel %vm409, %v3895, 0
    %v3904 = vsel %vm409, %v3897, 0
    %3906 = vmatpush.xpose.msra.mxu0 0.0
    %3907 = vmatpush.xpose.msra.mxu0 0.0
    %3908 = vmatpush.xpose.msra.mxu0 0.0
    %3909 = vmatpush.xpose.msra.mxu0 0.0
    %3910 = vmatpush.xpose.msra.mxu0 0.0
    %3911 = vmatpush.xpose.msra.mxu0 0.0
    %3912 = vmatpush.xpose.msra.mxu0 0.0
    %3913 = vmatpush.xpose.msra.mxu0 0.0
    %3914 = vmatpush.xpose.msra.mxu0 0.0
    %3915 = vmatpush.xpose.msra.mxu0 0.0
    %3916 = vmatpush.xpose.msra.mxu0 0.0
    %3917 = vmatpush.xpose.msra.mxu0 0.0
    %3918 = vmatpush.xpose.msra.mxu0 0.0
    %3919 = vmatpush.xpose.msra.mxu0 0.0
    %3920 = vmatpush.xpose.msra.mxu0 %v3904
    %3921 = vmatpush.xpose.msra.mxu0 %v3902
    %3922 = vmatmul.f32.gmra.mxu0 %v3898
    %v3923 = vpop.f32.mrf.mxu0
    %v3924 = vadd.f32 0.0, %v3923
    %3925 = vmatmul.f32.gmra.mxu0 %v3900
    %v3926 = vpop.f32.mrf.mxu0
    %v3927 = vadd.f32 0.0, %v3926
    %3928 = vdwg.mxu0
    %v3929 = vmul.f32 %v3885, 0.17677669
    %v3930 = vmul.f32 %v3888, 0.17677669
    %v3931 = vmul.f32 %v3924, 0.17677669
    %v3932 = vmul.f32 %v3927, 0.17677669
    %v3933 = vadd.f32 %v3929, %v2768
    %v3934 = vadd.f32 %v3930, %v2769
    %v3935 = vadd.f32 %v3931, %v2768
    %v3936 = vadd.f32 %v3932, %v2769
    %v3937 = vsel %vm2856, %v3933, -inf
    %3938 = vmax.xlane.f32.xlu0 %v3937
    %v3939 = vpop.xlane.xlu0 %3938
    %v3940 = vsel %vm2856, %v3934, -inf
    %3941 = vmax.xlane.f32.xlu0 %v3940
    %v3942 = vpop.xlane.xlu0 %3941
    %v3943 = vsel %vm2856, %v3935, -inf
    %3944 = vmax.xlane.f32.xlu0 %v3943
    %v3945 = vpop.xlane.xlu0 %3944
    %v3946 = vsel %vm2856, %v3936, -inf
    %3947 = vmax.xlane.f32.xlu0 %v3946
    %v3948 = vpop.xlane.xlu0 %3947
    %vm3949 = vcmp.ge.f32.partialorder %v3933, %v3939
    %vm3950 = vcmp.ge.f32.partialorder %v3934, %v3942
    %vm3951 = vcmp.ge.f32.partialorder %v3935, %v3945
    %vm3952 = vcmp.ge.f32.partialorder %v3936, %v3948
    %v3953 = vsel %vm3949, -inf, %v3933
    %v3954 = vsel %vm3950, -inf, %v3934
    %v3955 = vsel %vm3951, -inf, %v3935
    %v3956 = vsel %vm3952, -inf, %v3936
    %v3957 = vsel %vm2856, %v3953, -inf
    %3958 = vmax.xlane.f32.xlu0 %v3957
    %v3959 = vpop.xlane.xlu0 %3958
    %v3960 = vsel %vm2856, %v3954, -inf
    %3961 = vmax.xlane.f32.xlu0 %v3960
    %v3962 = vpop.xlane.xlu0 %3961
    %v3963 = vsel %vm2856, %v3955, -inf
    %3964 = vmax.xlane.f32.xlu0 %v3963
    %v3965 = vpop.xlane.xlu0 %3964
    %v3966 = vsel %vm2856, %v3956, -inf
    %3967 = vmax.xlane.f32.xlu0 %v3966
    %v3968 = vpop.xlane.xlu0 %3967
    %vm3969 = vcmp.ge.f32.partialorder %v3953, %v3959
    %vm3970 = vcmp.ge.f32.partialorder %v3954, %v3962
    %vm3971 = vcmp.ge.f32.partialorder %v3955, %v3965
    %vm3972 = vcmp.ge.f32.partialorder %v3956, %v3968
    %v3973 = vsel %vm3969, -inf, %v3953
    %v3974 = vsel %vm3970, -inf, %v3954
    %v3975 = vsel %vm3971, -inf, %v3955
    %v3976 = vsel %vm3972, -inf, %v3956
    %v3977 = vsel %vm2856, %v3973, -inf
    %3978 = vmax.xlane.f32.xlu0 %v3977
    %v3979 = vpop.xlane.xlu0 %3978
    %v3980 = vsel %vm2856, %v3974, -inf
    %3981 = vmax.xlane.f32.xlu0 %v3980
    %v3982 = vpop.xlane.xlu0 %3981
    %v3983 = vsel %vm2856, %v3975, -inf
    %3984 = vmax.xlane.f32.xlu0 %v3983
    %v3985 = vpop.xlane.xlu0 %3984
    %v3986 = vsel %vm2856, %v3976, -inf
    %3987 = vmax.xlane.f32.xlu0 %v3986
    %v3988 = vpop.xlane.xlu0 %3987
    %vm3989 = vcmp.ge.f32.partialorder %v3973, %v3979
    %vm3990 = vcmp.ge.f32.partialorder %v3974, %v3982
    %vm3991 = vcmp.ge.f32.partialorder %v3975, %v3985
    %vm3992 = vcmp.ge.f32.partialorder %v3976, %v3988
    %v3993 = vsel %vm3989, -inf, %v3973
    %v3994 = vsel %vm3990, -inf, %v3974
    %v3995 = vsel %vm3991, -inf, %v3975
    %v3996 = vsel %vm3992, -inf, %v3976
    %v3997 = vsel %vm2856, %v3993, -inf
    %3998 = vmax.xlane.f32.xlu0 %v3997
    %v3999 = vpop.xlane.xlu0 %3998
    %v4000 = vsel %vm2856, %v3994, -inf
    %4001 = vmax.xlane.f32.xlu0 %v4000
    %v4002 = vpop.xlane.xlu0 %4001
    %v4003 = vsel %vm2856, %v3995, -inf
    %4004 = vmax.xlane.f32.xlu0 %v4003
    %v4005 = vpop.xlane.xlu0 %4004
    %v4006 = vsel %vm2856, %v3996, -inf
    %4007 = vmax.xlane.f32.xlu0 %v4006
    %v4008 = vpop.xlane.xlu0 %4007
    %vm4009 = vcmp.ge.f32.partialorder %v3993, %v3999
    %vm4010 = vcmp.ge.f32.partialorder %v3994, %v4002
    %vm4011 = vcmp.ge.f32.partialorder %v3995, %v4005
    %vm4012 = vcmp.ge.f32.partialorder %v3996, %v4008
    %v4013 = vsel %vm4009, -inf, %v3993
    %v4014 = vsel %vm4010, -inf, %v3994
    %v4015 = vsel %vm4011, -inf, %v3995
    %v4016 = vsel %vm4012, -inf, %v3996
    %v4017 = vsel %vm2856, %v4013, -inf
    %4018 = vmax.xlane.f32.xlu0 %v4017
    %v4019 = vpop.xlane.xlu0 %4018
    %v4020 = vsel %vm2856, %v4014, -inf
    %4021 = vmax.xlane.f32.xlu0 %v4020
    %v4022 = vpop.xlane.xlu0 %4021
    %v4023 = vsel %vm2856, %v4015, -inf
    %4024 = vmax.xlane.f32.xlu0 %v4023
    %v4025 = vpop.xlane.xlu0 %4024
    %v4026 = vsel %vm2856, %v4016, -inf
    %4027 = vmax.xlane.f32.xlu0 %v4026
    %v4028 = vpop.xlane.xlu0 %4027
    %vm4029 = vcmp.ge.f32.partialorder %v4013, %v4019
    %vm4030 = vcmp.ge.f32.partialorder %v4014, %v4022
    %vm4031 = vcmp.ge.f32.partialorder %v4015, %v4025
    %vm4032 = vcmp.ge.f32.partialorder %v4016, %v4028
    %v4033 = vsel %vm4029, -inf, %v4013
    %v4034 = vsel %vm4030, -inf, %v4014
    %v4035 = vsel %vm4031, -inf, %v4015
    %v4036 = vsel %vm4032, -inf, %v4016
    %v4037 = vsel %vm2856, %v4033, -inf
    %4038 = vmax.xlane.f32.xlu0 %v4037
    %v4039 = vpop.xlane.xlu0 %4038
    %v4040 = vsel %vm2856, %v4034, -inf
    %4041 = vmax.xlane.f32.xlu0 %v4040
    %v4042 = vpop.xlane.xlu0 %4041
    %v4043 = vsel %vm2856, %v4035, -inf
    %4044 = vmax.xlane.f32.xlu0 %v4043
    %v4045 = vpop.xlane.xlu0 %4044
    %v4046 = vsel %vm2856, %v4036, -inf
    %4047 = vmax.xlane.f32.xlu0 %v4046
    %v4048 = vpop.xlane.xlu0 %4047
    %vm4049 = vcmp.ge.f32.partialorder %v3933, %v4039
    %vm4050 = vcmp.ge.f32.partialorder %v3934, %v4042
    %vm4051 = vcmp.ge.f32.partialorder %v3935, %v4045
    %vm4052 = vcmp.ge.f32.partialorder %v3936, %v4048
    %v4053 = vsel %vm4049, %v3933, -inf
    %v4054 = vsel %vm4050, %v3934, -inf
    %v4055 = vsel %vm4051, %v3935, -inf
    %v4056 = vsel %vm4052, %v3936, -inf
    %v4057 = vsel %vm2856, %v4053, -inf
    %4058 = vmax.xlane.f32.xlu0 %v4057
    %v4059 = vpop.xlane.xlu0 %4058
    %v4060 = vsel %vm2856, %v4054, -inf
    %4061 = vmax.xlane.f32.xlu0 %v4060
    %v4062 = vpop.xlane.xlu0 %4061
    %v4063 = vsel %vm2856, %v4055, -inf
    %4064 = vmax.xlane.f32.xlu0 %v4063
    %v4065 = vpop.xlane.xlu0 %4064
    %v4066 = vsel %vm2856, %v4056, -inf
    %4067 = vmax.xlane.f32.xlu0 %v4066
    %v4068 = vpop.xlane.xlu0 %4067
    %v4069 = vsub.f32 %v4053, %v4059
    %v4070 = vsub.f32 %v4054, %v4062
    %v4071 = vsub.f32 %v4055, %v4065
    %v4072 = vsub.f32 %v4056, %v4068
    %v4073 = vmul.f32 %v4069, 1.442695
    %v4074 = vpow.pop %v4073
    %v4075 = vmul.f32 %v4070, 1.442695
    %v4076 = vpow.pop %v4075
    %v4077 = vmul.f32 %v4071, 1.442695
    %v4078 = vpow.pop %v4077
    %v4079 = vmul.f32 %v4072, 1.442695
    %v4080 = vpow.pop %v4079
    %v4081 = vsel %vm2856, %v4074, 0.0
    %4082 = vadd.xlane.f32.xlu0 %v4081
    %v4083 = vpop.xlane.xlu0 %4082
    %v4084 = vsel %vm2856, %v4076, 0.0
    %4085 = vadd.xlane.f32.xlu0 %v4084
    %v4086 = vpop.xlane.xlu0 %4085
    %v4087 = vsel %vm2856, %v4078, 0.0
    %4088 = vadd.xlane.f32.xlu0 %v4087
    %v4089 = vpop.xlane.xlu0 %4088
    %v4090 = vsel %vm2856, %v4080, 0.0
    %4091 = vadd.xlane.f32.xlu0 %v4090
    %v4092 = vpop.xlane.xlu0 %4091
    %v4093 = vrcp.pop %v4083
    %v4094 = vmul.f32 %v4083, %v4093
    %v4095 = vsub.f32 1.0, %v4094
    %v4096 = vmul.f32 %v4093, %v4095
    %v4097 = vadd.f32 %v4093, %v4096
    %vm4098 = vweird.f32 %v4083
    %vm4099 = vweird.f32 %v4093
    %vm4100 = vmor %vm4098, %vm4099
    %v4101 = vsel %vm4100, %v4093, %v4097
    %v4102 = vand.u32 2147483647, %v4083
    %vm4103 = vcmp.eq.f32.partialorder %v4102, 8.507059e+37
    %v4104 = vand.u32 %v4083, 2147483648
    %v4105 = vor.u32 1.1754944e-38, %v4104
    %v4106 = vsel %vm4103, %v4105, %v4101
    %v4107 = vmul.f32 %v4074, %v4106
    %v4108 = vrcp.pop %v4086
    %v4109 = vmul.f32 %v4086, %v4108
    %v4110 = vsub.f32 1.0, %v4109
    %v4111 = vmul.f32 %v4108, %v4110
    %v4112 = vadd.f32 %v4108, %v4111
    %vm4113 = vweird.f32 %v4086
    %vm4114 = vweird.f32 %v4108
    %vm4115 = vmor %vm4113, %vm4114
    %v4116 = vsel %vm4115, %v4108, %v4112
    %v4117 = vand.u32 2147483647, %v4086
    %vm4118 = vcmp.eq.f32.partialorder %v4117, 8.507059e+37
    %v4119 = vand.u32 %v4086, 2147483648
    %v4120 = vor.u32 1.1754944e-38, %v4119
    %v4121 = vsel %vm4118, %v4120, %v4116
    %v4122 = vmul.f32 %v4076, %v4121
    %v4123 = vrcp.pop %v4089
    %v4124 = vmul.f32 %v4089, %v4123
    %v4125 = vsub.f32 1.0, %v4124
    %v4126 = vmul.f32 %v4123, %v4125
    %v4127 = vadd.f32 %v4123, %v4126
    %vm4128 = vweird.f32 %v4089
    %vm4129 = vweird.f32 %v4123
    %vm4130 = vmor %vm4128, %vm4129
    %v4131 = vsel %vm4130, %v4123, %v4127
    %v4132 = vand.u32 2147483647, %v4089
    %vm4133 = vcmp.eq.f32.partialorder %v4132, 8.507059e+37
    %v4134 = vand.u32 %v4089, 2147483648
    %v4135 = vor.u32 1.1754944e-38, %v4134
    %v4136 = vsel %vm4133, %v4135, %v4131
    %v4137 = vmul.f32 %v4078, %v4136
    %v4138 = vrcp.pop %v4092
    %v4139 = vmul.f32 %v4092, %v4138
    %v4140 = vsub.f32 1.0, %v4139
    %v4141 = vmul.f32 %v4138, %v4140
    %v4142 = vadd.f32 %v4138, %v4141
    %vm4143 = vweird.f32 %v4092
    %vm4144 = vweird.f32 %v4138
    %vm4145 = vmor %vm4143, %vm4144
    %v4146 = vsel %vm4145, %v4138, %v4142
    %v4147 = vand.u32 2147483647, %v4092
    %vm4148 = vcmp.eq.f32.partialorder %v4147, 8.507059e+37
    %v4149 = vand.u32 %v4092, 2147483648
    %v4150 = vor.u32 1.1754944e-38, %v4149
    %v4151 = vsel %vm4148, %v4150, %v4146
    %v4152 = vmul.f32 %v4080, %v4151
    %v4154 = vsel %vm2856, %v4107, 0
    %v4157 = vsel %vm2856, %v4122, 0
    %4159 = vmatpush.msra.mxu0 0.0
    %4160 = vmatpush.msra.mxu0 0.0
    %4161 = vmatpush.msra.mxu0 0.0
    %4162 = vmatpush.msra.mxu0 0.0
    %4163 = vmatpush.msra.mxu0 0.0
    %4164 = vmatpush.msra.mxu0 0.0
    %4165 = vmatpush.msra.mxu0 0.0
    %4166 = vmatpush.msra.mxu0 0.0
    %4167 = vmatpush.msra.mxu0 0.0
    %4168 = vmatpush.msra.mxu0 0.0
    %4169 = vmatpush.msra.mxu0 0.0
    %4170 = vmatpush.msra.mxu0 0.0
    %4171 = vmatpush.msra.mxu0 0.0
    %4172 = vmatpush.msra.mxu0 0.0
    %4173 = vmatpush.msra.mxu0 %v893
    %4174 = vmatpush.msra.mxu0 %v881
    %4175 = vmatmul.f32.gmra.mxu0 %v4154
    %v4176 = vpop.f32.mrf.mxu0
    %v4177 = vadd.f32 0.0, %v4176
    %4178 = vmatmul.f32.gmra.mxu0 %v4157
    %v4179 = vpop.f32.mrf.mxu0
    %v4180 = vadd.f32 0.0, %v4179
    %4181 = vdwg.mxu0
    %v4183 = vsel %vm2856, %v4137, 0
    %v4186 = vsel %vm2856, %v4152, 0
    %4188 = vmatpush.msra.mxu0 0.0
    %4189 = vmatpush.msra.mxu0 0.0
    %4190 = vmatpush.msra.mxu0 0.0
    %4191 = vmatpush.msra.mxu0 0.0
    %4192 = vmatpush.msra.mxu0 0.0
    %4193 = vmatpush.msra.mxu0 0.0
    %4194 = vmatpush.msra.mxu0 0.0
    %4195 = vmatpush.msra.mxu0 0.0
    %4196 = vmatpush.msra.mxu0 0.0
    %4197 = vmatpush.msra.mxu0 0.0
    %4198 = vmatpush.msra.mxu0 0.0
    %4199 = vmatpush.msra.mxu0 0.0
    %4200 = vmatpush.msra.mxu0 0.0
    %4201 = vmatpush.msra.mxu0 0.0
    %4202 = vmatpush.msra.mxu0 %v917
    %4203 = vmatpush.msra.mxu0 %v905
    %4204 = vmatmul.f32.gmra.mxu0 %v4183
    %v4205 = vpop.f32.mrf.mxu0
    %v4206 = vadd.f32 0.0, %v4205
    %4207 = vmatmul.f32.gmra.mxu0 %v4186
    %v4208 = vpop.f32.mrf.mxu0
    %v4209 = vadd.f32 0.0, %v4208
    %4210 = vdwg.mxu0
    %v4212 = vsel %vm409, %v875, 0
    %v4215 = vsel %vm409, %v887, 0
    %v4218 = vsel %vm409, %v877, 0
    %v4221 = vsel %vm409, %v889, 0
    %4223 = vmatpush.xpose.msra.mxu0 0.0
    %4224 = vmatpush.xpose.msra.mxu0 0.0
    %4225 = vmatpush.xpose.msra.mxu0 0.0
    %4226 = vmatpush.xpose.msra.mxu0 0.0
    %4227 = vmatpush.xpose.msra.mxu0 0.0
    %4228 = vmatpush.xpose.msra.mxu0 0.0
    %4229 = vmatpush.xpose.msra.mxu0 0.0
    %4230 = vmatpush.xpose.msra.mxu0 0.0
    %4231 = vmatpush.xpose.msra.mxu0 0.0
    %4232 = vmatpush.xpose.msra.mxu0 0.0
    %4233 = vmatpush.xpose.msra.mxu0 0.0
    %4234 = vmatpush.xpose.msra.mxu0 0.0
    %4235 = vmatpush.xpose.msra.mxu0 0.0
    %4236 = vmatpush.xpose.msra.mxu0 0.0
    %4237 = vmatpush.xpose.msra.mxu0 %v4221
    %4238 = vmatpush.xpose.msra.mxu0 %v4218
    %4239 = vmatmul.f32.gmra.mxu0 %v4212
    %v4240 = vpop.f32.mrf.mxu0
    %v4241 = vadd.f32 0.0, %v4240
    %4242 = vmatmul.f32.gmra.mxu0 %v4215
    %v4243 = vpop.f32.mrf.mxu0
    %v4244 = vadd.f32 0.0, %v4243
    %4245 = vdwg.mxu0
    %v4247 = vsel %vm409, %v899, 0
    %v4250 = vsel %vm409, %v911, 0
    %v4253 = vsel %vm409, %v901, 0
    %v4256 = vsel %vm409, %v913, 0
    %4258 = vmatpush.xpose.msra.mxu0 0.0
    %4259 = vmatpush.xpose.msra.mxu0 0.0
    %4260 = vmatpush.xpose.msra.mxu0 0.0
    %4261 = vmatpush.xpose.msra.mxu0 0.0
    %4262 = vmatpush.xpose.msra.mxu0 0.0
    %4263 = vmatpush.xpose.msra.mxu0 0.0
    %4264 = vmatpush.xpose.msra.mxu0 0.0
    %4265 = vmatpush.xpose.msra.mxu0 0.0
    %4266 = vmatpush.xpose.msra.mxu0 0.0
    %4267 = vmatpush.xpose.msra.mxu0 0.0
    %4268 = vmatpush.xpose.msra.mxu0 0.0
    %4269 = vmatpush.xpose.msra.mxu0 0.0
    %4270 = vmatpush.xpose.msra.mxu0 0.0
    %4271 = vmatpush.xpose.msra.mxu0 0.0
    %4272 = vmatpush.xpose.msra.mxu0 %v4256
    %4273 = vmatpush.xpose.msra.mxu0 %v4253
    %4274 = vmatmul.f32.gmra.mxu0 %v4247
    %v4275 = vpop.f32.mrf.mxu0
    %v4276 = vadd.f32 0.0, %v4275
    %4277 = vmatmul.f32.gmra.mxu0 %v4250
    %v4278 = vpop.f32.mrf.mxu0
    %v4279 = vadd.f32 0.0, %v4278
    %4280 = vdwg.mxu0
    %v4281 = vmul.f32 %v4241, 0.17677669
    %v4282 = vmul.f32 %v4244, 0.17677669
    %v4283 = vmul.f32 %v4276, 0.17677669
    %v4284 = vmul.f32 %v4279, 0.17677669
    %v4285 = vadd.f32 %v4281, %v2770
    %v4286 = vadd.f32 %v4282, %v2771
    %v4287 = vadd.f32 %v4283, %v2770
    %v4288 = vadd.f32 %v4284, %v2771
    %v4289 = vsel %vm2856, %v4285, -inf
    %4290 = vmax.xlane.f32.xlu0 %v4289
    %v4291 = vpop.xlane.xlu0 %4290
    %v4292 = vsel %vm2856, %v4286, -inf
    %4293 = vmax.xlane.f32.xlu0 %v4292
    %v4294 = vpop.xlane.xlu0 %4293
    %v4295 = vsel %vm2856, %v4287, -inf
    %4296 = vmax.xlane.f32.xlu0 %v4295
    %v4297 = vpop.xlane.xlu0 %4296
    %v4298 = vsel %vm2856, %v4288, -inf
    %4299 = vmax.xlane.f32.xlu0 %v4298
    %v4300 = vpop.xlane.xlu0 %4299
    %vm4301 = vcmp.ge.f32.partialorder %v4285, %v4291
    %vm4302 = vcmp.ge.f32.partialorder %v4286, %v4294
    %vm4303 = vcmp.ge.f32.partialorder %v4287, %v4297
    %vm4304 = vcmp.ge.f32.partialorder %v4288, %v4300
    %v4305 = vsel %vm4301, -inf, %v4285
    %v4306 = vsel %vm4302, -inf, %v4286
    %v4307 = vsel %vm4303, -inf, %v4287
    %v4308 = vsel %vm4304, -inf, %v4288
    %v4309 = vsel %vm2856, %v4305, -inf
    %4310 = vmax.xlane.f32.xlu0 %v4309
    %v4311 = vpop.xlane.xlu0 %4310
    %v4312 = vsel %vm2856, %v4306, -inf
    %4313 = vmax.xlane.f32.xlu0 %v4312
    %v4314 = vpop.xlane.xlu0 %4313
    %v4315 = vsel %vm2856, %v4307, -inf
    %4316 = vmax.xlane.f32.xlu0 %v4315
    %v4317 = vpop.xlane.xlu0 %4316
    %v4318 = vsel %vm2856, %v4308, -inf
    %4319 = vmax.xlane.f32.xlu0 %v4318
    %v4320 = vpop.xlane.xlu0 %4319
    %vm4321 = vcmp.ge.f32.partialorder %v4305, %v4311
    %vm4322 = vcmp.ge.f32.partialorder %v4306, %v4314
    %vm4323 = vcmp.ge.f32.partialorder %v4307, %v4317
    %vm4324 = vcmp.ge.f32.partialorder %v4308, %v4320
    %v4325 = vsel %vm4321, -inf, %v4305
    %v4326 = vsel %vm4322, -inf, %v4306
    %v4327 = vsel %vm4323, -inf, %v4307
    %v4328 = vsel %vm4324, -inf, %v4308
    %v4329 = vsel %vm2856, %v4325, -inf
    %4330 = vmax.xlane.f32.xlu0 %v4329
    %v4331 = vpop.xlane.xlu0 %4330
    %v4332 = vsel %vm2856, %v4326, -inf
    %4333 = vmax.xlane.f32.xlu0 %v4332
    %v4334 = vpop.xlane.xlu0 %4333
    %v4335 = vsel %vm2856, %v4327, -inf
    %4336 = vmax.xlane.f32.xlu0 %v4335
    %v4337 = vpop.xlane.xlu0 %4336
    %v4338 = vsel %vm2856, %v4328, -inf
    %4339 = vmax.xlane.f32.xlu0 %v4338
    %v4340 = vpop.xlane.xlu0 %4339
    %vm4341 = vcmp.ge.f32.partialorder %v4325, %v4331
    %vm4342 = vcmp.ge.f32.partialorder %v4326, %v4334
    %vm4343 = vcmp.ge.f32.partialorder %v4327, %v4337
    %vm4344 = vcmp.ge.f32.partialorder %v4328, %v4340
    %v4345 = vsel %vm4341, -inf, %v4325
    %v4346 = vsel %vm4342, -inf, %v4326
    %v4347 = vsel %vm4343, -inf, %v4327
    %v4348 = vsel %vm4344, -inf, %v4328
    %v4349 = vsel %vm2856, %v4345, -inf
    %4350 = vmax.xlane.f32.xlu0 %v4349
    %v4351 = vpop.xlane.xlu0 %4350
    %v4352 = vsel %vm2856, %v4346, -inf
    %4353 = vmax.xlane.f32.xlu0 %v4352
    %v4354 = vpop.xlane.xlu0 %4353
    %v4355 = vsel %vm2856, %v4347, -inf
    %4356 = vmax.xlane.f32.xlu0 %v4355
    %v4357 = vpop.xlane.xlu0 %4356
    %v4358 = vsel %vm2856, %v4348, -inf
    %4359 = vmax.xlane.f32.xlu0 %v4358
    %v4360 = vpop.xlane.xlu0 %4359
    %vm4361 = vcmp.ge.f32.partialorder %v4345, %v4351
    %vm4362 = vcmp.ge.f32.partialorder %v4346, %v4354
    %vm4363 = vcmp.ge.f32.partialorder %v4347, %v4357
    %vm4364 = vcmp.ge.f32.partialorder %v4348, %v4360
    %v4365 = vsel %vm4361, -inf, %v4345
    %v4366 = vsel %vm4362, -inf, %v4346
    %v4367 = vsel %vm4363, -inf, %v4347
    %v4368 = vsel %vm4364, -inf, %v4348
    %v4369 = vsel %vm2856, %v4365, -inf
    %4370 = vmax.xlane.f32.xlu0 %v4369
    %v4371 = vpop.xlane.xlu0 %4370
    %v4372 = vsel %vm2856, %v4366, -inf
    %4373 = vmax.xlane.f32.xlu0 %v4372
    %v4374 = vpop.xlane.xlu0 %4373
    %v4375 = vsel %vm2856, %v4367, -inf
    %4376 = vmax.xlane.f32.xlu0 %v4375
    %v4377 = vpop.xlane.xlu0 %4376
    %v4378 = vsel %vm2856, %v4368, -inf
    %4379 = vmax.xlane.f32.xlu0 %v4378
    %v4380 = vpop.xlane.xlu0 %4379
    %vm4381 = vcmp.ge.f32.partialorder %v4365, %v4371
    %vm4382 = vcmp.ge.f32.partialorder %v4366, %v4374
    %vm4383 = vcmp.ge.f32.partialorder %v4367, %v4377
    %vm4384 = vcmp.ge.f32.partialorder %v4368, %v4380
    %v4385 = vsel %vm4381, -inf, %v4365
    %v4386 = vsel %vm4382, -inf, %v4366
    %v4387 = vsel %vm4383, -inf, %v4367
    %v4388 = vsel %vm4384, -inf, %v4368
    %v4389 = vsel %vm2856, %v4385, -inf
    %4390 = vmax.xlane.f32.xlu0 %v4389
    %v4391 = vpop.xlane.xlu0 %4390
    %v4392 = vsel %vm2856, %v4386, -inf
    %4393 = vmax.xlane.f32.xlu0 %v4392
    %v4394 = vpop.xlane.xlu0 %4393
    %v4395 = vsel %vm2856, %v4387, -inf
    %4396 = vmax.xlane.f32.xlu0 %v4395
    %v4397 = vpop.xlane.xlu0 %4396
    %v4398 = vsel %vm2856, %v4388, -inf
    %4399 = vmax.xlane.f32.xlu0 %v4398
    %v4400 = vpop.xlane.xlu0 %4399
    %vm4401 = vcmp.ge.f32.partialorder %v4285, %v4391
    %vm4402 = vcmp.ge.f32.partialorder %v4286, %v4394
    %vm4403 = vcmp.ge.f32.partialorder %v4287, %v4397
    %vm4404 = vcmp.ge.f32.partialorder %v4288, %v4400
    %v4405 = vsel %vm4401, %v4285, -inf
    %v4406 = vsel %vm4402, %v4286, -inf
    %v4407 = vsel %vm4403, %v4287, -inf
    %v4408 = vsel %vm4404, %v4288, -inf
    %v4409 = vsel %vm2856, %v4405, -inf
    %4410 = vmax.xlane.f32.xlu0 %v4409
    %v4411 = vpop.xlane.xlu0 %4410
    %v4412 = vsel %vm2856, %v4406, -inf
    %4413 = vmax.xlane.f32.xlu0 %v4412
    %v4414 = vpop.xlane.xlu0 %4413
    %v4415 = vsel %vm2856, %v4407, -inf
    %4416 = vmax.xlane.f32.xlu0 %v4415
    %v4417 = vpop.xlane.xlu0 %4416
    %v4418 = vsel %vm2856, %v4408, -inf
    %4419 = vmax.xlane.f32.xlu0 %v4418
    %v4420 = vpop.xlane.xlu0 %4419
    %v4421 = vsub.f32 %v4405, %v4411
    %v4422 = vsub.f32 %v4406, %v4414
    %v4423 = vsub.f32 %v4407, %v4417
    %v4424 = vsub.f32 %v4408, %v4420
    %v4425 = vmul.f32 %v4421, 1.442695
    %v4426 = vpow.pop %v4425
    %v4427 = vmul.f32 %v4422, 1.442695
    %v4428 = vpow.pop %v4427
    %v4429 = vmul.f32 %v4423, 1.442695
    %v4430 = vpow.pop %v4429
    %v4431 = vmul.f32 %v4424, 1.442695
    %v4432 = vpow.pop %v4431
    %v4433 = vsel %vm2856, %v4426, 0.0
    %4434 = vadd.xlane.f32.xlu0 %v4433
    %v4435 = vpop.xlane.xlu0 %4434
    %v4436 = vsel %vm2856, %v4428, 0.0
    %4437 = vadd.xlane.f32.xlu0 %v4436
    %v4438 = vpop.xlane.xlu0 %4437
    %v4439 = vsel %vm2856, %v4430, 0.0
    %4440 = vadd.xlane.f32.xlu0 %v4439
    %v4441 = vpop.xlane.xlu0 %4440
    %v4442 = vsel %vm2856, %v4432, 0.0
    %4443 = vadd.xlane.f32.xlu0 %v4442
    %v4444 = vpop.xlane.xlu0 %4443
    %v4445 = vrcp.pop %v4435
    %v4446 = vmul.f32 %v4435, %v4445
    %v4447 = vsub.f32 1.0, %v4446
    %v4448 = vmul.f32 %v4445, %v4447
    %v4449 = vadd.f32 %v4445, %v4448
    %vm4450 = vweird.f32 %v4435
    %vm4451 = vweird.f32 %v4445
    %vm4452 = vmor %vm4450, %vm4451
    %v4453 = vsel %vm4452, %v4445, %v4449
    %v4454 = vand.u32 2147483647, %v4435
    %vm4455 = vcmp.eq.f32.partialorder %v4454, 8.507059e+37
    %v4456 = vand.u32 %v4435, 2147483648
    %v4457 = vor.u32 1.1754944e-38, %v4456
    %v4458 = vsel %vm4455, %v4457, %v4453
    %v4459 = vmul.f32 %v4426, %v4458
    %v4460 = vrcp.pop %v4438
    %v4461 = vmul.f32 %v4438, %v4460
    %v4462 = vsub.f32 1.0, %v4461
    %v4463 = vmul.f32 %v4460, %v4462
    %v4464 = vadd.f32 %v4460, %v4463
    %vm4465 = vweird.f32 %v4438
    %vm4466 = vweird.f32 %v4460
    %vm4467 = vmor %vm4465, %vm4466
    %v4468 = vsel %vm4467, %v4460, %v4464
    %v4469 = vand.u32 2147483647, %v4438
    %vm4470 = vcmp.eq.f32.partialorder %v4469, 8.507059e+37
    %v4471 = vand.u32 %v4438, 2147483648
    %v4472 = vor.u32 1.1754944e-38, %v4471
    %v4473 = vsel %vm4470, %v4472, %v4468
    %v4474 = vmul.f32 %v4428, %v4473
    %v4475 = vrcp.pop %v4441
    %v4476 = vmul.f32 %v4441, %v4475
    %v4477 = vsub.f32 1.0, %v4476
    %v4478 = vmul.f32 %v4475, %v4477
    %v4479 = vadd.f32 %v4475, %v4478
    %vm4480 = vweird.f32 %v4441
    %vm4481 = vweird.f32 %v4475
    %vm4482 = vmor %vm4480, %vm4481
    %v4483 = vsel %vm4482, %v4475, %v4479
    %v4484 = vand.u32 2147483647, %v4441
    %vm4485 = vcmp.eq.f32.partialorder %v4484, 8.507059e+37
    %v4486 = vand.u32 %v4441, 2147483648
    %v4487 = vor.u32 1.1754944e-38, %v4486
    %v4488 = vsel %vm4485, %v4487, %v4483
    %v4489 = vmul.f32 %v4430, %v4488
    %v4490 = vrcp.pop %v4444
    %v4491 = vmul.f32 %v4444, %v4490
    %v4492 = vsub.f32 1.0, %v4491
    %v4493 = vmul.f32 %v4490, %v4492
    %v4494 = vadd.f32 %v4490, %v4493
    %vm4495 = vweird.f32 %v4444
    %vm4496 = vweird.f32 %v4490
    %vm4497 = vmor %vm4495, %vm4496
    %v4498 = vsel %vm4497, %v4490, %v4494
    %v4499 = vand.u32 2147483647, %v4444
    %vm4500 = vcmp.eq.f32.partialorder %v4499, 8.507059e+37
    %v4501 = vand.u32 %v4444, 2147483648
    %v4502 = vor.u32 1.1754944e-38, %v4501
    %v4503 = vsel %vm4500, %v4502, %v4498
    %v4504 = vmul.f32 %v4432, %v4503
    %v4506 = vsel %vm2856, %v4459, 0
    %v4509 = vsel %vm2856, %v4474, 0
    %4511 = vmatpush.msra.mxu0 0.0
    %4512 = vmatpush.msra.mxu0 0.0
    %4513 = vmatpush.msra.mxu0 0.0
    %4514 = vmatpush.msra.mxu0 0.0
    %4515 = vmatpush.msra.mxu0 0.0
    %4516 = vmatpush.msra.mxu0 0.0
    %4517 = vmatpush.msra.mxu0 0.0
    %4518 = vmatpush.msra.mxu0 0.0
    %4519 = vmatpush.msra.mxu0 0.0
    %4520 = vmatpush.msra.mxu0 0.0
    %4521 = vmatpush.msra.mxu0 0.0
    %4522 = vmatpush.msra.mxu0 0.0
    %4523 = vmatpush.msra.mxu0 0.0
    %4524 = vmatpush.msra.mxu0 0.0
    %4525 = vmatpush.msra.mxu0 %v894
    %4526 = vmatpush.msra.mxu0 %v882
    %4527 = vmatmul.f32.gmra.mxu0 %v4506
    %v4528 = vpop.f32.mrf.mxu0
    %v4529 = vadd.f32 0.0, %v4528
    %4530 = vmatmul.f32.gmra.mxu0 %v4509
    %v4531 = vpop.f32.mrf.mxu0
    %v4532 = vadd.f32 0.0, %v4531
    %4533 = vdwg.mxu0
    %v4535 = vsel %vm2856, %v4489, 0
    %v4538 = vsel %vm2856, %v4504, 0
    %4540 = vmatpush.msra.mxu0 0.0
    %4541 = vmatpush.msra.mxu0 0.0
    %4542 = vmatpush.msra.mxu0 0.0
    %4543 = vmatpush.msra.mxu0 0.0
    %4544 = vmatpush.msra.mxu0 0.0
    %4545 = vmatpush.msra.mxu0 0.0
    %4546 = vmatpush.msra.mxu0 0.0
    %4547 = vmatpush.msra.mxu0 0.0
    %4548 = vmatpush.msra.mxu0 0.0
    %4549 = vmatpush.msra.mxu0 0.0
    %4550 = vmatpush.msra.mxu0 0.0
    %4551 = vmatpush.msra.mxu0 0.0
    %4552 = vmatpush.msra.mxu0 0.0
    %4553 = vmatpush.msra.mxu0 0.0
    %4554 = vmatpush.msra.mxu0 %v918
    %4555 = vmatpush.msra.mxu0 %v906
    %4556 = vmatmul.f32.gmra.mxu0 %v4535
    %v4557 = vpop.f32.mrf.mxu0
    %v4558 = vadd.f32 0.0, %v4557
    %4559 = vmatmul.f32.gmra.mxu0 %v4538
    %v4560 = vpop.f32.mrf.mxu0
    %v4561 = vadd.f32 0.0, %v4560
    %4562 = vdwg.mxu0
    %4563 = vrot.lane.b32.xlu0 %v875, 96
    %v4564 = vpop.permute.xlu0 %4563
    %4565 = vrot.lane.b32.xlu0 %v887, 96
    %v4566 = vpop.permute.xlu0 %4565
    %4567 = vrot.lane.b32.xlu0 %v877, 96
    %v4568 = vpop.permute.xlu0 %4567
    %4569 = vrot.lane.b32.xlu0 %v889, 96
    %v4570 = vpop.permute.xlu0 %4569
    %v4571 = vsel %vm409, %v4564, 0
    %v4573 = vsel %vm409, %v4566, 0
    %v4575 = vsel %vm409, %v4568, 0
    %v4577 = vsel %vm409, %v4570, 0
    %4579 = vmatpush.xpose.msra.mxu0 0.0
    %4580 = vmatpush.xpose.msra.mxu0 0.0
    %4581 = vmatpush.xpose.msra.mxu0 0.0
    %4582 = vmatpush.xpose.msra.mxu0 0.0
    %4583 = vmatpush.xpose.msra.mxu0 0.0
    %4584 = vmatpush.xpose.msra.mxu0 0.0
    %4585 = vmatpush.xpose.msra.mxu0 0.0
    %4586 = vmatpush.xpose.msra.mxu0 0.0
    %4587 = vmatpush.xpose.msra.mxu0 0.0
    %4588 = vmatpush.xpose.msra.mxu0 0.0
    %4589 = vmatpush.xpose.msra.mxu0 0.0
    %4590 = vmatpush.xpose.msra.mxu0 0.0
    %4591 = vmatpush.xpose.msra.mxu0 0.0
    %4592 = vmatpush.xpose.msra.mxu0 0.0
    %4593 = vmatpush.xpose.msra.mxu0 %v4577
    %4594 = vmatpush.xpose.msra.mxu0 %v4575
    %4595 = vmatmul.f32.gmra.mxu0 %v4571
    %v4596 = vpop.f32.mrf.mxu0
    %v4597 = vadd.f32 0.0, %v4596
    %4598 = vmatmul.f32.gmra.mxu0 %v4573
    %v4599 = vpop.f32.mrf.mxu0
    %v4600 = vadd.f32 0.0, %v4599
    %4601 = vdwg.mxu0
    %4602 = vrot.lane.b32.xlu0 %v899, 96
    %v4603 = vpop.permute.xlu0 %4602
    %4604 = vrot.lane.b32.xlu0 %v911, 96
    %v4605 = vpop.permute.xlu0 %4604
    %4606 = vrot.lane.b32.xlu0 %v901, 96
    %v4607 = vpop.permute.xlu0 %4606
    %4608 = vrot.lane.b32.xlu0 %v913, 96
    %v4609 = vpop.permute.xlu0 %4608
    %v4610 = vsel %vm409, %v4603, 0
    %v4612 = vsel %vm409, %v4605, 0
    %v4614 = vsel %vm409, %v4607, 0
    %v4616 = vsel %vm409, %v4609, 0
    %4618 = vmatpush.xpose.msra.mxu0 0.0
    %4619 = vmatpush.xpose.msra.mxu0 0.0
    %4620 = vmatpush.xpose.msra.mxu0 0.0
    %4621 = vmatpush.xpose.msra.mxu0 0.0
    %4622 = vmatpush.xpose.msra.mxu0 0.0
    %4623 = vmatpush.xpose.msra.mxu0 0.0
    %4624 = vmatpush.xpose.msra.mxu0 0.0
    %4625 = vmatpush.xpose.msra.mxu0 0.0
    %4626 = vmatpush.xpose.msra.mxu0 0.0
    %4627 = vmatpush.xpose.msra.mxu0 0.0
    %4628 = vmatpush.xpose.msra.mxu0 0.0
    %4629 = vmatpush.xpose.msra.mxu0 0.0
    %4630 = vmatpush.xpose.msra.mxu0 0.0
    %4631 = vmatpush.xpose.msra.mxu0 0.0
    %4632 = vmatpush.xpose.msra.mxu0 %v4616
    %4633 = vmatpush.xpose.msra.mxu0 %v4614
    %4634 = vmatmul.f32.gmra.mxu0 %v4610
    %v4635 = vpop.f32.mrf.mxu0
    %v4636 = vadd.f32 0.0, %v4635
    %4637 = vmatmul.f32.gmra.mxu0 %v4612
    %v4638 = vpop.f32.mrf.mxu0
    %v4639 = vadd.f32 0.0, %v4638
    %4640 = vdwg.mxu0
    %v4641 = vmul.f32 %v4597, 0.17677669
    %v4642 = vmul.f32 %v4600, 0.17677669
    %v4643 = vmul.f32 %v4636, 0.17677669
    %v4644 = vmul.f32 %v4639, 0.17677669
    %v4645 = vadd.f32 %v4641, %v2772
    %v4646 = vadd.f32 %v4642, %v2773
    %v4647 = vadd.f32 %v4643, %v2772
    %v4648 = vadd.f32 %v4644, %v2773
    %v4649 = vsel %vm2856, %v4645, -inf
    %4650 = vmax.xlane.f32.xlu0 %v4649
    %v4651 = vpop.xlane.xlu0 %4650
    %v4652 = vsel %vm2856, %v4646, -inf
    %4653 = vmax.xlane.f32.xlu0 %v4652
    %v4654 = vpop.xlane.xlu0 %4653
    %v4655 = vsel %vm2856, %v4647, -inf
    %4656 = vmax.xlane.f32.xlu0 %v4655
    %v4657 = vpop.xlane.xlu0 %4656
    %v4658 = vsel %vm2856, %v4648, -inf
    %4659 = vmax.xlane.f32.xlu0 %v4658
    %v4660 = vpop.xlane.xlu0 %4659
    %vm4661 = vcmp.ge.f32.partialorder %v4645, %v4651
    %vm4662 = vcmp.ge.f32.partialorder %v4646, %v4654
    %vm4663 = vcmp.ge.f32.partialorder %v4647, %v4657
    %vm4664 = vcmp.ge.f32.partialorder %v4648, %v4660
    %v4665 = vsel %vm4661, -inf, %v4645
    %v4666 = vsel %vm4662, -inf, %v4646
    %v4667 = vsel %vm4663, -inf, %v4647
    %v4668 = vsel %vm4664, -inf, %v4648
    %v4669 = vsel %vm2856, %v4665, -inf
    %4670 = vmax.xlane.f32.xlu0 %v4669
    %v4671 = vpop.xlane.xlu0 %4670
    %v4672 = vsel %vm2856, %v4666, -inf
    %4673 = vmax.xlane.f32.xlu0 %v4672
    %v4674 = vpop.xlane.xlu0 %4673
    %v4675 = vsel %vm2856, %v4667, -inf
    %4676 = vmax.xlane.f32.xlu0 %v4675
    %v4677 = vpop.xlane.xlu0 %4676
    %v4678 = vsel %vm2856, %v4668, -inf
    %4679 = vmax.xlane.f32.xlu0 %v4678
    %v4680 = vpop.xlane.xlu0 %4679
    %vm4681 = vcmp.ge.f32.partialorder %v4665, %v4671
    %vm4682 = vcmp.ge.f32.partialorder %v4666, %v4674
    %vm4683 = vcmp.ge.f32.partialorder %v4667, %v4677
    %vm4684 = vcmp.ge.f32.partialorder %v4668, %v4680
    %v4685 = vsel %vm4681, -inf, %v4665
    %v4686 = vsel %vm4682, -inf, %v4666
    %v4687 = vsel %vm4683, -inf, %v4667
    %v4688 = vsel %vm4684, -inf, %v4668
    %v4689 = vsel %vm2856, %v4685, -inf
    %4690 = vmax.xlane.f32.xlu0 %v4689
    %v4691 = vpop.xlane.xlu0 %4690
    %v4692 = vsel %vm2856, %v4686, -inf
    %4693 = vmax.xlane.f32.xlu0 %v4692
    %v4694 = vpop.xlane.xlu0 %4693
    %v4695 = vsel %vm2856, %v4687, -inf
    %4696 = vmax.xlane.f32.xlu0 %v4695
    %v4697 = vpop.xlane.xlu0 %4696
    %v4698 = vsel %vm2856, %v4688, -inf
    %4699 = vmax.xlane.f32.xlu0 %v4698
    %v4700 = vpop.xlane.xlu0 %4699
    %vm4701 = vcmp.ge.f32.partialorder %v4685, %v4691
    %vm4702 = vcmp.ge.f32.partialorder %v4686, %v4694
    %vm4703 = vcmp.ge.f32.partialorder %v4687, %v4697
    %vm4704 = vcmp.ge.f32.partialorder %v4688, %v4700
    %v4705 = vsel %vm4701, -inf, %v4685
    %v4706 = vsel %vm4702, -inf, %v4686
    %v4707 = vsel %vm4703, -inf, %v4687
    %v4708 = vsel %vm4704, -inf, %v4688
    %v4709 = vsel %vm2856, %v4705, -inf
    %4710 = vmax.xlane.f32.xlu0 %v4709
    %v4711 = vpop.xlane.xlu0 %4710
    %v4712 = vsel %vm2856, %v4706, -inf
    %4713 = vmax.xlane.f32.xlu0 %v4712
    %v4714 = vpop.xlane.xlu0 %4713
    %v4715 = vsel %vm2856, %v4707, -inf
    %4716 = vmax.xlane.f32.xlu0 %v4715
    %v4717 = vpop.xlane.xlu0 %4716
    %v4718 = vsel %vm2856, %v4708, -inf
    %4719 = vmax.xlane.f32.xlu0 %v4718
    %v4720 = vpop.xlane.xlu0 %4719
    %vm4721 = vcmp.ge.f32.partialorder %v4705, %v4711
    %vm4722 = vcmp.ge.f32.partialorder %v4706, %v4714
    %vm4723 = vcmp.ge.f32.partialorder %v4707, %v4717
    %vm4724 = vcmp.ge.f32.partialorder %v4708, %v4720
    %v4725 = vsel %vm4721, -inf, %v4705
    %v4726 = vsel %vm4722, -inf, %v4706
    %v4727 = vsel %vm4723, -inf, %v4707
    %v4728 = vsel %vm4724, -inf, %v4708
    %v4729 = vsel %vm2856, %v4725, -inf
    %4730 = vmax.xlane.f32.xlu0 %v4729
    %v4731 = vpop.xlane.xlu0 %4730
    %v4732 = vsel %vm2856, %v4726, -inf
    %4733 = vmax.xlane.f32.xlu0 %v4732
    %v4734 = vpop.xlane.xlu0 %4733
    %v4735 = vsel %vm2856, %v4727, -inf
    %4736 = vmax.xlane.f32.xlu0 %v4735
    %v4737 = vpop.xlane.xlu0 %4736
    %v4738 = vsel %vm2856, %v4728, -inf
    %4739 = vmax.xlane.f32.xlu0 %v4738
    %v4740 = vpop.xlane.xlu0 %4739
    %vm4741 = vcmp.ge.f32.partialorder %v4725, %v4731
    %vm4742 = vcmp.ge.f32.partialorder %v4726, %v4734
    %vm4743 = vcmp.ge.f32.partialorder %v4727, %v4737
    %vm4744 = vcmp.ge.f32.partialorder %v4728, %v4740
    %v4745 = vsel %vm4741, -inf, %v4725
    %v4746 = vsel %vm4742, -inf, %v4726
    %v4747 = vsel %vm4743, -inf, %v4727
    %v4748 = vsel %vm4744, -inf, %v4728
    %v4749 = vsel %vm2856, %v4745, -inf
    %4750 = vmax.xlane.f32.xlu0 %v4749
    %v4751 = vpop.xlane.xlu0 %4750
    %v4752 = vsel %vm2856, %v4746, -inf
    %4753 = vmax.xlane.f32.xlu0 %v4752
    %v4754 = vpop.xlane.xlu0 %4753
    %v4755 = vsel %vm2856, %v4747, -inf
    %4756 = vmax.xlane.f32.xlu0 %v4755
    %v4757 = vpop.xlane.xlu0 %4756
    %v4758 = vsel %vm2856, %v4748, -inf
    %4759 = vmax.xlane.f32.xlu0 %v4758
    %v4760 = vpop.xlane.xlu0 %4759
    %vm4761 = vcmp.ge.f32.partialorder %v4645, %v4751
    %vm4762 = vcmp.ge.f32.partialorder %v4646, %v4754
    %vm4763 = vcmp.ge.f32.partialorder %v4647, %v4757
    %vm4764 = vcmp.ge.f32.partialorder %v4648, %v4760
    %v4765 = vsel %vm4761, %v4645, -inf
    %v4766 = vsel %vm4762, %v4646, -inf
    %v4767 = vsel %vm4763, %v4647, -inf
    %v4768 = vsel %vm4764, %v4648, -inf
    %v4769 = vsel %vm2856, %v4765, -inf
    %4770 = vmax.xlane.f32.xlu0 %v4769
    %v4771 = vpop.xlane.xlu0 %4770
    %v4772 = vsel %vm2856, %v4766, -inf
    %4773 = vmax.xlane.f32.xlu0 %v4772
    %v4774 = vpop.xlane.xlu0 %4773
    %v4775 = vsel %vm2856, %v4767, -inf
    %4776 = vmax.xlane.f32.xlu0 %v4775
    %v4777 = vpop.xlane.xlu0 %4776
    %v4778 = vsel %vm2856, %v4768, -inf
    %4779 = vmax.xlane.f32.xlu0 %v4778
    %v4780 = vpop.xlane.xlu0 %4779
    %v4781 = vsub.f32 %v4765, %v4771
    %v4782 = vsub.f32 %v4766, %v4774
    %v4783 = vsub.f32 %v4767, %v4777
    %v4784 = vsub.f32 %v4768, %v4780
    %v4785 = vmul.f32 %v4781, 1.442695
    %v4786 = vpow.pop %v4785
    %v4787 = vmul.f32 %v4782, 1.442695
    %v4788 = vpow.pop %v4787
    %v4789 = vmul.f32 %v4783, 1.442695
    %v4790 = vpow.pop %v4789
    %v4791 = vmul.f32 %v4784, 1.442695
    %v4792 = vpow.pop %v4791
    %v4793 = vsel %vm2856, %v4786, 0.0
    %4794 = vadd.xlane.f32.xlu0 %v4793
    %v4795 = vpop.xlane.xlu0 %4794
    %v4796 = vsel %vm2856, %v4788, 0.0
    %4797 = vadd.xlane.f32.xlu0 %v4796
    %v4798 = vpop.xlane.xlu0 %4797
    %v4799 = vsel %vm2856, %v4790, 0.0
    %4800 = vadd.xlane.f32.xlu0 %v4799
    %v4801 = vpop.xlane.xlu0 %4800
    %v4802 = vsel %vm2856, %v4792, 0.0
    %4803 = vadd.xlane.f32.xlu0 %v4802
    %v4804 = vpop.xlane.xlu0 %4803
    %v4805 = vrcp.pop %v4795
    %v4806 = vmul.f32 %v4795, %v4805
    %v4807 = vsub.f32 1.0, %v4806
    %v4808 = vmul.f32 %v4805, %v4807
    %v4809 = vadd.f32 %v4805, %v4808
    %vm4810 = vweird.f32 %v4795
    %vm4811 = vweird.f32 %v4805
    %vm4812 = vmor %vm4810, %vm4811
    %v4813 = vsel %vm4812, %v4805, %v4809
    %v4814 = vand.u32 2147483647, %v4795
    %vm4815 = vcmp.eq.f32.partialorder %v4814, 8.507059e+37
    %v4816 = vand.u32 %v4795, 2147483648
    %v4817 = vor.u32 1.1754944e-38, %v4816
    %v4818 = vsel %vm4815, %v4817, %v4813
    %v4819 = vmul.f32 %v4786, %v4818
    %v4820 = vrcp.pop %v4798
    %v4821 = vmul.f32 %v4798, %v4820
    %v4822 = vsub.f32 1.0, %v4821
    %v4823 = vmul.f32 %v4820, %v4822
    %v4824 = vadd.f32 %v4820, %v4823
    %vm4825 = vweird.f32 %v4798
    %vm4826 = vweird.f32 %v4820
    %vm4827 = vmor %vm4825, %vm4826
    %v4828 = vsel %vm4827, %v4820, %v4824
    %v4829 = vand.u32 2147483647, %v4798
    %vm4830 = vcmp.eq.f32.partialorder %v4829, 8.507059e+37
    %v4831 = vand.u32 %v4798, 2147483648
    %v4832 = vor.u32 1.1754944e-38, %v4831
    %v4833 = vsel %vm4830, %v4832, %v4828
    %v4834 = vmul.f32 %v4788, %v4833
    %v4835 = vrcp.pop %v4801
    %v4836 = vmul.f32 %v4801, %v4835
    %v4837 = vsub.f32 1.0, %v4836
    %v4838 = vmul.f32 %v4835, %v4837
    %v4839 = vadd.f32 %v4835, %v4838
    %vm4840 = vweird.f32 %v4801
    %vm4841 = vweird.f32 %v4835
    %vm4842 = vmor %vm4840, %vm4841
    %v4843 = vsel %vm4842, %v4835, %v4839
    %v4844 = vand.u32 2147483647, %v4801
    %vm4845 = vcmp.eq.f32.partialorder %v4844, 8.507059e+37
    %v4846 = vand.u32 %v4801, 2147483648
    %v4847 = vor.u32 1.1754944e-38, %v4846
    %v4848 = vsel %vm4845, %v4847, %v4843
    %v4849 = vmul.f32 %v4790, %v4848
    %v4850 = vrcp.pop %v4804
    %v4851 = vmul.f32 %v4804, %v4850
    %v4852 = vsub.f32 1.0, %v4851
    %v4853 = vmul.f32 %v4850, %v4852
    %v4854 = vadd.f32 %v4850, %v4853
    %vm4855 = vweird.f32 %v4804
    %vm4856 = vweird.f32 %v4850
    %vm4857 = vmor %vm4855, %vm4856
    %v4858 = vsel %vm4857, %v4850, %v4854
    %v4859 = vand.u32 2147483647, %v4804
    %vm4860 = vcmp.eq.f32.partialorder %v4859, 8.507059e+37
    %v4861 = vand.u32 %v4804, 2147483648
    %v4862 = vor.u32 1.1754944e-38, %v4861
    %v4863 = vsel %vm4860, %v4862, %v4858
    %v4864 = vmul.f32 %v4792, %v4863
    %v4866 = vsel %vm2856, %v4819, 0
    %v4869 = vsel %vm2856, %v4834, 0
    %4871 = vmatpush.msra.mxu0 0.0
    %4872 = vmatpush.msra.mxu0 0.0
    %4873 = vmatpush.msra.mxu0 0.0
    %4874 = vmatpush.msra.mxu0 0.0
    %4875 = vmatpush.msra.mxu0 0.0
    %4876 = vmatpush.msra.mxu0 0.0
    %4877 = vmatpush.msra.mxu0 0.0
    %4878 = vmatpush.msra.mxu0 0.0
    %4879 = vmatpush.msra.mxu0 0.0
    %4880 = vmatpush.msra.mxu0 0.0
    %4881 = vmatpush.msra.mxu0 0.0
    %4882 = vmatpush.msra.mxu0 0.0
    %4883 = vmatpush.msra.mxu0 0.0
    %4884 = vmatpush.msra.mxu0 0.0
    %4885 = vmatpush.msra.mxu0 %v895
    %4886 = vmatpush.msra.mxu0 %v883
    %4887 = vmatmul.f32.gmra.mxu0 %v4866
    %v4888 = vpop.f32.mrf.mxu0
    %v4889 = vadd.f32 0.0, %v4888
    %4890 = vmatmul.f32.gmra.mxu0 %v4869
    %v4891 = vpop.f32.mrf.mxu0
    %v4892 = vadd.f32 0.0, %v4891
    %4893 = vdwg.mxu0
    %v4895 = vsel %vm2856, %v4849, 0
    %v4898 = vsel %vm2856, %v4864, 0
    %4900 = vmatpush.msra.mxu0 0.0
    %4901 = vmatpush.msra.mxu0 0.0
    %4902 = vmatpush.msra.mxu0 0.0
    %4903 = vmatpush.msra.mxu0 0.0
    %4904 = vmatpush.msra.mxu0 0.0
    %4905 = vmatpush.msra.mxu0 0.0
    %4906 = vmatpush.msra.mxu0 0.0
    %4907 = vmatpush.msra.mxu0 0.0
    %4908 = vmatpush.msra.mxu0 0.0
    %4909 = vmatpush.msra.mxu0 0.0
    %4910 = vmatpush.msra.mxu0 0.0
    %4911 = vmatpush.msra.mxu0 0.0
    %4912 = vmatpush.msra.mxu0 0.0
    %4913 = vmatpush.msra.mxu0 0.0
    %4914 = vmatpush.msra.mxu0 %v919
    %4915 = vmatpush.msra.mxu0 %v907
    %4916 = vmatmul.f32.gmra.mxu0 %v4895
    %v4917 = vpop.f32.mrf.mxu0
    %v4918 = vadd.f32 0.0, %v4917
    %4919 = vmatmul.f32.gmra.mxu0 %v4898
    %v4920 = vpop.f32.mrf.mxu0
    %v4921 = vadd.f32 0.0, %v4920
    %4922 = vdwg.mxu0
    %4923 = vrot.lane.b32.xlu0 %v875, 64
    %v4924 = vpop.permute.xlu0 %4923
    %4925 = vrot.lane.b32.xlu0 %v887, 64
    %v4926 = vpop.permute.xlu0 %4925
    %4927 = vrot.lane.b32.xlu0 %v877, 64
    %v4928 = vpop.permute.xlu0 %4927
    %4929 = vrot.lane.b32.xlu0 %v889, 64
    %v4930 = vpop.permute.xlu0 %4929
    %v4931 = vsel %vm409, %v4924, 0
    %v4933 = vsel %vm409, %v4926, 0
    %v4935 = vsel %vm409, %v4928, 0
    %v4937 = vsel %vm409, %v4930, 0
    %4939 = vmatpush.xpose.msra.mxu0 0.0
    %4940 = vmatpush.xpose.msra.mxu0 0.0
    %4941 = vmatpush.xpose.msra.mxu0 0.0
    %4942 = vmatpush.xpose.msra.mxu0 0.0
    %4943 = vmatpush.xpose.msra.mxu0 0.0
    %4944 = vmatpush.xpose.msra.mxu0 0.0
    %4945 = vmatpush.xpose.msra.mxu0 0.0
    %4946 = vmatpush.xpose.msra.mxu0 0.0
    %4947 = vmatpush.xpose.msra.mxu0 0.0
    %4948 = vmatpush.xpose.msra.mxu0 0.0
    %4949 = vmatpush.xpose.msra.mxu0 0.0
    %4950 = vmatpush.xpose.msra.mxu0 0.0
    %4951 = vmatpush.xpose.msra.mxu0 0.0
    %4952 = vmatpush.xpose.msra.mxu0 0.0
    %4953 = vmatpush.xpose.msra.mxu0 %v4937
    %4954 = vmatpush.xpose.msra.mxu0 %v4935
    %4955 = vmatmul.f32.gmra.mxu0 %v4931
    %v4956 = vpop.f32.mrf.mxu0
    %v4957 = vadd.f32 0.0, %v4956
    %4958 = vmatmul.f32.gmra.mxu0 %v4933
    %v4959 = vpop.f32.mrf.mxu0
    %v4960 = vadd.f32 0.0, %v4959
    %4961 = vdwg.mxu0
    %4962 = vrot.lane.b32.xlu0 %v899, 64
    %v4963 = vpop.permute.xlu0 %4962
    %4964 = vrot.lane.b32.xlu0 %v911, 64
    %v4965 = vpop.permute.xlu0 %4964
    %4966 = vrot.lane.b32.xlu0 %v901, 64
    %v4967 = vpop.permute.xlu0 %4966
    %4968 = vrot.lane.b32.xlu0 %v913, 64
    %v4969 = vpop.permute.xlu0 %4968
    %v4970 = vsel %vm409, %v4963, 0
    %v4972 = vsel %vm409, %v4965, 0
    %v4974 = vsel %vm409, %v4967, 0
    %v4976 = vsel %vm409, %v4969, 0
    %4978 = vmatpush.xpose.msra.mxu0 0.0
    %4979 = vmatpush.xpose.msra.mxu0 0.0
    %4980 = vmatpush.xpose.msra.mxu0 0.0
    %4981 = vmatpush.xpose.msra.mxu0 0.0
    %4982 = vmatpush.xpose.msra.mxu0 0.0
    %4983 = vmatpush.xpose.msra.mxu0 0.0
    %4984 = vmatpush.xpose.msra.mxu0 0.0
    %4985 = vmatpush.xpose.msra.mxu0 0.0
    %4986 = vmatpush.xpose.msra.mxu0 0.0
    %4987 = vmatpush.xpose.msra.mxu0 0.0
    %4988 = vmatpush.xpose.msra.mxu0 0.0
    %4989 = vmatpush.xpose.msra.mxu0 0.0
    %4990 = vmatpush.xpose.msra.mxu0 0.0
    %4991 = vmatpush.xpose.msra.mxu0 0.0
    %4992 = vmatpush.xpose.msra.mxu0 %v4976
    %4993 = vmatpush.xpose.msra.mxu0 %v4974
    %4994 = vmatmul.f32.gmra.mxu0 %v4970
    %v4995 = vpop.f32.mrf.mxu0
    %v4996 = vadd.f32 0.0, %v4995
    %4997 = vmatmul.f32.gmra.mxu0 %v4972
    %v4998 = vpop.f32.mrf.mxu0
    %v4999 = vadd.f32 0.0, %v4998
    %5000 = vdwg.mxu0
    %v5001 = vmul.f32 %v4957, 0.17677669
    %v5002 = vmul.f32 %v4960, 0.17677669
    %v5003 = vmul.f32 %v4996, 0.17677669
    %v5004 = vmul.f32 %v4999, 0.17677669
    %v5005 = vadd.f32 %v5001, %v2774
    %v5006 = vadd.f32 %v5002, %v2775
    %v5007 = vadd.f32 %v5003, %v2774
    %v5008 = vadd.f32 %v5004, %v2775
    %v5009 = vsel %vm2856, %v5005, -inf
    %5010 = vmax.xlane.f32.xlu0 %v5009
    %v5011 = vpop.xlane.xlu0 %5010
    %v5012 = vsel %vm2856, %v5006, -inf
    %5013 = vmax.xlane.f32.xlu0 %v5012
    %v5014 = vpop.xlane.xlu0 %5013
    %v5015 = vsel %vm2856, %v5007, -inf
    %5016 = vmax.xlane.f32.xlu0 %v5015
    %v5017 = vpop.xlane.xlu0 %5016
    %v5018 = vsel %vm2856, %v5008, -inf
    %5019 = vmax.xlane.f32.xlu0 %v5018
    %v5020 = vpop.xlane.xlu0 %5019
    %v5021 = vsub.f32 %v5005, %v5011
    %v5022 = vsub.f32 %v5006, %v5014
    %v5023 = vsub.f32 %v5007, %v5017
    %v5024 = vsub.f32 %v5008, %v5020
    %v5025 = vmul.f32 %v5021, 1.442695
    %v5026 = vpow.pop %v5025
    %v5027 = vmul.f32 %v5022, 1.442695
    %v5028 = vpow.pop %v5027
    %v5029 = vmul.f32 %v5023, 1.442695
    %v5030 = vpow.pop %v5029
    %v5031 = vmul.f32 %v5024, 1.442695
    %v5032 = vpow.pop %v5031
    %v5033 = vsel %vm2856, %v5026, 0.0
    %5034 = vadd.xlane.f32.xlu0 %v5033
    %v5035 = vpop.xlane.xlu0 %5034
    %v5036 = vsel %vm2856, %v5028, 0.0
    %5037 = vadd.xlane.f32.xlu0 %v5036
    %v5038 = vpop.xlane.xlu0 %5037
    %v5039 = vsel %vm2856, %v5030, 0.0
    %5040 = vadd.xlane.f32.xlu0 %v5039
    %v5041 = vpop.xlane.xlu0 %5040
    %v5042 = vsel %vm2856, %v5032, 0.0
    %5043 = vadd.xlane.f32.xlu0 %v5042
    %v5044 = vpop.xlane.xlu0 %5043
    %v5045 = vrcp.pop %v5035
    %v5046 = vmul.f32 %v5035, %v5045
    %v5047 = vsub.f32 1.0, %v5046
    %v5048 = vmul.f32 %v5045, %v5047
    %v5049 = vadd.f32 %v5045, %v5048
    %vm5050 = vweird.f32 %v5035
    %vm5051 = vweird.f32 %v5045
    %vm5052 = vmor %vm5050, %vm5051
    %v5053 = vsel %vm5052, %v5045, %v5049
    %v5054 = vand.u32 2147483647, %v5035
    %vm5055 = vcmp.eq.f32.partialorder %v5054, 8.507059e+37
    %v5056 = vand.u32 %v5035, 2147483648
    %v5057 = vor.u32 1.1754944e-38, %v5056
    %v5058 = vsel %vm5055, %v5057, %v5053
    %v5059 = vmul.f32 %v5026, %v5058
    %v5060 = vrcp.pop %v5038
    %v5061 = vmul.f32 %v5038, %v5060
    %v5062 = vsub.f32 1.0, %v5061
    %v5063 = vmul.f32 %v5060, %v5062
    %v5064 = vadd.f32 %v5060, %v5063
    %vm5065 = vweird.f32 %v5038
    %vm5066 = vweird.f32 %v5060
    %vm5067 = vmor %vm5065, %vm5066
    %v5068 = vsel %vm5067, %v5060, %v5064
    %v5069 = vand.u32 2147483647, %v5038
    %vm5070 = vcmp.eq.f32.partialorder %v5069, 8.507059e+37
    %v5071 = vand.u32 %v5038, 2147483648
    %v5072 = vor.u32 1.1754944e-38, %v5071
    %v5073 = vsel %vm5070, %v5072, %v5068
    %v5074 = vmul.f32 %v5028, %v5073
    %v5075 = vrcp.pop %v5041
    %v5076 = vmul.f32 %v5041, %v5075
    %v5077 = vsub.f32 1.0, %v5076
    %v5078 = vmul.f32 %v5075, %v5077
    %v5079 = vadd.f32 %v5075, %v5078
    %vm5080 = vweird.f32 %v5041
    %vm5081 = vweird.f32 %v5075
    %vm5082 = vmor %vm5080, %vm5081
    %v5083 = vsel %vm5082, %v5075, %v5079
    %v5084 = vand.u32 2147483647, %v5041
    %vm5085 = vcmp.eq.f32.partialorder %v5084, 8.507059e+37
    %v5086 = vand.u32 %v5041, 2147483648
    %v5087 = vor.u32 1.1754944e-38, %v5086
    %v5088 = vsel %vm5085, %v5087, %v5083
    %v5089 = vmul.f32 %v5030, %v5088
    %v5090 = vrcp.pop %v5044
    %v5091 = vmul.f32 %v5044, %v5090
    %v5092 = vsub.f32 1.0, %v5091
    %v5093 = vmul.f32 %v5090, %v5092
    %v5094 = vadd.f32 %v5090, %v5093
    %vm5095 = vweird.f32 %v5044
    %vm5096 = vweird.f32 %v5090
    %vm5097 = vmor %vm5095, %vm5096
    %v5098 = vsel %vm5097, %v5090, %v5094
    %v5099 = vand.u32 2147483647, %v5044
    %vm5100 = vcmp.eq.f32.partialorder %v5099, 8.507059e+37
    %v5101 = vand.u32 %v5044, 2147483648
    %v5102 = vor.u32 1.1754944e-38, %v5101
    %v5103 = vsel %vm5100, %v5102, %v5098
    %v5104 = vmul.f32 %v5032, %v5103
    %v5106 = vsel %vm2856, %v5059, 0
    %v5109 = vsel %vm2856, %v5074, 0
    %5111 = vmatpush.msra.mxu0 0.0
    %5112 = vmatpush.msra.mxu0 0.0
    %5113 = vmatpush.msra.mxu0 0.0
    %5114 = vmatpush.msra.mxu0 0.0
    %5115 = vmatpush.msra.mxu0 0.0
    %5116 = vmatpush.msra.mxu0 0.0
    %5117 = vmatpush.msra.mxu0 0.0
    %5118 = vmatpush.msra.mxu0 0.0
    %5119 = vmatpush.msra.mxu0 0.0
    %5120 = vmatpush.msra.mxu0 0.0
    %5121 = vmatpush.msra.mxu0 0.0
    %5122 = vmatpush.msra.mxu0 0.0
    %5123 = vmatpush.msra.mxu0 0.0
    %5124 = vmatpush.msra.mxu0 0.0
    %5125 = vmatpush.msra.mxu0 %v896
    %5126 = vmatpush.msra.mxu0 %v884
    %5127 = vmatmul.f32.gmra.mxu0 %v5106
    %v5128 = vpop.f32.mrf.mxu0
    %v5129 = vadd.f32 0.0, %v5128
    %5130 = vmatmul.f32.gmra.mxu0 %v5109
    %v5131 = vpop.f32.mrf.mxu0
    %v5132 = vadd.f32 0.0, %v5131
    %5133 = vdwg.mxu0
    %v5135 = vsel %vm2856, %v5089, 0
    %v5138 = vsel %vm2856, %v5104, 0
    %5140 = vmatpush.msra.mxu0 0.0
    %5141 = vmatpush.msra.mxu0 0.0
    %5142 = vmatpush.msra.mxu0 0.0
    %5143 = vmatpush.msra.mxu0 0.0
    %5144 = vmatpush.msra.mxu0 0.0
    %5145 = vmatpush.msra.mxu0 0.0
    %5146 = vmatpush.msra.mxu0 0.0
    %5147 = vmatpush.msra.mxu0 0.0
    %5148 = vmatpush.msra.mxu0 0.0
    %5149 = vmatpush.msra.mxu0 0.0
    %5150 = vmatpush.msra.mxu0 0.0
    %5151 = vmatpush.msra.mxu0 0.0
    %5152 = vmatpush.msra.mxu0 0.0
    %5153 = vmatpush.msra.mxu0 0.0
    %5154 = vmatpush.msra.mxu0 %v920
    %5155 = vmatpush.msra.mxu0 %v908
    %5156 = vmatmul.f32.gmra.mxu0 %v5135
    %v5157 = vpop.f32.mrf.mxu0
    %v5158 = vadd.f32 0.0, %v5157
    %5159 = vmatmul.f32.gmra.mxu0 %v5138
    %v5160 = vpop.f32.mrf.mxu0
    %v5161 = vadd.f32 0.0, %v5160
    %5162 = vdwg.mxu0
    %5163 = vrot.lane.b32.xlu0 %v875, 32
    %v5164 = vpop.permute.xlu0 %5163
    %5165 = vrot.lane.b32.xlu0 %v887, 32
    %v5166 = vpop.permute.xlu0 %5165
    %5167 = vrot.lane.b32.xlu0 %v877, 32
    %v5168 = vpop.permute.xlu0 %5167
    %5169 = vrot.lane.b32.xlu0 %v889, 32
    %v5170 = vpop.permute.xlu0 %5169
    %v5171 = vsel %vm409, %v5164, 0
    %v5173 = vsel %vm409, %v5166, 0
    %v5175 = vsel %vm409, %v5168, 0
    %v5177 = vsel %vm409, %v5170, 0
    %5179 = vmatpush.xpose.msra.mxu0 0.0
    %5180 = vmatpush.xpose.msra.mxu0 0.0
    %5181 = vmatpush.xpose.msra.mxu0 0.0
    %5182 = vmatpush.xpose.msra.mxu0 0.0
    %5183 = vmatpush.xpose.msra.mxu0 0.0
    %5184 = vmatpush.xpose.msra.mxu0 0.0
    %5185 = vmatpush.xpose.msra.mxu0 0.0
    %5186 = vmatpush.xpose.msra.mxu0 0.0
    %5187 = vmatpush.xpose.msra.mxu0 0.0
    %5188 = vmatpush.xpose.msra.mxu0 0.0
    %5189 = vmatpush.xpose.msra.mxu0 0.0
    %5190 = vmatpush.xpose.msra.mxu0 0.0
    %5191 = vmatpush.xpose.msra.mxu0 0.0
    %5192 = vmatpush.xpose.msra.mxu0 0.0
    %5193 = vmatpush.xpose.msra.mxu0 %v5177
    %5194 = vmatpush.xpose.msra.mxu0 %v5175
    %5195 = vmatmul.f32.gmra.mxu0 %v5171
    %v5196 = vpop.f32.mrf.mxu0
    %v5197 = vadd.f32 0.0, %v5196
    %5198 = vmatmul.f32.gmra.mxu0 %v5173
    %v5199 = vpop.f32.mrf.mxu0
    %v5200 = vadd.f32 0.0, %v5199
    %5201 = vdwg.mxu0
    %5202 = vrot.lane.b32.xlu0 %v899, 32
    %v5203 = vpop.permute.xlu0 %5202
    %5204 = vrot.lane.b32.xlu0 %v911, 32
    %v5205 = vpop.permute.xlu0 %5204
    %5206 = vrot.lane.b32.xlu0 %v901, 32
    %v5207 = vpop.permute.xlu0 %5206
    %5208 = vrot.lane.b32.xlu0 %v913, 32
    %v5209 = vpop.permute.xlu0 %5208
    %v5210 = vsel %vm409, %v5203, 0
    %v5212 = vsel %vm409, %v5205, 0
    %v5214 = vsel %vm409, %v5207, 0
    %v5216 = vsel %vm409, %v5209, 0
    %5218 = vmatpush.xpose.msra.mxu0 0.0
    %5219 = vmatpush.xpose.msra.mxu0 0.0
    %5220 = vmatpush.xpose.msra.mxu0 0.0
    %5221 = vmatpush.xpose.msra.mxu0 0.0
    %5222 = vmatpush.xpose.msra.mxu0 0.0
    %5223 = vmatpush.xpose.msra.mxu0 0.0
    %5224 = vmatpush.xpose.msra.mxu0 0.0
    %5225 = vmatpush.xpose.msra.mxu0 0.0
    %5226 = vmatpush.xpose.msra.mxu0 0.0
    %5227 = vmatpush.xpose.msra.mxu0 0.0
    %5228 = vmatpush.xpose.msra.mxu0 0.0
    %5229 = vmatpush.xpose.msra.mxu0 0.0
    %5230 = vmatpush.xpose.msra.mxu0 0.0
    %5231 = vmatpush.xpose.msra.mxu0 0.0
    %5232 = vmatpush.xpose.msra.mxu0 %v5216
    %5233 = vmatpush.xpose.msra.mxu0 %v5214
    %5234 = vmatmul.f32.gmra.mxu0 %v5210
    %v5235 = vpop.f32.mrf.mxu0
    %v5236 = vadd.f32 0.0, %v5235
    %5237 = vmatmul.f32.gmra.mxu0 %v5212
    %v5238 = vpop.f32.mrf.mxu0
    %v5239 = vadd.f32 0.0, %v5238
    %5240 = vdwg.mxu0
    %v5241 = vmul.f32 %v5197, 0.17677669
    %v5242 = vmul.f32 %v5200, 0.17677669
    %v5243 = vmul.f32 %v5236, 0.17677669
    %v5244 = vmul.f32 %v5239, 0.17677669
    %v5245 = vadd.f32 %v5241, %v2776
    %v5246 = vadd.f32 %v5242, %v2777
    %v5247 = vadd.f32 %v5243, %v2776
    %v5248 = vadd.f32 %v5244, %v2777
    %v5249 = vsel %vm2856, %v5245, -inf
    %5250 = vmax.xlane.f32.xlu0 %v5249
    %v5251 = vpop.xlane.xlu0 %5250
    %v5252 = vsel %vm2856, %v5246, -inf
    %5253 = vmax.xlane.f32.xlu0 %v5252
    %v5254 = vpop.xlane.xlu0 %5253
    %v5255 = vsel %vm2856, %v5247, -inf
    %5256 = vmax.xlane.f32.xlu0 %v5255
    %v5257 = vpop.xlane.xlu0 %5256
    %v5258 = vsel %vm2856, %v5248, -inf
    %5259 = vmax.xlane.f32.xlu0 %v5258
    %v5260 = vpop.xlane.xlu0 %5259
    %v5261 = vsub.f32 %v5245, %v5251
    %v5262 = vsub.f32 %v5246, %v5254
    %v5263 = vsub.f32 %v5247, %v5257
    %v5264 = vsub.f32 %v5248, %v5260
    %v5265 = vmul.f32 %v5261, 1.442695
    %v5266 = vpow.pop %v5265
    %v5267 = vmul.f32 %v5262, 1.442695
    %v5268 = vpow.pop %v5267
    %v5269 = vmul.f32 %v5263, 1.442695
    %v5270 = vpow.pop %v5269
    %v5271 = vmul.f32 %v5264, 1.442695
    %v5272 = vpow.pop %v5271
    %v5273 = vsel %vm2856, %v5266, 0.0
    %5274 = vadd.xlane.f32.xlu0 %v5273
    %v5275 = vpop.xlane.xlu0 %5274
    %v5276 = vsel %vm2856, %v5268, 0.0
    %5277 = vadd.xlane.f32.xlu0 %v5276
    %v5278 = vpop.xlane.xlu0 %5277
    %v5279 = vsel %vm2856, %v5270, 0.0
    %5280 = vadd.xlane.f32.xlu0 %v5279
    %v5281 = vpop.xlane.xlu0 %5280
    %v5282 = vsel %vm2856, %v5272, 0.0
    %5283 = vadd.xlane.f32.xlu0 %v5282
    %v5284 = vpop.xlane.xlu0 %5283
    %v5285 = vrcp.pop %v5275
    %v5286 = vmul.f32 %v5275, %v5285
    %v5287 = vsub.f32 1.0, %v5286
    %v5288 = vmul.f32 %v5285, %v5287
    %v5289 = vadd.f32 %v5285, %v5288
    %vm5290 = vweird.f32 %v5275
    %vm5291 = vweird.f32 %v5285
    %vm5292 = vmor %vm5290, %vm5291
    %v5293 = vsel %vm5292, %v5285, %v5289
    %v5294 = vand.u32 2147483647, %v5275
    %vm5295 = vcmp.eq.f32.partialorder %v5294, 8.507059e+37
    %v5296 = vand.u32 %v5275, 2147483648
    %v5297 = vor.u32 1.1754944e-38, %v5296
    %v5298 = vsel %vm5295, %v5297, %v5293
    %v5299 = vmul.f32 %v5266, %v5298
    %v5300 = vrcp.pop %v5278
    %v5301 = vmul.f32 %v5278, %v5300
    %v5302 = vsub.f32 1.0, %v5301
    %v5303 = vmul.f32 %v5300, %v5302
    %v5304 = vadd.f32 %v5300, %v5303
    %vm5305 = vweird.f32 %v5278
    %vm5306 = vweird.f32 %v5300
    %vm5307 = vmor %vm5305, %vm5306
    %v5308 = vsel %vm5307, %v5300, %v5304
    %v5309 = vand.u32 2147483647, %v5278
    %vm5310 = vcmp.eq.f32.partialorder %v5309, 8.507059e+37
    %v5311 = vand.u32 %v5278, 2147483648
    %v5312 = vor.u32 1.1754944e-38, %v5311
    %v5313 = vsel %vm5310, %v5312, %v5308
    %v5314 = vmul.f32 %v5268, %v5313
    %v5315 = vrcp.pop %v5281
    %v5316 = vmul.f32 %v5281, %v5315
    %v5317 = vsub.f32 1.0, %v5316
    %v5318 = vmul.f32 %v5315, %v5317
    %v5319 = vadd.f32 %v5315, %v5318
    %vm5320 = vweird.f32 %v5281
    %vm5321 = vweird.f32 %v5315
    %vm5322 = vmor %vm5320, %vm5321
    %v5323 = vsel %vm5322, %v5315, %v5319
    %v5324 = vand.u32 2147483647, %v5281
    %vm5325 = vcmp.eq.f32.partialorder %v5324, 8.507059e+37
    %v5326 = vand.u32 %v5281, 2147483648
    %v5327 = vor.u32 1.1754944e-38, %v5326
    %v5328 = vsel %vm5325, %v5327, %v5323
    %v5329 = vmul.f32 %v5270, %v5328
    %v5330 = vrcp.pop %v5284
    %v5331 = vmul.f32 %v5284, %v5330
    %v5332 = vsub.f32 1.0, %v5331
    %v5333 = vmul.f32 %v5330, %v5332
    %v5334 = vadd.f32 %v5330, %v5333
    %vm5335 = vweird.f32 %v5284
    %vm5336 = vweird.f32 %v5330
    %vm5337 = vmor %vm5335, %vm5336
    %v5338 = vsel %vm5337, %v5330, %v5334
    %v5339 = vand.u32 2147483647, %v5284
    %vm5340 = vcmp.eq.f32.partialorder %v5339, 8.507059e+37
    %v5341 = vand.u32 %v5284, 2147483648
    %v5342 = vor.u32 1.1754944e-38, %v5341
    %v5343 = vsel %vm5340, %v5342, %v5338
    %v5344 = vmul.f32 %v5272, %v5343
    %v5346 = vsel %vm2856, %v5299, 0
    %v5349 = vsel %vm2856, %v5314, 0
    %5351 = vmatpush.msra.mxu0 0.0
    %5352 = vmatpush.msra.mxu0 0.0
    %5353 = vmatpush.msra.mxu0 0.0
    %5354 = vmatpush.msra.mxu0 0.0
    %5355 = vmatpush.msra.mxu0 0.0
    %5356 = vmatpush.msra.mxu0 0.0
    %5357 = vmatpush.msra.mxu0 0.0
    %5358 = vmatpush.msra.mxu0 0.0
    %5359 = vmatpush.msra.mxu0 0.0
    %5360 = vmatpush.msra.mxu0 0.0
    %5361 = vmatpush.msra.mxu0 0.0
    %5362 = vmatpush.msra.mxu0 0.0
    %5363 = vmatpush.msra.mxu0 0.0
    %5364 = vmatpush.msra.mxu0 0.0
    %5365 = vmatpush.msra.mxu0 %v897
    %5366 = vmatpush.msra.mxu0 %v885
    %5367 = vmatmul.f32.gmra.mxu0 %v5346
    %v5368 = vpop.f32.mrf.mxu0
    %v5369 = vadd.f32 0.0, %v5368
    %5370 = vmatmul.f32.gmra.mxu0 %v5349
    %v5371 = vpop.f32.mrf.mxu0
    %v5372 = vadd.f32 0.0, %v5371
    %5373 = vdwg.mxu0
    %v5375 = vsel %vm2856, %v5329, 0
    %v5378 = vsel %vm2856, %v5344, 0
    %5380 = vmatpush.msra.mxu0 0.0
    %5381 = vmatpush.msra.mxu0 0.0
    %5382 = vmatpush.msra.mxu0 0.0
    %5383 = vmatpush.msra.mxu0 0.0
    %5384 = vmatpush.msra.mxu0 0.0
    %5385 = vmatpush.msra.mxu0 0.0
    %5386 = vmatpush.msra.mxu0 0.0
    %5387 = vmatpush.msra.mxu0 0.0
    %5388 = vmatpush.msra.mxu0 0.0
    %5389 = vmatpush.msra.mxu0 0.0
    %5390 = vmatpush.msra.mxu0 0.0
    %5391 = vmatpush.msra.mxu0 0.0
    %5392 = vmatpush.msra.mxu0 0.0
    %5393 = vmatpush.msra.mxu0 0.0
    %5394 = vmatpush.msra.mxu0 %v921
    %5395 = vmatpush.msra.mxu0 %v909
    %5396 = vmatmul.f32.gmra.mxu0 %v5375
    %v5397 = vpop.f32.mrf.mxu0
    %v5398 = vadd.f32 0.0, %v5397
    %5399 = vmatmul.f32.gmra.mxu0 %v5378
    %v5400 = vpop.f32.mrf.mxu0
    %v5401 = vadd.f32 0.0, %v5400
    %5402 = vdwg.mxu0
    %v5403 = vadd.f32 %v3097, %v2730
    %v5404 = vadd.f32 %v3457, %v2731
    %v5405 = vadd.f32 %v3817, %v2732
    %v5406 = vadd.f32 %v4177, %v2733
    %v5407 = vadd.f32 %v4529, %v2734
    %v5408 = vadd.f32 %v4889, %v2735
    %v5409 = vadd.f32 %v5129, %v2736
    %v5410 = vadd.f32 %v5369, %v2737
    %v5411 = vadd.f32 %v3100, %v2738
    %v5412 = vadd.f32 %v3460, %v2739
    %v5413 = vadd.f32 %v3820, %v2740
    %v5414 = vadd.f32 %v4180, %v2741
    %v5415 = vadd.f32 %v4532, %v2742
    %v5416 = vadd.f32 %v4892, %v2743
    %v5417 = vadd.f32 %v5132, %v2744
    %v5418 = vadd.f32 %v5372, %v2745
    %v5419 = vadd.f32 %v3126, %v2746
    %v5420 = vadd.f32 %v3486, %v2747
    %v5421 = vadd.f32 %v3846, %v2748
    %v5422 = vadd.f32 %v4206, %v2749
    %v5423 = vadd.f32 %v4558, %v2750
    %v5424 = vadd.f32 %v4918, %v2751
    %v5425 = vadd.f32 %v5158, %v2752
    %v5426 = vadd.f32 %v5398, %v2753
    %v5427 = vadd.f32 %v3129, %v2754
    %v5428 = vadd.f32 %v3489, %v2755
    %v5429 = vadd.f32 %v3849, %v2756
    %v5430 = vadd.f32 %v4209, %v2757
    %v5431 = vadd.f32 %v4561, %v2758
    %v5432 = vadd.f32 %v4921, %v2759
    %v5433 = vadd.f32 %v5161, %v2760
    %v5434 = vadd.f32 %v5401, %v2761
    %v5435 = vmax.f32 %v5403, 0.0
    %v5436 = vmax.f32 %v5404, 0.0
    %v5437 = vmax.f32 %v5405, 0.0
    %v5438 = vmax.f32 %v5406, 0.0
    %v5439 = vmax.f32 %v5407, 0.0
    %v5440 = vmax.f32 %v5408, 0.0
    %v5441 = vmax.f32 %v5409, 0.0
    %v5442 = vmax.f32 %v5410, 0.0
    %v5443 = vmax.f32 %v5411, 0.0
    %v5444 = vmax.f32 %v5412, 0.0
    %v5445 = vmax.f32 %v5413, 0.0
    %v5446 = vmax.f32 %v5414, 0.0
    %v5447 = vmax.f32 %v5415, 0.0
    %v5448 = vmax.f32 %v5416, 0.0
    %v5449 = vmax.f32 %v5417, 0.0
    %v5450 = vmax.f32 %v5418, 0.0
    %v5451 = vmax.f32 %v5419, 0.0
    %v5452 = vmax.f32 %v5420, 0.0
    %v5453 = vmax.f32 %v5421, 0.0
    %v5454 = vmax.f32 %v5422, 0.0
    %v5455 = vmax.f32 %v5423, 0.0
    %v5456 = vmax.f32 %v5424, 0.0
    %v5457 = vmax.f32 %v5425, 0.0
    %v5458 = vmax.f32 %v5426, 0.0
    %v5459 = vmax.f32 %v5427, 0.0
    %v5460 = vmax.f32 %v5428, 0.0
    %v5461 = vmax.f32 %v5429, 0.0
    %v5462 = vmax.f32 %v5430, 0.0
    %v5463 = vmax.f32 %v5431, 0.0
    %v5464 = vmax.f32 %v5432, 0.0
    %v5465 = vmax.f32 %v5433, 0.0
    %v5466 = vmax.f32 %v5434, 0.0
    %v5467 = vld [vmem:[#allocation17] sm:$0xff]
    %v5468 = vld [vmem:[#allocation17 + $0x8] sm:$0xff]
    %v5469 = vld [vmem:[#allocation17 + $0x10] sm:$0xff]
    %v5470 = vld [vmem:[#allocation17 + $0x18] sm:$0xff]
    %v5471 = vld [vmem:[#allocation17 + $0x20] sm:$0xff]
    %v5472 = vld [vmem:[#allocation17 + $0x28] sm:$0xff]
    %v5473 = vld [vmem:[#allocation17 + $0x30] sm:$0xff]
    %v5474 = vld [vmem:[#allocation17 + $0x38] sm:$0xff]
    %v5475 = vld [vmem:[#allocation17 + $0x40] sm:$0xff]
    %v5476 = vld [vmem:[#allocation17 + $0x48] sm:$0xff]
    %v5477 = vld [vmem:[#allocation17 + $0x50] sm:$0xff]
    %v5478 = vld [vmem:[#allocation17 + $0x58] sm:$0xff]
    %v5479 = vld [vmem:[#allocation17 + $0x60] sm:$0xff]
    %v5480 = vld [vmem:[#allocation17 + $0x68] sm:$0xff]
    %v5481 = vld [vmem:[#allocation17 + $0x70] sm:$0xff]
    %v5482 = vld [vmem:[#allocation17 + $0x78] sm:$0xff]
    %v5483 = vld [vmem:[#allocation17 + $0x80] sm:$0xff]
    %v5484 = vld [vmem:[#allocation17 + $0x88] sm:$0xff]
    %v5485 = vld [vmem:[#allocation17 + $0x90] sm:$0xff]
    %v5486 = vld [vmem:[#allocation17 + $0x98] sm:$0xff]
    %v5487 = vld [vmem:[#allocation17 + $0xa0] sm:$0xff]
    %v5488 = vld [vmem:[#allocation17 + $0xa8] sm:$0xff]
    %v5489 = vld [vmem:[#allocation17 + $0xb0] sm:$0xff]
    %v5490 = vld [vmem:[#allocation17 + $0xb8] sm:$0xff]
    %v5491 = vld [vmem:[#allocation17 + $0xc0] sm:$0xff]
    %v5492 = vld [vmem:[#allocation17 + $0xc8] sm:$0xff]
    %v5493 = vld [vmem:[#allocation17 + $0xd0] sm:$0xff]
    %v5494 = vld [vmem:[#allocation17 + $0xd8] sm:$0xff]
    %v5495 = vld [vmem:[#allocation17 + $0xe0] sm:$0xff]
    %v5496 = vld [vmem:[#allocation17 + $0xe8] sm:$0xff]
    %v5497 = vld [vmem:[#allocation17 + $0xf0] sm:$0xff]
    %v5498 = vld [vmem:[#allocation17 + $0xf8] sm:$0xff]
    %v5499 = vld [vmem:[#allocation17 + $0x100] sm:$0xff]
    %v5500 = vld [vmem:[#allocation17 + $0x108] sm:$0xff]
    %v5501 = vld [vmem:[#allocation17 + $0x110] sm:$0xff]
    %v5502 = vld [vmem:[#allocation17 + $0x118] sm:$0xff]
    %v5503 = vld [vmem:[#allocation17 + $0x120] sm:$0xff]
    %v5504 = vld [vmem:[#allocation17 + $0x128] sm:$0xff]
    %v5505 = vld [vmem:[#allocation17 + $0x130] sm:$0xff]
    %v5506 = vld [vmem:[#allocation17 + $0x138] sm:$0xff]
    %v5507 = vld [vmem:[#allocation17 + $0x140] sm:$0xff]
    %v5508 = vld [vmem:[#allocation17 + $0x148] sm:$0xff]
    %v5509 = vld [vmem:[#allocation17 + $0x150] sm:$0xff]
    %v5510 = vld [vmem:[#allocation17 + $0x158] sm:$0xff]
    %v5511 = vld [vmem:[#allocation17 + $0x160] sm:$0xff]
    %v5512 = vld [vmem:[#allocation17 + $0x168] sm:$0xff]
    %v5513 = vld [vmem:[#allocation17 + $0x170] sm:$0xff]
    %v5514 = vld [vmem:[#allocation17 + $0x178] sm:$0xff]
    %v5515 = vld [vmem:[#allocation17 + $0x180] sm:$0xff]
    %v5516 = vld [vmem:[#allocation17 + $0x188] sm:$0xff]
    %v5517 = vld [vmem:[#allocation17 + $0x190] sm:$0xff]
    %v5518 = vld [vmem:[#allocation17 + $0x198] sm:$0xff]
    %v5519 = vld [vmem:[#allocation17 + $0x1a0] sm:$0xff]
    %v5520 = vld [vmem:[#allocation17 + $0x1a8] sm:$0xff]
    %v5521 = vld [vmem:[#allocation17 + $0x1b0] sm:$0xff]
    %v5522 = vld [vmem:[#allocation17 + $0x1b8] sm:$0xff]
    %v5523 = vld [vmem:[#allocation17 + $0x1c0] sm:$0xff]
    %v5524 = vld [vmem:[#allocation17 + $0x1c8] sm:$0xff]
    %v5525 = vld [vmem:[#allocation17 + $0x1d0] sm:$0xff]
    %v5526 = vld [vmem:[#allocation17 + $0x1d8] sm:$0xff]
    %v5527 = vld [vmem:[#allocation17 + $0x1e0] sm:$0xff]
    %v5528 = vld [vmem:[#allocation17 + $0x1e8] sm:$0xff]
    %v5529 = vld [vmem:[#allocation17 + $0x1f0] sm:$0xff]
    %v5530 = vld [vmem:[#allocation17 + $0x1f8] sm:$0xff]
    %v5531 = vld [vmem:[#allocation17 + $0x200] sm:$0xff]
    %v5532 = vld [vmem:[#allocation17 + $0x208] sm:$0xff]
    %v5533 = vld [vmem:[#allocation17 + $0x210] sm:$0xff]
    %v5534 = vld [vmem:[#allocation17 + $0x218] sm:$0xff]
    %v5535 = vld [vmem:[#allocation17 + $0x220] sm:$0xff]
    %v5536 = vld [vmem:[#allocation17 + $0x228] sm:$0xff]
    %v5537 = vld [vmem:[#allocation17 + $0x230] sm:$0xff]
    %v5538 = vld [vmem:[#allocation17 + $0x238] sm:$0xff]
    %v5539 = vld [vmem:[#allocation17 + $0x240] sm:$0xff]
    %v5540 = vld [vmem:[#allocation17 + $0x248] sm:$0xff]
    %v5541 = vld [vmem:[#allocation17 + $0x250] sm:$0xff]
    %v5542 = vld [vmem:[#allocation17 + $0x258] sm:$0xff]
    %v5543 = vld [vmem:[#allocation17 + $0x260] sm:$0xff]
    %v5544 = vld [vmem:[#allocation17 + $0x268] sm:$0xff]
    %v5545 = vld [vmem:[#allocation17 + $0x270] sm:$0xff]
    %v5546 = vld [vmem:[#allocation17 + $0x278] sm:$0xff]
    %v5547 = vld [vmem:[#allocation17 + $0x280] sm:$0xff]
    %v5548 = vld [vmem:[#allocation17 + $0x288] sm:$0xff]
    %v5549 = vld [vmem:[#allocation17 + $0x290] sm:$0xff]
    %v5550 = vld [vmem:[#allocation17 + $0x298] sm:$0xff]
    %v5551 = vld [vmem:[#allocation17 + $0x2a0] sm:$0xff]
    %v5552 = vld [vmem:[#allocation17 + $0x2a8] sm:$0xff]
    %v5553 = vld [vmem:[#allocation17 + $0x2b0] sm:$0xff]
    %v5554 = vld [vmem:[#allocation17 + $0x2b8] sm:$0xff]
    %v5555 = vld [vmem:[#allocation17 + $0x2c0] sm:$0xff]
    %v5556 = vld [vmem:[#allocation17 + $0x2c8] sm:$0xff]
    %v5557 = vld [vmem:[#allocation17 + $0x2d0] sm:$0xff]
    %v5558 = vld [vmem:[#allocation17 + $0x2d8] sm:$0xff]
    %v5559 = vld [vmem:[#allocation17 + $0x2e0] sm:$0xff]
    %v5560 = vld [vmem:[#allocation17 + $0x2e8] sm:$0xff]
    %v5561 = vld [vmem:[#allocation17 + $0x2f0] sm:$0xff]
    %v5562 = vld [vmem:[#allocation17 + $0x2f8] sm:$0xff]
    %v5563 = vld [vmem:[#allocation17 + $0x300] sm:$0xff]
    %v5564 = vld [vmem:[#allocation17 + $0x308] sm:$0xff]
    %v5565 = vld [vmem:[#allocation17 + $0x310] sm:$0xff]
    %v5566 = vld [vmem:[#allocation17 + $0x318] sm:$0xff]
    %v5567 = vld [vmem:[#allocation17 + $0x320] sm:$0xff]
    %v5568 = vld [vmem:[#allocation17 + $0x328] sm:$0xff]
    %v5569 = vld [vmem:[#allocation17 + $0x330] sm:$0xff]
    %v5570 = vld [vmem:[#allocation17 + $0x338] sm:$0xff]
    %v5571 = vld [vmem:[#allocation17 + $0x340] sm:$0xff]
    %v5572 = vld [vmem:[#allocation17 + $0x348] sm:$0xff]
    %v5573 = vld [vmem:[#allocation17 + $0x350] sm:$0xff]
    %v5574 = vld [vmem:[#allocation17 + $0x358] sm:$0xff]
    %v5575 = vld [vmem:[#allocation17 + $0x360] sm:$0xff]
    %v5576 = vld [vmem:[#allocation17 + $0x368] sm:$0xff]
    %v5577 = vld [vmem:[#allocation17 + $0x370] sm:$0xff]
    %v5578 = vld [vmem:[#allocation17 + $0x378] sm:$0xff]
    %v5579 = vld [vmem:[#allocation17 + $0x380] sm:$0xff]
    %v5580 = vld [vmem:[#allocation17 + $0x388] sm:$0xff]
    %v5581 = vld [vmem:[#allocation17 + $0x390] sm:$0xff]
    %v5582 = vld [vmem:[#allocation17 + $0x398] sm:$0xff]
    %v5583 = vld [vmem:[#allocation17 + $0x3a0] sm:$0xff]
    %v5584 = vld [vmem:[#allocation17 + $0x3a8] sm:$0xff]
    %v5585 = vld [vmem:[#allocation17 + $0x3b0] sm:$0xff]
    %v5586 = vld [vmem:[#allocation17 + $0x3b8] sm:$0xff]
    %v5587 = vld [vmem:[#allocation17 + $0x3c0] sm:$0xff]
    %v5588 = vld [vmem:[#allocation17 + $0x3c8] sm:$0xff]
    %v5589 = vld [vmem:[#allocation17 + $0x3d0] sm:$0xff]
    %v5590 = vld [vmem:[#allocation17 + $0x3d8] sm:$0xff]
    %v5591 = vld [vmem:[#allocation17 + $0x3e0] sm:$0xff]
    %v5592 = vld [vmem:[#allocation17 + $0x3e8] sm:$0xff]
    %v5593 = vld [vmem:[#allocation17 + $0x3f0] sm:$0xff]
    %v5594 = vld [vmem:[#allocation17 + $0x3f8] sm:$0xff]
    %5595 = vmatpush.msra.mxu0 %v5482
    %5596 = vmatpush.msra.mxu0 %v5481
    %5597 = vmatpush.msra.mxu0 %v5480
    %5598 = vmatpush.msra.mxu0 %v5479
    %5599 = vmatpush.msra.mxu0 %v5478
    %5600 = vmatpush.msra.mxu0 %v5477
    %5601 = vmatpush.msra.mxu0 %v5476
    %5602 = vmatpush.msra.mxu0 %v5475
    %5603 = vmatpush.msra.mxu0 %v5474
    %5604 = vmatpush.msra.mxu0 %v5473
    %5605 = vmatpush.msra.mxu0 %v5472
    %5606 = vmatpush.msra.mxu0 %v5471
    %5607 = vmatpush.msra.mxu0 %v5470
    %5608 = vmatpush.msra.mxu0 %v5469
    %5609 = vmatpush.msra.mxu0 %v5468
    %5610 = vmatpush.msra.mxu0 %v5467
    %5611 = vmatmul.f32.gmra.mxu0 %v5435
    %v5612 = vpop.f32.mrf.mxu0
    %v5613 = vadd.f32 0.0, %v5612
    %5614 = vmatmul.f32.gmra.mxu0 %v5443
    %v5615 = vpop.f32.mrf.mxu0
    %v5616 = vadd.f32 0.0, %v5615
    %5617 = vmatmul.f32.gmra.mxu0 %v5451
    %v5618 = vpop.f32.mrf.mxu0
    %v5619 = vadd.f32 0.0, %v5618
    %5620 = vmatmul.f32.gmra.mxu0 %v5459
    %v5621 = vpop.f32.mrf.mxu0
    %v5622 = vadd.f32 0.0, %v5621
    %5623 = vdwg.mxu0
    %5624 = vmatpush.msra.mxu0 %v5498
    %5625 = vmatpush.msra.mxu0 %v5497
    %5626 = vmatpush.msra.mxu0 %v5496
    %5627 = vmatpush.msra.mxu0 %v5495
    %5628 = vmatpush.msra.mxu0 %v5494
    %5629 = vmatpush.msra.mxu0 %v5493
    %5630 = vmatpush.msra.mxu0 %v5492
    %5631 = vmatpush.msra.mxu0 %v5491
    %5632 = vmatpush.msra.mxu0 %v5490
    %5633 = vmatpush.msra.mxu0 %v5489
    %5634 = vmatpush.msra.mxu0 %v5488
    %5635 = vmatpush.msra.mxu0 %v5487
    %5636 = vmatpush.msra.mxu0 %v5486
    %5637 = vmatpush.msra.mxu0 %v5485
    %5638 = vmatpush.msra.mxu0 %v5484
    %5639 = vmatpush.msra.mxu0 %v5483
    %5640 = vmatmul.f32.gmra.mxu0 %v5436
    %v5641 = vpop.f32.mrf.mxu0
    %v5642 = vadd.f32 %v5613, %v5641
    %5643 = vmatmul.f32.gmra.mxu0 %v5444
    %v5644 = vpop.f32.mrf.mxu0
    %v5645 = vadd.f32 %v5616, %v5644
    %5646 = vmatmul.f32.gmra.mxu0 %v5452
    %v5647 = vpop.f32.mrf.mxu0
    %v5648 = vadd.f32 %v5619, %v5647
    %5649 = vmatmul.f32.gmra.mxu0 %v5460
    %v5650 = vpop.f32.mrf.mxu0
    %v5651 = vadd.f32 %v5622, %v5650
    %5652 = vdwg.mxu0
    %5653 = vmatpush.msra.mxu0 %v5514
    %5654 = vmatpush.msra.mxu0 %v5513
    %5655 = vmatpush.msra.mxu0 %v5512
    %5656 = vmatpush.msra.mxu0 %v5511
    %5657 = vmatpush.msra.mxu0 %v5510
    %5658 = vmatpush.msra.mxu0 %v5509
    %5659 = vmatpush.msra.mxu0 %v5508
    %5660 = vmatpush.msra.mxu0 %v5507
    %5661 = vmatpush.msra.mxu0 %v5506
    %5662 = vmatpush.msra.mxu0 %v5505
    %5663 = vmatpush.msra.mxu0 %v5504
    %5664 = vmatpush.msra.mxu0 %v5503
    %5665 = vmatpush.msra.mxu0 %v5502
    %5666 = vmatpush.msra.mxu0 %v5501
    %5667 = vmatpush.msra.mxu0 %v5500
    %5668 = vmatpush.msra.mxu0 %v5499
    %5669 = vmatmul.f32.gmra.mxu0 %v5437
    %v5670 = vpop.f32.mrf.mxu0
    %v5671 = vadd.f32 %v5642, %v5670
    %5672 = vmatmul.f32.gmra.mxu0 %v5445
    %v5673 = vpop.f32.mrf.mxu0
    %v5674 = vadd.f32 %v5645, %v5673
    %5675 = vmatmul.f32.gmra.mxu0 %v5453
    %v5676 = vpop.f32.mrf.mxu0
    %v5677 = vadd.f32 %v5648, %v5676
    %5678 = vmatmul.f32.gmra.mxu0 %v5461
    %v5679 = vpop.f32.mrf.mxu0
    %v5680 = vadd.f32 %v5651, %v5679
    %5681 = vdwg.mxu0
    %5682 = vmatpush.msra.mxu0 %v5530
    %5683 = vmatpush.msra.mxu0 %v5529
    %5684 = vmatpush.msra.mxu0 %v5528
    %5685 = vmatpush.msra.mxu0 %v5527
    %5686 = vmatpush.msra.mxu0 %v5526
    %5687 = vmatpush.msra.mxu0 %v5525
    %5688 = vmatpush.msra.mxu0 %v5524
    %5689 = vmatpush.msra.mxu0 %v5523
    %5690 = vmatpush.msra.mxu0 %v5522
    %5691 = vmatpush.msra.mxu0 %v5521
    %5692 = vmatpush.msra.mxu0 %v5520
    %5693 = vmatpush.msra.mxu0 %v5519
    %5694 = vmatpush.msra.mxu0 %v5518
    %5695 = vmatpush.msra.mxu0 %v5517
    %5696 = vmatpush.msra.mxu0 %v5516
    %5697 = vmatpush.msra.mxu0 %v5515
    %5698 = vmatmul.f32.gmra.mxu0 %v5438
    %v5699 = vpop.f32.mrf.mxu0
    %v5700 = vadd.f32 %v5671, %v5699
    %5701 = vmatmul.f32.gmra.mxu0 %v5446
    %v5702 = vpop.f32.mrf.mxu0
    %v5703 = vadd.f32 %v5674, %v5702
    %5704 = vmatmul.f32.gmra.mxu0 %v5454
    %v5705 = vpop.f32.mrf.mxu0
    %v5706 = vadd.f32 %v5677, %v5705
    %5707 = vmatmul.f32.gmra.mxu0 %v5462
    %v5708 = vpop.f32.mrf.mxu0
    %v5709 = vadd.f32 %v5680, %v5708
    %5710 = vdwg.mxu0
    %5711 = vmatpush.msra.mxu0 %v5546
    %5712 = vmatpush.msra.mxu0 %v5545
    %5713 = vmatpush.msra.mxu0 %v5544
    %5714 = vmatpush.msra.mxu0 %v5543
    %5715 = vmatpush.msra.mxu0 %v5542
    %5716 = vmatpush.msra.mxu0 %v5541
    %5717 = vmatpush.msra.mxu0 %v5540
    %5718 = vmatpush.msra.mxu0 %v5539
    %5719 = vmatpush.msra.mxu0 %v5538
    %5720 = vmatpush.msra.mxu0 %v5537
    %5721 = vmatpush.msra.mxu0 %v5536
    %5722 = vmatpush.msra.mxu0 %v5535
    %5723 = vmatpush.msra.mxu0 %v5534
    %5724 = vmatpush.msra.mxu0 %v5533
    %5725 = vmatpush.msra.mxu0 %v5532
    %5726 = vmatpush.msra.mxu0 %v5531
    %5727 = vmatmul.f32.gmra.mxu0 %v5439
    %v5728 = vpop.f32.mrf.mxu0
    %v5729 = vadd.f32 %v5700, %v5728
    %5730 = vmatmul.f32.gmra.mxu0 %v5447
    %v5731 = vpop.f32.mrf.mxu0
    %v5732 = vadd.f32 %v5703, %v5731
    %5733 = vmatmul.f32.gmra.mxu0 %v5455
    %v5734 = vpop.f32.mrf.mxu0
    %v5735 = vadd.f32 %v5706, %v5734
    %5736 = vmatmul.f32.gmra.mxu0 %v5463
    %v5737 = vpop.f32.mrf.mxu0
    %v5738 = vadd.f32 %v5709, %v5737
    %5739 = vdwg.mxu0
    %5740 = vmatpush.msra.mxu0 %v5562
    %5741 = vmatpush.msra.mxu0 %v5561
    %5742 = vmatpush.msra.mxu0 %v5560
    %5743 = vmatpush.msra.mxu0 %v5559
    %5744 = vmatpush.msra.mxu0 %v5558
    %5745 = vmatpush.msra.mxu0 %v5557
    %5746 = vmatpush.msra.mxu0 %v5556
    %5747 = vmatpush.msra.mxu0 %v5555
    %5748 = vmatpush.msra.mxu0 %v5554
    %5749 = vmatpush.msra.mxu0 %v5553
    %5750 = vmatpush.msra.mxu0 %v5552
    %5751 = vmatpush.msra.mxu0 %v5551
    %5752 = vmatpush.msra.mxu0 %v5550
    %5753 = vmatpush.msra.mxu0 %v5549
    %5754 = vmatpush.msra.mxu0 %v5548
    %5755 = vmatpush.msra.mxu0 %v5547
    %5756 = vmatmul.f32.gmra.mxu0 %v5440
    %v5757 = vpop.f32.mrf.mxu0
    %v5758 = vadd.f32 %v5729, %v5757
    %5759 = vmatmul.f32.gmra.mxu0 %v5448
    %v5760 = vpop.f32.mrf.mxu0
    %v5761 = vadd.f32 %v5732, %v5760
    %5762 = vmatmul.f32.gmra.mxu0 %v5456
    %v5763 = vpop.f32.mrf.mxu0
    %v5764 = vadd.f32 %v5735, %v5763
    %5765 = vmatmul.f32.gmra.mxu0 %v5464
    %v5766 = vpop.f32.mrf.mxu0
    %v5767 = vadd.f32 %v5738, %v5766
    %5768 = vdwg.mxu0
    %5769 = vmatpush.msra.mxu0 %v5578
    %5770 = vmatpush.msra.mxu0 %v5577
    %5771 = vmatpush.msra.mxu0 %v5576
    %5772 = vmatpush.msra.mxu0 %v5575
    %5773 = vmatpush.msra.mxu0 %v5574
    %5774 = vmatpush.msra.mxu0 %v5573
    %5775 = vmatpush.msra.mxu0 %v5572
    %5776 = vmatpush.msra.mxu0 %v5571
    %5777 = vmatpush.msra.mxu0 %v5570
    %5778 = vmatpush.msra.mxu0 %v5569
    %5779 = vmatpush.msra.mxu0 %v5568
    %5780 = vmatpush.msra.mxu0 %v5567
    %5781 = vmatpush.msra.mxu0 %v5566
    %5782 = vmatpush.msra.mxu0 %v5565
    %5783 = vmatpush.msra.mxu0 %v5564
    %5784 = vmatpush.msra.mxu0 %v5563
    %5785 = vmatmul.f32.gmra.mxu0 %v5441
    %v5786 = vpop.f32.mrf.mxu0
    %v5787 = vadd.f32 %v5758, %v5786
    %5788 = vmatmul.f32.gmra.mxu0 %v5449
    %v5789 = vpop.f32.mrf.mxu0
    %v5790 = vadd.f32 %v5761, %v5789
    %5791 = vmatmul.f32.gmra.mxu0 %v5457
    %v5792 = vpop.f32.mrf.mxu0
    %v5793 = vadd.f32 %v5764, %v5792
    %5794 = vmatmul.f32.gmra.mxu0 %v5465
    %v5795 = vpop.f32.mrf.mxu0
    %v5796 = vadd.f32 %v5767, %v5795
    %5797 = vdwg.mxu0
    %5798 = vmatpush.msra.mxu0 %v5594
    %5799 = vmatpush.msra.mxu0 %v5593
    %5800 = vmatpush.msra.mxu0 %v5592
    %5801 = vmatpush.msra.mxu0 %v5591
    %5802 = vmatpush.msra.mxu0 %v5590
    %5803 = vmatpush.msra.mxu0 %v5589
    %5804 = vmatpush.msra.mxu0 %v5588
    %5805 = vmatpush.msra.mxu0 %v5587
    %5806 = vmatpush.msra.mxu0 %v5586
    %5807 = vmatpush.msra.mxu0 %v5585
    %5808 = vmatpush.msra.mxu0 %v5584
    %5809 = vmatpush.msra.mxu0 %v5583
    %5810 = vmatpush.msra.mxu0 %v5582
    %5811 = vmatpush.msra.mxu0 %v5581
    %5812 = vmatpush.msra.mxu0 %v5580
    %5813 = vmatpush.msra.mxu0 %v5579
    %5814 = vmatmul.f32.gmra.mxu0 %v5442
    %v5815 = vpop.f32.mrf.mxu0
    %v5816 = vadd.f32 %v5787, %v5815
    %5817 = vmatmul.f32.gmra.mxu0 %v5450
    %v5818 = vpop.f32.mrf.mxu0
    %v5819 = vadd.f32 %v5790, %v5818
    %5820 = vmatmul.f32.gmra.mxu0 %v5458
    %v5821 = vpop.f32.mrf.mxu0
    %v5822 = vadd.f32 %v5793, %v5821
    %5823 = vmatmul.f32.gmra.mxu0 %v5466
    %v5824 = vpop.f32.mrf.mxu0
    %v5825 = vadd.f32 %v5796, %v5824
    %5826 = vdwg.mxu0
    %v5827 = vld [vmem:[#allocation19] sm:$0x1]
    %v5829 = vperm.slane %v5827, 0
    %v5831 = vmul.f32 %v5816, %v5829
    %v5832 = vmul.f32 %v5819, %v5829
    %v5833 = vmul.f32 %v5822, %v5829
    %v5834 = vmul.f32 %v5825, %v5829
    %v5835 = vld [vmem:[#allocation20] sm:$0x1]
    %v5837 = vperm.slane %v5835, 0
    %v5839 = vadd.f32 %v5831, %v5837
    %v5840 = vadd.f32 %v5832, %v5837
    %v5841 = vadd.f32 %v5833, %v5837
    %v5842 = vadd.f32 %v5834, %v5837
    %v5843 = vld [vmem:[%s12] sm:$0x1]
    %v5845 = vperm.slane %v5843, 0
    %v5847 = vmul.f32 %v5845, %v5839
    %v5848 = vmul.f32 %v5845, %v5840
    %v5849 = vmul.f32 %v5845, %v5841
    %v5850 = vmul.f32 %v5845, %v5842
    %v5851 = vadd.f32 %v321, %v5847
    %v5852 = vadd.f32 %v322, %v5848
    %v5853 = vadd.f32 %v323, %v5849
    %v5854 = vadd.f32 %v324, %v5850
    %v5855 = vld [vmem:[#allocation22] sm:$0xff]
    %v5856 = vld [vmem:[#allocation22 + $0x8] sm:$0xff]
    %v5857 = vld [vmem:[#allocation22 + $0x10] sm:$0xff]
    %v5858 = vld [vmem:[#allocation22 + $0x18] sm:$0xff]
    %v5860 = vsel %vm409, %v5851, 0
    %v5863 = vsel %vm409, %v5852, 0
    %v5866 = vsel %vm409, %v5853, 0
    %v5869 = vsel %vm409, %v5854, 0
    %5871 = vmatpush.msra.mxu0 0.0
    %5872 = vmatpush.msra.mxu0 0.0
    %5873 = vmatpush.msra.mxu0 0.0
    %5874 = vmatpush.msra.mxu0 0.0
    %5875 = vmatpush.msra.mxu0 0.0
    %5876 = vmatpush.msra.mxu0 0.0
    %5877 = vmatpush.msra.mxu0 0.0
    %5878 = vmatpush.msra.mxu0 0.0
    %5879 = vmatpush.msra.mxu0 0.0
    %5880 = vmatpush.msra.mxu0 0.0
    %5881 = vmatpush.msra.mxu0 0.0
    %5882 = vmatpush.msra.mxu0 0.0
    %5883 = vmatpush.msra.mxu0 %v5858
    %5884 = vmatpush.msra.mxu0 %v5857
    %5885 = vmatpush.msra.mxu0 %v5856
    %5886 = vmatpush.msra.mxu0 %v5855
    %5887 = vmatmul.f32.gmra.mxu0 %v5860
    %v5888 = vpop.f32.mrf.mxu0
    %v5889 = vadd.f32 0.0, %v5888
    %5890 = vmatmul.f32.gmra.mxu0 %v5863
    %v5891 = vpop.f32.mrf.mxu0
    %v5892 = vadd.f32 0.0, %v5891
    %5893 = vmatmul.f32.gmra.mxu0 %v5866
    %v5894 = vpop.f32.mrf.mxu0
    %v5895 = vadd.f32 0.0, %v5894
    %5896 = vmatmul.f32.gmra.mxu0 %v5869
    %v5897 = vpop.f32.mrf.mxu0
    %v5898 = vadd.f32 0.0, %v5897
    %5899 = vdwg.mxu0
    %v5900 = vld [vmem:[#allocation23] sm:$0x1]
    %v5902 = vperm.slane %v5900, 0
    %v5904 = vmul.f32 %v5889, %v5902
    %v5905 = vmul.f32 %v5892, %v5902
    %v5906 = vmul.f32 %v5895, %v5902
    %v5907 = vmul.f32 %v5898, %v5902
    %v5908 = vld [vmem:[#allocation25] sm:$0x1]
    %v5910 = vperm.slane %v5908, 0
    %v5912 = vadd.f32 %v5904, %v5910
    %v5913 = vadd.f32 %v5905, %v5910
    %v5914 = vadd.f32 %v5906, %v5910
    %v5915 = vadd.f32 %v5907, %v5910
    %v5916 = vmax.f32 %v5912, 0.0
    %v5917 = vmax.f32 %v5913, 0.0
    %v5918 = vmax.f32 %v5914, 0.0
    %v5919 = vmax.f32 %v5915, 0.0
    %v5920 = vld [vmem:[%s16] sm:$0xff]
    %v5921 = vld [vmem:[%s16 + $0x8] sm:$0x1]
    %v5922 = vld [vmem:[#allocation26] sm:$0x1]
    %v5923 = vld [vmem:[%s18] sm:$0x1]
    %5924 = vmatpush.msra.mxu0 0.0
    %5925 = vmatpush.msra.mxu0 0.0
    %5926 = vmatpush.msra.mxu0 0.0
    %5927 = vmatpush.msra.mxu0 0.0
    %5928 = vmatpush.msra.mxu0 0.0
    %5929 = vmatpush.msra.mxu0 0.0
    %5930 = vmatpush.msra.mxu0 0.0
    %5931 = vmatpush.msra.mxu0 0.0
    %5932 = vmatpush.msra.mxu0 0.0
    %5933 = vmatpush.msra.mxu0 0.0
    %5934 = vmatpush.msra.mxu0 0.0
    %5935 = vmatpush.msra.mxu0 0.0
    %5936 = vmatpush.msra.mxu0 %v5919
    %5937 = vmatpush.msra.mxu0 %v5918
    %5938 = vmatpush.msra.mxu0 %v5917
    %5939 = vmatpush.msra.mxu0 %v5916
    %5940 = vmatmul.f32.gmra.mxu0 %v941
    %v5941 = vpop.f32.mrf.mxu0
    %v5942 = vadd.f32 0.0, %v5941
    %5943 = vmatmul.f32.gmra.mxu0 %v944
    %v5944 = vpop.f32.mrf.mxu0
    %v5945 = vadd.f32 0.0, %v5944
    %5946 = vmatmul.f32.gmra.mxu0 %v947
    %v5947 = vpop.f32.mrf.mxu0
    %v5948 = vadd.f32 0.0, %v5947
    %5949 = vmatmul.f32.gmra.mxu0 %v950
    %v5950 = vpop.f32.mrf.mxu0
    %v5951 = vadd.f32 0.0, %v5950
    %5952 = vmatmul.f32.gmra.mxu0 %v953
    %v5953 = vpop.f32.mrf.mxu0
    %v5954 = vadd.f32 0.0, %v5953
    %5955 = vmatmul.f32.gmra.mxu0 %v956
    %v5956 = vpop.f32.mrf.mxu0
    %v5957 = vadd.f32 0.0, %v5956
    %5958 = vmatmul.f32.gmra.mxu0 %v959
    %v5959 = vpop.f32.mrf.mxu0
    %v5960 = vadd.f32 0.0, %v5959
    %5961 = vmatmul.f32.gmra.mxu0 %v962
    %v5962 = vpop.f32.mrf.mxu0
    %v5963 = vadd.f32 0.0, %v5962
    %5964 = vmatmul.f32.gmra.mxu0 %v965
    %v5965 = vpop.f32.mrf.mxu0
    %v5966 = vadd.f32 0.0, %v5965
    %5967 = vmatmul.f32.gmra.mxu0 %v968
    %v5968 = vpop.f32.mrf.mxu0
    %v5969 = vadd.f32 0.0, %v5968
    %5970 = vmatmul.f32.gmra.mxu0 %v971
    %v5971 = vpop.f32.mrf.mxu0
    %v5972 = vadd.f32 0.0, %v5971
    %5973 = vmatmul.f32.gmra.mxu0 %v974
    %v5974 = vpop.f32.mrf.mxu0
    %v5975 = vadd.f32 0.0, %v5974
    %5976 = vmatmul.f32.gmra.mxu0 %v977
    %v5977 = vpop.f32.mrf.mxu0
    %v5978 = vadd.f32 0.0, %v5977
    %5979 = vmatmul.f32.gmra.mxu0 %v980
    %v5980 = vpop.f32.mrf.mxu0
    %v5981 = vadd.f32 0.0, %v5980
    %5982 = vmatmul.f32.gmra.mxu0 %v983
    %v5983 = vpop.f32.mrf.mxu0
    %v5984 = vadd.f32 0.0, %v5983
    %5985 = vmatmul.f32.gmra.mxu0 %v986
    %v5986 = vpop.f32.mrf.mxu0
    %v5987 = vadd.f32 0.0, %v5986
    %5988 = vmatmul.f32.gmra.mxu0 %v989
    %v5989 = vpop.f32.mrf.mxu0
    %v5990 = vadd.f32 0.0, %v5989
    %5991 = vmatmul.f32.gmra.mxu0 %v992
    %v5992 = vpop.f32.mrf.mxu0
    %v5993 = vadd.f32 0.0, %v5992
    %5994 = vmatmul.f32.gmra.mxu0 %v995
    %v5995 = vpop.f32.mrf.mxu0
    %v5996 = vadd.f32 0.0, %v5995
    %5997 = vmatmul.f32.gmra.mxu0 %v998
    %v5998 = vpop.f32.mrf.mxu0
    %v5999 = vadd.f32 0.0, %v5998
    %6000 = vmatmul.f32.gmra.mxu0 %v1001
    %v6001 = vpop.f32.mrf.mxu0
    %v6002 = vadd.f32 0.0, %v6001
    %6003 = vmatmul.f32.gmra.mxu0 %v1004
    %v6004 = vpop.f32.mrf.mxu0
    %v6005 = vadd.f32 0.0, %v6004
    %6006 = vmatmul.f32.gmra.mxu0 %v1007
    %v6007 = vpop.f32.mrf.mxu0
    %v6008 = vadd.f32 0.0, %v6007
    %6009 = vmatmul.f32.gmra.mxu0 %v1010
    %v6010 = vpop.f32.mrf.mxu0
    %v6011 = vadd.f32 0.0, %v6010
    %6012 = vmatmul.f32.gmra.mxu0 %v1013
    %v6013 = vpop.f32.mrf.mxu0
    %v6014 = vadd.f32 0.0, %v6013
    %6015 = vmatmul.f32.gmra.mxu0 %v1016
    %v6016 = vpop.f32.mrf.mxu0
    %v6017 = vadd.f32 0.0, %v6016
    %6018 = vmatmul.f32.gmra.mxu0 %v1019
    %v6019 = vpop.f32.mrf.mxu0
    %v6020 = vadd.f32 0.0, %v6019
    %6021 = vmatmul.f32.gmra.mxu0 %v1022
    %v6022 = vpop.f32.mrf.mxu0
    %v6023 = vadd.f32 0.0, %v6022
    %6024 = vmatmul.f32.gmra.mxu0 %v1025
    %v6025 = vpop.f32.mrf.mxu0
    %v6026 = vadd.f32 0.0, %v6025
    %6027 = vmatmul.f32.gmra.mxu0 %v1028
    %v6028 = vpop.f32.mrf.mxu0
    %v6029 = vadd.f32 0.0, %v6028
    %6030 = vmatmul.f32.gmra.mxu0 %v1031
    %v6031 = vpop.f32.mrf.mxu0
    %v6032 = vadd.f32 0.0, %v6031
    %6033 = vmatmul.f32.gmra.mxu0 %v1034
    %v6034 = vpop.f32.mrf.mxu0
    %v6035 = vadd.f32 0.0, %v6034
    %6036 = vmatmul.f32.gmra.mxu0 %v1037
    %v6037 = vpop.f32.mrf.mxu0
    %v6038 = vadd.f32 0.0, %v6037
    %6039 = vmatmul.f32.gmra.mxu0 %v1040
    %v6040 = vpop.f32.mrf.mxu0
    %v6041 = vadd.f32 0.0, %v6040
    %6042 = vmatmul.f32.gmra.mxu0 %v1043
    %v6043 = vpop.f32.mrf.mxu0
    %v6044 = vadd.f32 0.0, %v6043
    %6045 = vmatmul.f32.gmra.mxu0 %v1046
    %v6046 = vpop.f32.mrf.mxu0
    %v6047 = vadd.f32 0.0, %v6046
    %6048 = vdwg.mxu0
    %v6049 = vperm.slane %v5920, 0
    %v6050 = vmul.f32 %v5942, %v6049
    %v6051 = vmul.f32 %v5945, %v6049
    %v6052 = vmul.f32 %v5948, %v6049
    %v6053 = vmul.f32 %v5951, %v6049
    %v6054 = vperm.slane %v5920, 1
    %v6055 = vmul.f32 %v5954, %v6054
    %v6056 = vmul.f32 %v5957, %v6054
    %v6057 = vmul.f32 %v5960, %v6054
    %v6058 = vmul.f32 %v5963, %v6054
    %v6059 = vadd.f32 %v6050, %v6055
    %v6060 = vadd.f32 %v6051, %v6056
    %v6061 = vadd.f32 %v6052, %v6057
    %v6062 = vadd.f32 %v6053, %v6058
    %v6063 = vperm.slane %v5920, 2
    %v6064 = vmul.f32 %v5966, %v6063
    %v6065 = vmul.f32 %v5969, %v6063
    %v6066 = vmul.f32 %v5972, %v6063
    %v6067 = vmul.f32 %v5975, %v6063
    %v6068 = vadd.f32 %v6059, %v6064
    %v6069 = vadd.f32 %v6060, %v6065
    %v6070 = vadd.f32 %v6061, %v6066
    %v6071 = vadd.f32 %v6062, %v6067
    %v6072 = vperm.slane %v5920, 3
    %v6073 = vmul.f32 %v5978, %v6072
    %v6074 = vmul.f32 %v5981, %v6072
    %v6075 = vmul.f32 %v5984, %v6072
    %v6076 = vmul.f32 %v5987, %v6072
    %v6077 = vadd.f32 %v6068, %v6073
    %v6078 = vadd.f32 %v6069, %v6074
    %v6079 = vadd.f32 %v6070, %v6075
    %v6080 = vadd.f32 %v6071, %v6076
    %v6081 = vperm.slane %v5920, 4
    %v6082 = vmul.f32 %v5990, %v6081
    %v6083 = vmul.f32 %v5993, %v6081
    %v6084 = vmul.f32 %v5996, %v6081
    %v6085 = vmul.f32 %v5999, %v6081
    %v6086 = vadd.f32 %v6077, %v6082
    %v6087 = vadd.f32 %v6078, %v6083
    %v6088 = vadd.f32 %v6079, %v6084
    %v6089 = vadd.f32 %v6080, %v6085
    %v6090 = vperm.slane %v5920, 5
    %v6091 = vmul.f32 %v6002, %v6090
    %v6092 = vmul.f32 %v6005, %v6090
    %v6093 = vmul.f32 %v6008, %v6090
    %v6094 = vmul.f32 %v6011, %v6090
    %v6095 = vadd.f32 %v6086, %v6091
    %v6096 = vadd.f32 %v6087, %v6092
    %v6097 = vadd.f32 %v6088, %v6093
    %v6098 = vadd.f32 %v6089, %v6094
    %v6099 = vperm.slane %v5920, 6
    %v6100 = vmul.f32 %v6014, %v6099
    %v6101 = vmul.f32 %v6017, %v6099
    %v6102 = vmul.f32 %v6020, %v6099
    %v6103 = vmul.f32 %v6023, %v6099
    %v6104 = vadd.f32 %v6095, %v6100
    %v6105 = vadd.f32 %v6096, %v6101
    %v6106 = vadd.f32 %v6097, %v6102
    %v6107 = vadd.f32 %v6098, %v6103
    %v6108 = vperm.slane %v5920, 7
    %v6109 = vmul.f32 %v6026, %v6108
    %v6110 = vmul.f32 %v6029, %v6108
    %v6111 = vmul.f32 %v6032, %v6108
    %v6112 = vmul.f32 %v6035, %v6108
    %v6113 = vadd.f32 %v6104, %v6109
    %v6114 = vadd.f32 %v6105, %v6110
    %v6115 = vadd.f32 %v6106, %v6111
    %v6116 = vadd.f32 %v6107, %v6112
    %v6117 = vperm.slane %v5921, 0
    %v6118 = vmul.f32 %v6038, %v6117
    %v6119 = vmul.f32 %v6041, %v6117
    %v6120 = vmul.f32 %v6044, %v6117
    %v6121 = vmul.f32 %v6047, %v6117
    %v6122 = vadd.f32 %v6113, %v6118
    %v6123 = vadd.f32 %v6114, %v6119
    %v6124 = vadd.f32 %v6115, %v6120
    %v6125 = vadd.f32 %v6116, %v6121
    %v6127 = vperm.slane %v5922, 0
    %v6129 = vmul.f32 %v6122, %v6127
    %v6130 = vmul.f32 %v6123, %v6127
    %v6131 = vmul.f32 %v6124, %v6127
    %v6132 = vmul.f32 %v6125, %v6127
    %v6134 = vperm.slane %v5923, 0
    %v6136 = vadd.f32 %v6129, %v6134
    %v6137 = vadd.f32 %v6130, %v6134
    %v6138 = vadd.f32 %v6131, %v6134
    %v6139 = vadd.f32 %v6132, %v6134
    %v6140 = vmax.f32 %v6136, 0.0
    %v6141 = vmax.f32 %v6137, 0.0
    %v6142 = vmax.f32 %v6138, 0.0
    %v6143 = vmax.f32 %v6139, 0.0
    %v6144 = vld [vmem:[#allocation28] sm:$0xff]
    %v6145 = vld [vmem:[#allocation28 + $0x8] sm:$0xff]
    %v6146 = vld [vmem:[#allocation28 + $0x10] sm:$0xff]
    %v6147 = vld [vmem:[#allocation28 + $0x18] sm:$0xff]
    %v6148 = vld [vmem:[#allocation28 + $0x20] sm:$0xff]
    %v6149 = vld [vmem:[#allocation28 + $0x28] sm:$0xff]
    %v6150 = vld [vmem:[#allocation28 + $0x30] sm:$0xff]
    %v6151 = vld [vmem:[#allocation28 + $0x38] sm:$0xff]
    %v6152 = vld [vmem:[#allocation28 + $0x40] sm:$0xff]
    %v6153 = vld [vmem:[#allocation28 + $0x48] sm:$0xff]
    %v6154 = vld [vmem:[#allocation28 + $0x50] sm:$0xff]
    %v6155 = vld [vmem:[#allocation28 + $0x58] sm:$0xff]
    %v6156 = vld [vmem:[#allocation28 + $0x60] sm:$0xff]
    %v6157 = vld [vmem:[#allocation28 + $0x68] sm:$0xff]
    %v6158 = vld [vmem:[#allocation28 + $0x70] sm:$0xff]
    %v6159 = vld [vmem:[#allocation28 + $0x78] sm:$0xff]
    %6160 = vmatpush.msra.mxu0 %v6159
    %6161 = vmatpush.msra.mxu0 %v6158
    %6162 = vmatpush.msra.mxu0 %v6157
    %6163 = vmatpush.msra.mxu0 %v6156
    %6164 = vmatpush.msra.mxu0 %v6155
    %6165 = vmatpush.msra.mxu0 %v6154
    %6166 = vmatpush.msra.mxu0 %v6153
    %6167 = vmatpush.msra.mxu0 %v6152
    %6168 = vmatpush.msra.mxu0 %v6151
    %6169 = vmatpush.msra.mxu0 %v6150
    %6170 = vmatpush.msra.mxu0 %v6149
    %6171 = vmatpush.msra.mxu0 %v6148
    %6172 = vmatpush.msra.mxu0 %v6147
    %6173 = vmatpush.msra.mxu0 %v6146
    %6174 = vmatpush.msra.mxu0 %v6145
    %6175 = vmatpush.msra.mxu0 %v6144
    %6176 = vmatmul.f32.gmra.mxu0 %v6140
    %v6177 = vpop.f32.mrf.mxu0
    %v6178 = vadd.f32 0.0, %v6177
    %6179 = vmatmul.f32.gmra.mxu0 %v6141
    %v6180 = vpop.f32.mrf.mxu0
    %v6181 = vadd.f32 0.0, %v6180
    %6182 = vmatmul.f32.gmra.mxu0 %v6142
    %v6183 = vpop.f32.mrf.mxu0
    %v6184 = vadd.f32 0.0, %v6183
    %6185 = vmatmul.f32.gmra.mxu0 %v6143
    %v6186 = vpop.f32.mrf.mxu0
    %v6187 = vadd.f32 0.0, %v6186
    %6188 = vdwg.mxu0
    %v6189 = vld [vmem:[%s20] sm:$0x1]
    %v6191 = vperm.slane %v6189, 0
    %v6193 = vmul.f32 %v6178, %v6191
    %v6194 = vmul.f32 %v6181, %v6191
    %v6195 = vmul.f32 %v6184, %v6191
    %v6196 = vmul.f32 %v6187, %v6191
    %v6197 = vld [vmem:[%s21] sm:$0x1]
    %v6199 = vperm.slane %v6197, 0
    %v6201 = vadd.f32 %v6193, %v6199
    %v6202 = vadd.f32 %v6194, %v6199
    %v6203 = vadd.f32 %v6195, %v6199
    %v6204 = vadd.f32 %v6196, %v6199
    %v6205 = vld [vmem:[%s22] sm:$0x1]
    %v6207 = vperm.slane %v6205, 0
    %v6209 = vmul.f32 %v6207, %v6201
    %v6210 = vmul.f32 %v6207, %v6202
    %v6211 = vmul.f32 %v6207, %v6203
    %v6212 = vmul.f32 %v6207, %v6204
    %v6213 = vadd.f32 %v5851, %v6209
    %v6214 = vadd.f32 %v5852, %v6210
    %v6215 = vadd.f32 %v5853, %v6211
    %v6216 = vadd.f32 %v5854, %v6212
    %6217 = vst.msk [vmem:[#allocation29] sm:$0xff] %vm409, %v6213
    %6218 = vst.msk [vmem:[#allocation29 + $0x8] sm:$0xff] %vm409, %v6214
    %6219 = vst.msk [vmem:[#allocation29 + $0x10] sm:$0xff] %vm409, %v6215
    %6220 = vst.msk [vmem:[#allocation29 + $0x18] sm:$0xff] %vm409, %v6216
    // Predicated region
    $region162: #{_lambda_.1} parent=1 // pred_check
      _
    $region163: #{_lambda_.1} parent=1 // pred_check_branch
      %6222 = sbr.rel (0) target = $region165
    $region164: #{_lambda_.1} parent=1 // pred_region
      %6224 = vsyncadd [#allocation4], 0
      %s6225 = sshll.u32 [#allocation29], 4
      %s6226 = int_to_ptr.vmem [resolvable:$true] %s6225
      %s6227 = sshll.u32 %s23, 4
      %s6228 = int_to_ptr.hbm [resolvable:$true] %s6227
      %6233 = dma.vmem_to_hbm [thread:$0]  %s6226, 512, %s6228, [#allocation4], 128, 128, 8
    $region165: #{_lambda_.1} parent=1 // pred_fallthru
      _
    // Predicated region
    $region166: #{_lambda_.1} parent=1 // pred_check
      _
    $region167: #{_lambda_.1} parent=1 // pred_check_branch
      %6235 = sbr.rel (0) target = $region169
    $region168: #{_lambda_.1} parent=1 // pred_region
      %6237 = dma.done [#allocation4], 512
    $region169: #{_lambda_.1} parent=1 // pred_fallthru
      _
    %6238 = vsyncpa [#allocation3], 1
    %6239 = vsyncpa [#allocation6], 1
    %6240 = vsyncpa [#allocation9], 1
    %6241 = vsyncpa [#allocation12], 1
    %6242 = vsyncpa [#allocation15], 1
    %6243 = vsyncpa [#allocation18], 1
    %6244 = vsyncpa [#allocation21], 1
    %6245 = vsyncpa [#allocation24], 1
    %6246 = vsyncpa [#allocation27], 1
    %6247 = vsyncpa [#allocation4], 1

</llo_original>
